<compile_context>
chip_gen: v7x
topology: tpu7x:2x2x1
jax: 0.10.0
libtpu: 0.0.40
codegen_flags: <defaults>
</compile_context>

<pallas_src>
import functools

import jax
import jax.numpy as jnp
from jax.experimental import pallas as pl
from jax.experimental.pallas import tpu as pltpu


# ---------------------------------------------------------------------------
# Fused kernel: nearest-2x upsample (H, W) + zero-pad-1 + 3x3 conv + bias.
# ---------------------------------------------------------------------------
def _fused_up_conv_kernel(x_ref, w_ref, b_ref, o_ref, acc_e_ref, acc_o_ref):
    # x_ref : (1, H, W, Cin)        -- full ORIGINAL frame, channels on lanes
    # w_ref : (3, 3, Cin, TCo)      -- HWIO weight tile
    # b_ref : (1, TCo)
    # o_ref : (1, 2, 2*TH, W, TCo)  -- [col-phase, out-row, orig-col, out-ch]
    # acc_* : (2*TH*W, TCo) f32 VMEM scratch accumulators
    H, W, Cin = x_ref.shape[1], x_ref.shape[2], x_ref.shape[3]
    TH = o_ref.shape[2] // 2
    TCo = o_ref.shape[4]
    ME = 2 * TH * W

    h_idx = pl.program_id(2)
    h0 = h_idx * TH                                   # first original row of tile

    # ---- original-resolution row slab with zero halo rows -------------------
    mid = x_ref[0, pl.ds(h0, TH), :, :]                               # (TH, W, Cin)
    top_src = x_ref[0, pl.ds(jnp.maximum(h0 - 1, 0), 1), :, :]        # (1, W, Cin)
    bot_src = x_ref[0, pl.ds(jnp.minimum(h0 + TH, H - 1), 1), :, :]   # (1, W, Cin)
    top = jnp.where(h0 == 0, jnp.zeros_like(top_src), top_src)
    bot = jnp.where(h0 + TH == H, jnp.zeros_like(bot_src), bot_src)

    # Rows of the padded, H-upsampled image covering this tile, at ORIGINAL
    # column resolution: [top, r0, r0, r1, r1, ..., r_{TH-1}, r_{TH-1}, bot].
    dup = jnp.broadcast_to(mid[:, None, :, :], (TH, 2, W, Cin))
    dup = dup.reshape(2 * TH, W, Cin)
    rows = jnp.concatenate([top, dup, bot], axis=0)                   # (2TH+2, W, Cin)

    # Column-shifted neighbours (zero at the borders).
    zcol = jnp.zeros((2 * TH + 2, 1, Cin), rows.dtype)
    rows_l = jnp.concatenate([zcol, rows[:, :W - 1, :]], axis=1)      # x[., j-1]
    rows_r = jnp.concatenate([rows[:, 1:, :], zcol], axis=1)          # x[., j+1]

    # 12 GEMMs (vs 18 GEMM-rows-equivalent for the naive fused version).
    for kh in range(3):
        lc = rows[kh:kh + 2 * TH].reshape(ME, Cin)
        ll = rows_l[kh:kh + 2 * TH].reshape(ME, Cin)
        lr = rows_r[kh:kh + 2 * TH].reshape(ME, Cin)

        w_l = w_ref[kh, 0]                                            # (Cin, TCo)
        w_c = w_ref[kh, 1]
        w_r = w_ref[kh, 2]

        even = (jnp.dot(ll, w_l, preferred_element_type=jnp.float32)
                + jnp.dot(lc, w_c + w_r, preferred_element_type=jnp.float32))
        odd = (jnp.dot(lc, w_l + w_c, preferred_element_type=jnp.float32)
               + jnp.dot(lr, w_r, preferred_element_type=jnp.float32))

        if kh == 0:
            acc_e_ref[...] = even
            acc_o_ref[...] = odd
        else:
            acc_e_ref[...] += even
            acc_o_ref[...] += odd

    bias = b_ref[...].astype(jnp.float32)                             # (1, TCo)
    out_e = (acc_e_ref[...] + bias).reshape(2 * TH, W, TCo).astype(o_ref.dtype)
    out_o = (acc_o_ref[...] + bias).reshape(2 * TH, W, TCo).astype(o_ref.dtype)
    o_ref[...] = jnp.stack([out_e, out_o], axis=0)[None]


def _pick_cout_tile(cout):
    for t in (256, 128):
        if cout % t == 0:
            return t
    return cout


def _pick_h_tile(H, W, cin, tco, itemsize, budget=8 * 1024 * 1024):
    for th in range(H, 0, -1):
        if H % th:
            continue
        work = (3 * (2 * th + 2) * W * cin * itemsize       # rows / rows_l / rows_r
                + 2 * 4 * 2 * th * W * tco                  # two f32 accumulators
                + 2 * 2 * 2 * th * W * tco * itemsize)      # double-buffered out blk
        if work <= budget:
            return th
    return 1


def fused_upsample2x_conv3x3(x, w_hwio, bias, *, h_tile=None, cout_tile=None):
    """x: (N, H, W, Cin) -> (N, 2, 2H, W, Cout); axis 1 = output-column parity.

    out[n, p, r, j, c] == conv3x3(pad1(nearest2x(x)))[n, r, 2*j + p, c]
    """
    N, H, W, Cin = x.shape
    Cout = w_hwio.shape[-1]
    dtype = x.dtype
    isz = jnp.dtype(dtype).itemsize

    TCo = cout_tile if cout_tile is not None else _pick_cout_tile(Cout)
    assert Cout % TCo == 0 and (TCo == Cout or TCo % 128 == 0)
    TH = h_tile if h_tile is not None else _pick_h_tile(H, W, Cin, TCo, isz)
    assert H % TH == 0
    n_co, n_h = Cout // TCo, H // TH

    # Advisory cost + VMEM sizing (never below the default scoped limit).
    flops = 2 * N * (2 * H) * (2 * W) * 9 * Cin * Cout
    bytes_accessed = ((N * H * W * Cin + 9 * Cin * Cout + Cout) * isz
                      + N * 4 * H * W * Cout * isz)
    vmem_est = 2 * (H * W * Cin * isz                 # input frame buffer (x2)
                    + 9 * Cin * TCo * isz             # weight tile (x2)
                    + 2 * 2 * TH * W * TCo * isz)     # output block (x2)
    vmem_est += 2 * 4 * 2 * TH * W * TCo + 4 * (2 * TH + 2) * W * Cin * isz
    vmem_limit = max(32 * 1024 * 1024, min(64 * 1024 * 1024, int(1.3 * vmem_est)))

    return pl.pallas_call(
        _fused_up_conv_kernel,
        grid=(N, n_co, n_h),
        in_specs=[
            pl.BlockSpec((1, H, W, Cin), lambda n, co, h: (n, 0, 0, 0)),
            pl.BlockSpec((3, 3, Cin, TCo), lambda n, co, h: (0, 0, 0, co)),
            pl.BlockSpec((1, TCo), lambda n, co, h: (0, co)),
        ],
        out_specs=pl.BlockSpec((1, 2, 2 * TH, W, TCo),
                               lambda n, co, h: (n, 0, h, 0, co)),
        out_shape=jax.ShapeDtypeStruct((N, 2, 2 * H, W, Cout), dtype),
        scratch_shapes=[pltpu.VMEM((2 * TH * W, TCo), jnp.float32),
                        pltpu.VMEM((2 * TH * W, TCo), jnp.float32)],
        compiler_params=pltpu.CompilerParams(
            dimension_semantics=("parallel", "parallel", "parallel"),
            vmem_limit_bytes=vmem_limit),
        cost_estimate=pl.CostEstimate(flops=flops, transcendentals=0,
                                      bytes_accessed=bytes_accessed),
    )(x, w_hwio.astype(dtype), bias.reshape(1, Cout).astype(dtype))


# ---------------------------------------------------------------------------
# Standalone nearest-2x upsample (use_conv=False path), lane/sublane-dense out.
# ---------------------------------------------------------------------------
def _nearest2x_kernel(x_ref, o_ref):
    # x_ref: (1, TH, W, C)    o_ref: (1, 2, 2, TH, W, C)  [row-phase, col-phase]
    x = x_ref[...]
    o_ref[...] = jnp.broadcast_to(x[:, None, None], o_ref.shape)


def nearest_upsample2x(x, *, h_tile=None):
    N, H, W, C = x.shape
    isz = jnp.dtype(x.dtype).itemsize
    if h_tile is None:
        h_tile = 1
        for th in range(H, 0, -1):
            if H % th == 0 and 2 * 5 * th * W * C * isz <= 8 * 1024 * 1024:
                h_tile = th
                break
    assert H % h_tile == 0
    return pl.pallas_call(
        _nearest2x_kernel,
        grid=(N, H // h_tile),
        in_specs=[pl.BlockSpec((1, h_tile, W, C), lambda n, h: (n, h, 0, 0))],
        out_specs=pl.BlockSpec((1, 2, 2, h_tile, W, C),
                               lambda n, h: (n, 0, 0, h, 0, 0)),
        out_shape=jax.ShapeDtypeStruct((N, 2, 2, H, W, C), x.dtype),
        compiler_params=pltpu.CompilerParams(
            dimension_semantics=("parallel", "parallel")),
    )(x)


# ---------------------------------------------------------------------------
# Upsample3D.forward
# ---------------------------------------------------------------------------
@functools.partial(jax.jit, static_argnames=("use_conv", "h_tile", "cout_tile"))
def upsample3d_forward(hidden_states, w_hwio=None, bias=None, *,
                       use_conv=True, h_tile=None, cout_tile=None):
    # hidden_states: (B, C, F, H, W)  ->  (B, Cout, F, 2H, 2W)
    # TODO(synk): use_conv_transpose (ConvTranspose2d), output_size-based
    #             interpolation and the LoRA `scale` delta are not implemented.
    B, C, F, H, W = hidden_states.shape
    N = B * F
    # b c f h w -> (b f) h w c   (channels on the lane dimension)
    x = jnp.transpose(hidden_states, (0, 2, 3, 4, 1)).reshape(N, H, W, C)
    # NOTE: torch's bf16->f32->bf16 round-trip around F.interpolate is
    # value-exact for nearest upsampling, so it is elided (saves 2 full passes).
    if use_conv:
        Cout = w_hwio.shape[-1]
        y = fused_upsample2x_conv3x3(x, w_hwio, bias,
                                     h_tile=h_tile, cout_tile=cout_tile)
        # (B*F, 2, 2H, W, Cout) -> (B, Cout, F, 2H, 2W); the even/odd column
        # interleave is folded into the (unavoidable) NHWC -> NCDHW transpose.
        y = y.reshape(B, F, 2, 2 * H, W, Cout)
        return y.transpose(0, 5, 1, 3, 4, 2).reshape(B, Cout, F, 2 * H, 2 * W)
    else:
        y = nearest_upsample2x(x, h_tile=h_tile)          # (B*F, 2, 2, H, W, C)
        y = y.reshape(B, F, 2, 2, H, W, C)
        return y.transpose(0, 6, 1, 4, 2, 5, 3).reshape(B, C, F, 2 * H, 2 * W)


# ---------------------------------------------------------------------------
# Pure-JAX reference (for correctness check)
# ---------------------------------------------------------------------------
def _reference(x, w_hwio, bias, use_conv=True):
    B, C, F, H, W = x.shape
    up = jnp.repeat(jnp.repeat(x, 2, axis=3), 2, axis=4)
    if not use_conv:
        return up
    xr = jnp.transpose(up, (0, 2, 3, 4, 1)).reshape(B * F, 2 * H, 2 * W, C)
    out = jax.lax.conv_general_dilated(
        xr, w_hwio, window_strides=(1, 1), padding="SAME",
        dimension_numbers=("NHWC", "HWIO", "NHWC")) + bias
    Cout = out.shape[-1]
    return out.reshape(B, F, 2 * H, 2 * W, Cout).transpose(0, 4, 1, 2, 3)


if __name__ == "__main__":
    B, C, F, H, W = 2, 4, 3, 16, 16
    channels, out_channels = C, C

    key = jax.random.PRNGKey(0)
    kx, kw, kb = jax.random.split(key, 3)
    x = jax.random.normal(kx, (B, C, F, H, W), jnp.float32)

    # torch Conv2d weight layout is OIHW; convert to HWIO for the NHWC kernel.
    w_oihw = 0.1 * jax.random.normal(kw, (out_channels, channels, 3, 3), jnp.float32)
    bias = 0.1 * jax.random.normal(kb, (out_channels,), jnp.float32)
    w_hwio = jnp.transpose(w_oihw, (2, 3, 1, 0))

    ref = _reference(x, w_hwio, bias, use_conv=True)

    # Default tiling.
    out = jax.block_until_ready(upsample3d_forward(x, w_hwio, bias, use_conv=True))
    assert out.shape == (B, out_channels, F, 2 * H, 2 * W), out.shape
    assert jnp.allclose(out, ref, atol=2e-3, rtol=2e-3), \
        float(jnp.max(jnp.abs(out - ref)))

    # Force multiple H tiles to exercise the in-kernel halo handling.
    out_t = jax.block_until_ready(
        upsample3d_forward(x, w_hwio, bias, use_conv=True, h_tile=4))
    assert jnp.allclose(out_t, ref, atol=2e-3, rtol=2e-3), \
        float(jnp.max(jnp.abs(out_t - ref)))

    # use_conv=False path (pure nearest upsample).
    out_up = jax.block_until_ready(upsample3d_forward(x, use_conv=False))
    ref_up = _reference(x, w_hwio, bias, use_conv=False)
    assert jnp.allclose(out_up, ref_up), float(jnp.max(jnp.abs(out_up - ref_up)))

    print("KERNEL_OK")
</pallas_src>

<mosaic_0001>
module attributes {stable_mosaic.version = 11 : i64} {
  func.func @_fused_up_conv_kernel(%arg0: i32, %arg1: i32, %arg2: i32, %arg3: memref<1x16x16x4xf32, #tpu.memory_space<vmem>>, %arg4: memref<3x3x4x4xf32, #tpu.memory_space<vmem>>, %arg5: memref<1x4xf32, #tpu.memory_space<vmem>>, %arg6: memref<1x2x32x16x4xf32, #tpu.memory_space<vmem>>, %arg7: memref<512x4xf32, #tpu.memory_space<vmem>>, %arg8: memref<512x4xf32, #tpu.memory_space<vmem>>) attributes {dimension_semantics = [#tpu.dimension_semantics<parallel>, #tpu.dimension_semantics<parallel>, #tpu.dimension_semantics<parallel>], iteration_bounds = array<i64: 6, 1, 1>, scalar_prefetch = 0 : i64, scratch_operands = 2 : i64, tpu.core_type = #tpu.core_type<tc>, window_params = [{transform_indices = @transform_0, window_bounds = array<i64: 1, 16, 16, 4>}, {transform_indices = @transform_1, window_bounds = array<i64: 3, 3, 4, 4>}, {transform_indices = @transform_2, window_bounds = array<i64: 1, 4>}, {transform_indices = @transform_3, window_bounds = array<i64: 1, 2, 32, 16, 4>}]} {
    %c16_i32 = arith.constant 16 : i32
    %0 = arith.muli %arg2, %c16_i32 : i32
    %c0 = arith.constant 0 : index
    %1 = arith.index_cast %0 : i32 to index
    %c0_0 = arith.constant 0 : index
    %c0_1 = arith.constant 0 : index
    %2 = vector.load %arg3[%c0, %1, %c0_0, %c0_1] : memref<1x16x16x4xf32, #tpu.memory_space<vmem>>, vector<1x16x16x4xf32>
    %3 = vector.shape_cast %2 : vector<1x16x16x4xf32> to vector<16x16x4xf32>
    %c1_i32 = arith.constant 1 : i32
    %4 = arith.subi %0, %c1_i32 : i32
    %c0_i32 = arith.constant 0 : i32
    %5 = arith.maxsi %4, %c0_i32 : i32
    %c0_2 = arith.constant 0 : index
    %6 = arith.index_cast %5 : i32 to index
    %c0_3 = arith.constant 0 : index
    %c0_4 = arith.constant 0 : index
    %7 = vector.load %arg3[%c0_2, %6, %c0_3, %c0_4] : memref<1x16x16x4xf32, #tpu.memory_space<vmem>>, vector<1x1x16x4xf32>
    %8 = vector.shape_cast %7 : vector<1x1x16x4xf32> to vector<1x16x4xf32>
    %c16_i32_5 = arith.constant 16 : i32
    %9 = arith.addi %0, %c16_i32_5 : i32
    %c15_i32 = arith.constant 15 : i32
    %10 = arith.minsi %9, %c15_i32 : i32
    %c0_6 = arith.constant 0 : index
    %11 = arith.index_cast %10 : i32 to index
    %c0_7 = arith.constant 0 : index
    %c0_8 = arith.constant 0 : index
    %12 = vector.load %arg3[%c0_6, %11, %c0_7, %c0_8] : memref<1x16x16x4xf32, #tpu.memory_space<vmem>>, vector<1x1x16x4xf32>
    %13 = vector.shape_cast %12 : vector<1x1x16x4xf32> to vector<1x16x4xf32>
    %c0_i32_9 = arith.constant 0 : i32
    %14 = arith.cmpi eq, %0, %c0_i32_9 : i32
    %cst = arith.constant 0.000000e+00 : f32
    %15 = vector.broadcast %cst : f32 to vector<1x16x4xf32>
    %16 = arith.select %14, %15, %8 : vector<1x16x4xf32>
    %c16_i32_10 = arith.constant 16 : i32
    %17 = arith.addi %0, %c16_i32_10 : i32
    %c16_i32_11 = arith.constant 16 : i32
    %18 = arith.cmpi eq, %17, %c16_i32_11 : i32
    %cst_12 = arith.constant 0.000000e+00 : f32
    %19 = vector.broadcast %cst_12 : f32 to vector<1x16x4xf32>
    %20 = arith.select %18, %19, %13 : vector<1x16x4xf32>
    %21 = vector.shape_cast %3 : vector<16x16x4xf32> to vector<16x1x16x4xf32>
    %22 = vector.shape_cast %21 : vector<16x1x16x4xf32> to vector<16x1x16x4xf32>
    %23 = vector.broadcast %22 : vector<16x1x16x4xf32> to vector<16x2x16x4xf32>
    %24 = vector.shape_cast %23 : vector<16x2x16x4xf32> to vector<32x16x4xf32>
    %25 = tpu.concatenate %16, %24, %20 in 0 : vector<1x16x4xf32>, vector<32x16x4xf32>, vector<1x16x4xf32> -> vector<34x16x4xf32>
    %cst_13 = arith.constant 0.000000e+00 : f32
    %26 = vector.broadcast %cst_13 : f32 to vector<34x1x4xf32>
    %27 = vector.extract_strided_slice %25 {offsets = [0, 0, 0], sizes = [34, 15, 4], strides = [1, 1, 1]} : vector<34x16x4xf32> to vector<34x15x4xf32>
    %28 = tpu.concatenate %26, %27 in 1 : vector<34x1x4xf32>, vector<34x15x4xf32> -> vector<34x16x4xf32>
    %29 = vector.extract_strided_slice %25 {offsets = [0, 1, 0], sizes = [34, 15, 4], strides = [1, 1, 1]} : vector<34x16x4xf32> to vector<34x15x4xf32>
    %30 = tpu.concatenate %29, %26 in 1 : vector<34x15x4xf32>, vector<34x1x4xf32> -> vector<34x16x4xf32>
    %31 = vector.extract_strided_slice %25 {offsets = [0, 0, 0], sizes = [32, 16, 4], strides = [1, 1, 1]} : vector<34x16x4xf32> to vector<32x16x4xf32>
    %32 = vector.shape_cast %31 : vector<32x16x4xf32> to vector<512x4xf32>
    %33 = vector.extract_strided_slice %28 {offsets = [0, 0, 0], sizes = [32, 16, 4], strides = [1, 1, 1]} : vector<34x16x4xf32> to vector<32x16x4xf32>
    %34 = vector.shape_cast %33 : vector<32x16x4xf32> to vector<512x4xf32>
    %35 = vector.extract_strided_slice %30 {offsets = [0, 0, 0], sizes = [32, 16, 4], strides = [1, 1, 1]} : vector<34x16x4xf32> to vector<32x16x4xf32>
    %36 = vector.shape_cast %35 : vector<32x16x4xf32> to vector<512x4xf32>
    %c0_14 = arith.constant 0 : index
    %c0_15 = arith.constant 0 : index
    %c0_16 = arith.constant 0 : index
    %c0_17 = arith.constant 0 : index
    %37 = vector.load %arg4[%c0_14, %c0_15, %c0_16, %c0_17] : memref<3x3x4x4xf32, #tpu.memory_space<vmem>>, vector<1x1x4x4xf32>
    %38 = vector.shape_cast %37 : vector<1x1x4x4xf32> to vector<4x4xf32>
    %c0_18 = arith.constant 0 : index
    %c1 = arith.constant 1 : index
    %c0_19 = arith.constant 0 : index
    %c0_20 = arith.constant 0 : index
    %39 = vector.load %arg4[%c0_18, %c1, %c0_19, %c0_20] : memref<3x3x4x4xf32, #tpu.memory_space<vmem>>, vector<1x1x4x4xf32>
    %40 = vector.shape_cast %39 : vector<1x1x4x4xf32> to vector<4x4xf32>
    %c0_21 = arith.constant 0 : index
    %c2 = arith.constant 2 : index
    %c0_22 = arith.constant 0 : index
    %c0_23 = arith.constant 0 : index
    %41 = vector.load %arg4[%c0_21, %c2, %c0_22, %c0_23] : memref<3x3x4x4xf32, #tpu.memory_space<vmem>>, vector<1x1x4x4xf32>
    %42 = vector.shape_cast %41 : vector<1x1x4x4xf32> to vector<4x4xf32>
    %cst_24 = arith.constant dense<0.000000e+00> : vector<512x4xf32>
    %43 = tpu.matmul %34, %38, %cst_24 {dimension_numbers = #tpu.dot_dimension_numbers<[1], [0], [0], [1], [0, 0, 1, 1], [], []>} : vector<512x4xf32>, vector<4x4xf32>, vector<512x4xf32> -> vector<512x4xf32>
    %44 = arith.addf %40, %42 : vector<4x4xf32>
    %cst_25 = arith.constant dense<0.000000e+00> : vector<512x4xf32>
    %45 = tpu.matmul %32, %44, %cst_25 {dimension_numbers = #tpu.dot_dimension_numbers<[1], [0], [0], [1], [0, 0, 1, 1], [], []>} : vector<512x4xf32>, vector<4x4xf32>, vector<512x4xf32> -> vector<512x4xf32>
    %46 = arith.addf %43, %45 : vector<512x4xf32>
    %47 = arith.addf %38, %40 : vector<4x4xf32>
    %cst_26 = arith.constant dense<0.000000e+00> : vector<512x4xf32>
    %48 = tpu.matmul %32, %47, %cst_26 {dimension_numbers = #tpu.dot_dimension_numbers<[1], [0], [0], [1], [0, 0, 1, 1], [], []>} : vector<512x4xf32>, vector<4x4xf32>, vector<512x4xf32> -> vector<512x4xf32>
    %cst_27 = arith.constant dense<0.000000e+00> : vector<512x4xf32>
    %49 = tpu.matmul %36, %42, %cst_27 {dimension_numbers = #tpu.dot_dimension_numbers<[1], [0], [0], [1], [0, 0, 1, 1], [], []>} : vector<512x4xf32>, vector<4x4xf32>, vector<512x4xf32> -> vector<512x4xf32>
    %50 = arith.addf %48, %49 : vector<512x4xf32>
    %c0_28 = arith.constant 0 : index
    %c0_29 = arith.constant 0 : index
    %51 = vector.load %arg7[%c0_28, %c0_29] : memref<512x4xf32, #tpu.memory_space<vmem>>, vector<512x4xf32>
    tpu.vector_store %arg7[%c0_28, %c0_29], %46 {strides = array<i32>} : memref<512x4xf32, #tpu.memory_space<vmem>>, vector<512x4xf32>,
    %c0_30 = arith.constant 0 : index
    %c0_31 = arith.constant 0 : index
    %52 = vector.load %arg8[%c0_30, %c0_31] : memref<512x4xf32, #tpu.memory_space<vmem>>, vector<512x4xf32>
    tpu.vector_store %arg8[%c0_30, %c0_31], %50 {strides = array<i32>} : memref<512x4xf32, #tpu.memory_space<vmem>>, vector<512x4xf32>,
    %53 = vector.extract_strided_slice %25 {offsets = [1, 0, 0], sizes = [32, 16, 4], strides = [1, 1, 1]} : vector<34x16x4xf32> to vector<32x16x4xf32>
    %54 = vector.shape_cast %53 : vector<32x16x4xf32> to vector<512x4xf32>
    %55 = vector.extract_strided_slice %28 {offsets = [1, 0, 0], sizes = [32, 16, 4], strides = [1, 1, 1]} : vector<34x16x4xf32> to vector<32x16x4xf32>
    %56 = vector.shape_cast %55 : vector<32x16x4xf32> to vector<512x4xf32>
    %57 = vector.extract_strided_slice %30 {offsets = [1, 0, 0], sizes = [32, 16, 4], strides = [1, 1, 1]} : vector<34x16x4xf32> to vector<32x16x4xf32>
    %58 = vector.shape_cast %57 : vector<32x16x4xf32> to vector<512x4xf32>
    %c1_32 = arith.constant 1 : index
    %c0_33 = arith.constant 0 : index
    %c0_34 = arith.constant 0 : index
    %c0_35 = arith.constant 0 : index
    %59 = vector.load %arg4[%c1_32, %c0_33, %c0_34, %c0_35] : memref<3x3x4x4xf32, #tpu.memory_space<vmem>>, vector<1x1x4x4xf32>
    %60 = vector.shape_cast %59 : vector<1x1x4x4xf32> to vector<4x4xf32>
    %c1_36 = arith.constant 1 : index
    %c1_37 = arith.constant 1 : index
    %c0_38 = arith.constant 0 : index
    %c0_39 = arith.constant 0 : index
    %61 = vector.load %arg4[%c1_36, %c1_37, %c0_38, %c0_39] : memref<3x3x4x4xf32, #tpu.memory_space<vmem>>, vector<1x1x4x4xf32>
    %62 = vector.shape_cast %61 : vector<1x1x4x4xf32> to vector<4x4xf32>
    %c1_40 = arith.constant 1 : index
    %c2_41 = arith.constant 2 : index
    %c0_42 = arith.constant 0 : index
    %c0_43 = arith.constant 0 : index
    %63 = vector.load %arg4[%c1_40, %c2_41, %c0_42, %c0_43] : memref<3x3x4x4xf32, #tpu.memory_space<vmem>>, vector<1x1x4x4xf32>
    %64 = vector.shape_cast %63 : vector<1x1x4x4xf32> to vector<4x4xf32>
    %cst_44 = arith.constant dense<0.000000e+00> : vector<512x4xf32>
    %65 = tpu.matmul %56, %60, %cst_44 {dimension_numbers = #tpu.dot_dimension_numbers<[1], [0], [0], [1], [0, 0, 1, 1], [], []>} : vector<512x4xf32>, vector<4x4xf32>, vector<512x4xf32> -> vector<512x4xf32>
    %66 = arith.addf %62, %64 : vector<4x4xf32>
    %cst_45 = arith.constant dense<0.000000e+00> : vector<512x4xf32>
    %67 = tpu.matmul %54, %66, %cst_45 {dimension_numbers = #tpu.dot_dimension_numbers<[1], [0], [0], [1], [0, 0, 1, 1], [], []>} : vector<512x4xf32>, vector<4x4xf32>, vector<512x4xf32> -> vector<512x4xf32>
    %68 = arith.addf %65, %67 : vector<512x4xf32>
    %69 = arith.addf %60, %62 : vector<4x4xf32>
    %cst_46 = arith.constant dense<0.000000e+00> : vector<512x4xf32>
    %70 = tpu.matmul %54, %69, %cst_46 {dimension_numbers = #tpu.dot_dimension_numbers<[1], [0], [0], [1], [0, 0, 1, 1], [], []>} : vector<512x4xf32>, vector<4x4xf32>, vector<512x4xf32> -> vector<512x4xf32>
    %cst_47 = arith.constant dense<0.000000e+00> : vector<512x4xf32>
    %71 = tpu.matmul %58, %64, %cst_47 {dimension_numbers = #tpu.dot_dimension_numbers<[1], [0], [0], [1], [0, 0, 1, 1], [], []>} : vector<512x4xf32>, vector<4x4xf32>, vector<512x4xf32> -> vector<512x4xf32>
    %72 = arith.addf %70, %71 : vector<512x4xf32>
    %c0_48 = arith.constant 0 : index
    %c0_49 = arith.constant 0 : index
    %73 = vector.load %arg7[%c0_48, %c0_49] : memref<512x4xf32, #tpu.memory_space<vmem>>, vector<512x4xf32>
    %74 = arith.addf %73, %68 : vector<512x4xf32>
    %c0_50 = arith.constant 0 : index
    %c0_51 = arith.constant 0 : index
    %75 = vector.load %arg7[%c0_50, %c0_51] : memref<512x4xf32, #tpu.memory_space<vmem>>, vector<512x4xf32>
    tpu.vector_store %arg7[%c0_50, %c0_51], %74 {strides = array<i32>} : memref<512x4xf32, #tpu.memory_space<vmem>>, vector<512x4xf32>,
    %c0_52 = arith.constant 0 : index
    %c0_53 = arith.constant 0 : index
    %76 = vector.load %arg8[%c0_52, %c0_53] : memref<512x4xf32, #tpu.memory_space<vmem>>, vector<512x4xf32>
    %77 = arith.addf %76, %72 : vector<512x4xf32>
    %c0_54 = arith.constant 0 : index
    %c0_55 = arith.constant 0 : index
    %78 = vector.load %arg8[%c0_54, %c0_55] : memref<512x4xf32, #tpu.memory_space<vmem>>, vector<512x4xf32>
    tpu.vector_store %arg8[%c0_54, %c0_55], %77 {strides = array<i32>} : memref<512x4xf32, #tpu.memory_space<vmem>>, vector<512x4xf32>,
    %79 = vector.extract_strided_slice %25 {offsets = [2, 0, 0], sizes = [32, 16, 4], strides = [1, 1, 1]} : vector<34x16x4xf32> to vector<32x16x4xf32>
    %80 = vector.shape_cast %79 : vector<32x16x4xf32> to vector<512x4xf32>
    %81 = vector.extract_strided_slice %28 {offsets = [2, 0, 0], sizes = [32, 16, 4], strides = [1, 1, 1]} : vector<34x16x4xf32> to vector<32x16x4xf32>
    %82 = vector.shape_cast %81 : vector<32x16x4xf32> to vector<512x4xf32>
    %83 = vector.extract_strided_slice %30 {offsets = [2, 0, 0], sizes = [32, 16, 4], strides = [1, 1, 1]} : vector<34x16x4xf32> to vector<32x16x4xf32>
    %84 = vector.shape_cast %83 : vector<32x16x4xf32> to vector<512x4xf32>
    %c2_56 = arith.constant 2 : index
    %c0_57 = arith.constant 0 : index
    %c0_58 = arith.constant 0 : index
    %c0_59 = arith.constant 0 : index
    %85 = vector.load %arg4[%c2_56, %c0_57, %c0_58, %c0_59] : memref<3x3x4x4xf32, #tpu.memory_space<vmem>>, vector<1x1x4x4xf32>
    %86 = vector.shape_cast %85 : vector<1x1x4x4xf32> to vector<4x4xf32>
    %c2_60 = arith.constant 2 : index
    %c1_61 = arith.constant 1 : index
    %c0_62 = arith.constant 0 : index
    %c0_63 = arith.constant 0 : index
    %87 = vector.load %arg4[%c2_60, %c1_61, %c0_62, %c0_63] : memref<3x3x4x4xf32, #tpu.memory_space<vmem>>, vector<1x1x4x4xf32>
    %88 = vector.shape_cast %87 : vector<1x1x4x4xf32> to vector<4x4xf32>
    %c2_64 = arith.constant 2 : index
    %c2_65 = arith.constant 2 : index
    %c0_66 = arith.constant 0 : index
    %c0_67 = arith.constant 0 : index
    %89 = vector.load %arg4[%c2_64, %c2_65, %c0_66, %c0_67] : memref<3x3x4x4xf32, #tpu.memory_space<vmem>>, vector<1x1x4x4xf32>
    %90 = vector.shape_cast %89 : vector<1x1x4x4xf32> to vector<4x4xf32>
    %cst_68 = arith.constant dense<0.000000e+00> : vector<512x4xf32>
    %91 = tpu.matmul %82, %86, %cst_68 {dimension_numbers = #tpu.dot_dimension_numbers<[1], [0], [0], [1], [0, 0, 1, 1], [], []>} : vector<512x4xf32>, vector<4x4xf32>, vector<512x4xf32> -> vector<512x4xf32>
    %92 = arith.addf %88, %90 : vector<4x4xf32>
    %cst_69 = arith.constant dense<0.000000e+00> : vector<512x4xf32>
    %93 = tpu.matmul %80, %92, %cst_69 {dimension_numbers = #tpu.dot_dimension_numbers<[1], [0], [0], [1], [0, 0, 1, 1], [], []>} : vector<512x4xf32>, vector<4x4xf32>, vector<512x4xf32> -> vector<512x4xf32>
    %94 = arith.addf %91, %93 : vector<512x4xf32>
    %95 = arith.addf %86, %88 : vector<4x4xf32>
    %cst_70 = arith.constant dense<0.000000e+00> : vector<512x4xf32>
    %96 = tpu.matmul %80, %95, %cst_70 {dimension_numbers = #tpu.dot_dimension_numbers<[1], [0], [0], [1], [0, 0, 1, 1], [], []>} : vector<512x4xf32>, vector<4x4xf32>, vector<512x4xf32> -> vector<512x4xf32>
    %cst_71 = arith.constant dense<0.000000e+00> : vector<512x4xf32>
    %97 = tpu.matmul %84, %90, %cst_71 {dimension_numbers = #tpu.dot_dimension_numbers<[1], [0], [0], [1], [0, 0, 1, 1], [], []>} : vector<512x4xf32>, vector<4x4xf32>, vector<512x4xf32> -> vector<512x4xf32>
    %98 = arith.addf %96, %97 : vector<512x4xf32>
    %c0_72 = arith.constant 0 : index
    %c0_73 = arith.constant 0 : index
    %99 = vector.load %arg7[%c0_72, %c0_73] : memref<512x4xf32, #tpu.memory_space<vmem>>, vector<512x4xf32>
    %100 = arith.addf %99, %94 : vector<512x4xf32>
    %c0_74 = arith.constant 0 : index
    %c0_75 = arith.constant 0 : index
    %101 = vector.load %arg7[%c0_74, %c0_75] : memref<512x4xf32, #tpu.memory_space<vmem>>, vector<512x4xf32>
    tpu.vector_store %arg7[%c0_74, %c0_75], %100 {strides = array<i32>} : memref<512x4xf32, #tpu.memory_space<vmem>>, vector<512x4xf32>,
    %c0_76 = arith.constant 0 : index
    %c0_77 = arith.constant 0 : index
    %102 = vector.load %arg8[%c0_76, %c0_77] : memref<512x4xf32, #tpu.memory_space<vmem>>, vector<512x4xf32>
    %103 = arith.addf %102, %98 : vector<512x4xf32>
    %c0_78 = arith.constant 0 : index
    %c0_79 = arith.constant 0 : index
    %104 = vector.load %arg8[%c0_78, %c0_79] : memref<512x4xf32, #tpu.memory_space<vmem>>, vector<512x4xf32>
    tpu.vector_store %arg8[%c0_78, %c0_79], %103 {strides = array<i32>} : memref<512x4xf32, #tpu.memory_space<vmem>>, vector<512x4xf32>,
    %c0_80 = arith.constant 0 : index
    %c0_81 = arith.constant 0 : index
    %105 = vector.load %arg5[%c0_80, %c0_81] : memref<1x4xf32, #tpu.memory_space<vmem>>, vector<1x4xf32>
    %c0_82 = arith.constant 0 : index
    %c0_83 = arith.constant 0 : index
    %106 = vector.load %arg7[%c0_82, %c0_83] : memref<512x4xf32, #tpu.memory_space<vmem>>, vector<512x4xf32>
    %107 = vector.broadcast %105 : vector<1x4xf32> to vector<512x4xf32>
    %108 = arith.addf %106, %107 : vector<512x4xf32>
    %109 = vector.shape_cast %108 : vector<512x4xf32> to vector<32x16x4xf32>
    %c0_84 = arith.constant 0 : index
    %c0_85 = arith.constant 0 : index
    %110 = vector.load %arg8[%c0_84, %c0_85] : memref<512x4xf32, #tpu.memory_space<vmem>>, vector<512x4xf32>
    %111 = vector.broadcast %105 : vector<1x4xf32> to vector<512x4xf32>
    %112 = arith.addf %110, %111 : vector<512x4xf32>
    %113 = vector.shape_cast %112 : vector<512x4xf32> to vector<32x16x4xf32>
    %114 = vector.shape_cast %109 : vector<32x16x4xf32> to vector<1x32x16x4xf32>
    %115 = vector.shape_cast %113 : vector<32x16x4xf32> to vector<1x32x16x4xf32>
    %116 = tpu.concatenate %114, %115 in 0 : vector<1x32x16x4xf32>, vector<1x32x16x4xf32> -> vector<2x32x16x4xf32>
    %117 = vector.shape_cast %116 : vector<2x32x16x4xf32> to vector<1x2x32x16x4xf32>
    %c0_86 = arith.constant 0 : index
    %c0_87 = arith.constant 0 : index
    %c0_88 = arith.constant 0 : index
    %c0_89 = arith.constant 0 : index
    %c0_90 = arith.constant 0 : index
    %118 = vector.load %arg6[%c0_86, %c0_87, %c0_88, %c0_89, %c0_90] : memref<1x2x32x16x4xf32, #tpu.memory_space<vmem>>, vector<1x2x32x16x4xf32>
    tpu.vector_store %arg6[%c0_86, %c0_87, %c0_88, %c0_89, %c0_90], %117 {strides = array<i32>} : memref<1x2x32x16x4xf32, #tpu.memory_space<vmem>>, vector<1x2x32x16x4xf32>,
    return
  }
  func.func @transform_0(%arg0: i32, %arg1: i32, %arg2: i32) -> (i32, i32, i32, i32) {
    %c0_i32 = arith.constant 0 : i32
    %c0_i32_0 = arith.constant 0 : i32
    %c0_i32_1 = arith.constant 0 : i32
    %c0_i32_2 = arith.constant 0 : i32
    return %arg0, %c0_i32, %c0_i32_0, %c0_i32_1 : i32, i32, i32, i32
  }
  func.func @transform_1(%arg0: i32, %arg1: i32, %arg2: i32) -> (i32, i32, i32, i32) {
    %c0_i32 = arith.constant 0 : i32
    %c0_i32_0 = arith.constant 0 : i32
    %c0_i32_1 = arith.constant 0 : i32
    %c0_i32_2 = arith.constant 0 : i32
    return %c0_i32, %c0_i32_0, %c0_i32_1, %arg1 : i32, i32, i32, i32
  }
  func.func @transform_2(%arg0: i32, %arg1: i32, %arg2: i32) -> (i32, i32) {
    %c0_i32 = arith.constant 0 : i32
    %c0_i32_0 = arith.constant 0 : i32
    return %c0_i32, %arg1 : i32, i32
  }
  func.func @transform_3(%arg0: i32, %arg1: i32, %arg2: i32) -> (i32, i32, i32, i32, i32) {
    %c0_i32 = arith.constant 0 : i32
    %c0_i32_0 = arith.constant 0 : i32
    %c0_i32_1 = arith.constant 0 : i32
    return %arg0, %c0_i32, %arg2, %c0_i32_0, %arg1 : i32, i32, i32, i32, i32
  }
}

</mosaic_0001>

<llo_original>
// kernel: upsample3d_forward.1
$region0: #{upsample3d_forward.1}
  #allocation0 [shape = 'u32[]', space=smem, size = 0x4, offset = 0x4, fixed_abs, tag = 'smem constant byte address 0x4 - core index']
  #allocation1 [shape = 'u32[144,128]{1,0:T(1,128)}', space=vmem, size = 0x12000, scoped, tag = 'internal scratch']
  #allocation2 [shape = 'f32[512,4]{1,0:T(8,128)}', space=vmem, size = 0x40000, scoped, tag = 'scratch operand']
  #allocation3 [shape = 'f32[512,4]{1,0:T(8,128)}', space=vmem, size = 0x40000, scoped, tag = 'scratch operand']
  %s0 = inlined_call_operand.vmem [shape: f32[6,16,16,4], index: 0, kind: input, shape index: {}]
  %s1 = inlined_call_operand.hbm [shape: f32[3,3,4,4], index: 1, kind: input, shape index: {}]
  %s2 = inlined_call_operand.hbm [shape: f32[1,4], index: 2, kind: input, shape index: {}]
  %s3 = inlined_call_operand.vmem [shape: f32[6,2,32,16,4], index: 3, kind: output, shape index: {}]
  %s4 = sld [smem:[#allocation0]]
  $region53: #{upsample3d_forward.1} parent=0
    _
  %s6 = ssub.s32 1, %s4
  %s7 = scalar_select 0, %s6, %s4
  $region1: #{upsample3d_forward.1} parent=0
    #allocation4 [shape = 'u8[18432]{0}', space=vmem, size = 0x4800, scoped, tag = 'input window, operand 1, single buffered']
    #allocation5 [shape = 's32[2]{0}', space=sflag, size = 0x8, scoped, tag = 'scoped memory for upsample3d_forward.1']
    #allocation6 [shape = 'u8[512]{0}', space=vmem, size = 0x400, scoped, tag = 'input window, operand 2, single buffered']
    #allocation7 [shape = 's32[1]{0}', space=sflag, size = 0x4, scoped, tag = 'scoped memory for upsample3d_forward.1']
    %8 = vsyncpa [#allocation5], 0
    %9 = vsyncpa [#allocation7], 0
    loop: start=0, step=1, limit=8
    $region2: #{upsample3d_forward.1} parent=1 // loop_pre_header
      _
    $region3: #{upsample3d_forward.1} parent=1 // loop_header
      %s11 = sphi 0, %s15
      %p12 = scmp.ge.s32.totalorder %s11, 8
      %s18 = sphi 0, %s37
      %s19 = sphi 0, %s33
      %s20 = sphi 0, %s29
      %s21 = sphi 0, %s18
      %s22 = sphi 0, %s19
      %s23 = sphi 0, %s20
      %s24 = sphi 0, %s21
      %s25 = sphi 0, %s22
      %s26 = sphi 0, %s23
      %s40 = sphi 0, %s42
      %s43 = sphi 0, %s40
      %s44 = sphi 0, %s43
      %s60 = sphi 0, %s44
      %s66 = sphi 0, %s68
      %s69 = sphi 0, %s66
      %s70 = sphi 0, %s69
      %s86 = sphi 0, %s70
      %s92 = sphi 0, %s94
      %s95 = sphi 0, %s92
      %s96 = sphi 0, %s95
      %s112 = sphi 0, %s96
      %s122 = sphi 0, %s124
      %s125 = sphi 0, %s122
      %s126 = sphi 0, %s125
      %s142 = sphi 0, %s126
    $region4: #{upsample3d_forward.1} parent=1 // loop_header_branch
      %14 = sbr.rel (%p12) target = $region8
    $region5: #{upsample3d_forward.1} parent=1 // loop_body
      %s16 = ssub.s32 %s11, 1
      %s17 = ssub.s32 %s11, 2
      %s27 = sadd.s32 1, %s20
      %p28 = scmp.ge.s32.totalorder %s27, 1
      %s29 = scalar_select %p28, 0, %s27
      %s30 = sadd.s32 1, %s19
      %s31 = scalar_select %p28, %s30, %s19
      %p32 = scmp.ge.s32.totalorder %s31, 1
      %s33 = scalar_select %p32, 0, %s31
      %s34 = sadd.s32 1, %s18
      %s35 = scalar_select %p32, %s34, %s18
      %p36 = scmp.ge.s32.totalorder %s35, 6
      %s37 = scalar_select %p36, 0, %s35
      %s38 = ssub.s32 %s18, %s37
      %p39 = scmp.eq.s32.totalorder %s38, 0
      %s41 = sadd.s32 %s40, 1
      %s42 = scalar_select %p39, %s40, %s41
      %p45 = pneg %p39
      %p46 = scmp.eq.s32.totalorder %s11, 5
      %p47 = por %p45, %p46
      %p48 = scmp.ne.s32.totalorder %s40, %s43
      %p49 = scmp.eq.s32.totalorder %s11, 0
      %p50 = por %p48, %p49
      %p51 = scmp.ne.s32.totalorder %s40, %s43
      %p52 = scmp.eq.s32.totalorder %s16, 5
      %p53 = por %p51, %p52
      %p54 = scmp.ne.s32.totalorder %s43, %s44
      %p55 = scmp.eq.s32.totalorder %s16, 0
      %p56 = por %p54, %p55
      %p57 = scmp.ne.s32.totalorder %s43, %s44
      %p58 = scmp.eq.s32.totalorder %s17, 5
      %p59 = por %p57, %p58
      %p61 = scmp.ne.s32.totalorder %s44, %s60
      %p62 = scmp.eq.s32.totalorder %s17, 0
      %p63 = por %p61, %p62
      %s64 = ssub.s32 %s19, %s33
      %p65 = scmp.eq.s32.totalorder %s64, 0
      %s67 = sadd.s32 %s66, 1
      %s68 = scalar_select %p65, %s66, %s67
      %p71 = pneg %p65
      %p72 = scmp.eq.s32.totalorder %s11, 5
      %p73 = por %p71, %p72
      %p74 = scmp.ne.s32.totalorder %s66, %s69
      %p75 = scmp.eq.s32.totalorder %s11, 0
      %p76 = por %p74, %p75
      %p77 = scmp.ne.s32.totalorder %s66, %s69
      %p78 = scmp.eq.s32.totalorder %s16, 5
      %p79 = por %p77, %p78
      %p80 = scmp.ne.s32.totalorder %s69, %s70
      %p81 = scmp.eq.s32.totalorder %s16, 0
      %p82 = por %p80, %p81
      %p83 = scmp.ne.s32.totalorder %s69, %s70
      %p84 = scmp.eq.s32.totalorder %s17, 5
      %p85 = por %p83, %p84
      %p87 = scmp.ne.s32.totalorder %s70, %s86
      %p88 = scmp.eq.s32.totalorder %s17, 0
      %p89 = por %p87, %p88
      %s90 = ssub.s32 %s19, %s33
      %p91 = scmp.eq.s32.totalorder %s90, 0
      %s93 = sadd.s32 %s92, 1
      %s94 = scalar_select %p91, %s92, %s93
      %p97 = pneg %p91
      %p98 = scmp.eq.s32.totalorder %s11, 5
      %p99 = por %p97, %p98
      %p100 = scmp.ne.s32.totalorder %s92, %s95
      %p101 = scmp.eq.s32.totalorder %s11, 0
      %p102 = por %p100, %p101
      %p103 = scmp.ne.s32.totalorder %s92, %s95
      %p104 = scmp.eq.s32.totalorder %s16, 5
      %p105 = por %p103, %p104
      %p106 = scmp.ne.s32.totalorder %s95, %s96
      %p107 = scmp.eq.s32.totalorder %s16, 0
      %p108 = por %p106, %p107
      %p109 = scmp.ne.s32.totalorder %s95, %s96
      %p110 = scmp.eq.s32.totalorder %s17, 5
      %p111 = por %p109, %p110
      %p113 = scmp.ne.s32.totalorder %s96, %s112
      %p114 = scmp.eq.s32.totalorder %s17, 0
      %p115 = por %p113, %p114
      %s116 = ssub.s32 %s18, %s37
      %s117 = ssub.s32 %s20, %s29
      %s118 = sor.u32 %s116, %s117
      %s119 = ssub.s32 %s19, %s33
      %s120 = sor.u32 %s118, %s119
      %p121 = scmp.eq.s32.totalorder %s120, 0
      %s123 = sadd.s32 %s122, 1
      %s124 = scalar_select %p121, %s122, %s123
      %p127 = pneg %p121
      %p128 = scmp.eq.s32.totalorder %s11, 5
      %p129 = por %p127, %p128
      %p130 = scmp.ne.s32.totalorder %s122, %s125
      %p131 = scmp.eq.s32.totalorder %s11, 0
      %p132 = por %p130, %p131
      %p133 = scmp.ne.s32.totalorder %s122, %s125
      %p134 = scmp.eq.s32.totalorder %s16, 5
      %p135 = por %p133, %p134
      %p136 = scmp.ne.s32.totalorder %s125, %s126
      %p137 = scmp.eq.s32.totalorder %s16, 0
      %p138 = por %p136, %p137
      %p139 = scmp.ne.s32.totalorder %s125, %s126
      %p140 = scmp.eq.s32.totalorder %s17, 5
      %p141 = por %p139, %p140
      %p143 = scmp.ne.s32.totalorder %s126, %s142
      %p144 = scmp.eq.s32.totalorder %s17, 0
      %p145 = por %p143, %p144
      %p146 = scmp.le.s32.totalorder 1, %s11
      %p147 = scmp.lt.s32.totalorder %s11, 7
      %p148 = pnand %p146, %p147
      %p149 = pneg %p148
      // Predicated region
      $region9: #{upsample3d_forward.1} parent=5 // pred_check
        _
      $region10: #{upsample3d_forward.1} parent=5 // pred_check_branch
        %151 = sbr.rel (%p148) target = $region12
      $region11: #{upsample3d_forward.1} parent=5 // pred_region
        %s152 = ssub.s32 %s11, 1
        // Predicated region
        $region13: #{upsample3d_forward.1} parent=11 // pred_check
          %p153 = pneg %p82
        $region14: #{upsample3d_forward.1} parent=11 // pred_check_branch
          %155 = sbr.rel (%p153) target = $region16
        $region15: #{upsample3d_forward.1} parent=11 // pred_region
          %s157 = ssub.s32 576, 576
          %158 = vsyncadd [#allocation5], %s157
          %s159 = smul.addr %s22, 64
          %s160 = scalar_lea.hbm %s1, %s159
          %s161 = sshll.u32 [#allocation4], 4
          %s162 = int_to_ptr.vmem [resolvable:$true] %s161
          %167 = dma.hbm_to_vmem [thread:$0]  %s160, 576, %s162, [#allocation5], 64, 64, 4
        $region16: #{upsample3d_forward.1} parent=11 // pred_fallthru
          _
        // Predicated region
        $region17: #{upsample3d_forward.1} parent=11 // pred_check
          %p168 = pneg %p108
        $region18: #{upsample3d_forward.1} parent=11 // pred_check_branch
          %170 = sbr.rel (%p168) target = $region20
        $region19: #{upsample3d_forward.1} parent=11 // pred_region
          %s172 = ssub.s32 16, 16
          %173 = vsyncadd [#allocation7], %s172
          %s174 = smul.addr %s22, 16
          %s175 = scalar_lea.hbm %s2, %s174
          %s177 = sshll.u32 [#allocation6], 4
          %s178 = int_to_ptr.vmem [resolvable:$true] %s177
          %180 = dma.hbm_to_vmem [thread:$0]  %s175, 16, %s178, [#allocation7]
        $region20: #{upsample3d_forward.1} parent=11 // pred_fallthru
          _
      $region12: #{upsample3d_forward.1} parent=5 // pred_fallthru
        _
      %p181 = scmp.lt.s32.totalorder %s11, 6
      // Predicated region
      $region21: #{upsample3d_forward.1} parent=5 // pred_check
        %p182 = pneg %p181
      $region22: #{upsample3d_forward.1} parent=5 // pred_check_branch
        %184 = sbr.rel (%p182) target = $region24
      $region23: #{upsample3d_forward.1} parent=5 // pred_region
        // Predicated region
        $region25: #{upsample3d_forward.1} parent=23 // pred_check
          %p185 = pneg %p50
        $region26: #{upsample3d_forward.1} parent=23 // pred_check_branch
          %187 = sbr.rel (%p185) target = $region28
        $region27: #{upsample3d_forward.1} parent=23 // pred_region
          %p188 = scmp.lt.s32.totalorder %s18, 5
          %s189 = scalar_select %p188, %s18, 5
          %s190 = smul.addr %s189, 32
          %s191 = smul.addr %s190, 8
          %s192 = scalar_lea.vmem %s0, %s191
        $region28: #{upsample3d_forward.1} parent=23 // pred_fallthru
          _
      $region24: #{upsample3d_forward.1} parent=5 // pred_fallthru
        _
      %p193 = scmp.le.s32.totalorder 1, %s11
      %p194 = scmp.lt.s32.totalorder %s11, 7
      %p195 = pnand %p193, %p194
      %p196 = pneg %p195
      // Predicated region
      $region29: #{upsample3d_forward.1} parent=5 // pred_check
        _
      $region30: #{upsample3d_forward.1} parent=5 // pred_check_branch
        %198 = sbr.rel (%p195) target = $region32
      $region31: #{upsample3d_forward.1} parent=5 // pred_region
        %s199 = ssub.s32 %s11, 1
        // Predicated region
        $region33: #{upsample3d_forward.1} parent=31 // pred_check
          %p200 = pneg %p82
        $region34: #{upsample3d_forward.1} parent=31 // pred_check_branch
          %202 = sbr.rel (%p200) target = $region36
        $region35: #{upsample3d_forward.1} parent=31 // pred_region
          %203 = dma.done [#allocation5], 576
        $region36: #{upsample3d_forward.1} parent=31 // pred_fallthru
          _
        // Predicated region
        $region37: #{upsample3d_forward.1} parent=31 // pred_check
          %p204 = pneg %p108
        $region38: #{upsample3d_forward.1} parent=31 // pred_check_branch
          %206 = sbr.rel (%p204) target = $region40
        $region39: #{upsample3d_forward.1} parent=31 // pred_region
          %207 = dma.done [#allocation7], 16
        $region40: #{upsample3d_forward.1} parent=31 // pred_fallthru
          _
        %p208 = scmp.lt.s32.totalorder %s21, 5
        %s209 = scalar_select %p208, %s21, 5
        %s210 = smul.addr %s209, 32
        %s211 = smul.addr %s210, 8
        %s212 = scalar_lea.vmem %s0, %s211
        %p213 = pneg %p56
        %p214 = pneg %p53
        %p215 = pneg %p82
        %p216 = pneg %p79
        %p217 = pneg %p108
        %p218 = pneg %p105
        %p219 = pneg %p138
        %p220 = pneg %p135
        %s221 = smul.u32 32, %s23
        %p222 = scmp.lt.s32.totalorder %s21, 5
        %s223 = scalar_select %p222, %s21, 5
        %p224 = scmp.lt.s32.totalorder %s221, 31
        %s225 = scalar_select %p224, %s221, 31
        %p226 = scmp.lt.s32.totalorder %s22, 0
        %s227 = scalar_select %p226, %s22, 0
        %s228 = smul.addr %s225, 2
        %s229 = sadd.s32 %s227, %s228
        %s230 = smul.addr %s223, 128
        %s231 = sadd.s32 %s229, %s230
        %s232 = smul.addr %s231, 8
        %s233 = scalar_lea.vmem %s3, %s232
        %p234 = scmp.lt.s32.totalorder %s21, 5
        %s235 = scalar_select %p234, %s21, 5
        %s236 = smul.addr %s235, 32
        %s237 = smul.addr %s236, 8
        %s238 = scalar_lea.vmem %s0, %s237
        %s239 = smul.u32 32, %s23
        %p240 = scmp.lt.s32.totalorder %s21, 5
        %s241 = scalar_select %p240, %s21, 5
        %p242 = scmp.lt.s32.totalorder %s239, 31
        %s243 = scalar_select %p242, %s239, 31
        %p244 = scmp.lt.s32.totalorder %s22, 0
        %s245 = scalar_select %p244, %s22, 0
        %s246 = smul.addr %s243, 2
        %s247 = sadd.s32 %s245, %s246
        %s248 = smul.addr %s241, 128
        %s249 = sadd.s32 %s247, %s248
        %s250 = smul.addr %s249, 8
        %s251 = scalar_lea.vmem %s3, %s250
        %s252 = smul.u32 32, %s23
        %s253 = smul.u32 %s23, 16
        %s254 = smul.u32 %s253, 16
        %s255 = scalar_lea.vmem %s238, %s254
        %v256 = vld [vmem:[%s255] sm:$0xff]
        %v257 = vld [vmem:[%s255 + $0x8] sm:$0xff]
        %v258 = vld [vmem:[%s255 + $0x10] sm:$0xff]
        %v259 = vld [vmem:[%s255 + $0x18] sm:$0xff]
        %v260 = vld [vmem:[%s255 + $0x20] sm:$0xff]
        %v261 = vld [vmem:[%s255 + $0x28] sm:$0xff]
        %v262 = vld [vmem:[%s255 + $0x30] sm:$0xff]
        %v263 = vld [vmem:[%s255 + $0x38] sm:$0xff]
        %v264 = vld [vmem:[%s255 + $0x40] sm:$0xff]
        %v265 = vld [vmem:[%s255 + $0x48] sm:$0xff]
        %v266 = vld [vmem:[%s255 + $0x50] sm:$0xff]
        %v267 = vld [vmem:[%s255 + $0x58] sm:$0xff]
        %v268 = vld [vmem:[%s255 + $0x60] sm:$0xff]
        %v269 = vld [vmem:[%s255 + $0x68] sm:$0xff]
        %v270 = vld [vmem:[%s255 + $0x70] sm:$0xff]
        %v271 = vld [vmem:[%s255 + $0x78] sm:$0xff]
        %v272 = vld [vmem:[%s255 + $0x80] sm:$0xff]
        %v273 = vld [vmem:[%s255 + $0x88] sm:$0xff]
        %v274 = vld [vmem:[%s255 + $0x90] sm:$0xff]
        %v275 = vld [vmem:[%s255 + $0x98] sm:$0xff]
        %v276 = vld [vmem:[%s255 + $0xa0] sm:$0xff]
        %v277 = vld [vmem:[%s255 + $0xa8] sm:$0xff]
        %v278 = vld [vmem:[%s255 + $0xb0] sm:$0xff]
        %v279 = vld [vmem:[%s255 + $0xb8] sm:$0xff]
        %v280 = vld [vmem:[%s255 + $0xc0] sm:$0xff]
        %v281 = vld [vmem:[%s255 + $0xc8] sm:$0xff]
        %v282 = vld [vmem:[%s255 + $0xd0] sm:$0xff]
        %v283 = vld [vmem:[%s255 + $0xd8] sm:$0xff]
        %v284 = vld [vmem:[%s255 + $0xe0] sm:$0xff]
        %v285 = vld [vmem:[%s255 + $0xe8] sm:$0xff]
        %v286 = vld [vmem:[%s255 + $0xf0] sm:$0xff]
        %v287 = vld [vmem:[%s255 + $0xf8] sm:$0xff]
        %s288 = ssub.s32 %s253, 1
        %p289 = scmp.gt.s32.totalorder %s288, 0
        %s290 = scalar_select %p289, %s288, 0
        %s291 = smul.u32 %s290, 16
        %s292 = scalar_lea.vmem %s238, %s291
        %v293 = vld [vmem:[%s292] sm:$0xff]
        %v294 = vld [vmem:[%s292 + $0x8] sm:$0xff]
        %s295 = sadd.s32 %s253, 16
        %p296 = scmp.lt.s32.totalorder %s295, 15
        %s297 = scalar_select %p296, %s295, 15
        %s298 = smul.u32 %s297, 16
        %s299 = scalar_lea.vmem %s238, %s298
        %v300 = vld [vmem:[%s299] sm:$0xff]
        %v301 = vld [vmem:[%s299 + $0x8] sm:$0xff]
        %p302 = scmp.eq.s32.totalorder %s253, 0
        %s303 = scalar_select %p302, 1, 0
        %v304 = vstv %s303
        %vm305 = vcmp.eq.s32.totalorder %v304, 1
        %v306 = vsel %vm305, 0.0, %v293
        %v307 = vsel %vm305, 0.0, %v294
        %p308 = scmp.eq.s32.totalorder %s295, 16
        %s309 = scalar_select %p308, 1, 0
        %v310 = vstv %s309
        %vm311 = vcmp.eq.s32.totalorder %v310, 1
        %v312 = vsel %vm311, 0.0, %v300
        %v313 = vsel %vm311, 0.0, %v301
        %vm350 = vcmask 1040384
        %v351 = vrot.slane %v306, 7
        %v352 = vrot.slane %v307, 7
        %v353 = vsel %vm350, %v351, %v352
        %v354 = vrot.slane %v256, 7
        %v355 = vrot.slane %v257, 7
        %v356 = vsel %vm350, %v354, %v355
        %v357 = vrot.slane %v258, 7
        %v358 = vrot.slane %v259, 7
        %v359 = vsel %vm350, %v357, %v358
        %v360 = vrot.slane %v260, 7
        %v361 = vrot.slane %v261, 7
        %v362 = vsel %vm350, %v360, %v361
        %v363 = vrot.slane %v262, 7
        %v364 = vrot.slane %v263, 7
        %v365 = vsel %vm350, %v363, %v364
        %v366 = vrot.slane %v264, 7
        %v367 = vrot.slane %v265, 7
        %v368 = vsel %vm350, %v366, %v367
        %v369 = vrot.slane %v266, 7
        %v370 = vrot.slane %v267, 7
        %v371 = vsel %vm350, %v369, %v370
        %v372 = vrot.slane %v268, 7
        %v373 = vrot.slane %v269, 7
        %v374 = vsel %vm350, %v372, %v373
        %v375 = vrot.slane %v270, 7
        %v376 = vrot.slane %v271, 7
        %v377 = vsel %vm350, %v375, %v376
        %v378 = vrot.slane %v272, 7
        %v379 = vrot.slane %v273, 7
        %v380 = vsel %vm350, %v378, %v379
        %v381 = vrot.slane %v274, 7
        %v382 = vrot.slane %v275, 7
        %v383 = vsel %vm350, %v381, %v382
        %v384 = vrot.slane %v276, 7
        %v385 = vrot.slane %v277, 7
        %v386 = vsel %vm350, %v384, %v385
        %v387 = vrot.slane %v278, 7
        %v388 = vrot.slane %v279, 7
        %v389 = vsel %vm350, %v387, %v388
        %v390 = vrot.slane %v280, 7
        %v391 = vrot.slane %v281, 7
        %v392 = vsel %vm350, %v390, %v391
        %v393 = vrot.slane %v282, 7
        %v394 = vrot.slane %v283, 7
        %v395 = vsel %vm350, %v393, %v394
        %v396 = vrot.slane %v284, 7
        %v397 = vrot.slane %v285, 7
        %v398 = vsel %vm350, %v396, %v397
        %v399 = vrot.slane %v286, 7
        %v400 = vrot.slane %v287, 7
        %v401 = vsel %vm350, %v399, %v400
        %v402 = vrot.slane %v312, 7
        %v403 = vrot.slane %v313, 7
        %v404 = vsel %vm350, %v402, %v403
        %v423 = vsel %vm350, 0.0, %v351
        %v424 = vsel %vm350, 0.0, %v354
        %v425 = vsel %vm350, 0.0, %v357
        %v426 = vsel %vm350, 0.0, %v360
        %v427 = vsel %vm350, 0.0, %v363
        %v428 = vsel %vm350, 0.0, %v366
        %v429 = vsel %vm350, 0.0, %v369
        %v430 = vsel %vm350, 0.0, %v372
        %v431 = vsel %vm350, 0.0, %v375
        %v432 = vsel %vm350, 0.0, %v378
        %v433 = vsel %vm350, 0.0, %v381
        %v434 = vsel %vm350, 0.0, %v384
        %v435 = vsel %vm350, 0.0, %v387
        %v436 = vsel %vm350, 0.0, %v390
        %v437 = vsel %vm350, 0.0, %v393
        %v438 = vsel %vm350, 0.0, %v396
        %v439 = vsel %vm350, 0.0, %v399
        %v440 = vsel %vm350, 0.0, %v402
        %vm441 = vcmask 1046528
        %v442 = vrot.slane %v306, 1
        %v443 = vrot.slane %v307, 1
        %v444 = vsel %vm441, %v442, %v443
        %v445 = vrot.slane %v256, 1
        %v446 = vrot.slane %v257, 1
        %v447 = vsel %vm441, %v445, %v446
        %v448 = vrot.slane %v258, 1
        %v449 = vrot.slane %v259, 1
        %v450 = vsel %vm441, %v448, %v449
        %v451 = vrot.slane %v260, 1
        %v452 = vrot.slane %v261, 1
        %v453 = vsel %vm441, %v451, %v452
        %v454 = vrot.slane %v262, 1
        %v455 = vrot.slane %v263, 1
        %v456 = vsel %vm441, %v454, %v455
        %v457 = vrot.slane %v264, 1
        %v458 = vrot.slane %v265, 1
        %v459 = vsel %vm441, %v457, %v458
        %v460 = vrot.slane %v266, 1
        %v461 = vrot.slane %v267, 1
        %v462 = vsel %vm441, %v460, %v461
        %v463 = vrot.slane %v268, 1
        %v464 = vrot.slane %v269, 1
        %v465 = vsel %vm441, %v463, %v464
        %v466 = vrot.slane %v270, 1
        %v467 = vrot.slane %v271, 1
        %v468 = vsel %vm441, %v466, %v467
        %v469 = vrot.slane %v272, 1
        %v470 = vrot.slane %v273, 1
        %v471 = vsel %vm441, %v469, %v470
        %v472 = vrot.slane %v274, 1
        %v473 = vrot.slane %v275, 1
        %v474 = vsel %vm441, %v472, %v473
        %v475 = vrot.slane %v276, 1
        %v476 = vrot.slane %v277, 1
        %v477 = vsel %vm441, %v475, %v476
        %v478 = vrot.slane %v278, 1
        %v479 = vrot.slane %v279, 1
        %v480 = vsel %vm441, %v478, %v479
        %v481 = vrot.slane %v280, 1
        %v482 = vrot.slane %v281, 1
        %v483 = vsel %vm441, %v481, %v482
        %v484 = vrot.slane %v282, 1
        %v485 = vrot.slane %v283, 1
        %v486 = vsel %vm441, %v484, %v485
        %v487 = vrot.slane %v284, 1
        %v488 = vrot.slane %v285, 1
        %v489 = vsel %vm441, %v487, %v488
        %v490 = vrot.slane %v286, 1
        %v491 = vrot.slane %v287, 1
        %v492 = vsel %vm441, %v490, %v491
        %v493 = vrot.slane %v312, 1
        %v494 = vrot.slane %v313, 1
        %v495 = vsel %vm441, %v493, %v494
        %v514 = vsel %vm441, %v443, 0.0
        %v515 = vsel %vm441, %v446, 0.0
        %v516 = vsel %vm441, %v449, 0.0
        %v517 = vsel %vm441, %v452, 0.0
        %v518 = vsel %vm441, %v455, 0.0
        %v519 = vsel %vm441, %v458, 0.0
        %v520 = vsel %vm441, %v461, 0.0
        %v521 = vsel %vm441, %v464, 0.0
        %v522 = vsel %vm441, %v467, 0.0
        %v523 = vsel %vm441, %v470, 0.0
        %v524 = vsel %vm441, %v473, 0.0
        %v525 = vsel %vm441, %v476, 0.0
        %v526 = vsel %vm441, %v479, 0.0
        %v527 = vsel %vm441, %v482, 0.0
        %v528 = vsel %vm441, %v485, 0.0
        %v529 = vsel %vm441, %v488, 0.0
        %v530 = vsel %vm441, %v491, 0.0
        %v531 = vsel %vm441, %v494, 0.0
        %v532 = vld [vmem:[#allocation4] sm:$0xf]
        %s533 = scalar_lea.vmem [#allocation4], 4
        %v534 = vld [vmem:[%s533] sm:$0xf]
        %s535 = scalar_lea.vmem [#allocation4], 8
        %v536 = vld [vmem:[%s535] sm:$0xf]
        %v537 = vadd.f32 %v534, %v536
        %vm538 = vcmask 31744
        %v539 = vsel %vm538, %v306, 0
        %v541 = vsel %vm538, %v307, 0
        %v543 = vsel %vm538, %v256, 0
        %v545 = vsel %vm538, %v257, 0
        %v547 = vsel %vm538, %v258, 0
        %v549 = vsel %vm538, %v259, 0
        %v551 = vsel %vm538, %v260, 0
        %v553 = vsel %vm538, %v261, 0
        %v555 = vsel %vm538, %v262, 0
        %v557 = vsel %vm538, %v263, 0
        %v559 = vsel %vm538, %v264, 0
        %v561 = vsel %vm538, %v265, 0
        %v563 = vsel %vm538, %v266, 0
        %v565 = vsel %vm538, %v267, 0
        %v567 = vsel %vm538, %v268, 0
        %v569 = vsel %vm538, %v269, 0
        %v571 = vsel %vm538, %v270, 0
        %v573 = vsel %vm538, %v271, 0
        %v575 = vsel %vm538, %v272, 0
        %v577 = vsel %vm538, %v273, 0
        %v579 = vsel %vm538, %v274, 0
        %v581 = vsel %vm538, %v275, 0
        %v583 = vsel %vm538, %v276, 0
        %v585 = vsel %vm538, %v277, 0
        %v587 = vsel %vm538, %v278, 0
        %v589 = vsel %vm538, %v279, 0
        %v591 = vsel %vm538, %v280, 0
        %v593 = vsel %vm538, %v281, 0
        %v595 = vsel %vm538, %v282, 0
        %v597 = vsel %vm538, %v283, 0
        %v599 = vsel %vm538, %v284, 0
        %v601 = vsel %vm538, %v285, 0
        %v603 = vsel %vm538, %v286, 0
        %v605 = vsel %vm538, %v287, 0
        %vm607 = vcmask 1043456
        %v609 = vsel %vm607, %v537, 0
        %611 = vmatprep.subr.mxu0 0.0
        %612 = vmatpush1.msra.mxu0 %v609
        %613 = vmatprep.subr.mxu0 0.0
        %614 = vmatpush1.msra.mxu0 0.0
        %615 = vmatprep.subr.mxu0 0.0
        %616 = vmatpush1.msra.mxu0 0.0
        %617 = vmatprep.subr.mxu0 0.0
        %618 = vmatpush1.msra.mxu0 0.0
        %619 = vmatprep.subr.mxu0 0.0
        %620 = vmatpush1.msra.mxu0 0.0
        %621 = vmatprep.subr.mxu0 0.0
        %622 = vmatpush1.msra.mxu0 0.0
        %623 = vmatprep.subr.mxu0 0.0
        %624 = vmatpush1.msra.mxu0 0.0
        %625 = vmatprep.subr.mxu0 0.0
        %626 = vmatpush1.msra.mxu0 0.0
        %627 = vmatprep.subr.mxu0 0.0
        %628 = vmatpush1.msra.mxu0 0.0
        %629 = vmatprep.subr.mxu0 0.0
        %630 = vmatpush1.msra.mxu0 0.0
        %631 = vmatprep.subr.mxu0 0.0
        %632 = vmatpush1.msra.mxu0 0.0
        %633 = vmatprep.subr.mxu0 0.0
        %634 = vmatpush1.msra.mxu0 0.0
        %635 = vmatprep.subr.mxu0 0.0
        %636 = vmatpush1.msra.mxu0 0.0
        %637 = vmatprep.subr.mxu0 0.0
        %638 = vmatpush1.msra.mxu0 0.0
        %639 = vmatprep.subr.mxu0 0.0
        %640 = vmatpush1.msra.mxu0 0.0
        %641 = vmatprep.subr.mxu0 0.0
        %642 = vmatpush1.msra.mxu0 0.0
        %643 = vmatprep.subr.mxu0 0.0
        %644 = vmatpush1.msra.mxu0 0.0
        %645 = vmatprep.subr.mxu0 0.0
        %646 = vmatpush1.msra.mxu0 0.0
        %647 = vmatprep.subr.mxu0 0.0
        %648 = vmatpush1.msra.mxu0 0.0
        %649 = vmatprep.subr.mxu0 0.0
        %650 = vmatpush1.msra.mxu0 0.0
        %651 = vmatprep.subr.mxu0 0.0
        %652 = vmatpush1.msra.mxu0 0.0
        %653 = vmatprep.subr.mxu0 0.0
        %654 = vmatpush1.msra.mxu0 0.0
        %655 = vmatprep.subr.mxu0 0.0
        %656 = vmatpush1.msra.mxu0 0.0
        %657 = vmatprep.subr.mxu0 0.0
        %658 = vmatpush1.msra.mxu0 0.0
        %659 = vmatprep.subr.mxu0 0.0
        %660 = vmatpush1.msra.mxu0 0.0
        %661 = vmatprep.subr.mxu0 0.0
        %662 = vmatpush1.msra.mxu0 0.0
        %663 = vmatprep.subr.mxu0 0.0
        %664 = vmatpush1.msra.mxu0 0.0
        %665 = vmatprep.subr.mxu0 0.0
        %666 = vmatpush1.msra.mxu0 0.0
        %667 = vmatprep.subr.mxu0 0.0
        %668 = vmatpush1.msra.mxu0 0.0
        %669 = vmatprep.subr.mxu0 0.0
        %670 = vmatpush1.msra.mxu0 0.0
        %671 = vmatprep.subr.mxu0 0.0
        %672 = vmatpush1.msra.mxu0 0.0
        %673 = vmatprep.subr.mxu0 0.0
        %674 = vmatpush1.msra.mxu0 0.0
        %675 = vmatprep.mubr.f32.mxu0 0.0
        %676 = vmatmul.mubr.f32.gmra.mrb[0].mxu0 %v539
        %v677 = vpop.f32.mrb[0].mxu0
        %v678 = vadd.f32 0.0, %v677
        %v679 = vpop.f32.mrb[0].mxu0
        %680 = vmatprep.mubr.f32.mxu0 0.0
        %681 = vmatmul.mubr.f32.gmra.mrb[0].mxu0 %v541
        %v682 = vpop.f32.mrb[0].mxu0
        %v683 = vadd.f32 0.0, %v682
        %v684 = vpop.f32.mrb[0].mxu0
        %685 = vmatprep.mubr.f32.mxu0 0.0
        %686 = vmatmul.mubr.f32.gmra.mrb[0].mxu0 %v543
        %v687 = vpop.f32.mrb[0].mxu0
        %v688 = vadd.f32 0.0, %v687
        %v689 = vpop.f32.mrb[0].mxu0
        %690 = vmatprep.mubr.f32.mxu0 0.0
        %691 = vmatmul.mubr.f32.gmra.mrb[0].mxu0 %v545
        %v692 = vpop.f32.mrb[0].mxu0
        %v693 = vadd.f32 0.0, %v692
        %v694 = vpop.f32.mrb[0].mxu0
        %695 = vmatprep.mubr.f32.mxu0 0.0
        %696 = vmatmul.mubr.f32.gmra.mrb[0].mxu0 %v543
        %v697 = vpop.f32.mrb[0].mxu0
        %v698 = vadd.f32 0.0, %v697
        %v699 = vpop.f32.mrb[0].mxu0
        %700 = vmatprep.mubr.f32.mxu0 0.0
        %701 = vmatmul.mubr.f32.gmra.mrb[0].mxu0 %v545
        %v702 = vpop.f32.mrb[0].mxu0
        %v703 = vadd.f32 0.0, %v702
        %v704 = vpop.f32.mrb[0].mxu0
        %705 = vmatprep.mubr.f32.mxu0 0.0
        %706 = vmatmul.mubr.f32.gmra.mrb[0].mxu0 %v547
        %v707 = vpop.f32.mrb[0].mxu0
        %v708 = vadd.f32 0.0, %v707
        %v709 = vpop.f32.mrb[0].mxu0
        %710 = vmatprep.mubr.f32.mxu0 0.0
        %711 = vmatmul.mubr.f32.gmra.mrb[0].mxu0 %v549
        %v712 = vpop.f32.mrb[0].mxu0
        %v713 = vadd.f32 0.0, %v712
        %v714 = vpop.f32.mrb[0].mxu0
        %715 = vmatprep.mubr.f32.mxu0 0.0
        %716 = vmatmul.mubr.f32.gmra.mrb[0].mxu0 %v547
        %v717 = vpop.f32.mrb[0].mxu0
        %v718 = vadd.f32 0.0, %v717
        %v719 = vpop.f32.mrb[0].mxu0
        %720 = vmatprep.mubr.f32.mxu0 0.0
        %721 = vmatmul.mubr.f32.gmra.mrb[0].mxu0 %v549
        %v722 = vpop.f32.mrb[0].mxu0
        %v723 = vadd.f32 0.0, %v722
        %v724 = vpop.f32.mrb[0].mxu0
        %725 = vmatprep.mubr.f32.mxu0 0.0
        %726 = vmatmul.mubr.f32.gmra.mrb[0].mxu0 %v551
        %v727 = vpop.f32.mrb[0].mxu0
        %v728 = vadd.f32 0.0, %v727
        %v729 = vpop.f32.mrb[0].mxu0
        %730 = vmatprep.mubr.f32.mxu0 0.0
        %731 = vmatmul.mubr.f32.gmra.mrb[0].mxu0 %v553
        %v732 = vpop.f32.mrb[0].mxu0
        %v733 = vadd.f32 0.0, %v732
        %v734 = vpop.f32.mrb[0].mxu0
        %735 = vmatprep.mubr.f32.mxu0 0.0
        %736 = vmatmul.mubr.f32.gmra.mrb[0].mxu0 %v551
        %v737 = vpop.f32.mrb[0].mxu0
        %v738 = vadd.f32 0.0, %v737
        %v739 = vpop.f32.mrb[0].mxu0
        %740 = vmatprep.mubr.f32.mxu0 0.0
        %741 = vmatmul.mubr.f32.gmra.mrb[0].mxu0 %v553
        %v742 = vpop.f32.mrb[0].mxu0
        %v743 = vadd.f32 0.0, %v742
        %v744 = vpop.f32.mrb[0].mxu0
        %745 = vmatprep.mubr.f32.mxu0 0.0
        %746 = vmatmul.mubr.f32.gmra.mrb[0].mxu0 %v555
        %v747 = vpop.f32.mrb[0].mxu0
        %v748 = vadd.f32 0.0, %v747
        %v749 = vpop.f32.mrb[0].mxu0
        %750 = vmatprep.mubr.f32.mxu0 0.0
        %751 = vmatmul.mubr.f32.gmra.mrb[0].mxu0 %v557
        %v752 = vpop.f32.mrb[0].mxu0
        %v753 = vadd.f32 0.0, %v752
        %v754 = vpop.f32.mrb[0].mxu0
        %755 = vmatprep.mubr.f32.mxu0 0.0
        %756 = vmatmul.mubr.f32.gmra.mrb[0].mxu0 %v555
        %v757 = vpop.f32.mrb[0].mxu0
        %v758 = vadd.f32 0.0, %v757
        %v759 = vpop.f32.mrb[0].mxu0
        %760 = vmatprep.mubr.f32.mxu0 0.0
        %761 = vmatmul.mubr.f32.gmra.mrb[0].mxu0 %v557
        %v762 = vpop.f32.mrb[0].mxu0
        %v763 = vadd.f32 0.0, %v762
        %v764 = vpop.f32.mrb[0].mxu0
        %765 = vmatprep.mubr.f32.mxu0 0.0
        %766 = vmatmul.mubr.f32.gmra.mrb[0].mxu0 %v559
        %v767 = vpop.f32.mrb[0].mxu0
        %v768 = vadd.f32 0.0, %v767
        %v769 = vpop.f32.mrb[0].mxu0
        %770 = vmatprep.mubr.f32.mxu0 0.0
        %771 = vmatmul.mubr.f32.gmra.mrb[0].mxu0 %v561
        %v772 = vpop.f32.mrb[0].mxu0
        %v773 = vadd.f32 0.0, %v772
        %v774 = vpop.f32.mrb[0].mxu0
        %775 = vmatprep.mubr.f32.mxu0 0.0
        %776 = vmatmul.mubr.f32.gmra.mrb[0].mxu0 %v559
        %v777 = vpop.f32.mrb[0].mxu0
        %v778 = vadd.f32 0.0, %v777
        %v779 = vpop.f32.mrb[0].mxu0
        %780 = vmatprep.mubr.f32.mxu0 0.0
        %781 = vmatmul.mubr.f32.gmra.mrb[0].mxu0 %v561
        %v782 = vpop.f32.mrb[0].mxu0
        %v783 = vadd.f32 0.0, %v782
        %v784 = vpop.f32.mrb[0].mxu0
        %785 = vmatprep.mubr.f32.mxu0 0.0
        %786 = vmatmul.mubr.f32.gmra.mrb[0].mxu0 %v563
        %v787 = vpop.f32.mrb[0].mxu0
        %v788 = vadd.f32 0.0, %v787
        %v789 = vpop.f32.mrb[0].mxu0
        %790 = vmatprep.mubr.f32.mxu0 0.0
        %791 = vmatmul.mubr.f32.gmra.mrb[0].mxu0 %v565
        %v792 = vpop.f32.mrb[0].mxu0
        %v793 = vadd.f32 0.0, %v792
        %v794 = vpop.f32.mrb[0].mxu0
        %795 = vmatprep.mubr.f32.mxu0 0.0
        %796 = vmatmul.mubr.f32.gmra.mrb[0].mxu0 %v563
        %v797 = vpop.f32.mrb[0].mxu0
        %v798 = vadd.f32 0.0, %v797
        %v799 = vpop.f32.mrb[0].mxu0
        %800 = vmatprep.mubr.f32.mxu0 0.0
        %801 = vmatmul.mubr.f32.gmra.mrb[0].mxu0 %v565
        %v802 = vpop.f32.mrb[0].mxu0
        %v803 = vadd.f32 0.0, %v802
        %v804 = vpop.f32.mrb[0].mxu0
        %805 = vmatprep.mubr.f32.mxu0 0.0
        %806 = vmatmul.mubr.f32.gmra.mrb[0].mxu0 %v567
        %v807 = vpop.f32.mrb[0].mxu0
        %v808 = vadd.f32 0.0, %v807
        %v809 = vpop.f32.mrb[0].mxu0
        %810 = vmatprep.mubr.f32.mxu0 0.0
        %811 = vmatmul.mubr.f32.gmra.mrb[0].mxu0 %v569
        %v812 = vpop.f32.mrb[0].mxu0
        %v813 = vadd.f32 0.0, %v812
        %v814 = vpop.f32.mrb[0].mxu0
        %815 = vmatprep.mubr.f32.mxu0 0.0
        %816 = vmatmul.mubr.f32.gmra.mrb[0].mxu0 %v567
        %v817 = vpop.f32.mrb[0].mxu0
        %v818 = vadd.f32 0.0, %v817
        %v819 = vpop.f32.mrb[0].mxu0
        %820 = vmatprep.mubr.f32.mxu0 0.0
        %821 = vmatmul.mubr.f32.gmra.mrb[0].mxu0 %v569
        %v822 = vpop.f32.mrb[0].mxu0
        %v823 = vadd.f32 0.0, %v822
        %v824 = vpop.f32.mrb[0].mxu0
        %825 = vmatprep.mubr.f32.mxu0 0.0
        %826 = vmatmul.mubr.f32.gmra.mrb[0].mxu0 %v571
        %v827 = vpop.f32.mrb[0].mxu0
        %v828 = vadd.f32 0.0, %v827
        %v829 = vpop.f32.mrb[0].mxu0
        %830 = vmatprep.mubr.f32.mxu0 0.0
        %831 = vmatmul.mubr.f32.gmra.mrb[0].mxu0 %v573
        %v832 = vpop.f32.mrb[0].mxu0
        %v833 = vadd.f32 0.0, %v832
        %v834 = vpop.f32.mrb[0].mxu0
        %835 = vmatprep.mubr.f32.mxu0 0.0
        %836 = vmatmul.mubr.f32.gmra.mrb[0].mxu0 %v571
        %v837 = vpop.f32.mrb[0].mxu0
        %v838 = vadd.f32 0.0, %v837
        %v839 = vpop.f32.mrb[0].mxu0
        %840 = vmatprep.mubr.f32.mxu0 0.0
        %841 = vmatmul.mubr.f32.gmra.mrb[0].mxu0 %v573
        %v842 = vpop.f32.mrb[0].mxu0
        %v843 = vadd.f32 0.0, %v842
        %v844 = vpop.f32.mrb[0].mxu0
        %845 = vmatprep.mubr.f32.mxu0 0.0
        %846 = vmatmul.mubr.f32.gmra.mrb[0].mxu0 %v575
        %v847 = vpop.f32.mrb[0].mxu0
        %v848 = vadd.f32 0.0, %v847
        %v849 = vpop.f32.mrb[0].mxu0
        %850 = vmatprep.mubr.f32.mxu0 0.0
        %851 = vmatmul.mubr.f32.gmra.mrb[0].mxu0 %v577
        %v852 = vpop.f32.mrb[0].mxu0
        %v853 = vadd.f32 0.0, %v852
        %v854 = vpop.f32.mrb[0].mxu0
        %855 = vmatprep.mubr.f32.mxu0 0.0
        %856 = vmatmul.mubr.f32.gmra.mrb[0].mxu0 %v575
        %v857 = vpop.f32.mrb[0].mxu0
        %v858 = vadd.f32 0.0, %v857
        %v859 = vpop.f32.mrb[0].mxu0
        %860 = vmatprep.mubr.f32.mxu0 0.0
        %861 = vmatmul.mubr.f32.gmra.mrb[0].mxu0 %v577
        %v862 = vpop.f32.mrb[0].mxu0
        %v863 = vadd.f32 0.0, %v862
        %v864 = vpop.f32.mrb[0].mxu0
        %865 = vmatprep.mubr.f32.mxu0 0.0
        %866 = vmatmul.mubr.f32.gmra.mrb[0].mxu0 %v579
        %v867 = vpop.f32.mrb[0].mxu0
        %v868 = vadd.f32 0.0, %v867
        %v869 = vpop.f32.mrb[0].mxu0
        %870 = vmatprep.mubr.f32.mxu0 0.0
        %871 = vmatmul.mubr.f32.gmra.mrb[0].mxu0 %v581
        %v872 = vpop.f32.mrb[0].mxu0
        %v873 = vadd.f32 0.0, %v872
        %v874 = vpop.f32.mrb[0].mxu0
        %875 = vmatprep.mubr.f32.mxu0 0.0
        %876 = vmatmul.mubr.f32.gmra.mrb[0].mxu0 %v579
        %v877 = vpop.f32.mrb[0].mxu0
        %v878 = vadd.f32 0.0, %v877
        %v879 = vpop.f32.mrb[0].mxu0
        %880 = vmatprep.mubr.f32.mxu0 0.0
        %881 = vmatmul.mubr.f32.gmra.mrb[0].mxu0 %v581
        %v882 = vpop.f32.mrb[0].mxu0
        %v883 = vadd.f32 0.0, %v882
        %v884 = vpop.f32.mrb[0].mxu0
        %885 = vmatprep.mubr.f32.mxu0 0.0
        %886 = vmatmul.mubr.f32.gmra.mrb[0].mxu0 %v583
        %v887 = vpop.f32.mrb[0].mxu0
        %v888 = vadd.f32 0.0, %v887
        %v889 = vpop.f32.mrb[0].mxu0
        %890 = vmatprep.mubr.f32.mxu0 0.0
        %891 = vmatmul.mubr.f32.gmra.mrb[0].mxu0 %v585
        %v892 = vpop.f32.mrb[0].mxu0
        %v893 = vadd.f32 0.0, %v892
        %v894 = vpop.f32.mrb[0].mxu0
        %895 = vmatprep.mubr.f32.mxu0 0.0
        %896 = vmatmul.mubr.f32.gmra.mrb[0].mxu0 %v583
        %v897 = vpop.f32.mrb[0].mxu0
        %v898 = vadd.f32 0.0, %v897
        %v899 = vpop.f32.mrb[0].mxu0
        %900 = vmatprep.mubr.f32.mxu0 0.0
        %901 = vmatmul.mubr.f32.gmra.mrb[0].mxu0 %v585
        %v902 = vpop.f32.mrb[0].mxu0
        %v903 = vadd.f32 0.0, %v902
        %v904 = vpop.f32.mrb[0].mxu0
        %905 = vmatprep.mubr.f32.mxu0 0.0
        %906 = vmatmul.mubr.f32.gmra.mrb[0].mxu0 %v587
        %v907 = vpop.f32.mrb[0].mxu0
        %v908 = vadd.f32 0.0, %v907
        %v909 = vpop.f32.mrb[0].mxu0
        %910 = vmatprep.mubr.f32.mxu0 0.0
        %911 = vmatmul.mubr.f32.gmra.mrb[0].mxu0 %v589
        %v912 = vpop.f32.mrb[0].mxu0
        %v913 = vadd.f32 0.0, %v912
        %v914 = vpop.f32.mrb[0].mxu0
        %915 = vmatprep.mubr.f32.mxu0 0.0
        %916 = vmatmul.mubr.f32.gmra.mrb[0].mxu0 %v587
        %v917 = vpop.f32.mrb[0].mxu0
        %v918 = vadd.f32 0.0, %v917
        %v919 = vpop.f32.mrb[0].mxu0
        %920 = vmatprep.mubr.f32.mxu0 0.0
        %921 = vmatmul.mubr.f32.gmra.mrb[0].mxu0 %v589
        %v922 = vpop.f32.mrb[0].mxu0
        %v923 = vadd.f32 0.0, %v922
        %v924 = vpop.f32.mrb[0].mxu0
        %925 = vmatprep.mubr.f32.mxu0 0.0
        %926 = vmatmul.mubr.f32.gmra.mrb[0].mxu0 %v591
        %v927 = vpop.f32.mrb[0].mxu0
        %v928 = vadd.f32 0.0, %v927
        %v929 = vpop.f32.mrb[0].mxu0
        %930 = vmatprep.mubr.f32.mxu0 0.0
        %931 = vmatmul.mubr.f32.gmra.mrb[0].mxu0 %v593
        %v932 = vpop.f32.mrb[0].mxu0
        %v933 = vadd.f32 0.0, %v932
        %v934 = vpop.f32.mrb[0].mxu0
        %935 = vmatprep.mubr.f32.mxu0 0.0
        %936 = vmatmul.mubr.f32.gmra.mrb[0].mxu0 %v591
        %v937 = vpop.f32.mrb[0].mxu0
        %v938 = vadd.f32 0.0, %v937
        %v939 = vpop.f32.mrb[0].mxu0
        %940 = vmatprep.mubr.f32.mxu0 0.0
        %941 = vmatmul.mubr.f32.gmra.mrb[0].mxu0 %v593
        %v942 = vpop.f32.mrb[0].mxu0
        %v943 = vadd.f32 0.0, %v942
        %v944 = vpop.f32.mrb[0].mxu0
        %945 = vmatprep.mubr.f32.mxu0 0.0
        %946 = vmatmul.mubr.f32.gmra.mrb[0].mxu0 %v595
        %v947 = vpop.f32.mrb[0].mxu0
        %v948 = vadd.f32 0.0, %v947
        %v949 = vpop.f32.mrb[0].mxu0
        %950 = vmatprep.mubr.f32.mxu0 0.0
        %951 = vmatmul.mubr.f32.gmra.mrb[0].mxu0 %v597
        %v952 = vpop.f32.mrb[0].mxu0
        %v953 = vadd.f32 0.0, %v952
        %v954 = vpop.f32.mrb[0].mxu0
        %955 = vmatprep.mubr.f32.mxu0 0.0
        %956 = vmatmul.mubr.f32.gmra.mrb[0].mxu0 %v595
        %v957 = vpop.f32.mrb[0].mxu0
        %v958 = vadd.f32 0.0, %v957
        %v959 = vpop.f32.mrb[0].mxu0
        %960 = vmatprep.mubr.f32.mxu0 0.0
        %961 = vmatmul.mubr.f32.gmra.mrb[0].mxu0 %v597
        %v962 = vpop.f32.mrb[0].mxu0
        %v963 = vadd.f32 0.0, %v962
        %v964 = vpop.f32.mrb[0].mxu0
        %965 = vmatprep.mubr.f32.mxu0 0.0
        %966 = vmatmul.mubr.f32.gmra.mrb[0].mxu0 %v599
        %v967 = vpop.f32.mrb[0].mxu0
        %v968 = vadd.f32 0.0, %v967
        %v969 = vpop.f32.mrb[0].mxu0
        %970 = vmatprep.mubr.f32.mxu0 0.0
        %971 = vmatmul.mubr.f32.gmra.mrb[0].mxu0 %v601
        %v972 = vpop.f32.mrb[0].mxu0
        %v973 = vadd.f32 0.0, %v972
        %v974 = vpop.f32.mrb[0].mxu0
        %975 = vmatprep.mubr.f32.mxu0 0.0
        %976 = vmatmul.mubr.f32.gmra.mrb[0].mxu0 %v599
        %v977 = vpop.f32.mrb[0].mxu0
        %v978 = vadd.f32 0.0, %v977
        %v979 = vpop.f32.mrb[0].mxu0
        %980 = vmatprep.mubr.f32.mxu0 0.0
        %981 = vmatmul.mubr.f32.gmra.mrb[0].mxu0 %v601
        %v982 = vpop.f32.mrb[0].mxu0
        %v983 = vadd.f32 0.0, %v982
        %v984 = vpop.f32.mrb[0].mxu0
        %985 = vmatprep.mubr.f32.mxu0 0.0
        %986 = vmatmul.mubr.f32.gmra.mrb[0].mxu0 %v603
        %v987 = vpop.f32.mrb[0].mxu0
        %v988 = vadd.f32 0.0, %v987
        %v989 = vpop.f32.mrb[0].mxu0
        %990 = vmatprep.mubr.f32.mxu0 0.0
        %991 = vmatmul.mubr.f32.gmra.mrb[0].mxu0 %v605
        %v992 = vpop.f32.mrb[0].mxu0
        %v993 = vadd.f32 0.0, %v992
        %v994 = vpop.f32.mrb[0].mxu0
        %995 = vdwg.mxu0
        %v997 = vsel %vm538, %v423, 0
        %v999 = vsel %vm538, %v353, 0
        %v1002 = vsel %vm538, %v424, 0
        %v1004 = vsel %vm538, %v356, 0
        %v1007 = vsel %vm538, %v425, 0
        %v1009 = vsel %vm538, %v359, 0
        %v1012 = vsel %vm538, %v426, 0
        %v1014 = vsel %vm538, %v362, 0
        %v1017 = vsel %vm538, %v427, 0
        %v1019 = vsel %vm538, %v365, 0
        %v1022 = vsel %vm538, %v428, 0
        %v1024 = vsel %vm538, %v368, 0
        %v1027 = vsel %vm538, %v429, 0
        %v1029 = vsel %vm538, %v371, 0
        %v1032 = vsel %vm538, %v430, 0
        %v1034 = vsel %vm538, %v374, 0
        %v1037 = vsel %vm538, %v431, 0
        %v1039 = vsel %vm538, %v377, 0
        %v1042 = vsel %vm538, %v432, 0
        %v1044 = vsel %vm538, %v380, 0
        %v1047 = vsel %vm538, %v433, 0
        %v1049 = vsel %vm538, %v383, 0
        %v1052 = vsel %vm538, %v434, 0
        %v1054 = vsel %vm538, %v386, 0
        %v1057 = vsel %vm538, %v435, 0
        %v1059 = vsel %vm538, %v389, 0
        %v1062 = vsel %vm538, %v436, 0
        %v1064 = vsel %vm538, %v392, 0
        %v1067 = vsel %vm538, %v437, 0
        %v1069 = vsel %vm538, %v395, 0
        %v1072 = vsel %vm538, %v438, 0
        %v1074 = vsel %vm538, %v398, 0
        %v1077 = vsel %vm538, %v439, 0
        %v1079 = vsel %vm538, %v401, 0
        %v1082 = vsel %vm607, %v532, 0
        %1084 = vmatprep.subr.mxu0 0.0
        %1085 = vmatpush1.msra.mxu0 %v1082
        %1086 = vmatprep.subr.mxu0 0.0
        %1087 = vmatpush1.msra.mxu0 0.0
        %1088 = vmatprep.subr.mxu0 0.0
        %1089 = vmatpush1.msra.mxu0 0.0
        %1090 = vmatprep.subr.mxu0 0.0
        %1091 = vmatpush1.msra.mxu0 0.0
        %1092 = vmatprep.subr.mxu0 0.0
        %1093 = vmatpush1.msra.mxu0 0.0
        %1094 = vmatprep.subr.mxu0 0.0
        %1095 = vmatpush1.msra.mxu0 0.0
        %1096 = vmatprep.subr.mxu0 0.0
        %1097 = vmatpush1.msra.mxu0 0.0
        %1098 = vmatprep.subr.mxu0 0.0
        %1099 = vmatpush1.msra.mxu0 0.0
        %1100 = vmatprep.subr.mxu0 0.0
        %1101 = vmatpush1.msra.mxu0 0.0
        %1102 = vmatprep.subr.mxu0 0.0
        %1103 = vmatpush1.msra.mxu0 0.0
        %1104 = vmatprep.subr.mxu0 0.0
        %1105 = vmatpush1.msra.mxu0 0.0
        %1106 = vmatprep.subr.mxu0 0.0
        %1107 = vmatpush1.msra.mxu0 0.0
        %1108 = vmatprep.subr.mxu0 0.0
        %1109 = vmatpush1.msra.mxu0 0.0
        %1110 = vmatprep.subr.mxu0 0.0
        %1111 = vmatpush1.msra.mxu0 0.0
        %1112 = vmatprep.subr.mxu0 0.0
        %1113 = vmatpush1.msra.mxu0 0.0
        %1114 = vmatprep.subr.mxu0 0.0
        %1115 = vmatpush1.msra.mxu0 0.0
        %1116 = vmatprep.subr.mxu0 0.0
        %1117 = vmatpush1.msra.mxu0 0.0
        %1118 = vmatprep.subr.mxu0 0.0
        %1119 = vmatpush1.msra.mxu0 0.0
        %1120 = vmatprep.subr.mxu0 0.0
        %1121 = vmatpush1.msra.mxu0 0.0
        %1122 = vmatprep.subr.mxu0 0.0
        %1123 = vmatpush1.msra.mxu0 0.0
        %1124 = vmatprep.subr.mxu0 0.0
        %1125 = vmatpush1.msra.mxu0 0.0
        %1126 = vmatprep.subr.mxu0 0.0
        %1127 = vmatpush1.msra.mxu0 0.0
        %1128 = vmatprep.subr.mxu0 0.0
        %1129 = vmatpush1.msra.mxu0 0.0
        %1130 = vmatprep.subr.mxu0 0.0
        %1131 = vmatpush1.msra.mxu0 0.0
        %1132 = vmatprep.subr.mxu0 0.0
        %1133 = vmatpush1.msra.mxu0 0.0
        %1134 = vmatprep.subr.mxu0 0.0
        %1135 = vmatpush1.msra.mxu0 0.0
        %1136 = vmatprep.subr.mxu0 0.0
        %1137 = vmatpush1.msra.mxu0 0.0
        %1138 = vmatprep.subr.mxu0 0.0
        %1139 = vmatpush1.msra.mxu0 0.0
        %1140 = vmatprep.subr.mxu0 0.0
        %1141 = vmatpush1.msra.mxu0 0.0
        %1142 = vmatprep.subr.mxu0 0.0
        %1143 = vmatpush1.msra.mxu0 0.0
        %1144 = vmatprep.subr.mxu0 0.0
        %1145 = vmatpush1.msra.mxu0 0.0
        %1146 = vmatprep.subr.mxu0 0.0
        %1147 = vmatpush1.msra.mxu0 0.0
        %1148 = vmatprep.mubr.f32.mxu0 0.0
        %1149 = vmatmul.mubr.f32.gmra.mrb[0].mxu0 %v997
        %v1150 = vpop.f32.mrb[0].mxu0
        %v1151 = vadd.f32 %v678, %v1150
        %v1152 = vpop.f32.mrb[0].mxu0
        %1153 = vmatprep.mubr.f32.mxu0 0.0
        %1154 = vmatmul.mubr.f32.gmra.mrb[0].mxu0 %v999
        %v1155 = vpop.f32.mrb[0].mxu0
        %v1156 = vadd.f32 %v683, %v1155
        %v1157 = vpop.f32.mrb[0].mxu0
        %1158 = vmatprep.mubr.f32.mxu0 0.0
        %1159 = vmatmul.mubr.f32.gmra.mrb[0].mxu0 %v1002
        %v1160 = vpop.f32.mrb[0].mxu0
        %v1161 = vadd.f32 %v688, %v1160
        %v1162 = vpop.f32.mrb[0].mxu0
        %1163 = vmatprep.mubr.f32.mxu0 0.0
        %1164 = vmatmul.mubr.f32.gmra.mrb[0].mxu0 %v1004
        %v1165 = vpop.f32.mrb[0].mxu0
        %v1166 = vadd.f32 %v693, %v1165
        %v1167 = vpop.f32.mrb[0].mxu0
        %1168 = vmatprep.mubr.f32.mxu0 0.0
        %1169 = vmatmul.mubr.f32.gmra.mrb[0].mxu0 %v1002
        %v1170 = vpop.f32.mrb[0].mxu0
        %v1171 = vadd.f32 %v698, %v1170
        %v1172 = vpop.f32.mrb[0].mxu0
        %1173 = vmatprep.mubr.f32.mxu0 0.0
        %1174 = vmatmul.mubr.f32.gmra.mrb[0].mxu0 %v1004
        %v1175 = vpop.f32.mrb[0].mxu0
        %v1176 = vadd.f32 %v703, %v1175
        %v1177 = vpop.f32.mrb[0].mxu0
        %1178 = vmatprep.mubr.f32.mxu0 0.0
        %1179 = vmatmul.mubr.f32.gmra.mrb[0].mxu0 %v1007
        %v1180 = vpop.f32.mrb[0].mxu0
        %v1181 = vadd.f32 %v708, %v1180
        %v1182 = vpop.f32.mrb[0].mxu0
        %1183 = vmatprep.mubr.f32.mxu0 0.0
        %1184 = vmatmul.mubr.f32.gmra.mrb[0].mxu0 %v1009
        %v1185 = vpop.f32.mrb[0].mxu0
        %v1186 = vadd.f32 %v713, %v1185
        %v1187 = vpop.f32.mrb[0].mxu0
        %1188 = vmatprep.mubr.f32.mxu0 0.0
        %1189 = vmatmul.mubr.f32.gmra.mrb[0].mxu0 %v1007
        %v1190 = vpop.f32.mrb[0].mxu0
        %v1191 = vadd.f32 %v718, %v1190
        %v1192 = vpop.f32.mrb[0].mxu0
        %1193 = vmatprep.mubr.f32.mxu0 0.0
        %1194 = vmatmul.mubr.f32.gmra.mrb[0].mxu0 %v1009
        %v1195 = vpop.f32.mrb[0].mxu0
        %v1196 = vadd.f32 %v723, %v1195
        %v1197 = vpop.f32.mrb[0].mxu0
        %1198 = vmatprep.mubr.f32.mxu0 0.0
        %1199 = vmatmul.mubr.f32.gmra.mrb[0].mxu0 %v1012
        %v1200 = vpop.f32.mrb[0].mxu0
        %v1201 = vadd.f32 %v728, %v1200
        %v1202 = vpop.f32.mrb[0].mxu0
        %1203 = vmatprep.mubr.f32.mxu0 0.0
        %1204 = vmatmul.mubr.f32.gmra.mrb[0].mxu0 %v1014
        %v1205 = vpop.f32.mrb[0].mxu0
        %v1206 = vadd.f32 %v733, %v1205
        %v1207 = vpop.f32.mrb[0].mxu0
        %1208 = vmatprep.mubr.f32.mxu0 0.0
        %1209 = vmatmul.mubr.f32.gmra.mrb[0].mxu0 %v1012
        %v1210 = vpop.f32.mrb[0].mxu0
        %v1211 = vadd.f32 %v738, %v1210
        %v1212 = vpop.f32.mrb[0].mxu0
        %1213 = vmatprep.mubr.f32.mxu0 0.0
        %1214 = vmatmul.mubr.f32.gmra.mrb[0].mxu0 %v1014
        %v1215 = vpop.f32.mrb[0].mxu0
        %v1216 = vadd.f32 %v743, %v1215
        %v1217 = vpop.f32.mrb[0].mxu0
        %1218 = vmatprep.mubr.f32.mxu0 0.0
        %1219 = vmatmul.mubr.f32.gmra.mrb[0].mxu0 %v1017
        %v1220 = vpop.f32.mrb[0].mxu0
        %v1221 = vadd.f32 %v748, %v1220
        %v1222 = vpop.f32.mrb[0].mxu0
        %1223 = vmatprep.mubr.f32.mxu0 0.0
        %1224 = vmatmul.mubr.f32.gmra.mrb[0].mxu0 %v1019
        %v1225 = vpop.f32.mrb[0].mxu0
        %v1226 = vadd.f32 %v753, %v1225
        %v1227 = vpop.f32.mrb[0].mxu0
        %1228 = vmatprep.mubr.f32.mxu0 0.0
        %1229 = vmatmul.mubr.f32.gmra.mrb[0].mxu0 %v1017
        %v1230 = vpop.f32.mrb[0].mxu0
        %v1231 = vadd.f32 %v758, %v1230
        %v1232 = vpop.f32.mrb[0].mxu0
        %1233 = vmatprep.mubr.f32.mxu0 0.0
        %1234 = vmatmul.mubr.f32.gmra.mrb[0].mxu0 %v1019
        %v1235 = vpop.f32.mrb[0].mxu0
        %v1236 = vadd.f32 %v763, %v1235
        %v1237 = vpop.f32.mrb[0].mxu0
        %1238 = vmatprep.mubr.f32.mxu0 0.0
        %1239 = vmatmul.mubr.f32.gmra.mrb[0].mxu0 %v1022
        %v1240 = vpop.f32.mrb[0].mxu0
        %v1241 = vadd.f32 %v768, %v1240
        %v1242 = vpop.f32.mrb[0].mxu0
        %1243 = vmatprep.mubr.f32.mxu0 0.0
        %1244 = vmatmul.mubr.f32.gmra.mrb[0].mxu0 %v1024
        %v1245 = vpop.f32.mrb[0].mxu0
        %v1246 = vadd.f32 %v773, %v1245
        %v1247 = vpop.f32.mrb[0].mxu0
        %1248 = vmatprep.mubr.f32.mxu0 0.0
        %1249 = vmatmul.mubr.f32.gmra.mrb[0].mxu0 %v1022
        %v1250 = vpop.f32.mrb[0].mxu0
        %v1251 = vadd.f32 %v778, %v1250
        %v1252 = vpop.f32.mrb[0].mxu0
        %1253 = vmatprep.mubr.f32.mxu0 0.0
        %1254 = vmatmul.mubr.f32.gmra.mrb[0].mxu0 %v1024
        %v1255 = vpop.f32.mrb[0].mxu0
        %v1256 = vadd.f32 %v783, %v1255
        %v1257 = vpop.f32.mrb[0].mxu0
        %1258 = vmatprep.mubr.f32.mxu0 0.0
        %1259 = vmatmul.mubr.f32.gmra.mrb[0].mxu0 %v1027
        %v1260 = vpop.f32.mrb[0].mxu0
        %v1261 = vadd.f32 %v788, %v1260
        %v1262 = vpop.f32.mrb[0].mxu0
        %1263 = vmatprep.mubr.f32.mxu0 0.0
        %1264 = vmatmul.mubr.f32.gmra.mrb[0].mxu0 %v1029
        %v1265 = vpop.f32.mrb[0].mxu0
        %v1266 = vadd.f32 %v793, %v1265
        %v1267 = vpop.f32.mrb[0].mxu0
        %1268 = vmatprep.mubr.f32.mxu0 0.0
        %1269 = vmatmul.mubr.f32.gmra.mrb[0].mxu0 %v1027
        %v1270 = vpop.f32.mrb[0].mxu0
        %v1271 = vadd.f32 %v798, %v1270
        %v1272 = vpop.f32.mrb[0].mxu0
        %1273 = vmatprep.mubr.f32.mxu0 0.0
        %1274 = vmatmul.mubr.f32.gmra.mrb[0].mxu0 %v1029
        %v1275 = vpop.f32.mrb[0].mxu0
        %v1276 = vadd.f32 %v803, %v1275
        %v1277 = vpop.f32.mrb[0].mxu0
        %1278 = vmatprep.mubr.f32.mxu0 0.0
        %1279 = vmatmul.mubr.f32.gmra.mrb[0].mxu0 %v1032
        %v1280 = vpop.f32.mrb[0].mxu0
        %v1281 = vadd.f32 %v808, %v1280
        %v1282 = vpop.f32.mrb[0].mxu0
        %1283 = vmatprep.mubr.f32.mxu0 0.0
        %1284 = vmatmul.mubr.f32.gmra.mrb[0].mxu0 %v1034
        %v1285 = vpop.f32.mrb[0].mxu0
        %v1286 = vadd.f32 %v813, %v1285
        %v1287 = vpop.f32.mrb[0].mxu0
        %1288 = vmatprep.mubr.f32.mxu0 0.0
        %1289 = vmatmul.mubr.f32.gmra.mrb[0].mxu0 %v1032
        %v1290 = vpop.f32.mrb[0].mxu0
        %v1291 = vadd.f32 %v818, %v1290
        %v1292 = vpop.f32.mrb[0].mxu0
        %1293 = vmatprep.mubr.f32.mxu0 0.0
        %1294 = vmatmul.mubr.f32.gmra.mrb[0].mxu0 %v1034
        %v1295 = vpop.f32.mrb[0].mxu0
        %v1296 = vadd.f32 %v823, %v1295
        %v1297 = vpop.f32.mrb[0].mxu0
        %1298 = vmatprep.mubr.f32.mxu0 0.0
        %1299 = vmatmul.mubr.f32.gmra.mrb[0].mxu0 %v1037
        %v1300 = vpop.f32.mrb[0].mxu0
        %v1301 = vadd.f32 %v828, %v1300
        %v1302 = vpop.f32.mrb[0].mxu0
        %1303 = vmatprep.mubr.f32.mxu0 0.0
        %1304 = vmatmul.mubr.f32.gmra.mrb[0].mxu0 %v1039
        %v1305 = vpop.f32.mrb[0].mxu0
        %v1306 = vadd.f32 %v833, %v1305
        %v1307 = vpop.f32.mrb[0].mxu0
        %1308 = vmatprep.mubr.f32.mxu0 0.0
        %1309 = vmatmul.mubr.f32.gmra.mrb[0].mxu0 %v1037
        %v1310 = vpop.f32.mrb[0].mxu0
        %v1311 = vadd.f32 %v838, %v1310
        %v1312 = vpop.f32.mrb[0].mxu0
        %1313 = vmatprep.mubr.f32.mxu0 0.0
        %1314 = vmatmul.mubr.f32.gmra.mrb[0].mxu0 %v1039
        %v1315 = vpop.f32.mrb[0].mxu0
        %v1316 = vadd.f32 %v843, %v1315
        %v1317 = vpop.f32.mrb[0].mxu0
        %1318 = vmatprep.mubr.f32.mxu0 0.0
        %1319 = vmatmul.mubr.f32.gmra.mrb[0].mxu0 %v1042
        %v1320 = vpop.f32.mrb[0].mxu0
        %v1321 = vadd.f32 %v848, %v1320
        %v1322 = vpop.f32.mrb[0].mxu0
        %1323 = vmatprep.mubr.f32.mxu0 0.0
        %1324 = vmatmul.mubr.f32.gmra.mrb[0].mxu0 %v1044
        %v1325 = vpop.f32.mrb[0].mxu0
        %v1326 = vadd.f32 %v853, %v1325
        %v1327 = vpop.f32.mrb[0].mxu0
        %1328 = vmatprep.mubr.f32.mxu0 0.0
        %1329 = vmatmul.mubr.f32.gmra.mrb[0].mxu0 %v1042
        %v1330 = vpop.f32.mrb[0].mxu0
        %v1331 = vadd.f32 %v858, %v1330
        %v1332 = vpop.f32.mrb[0].mxu0
        %1333 = vmatprep.mubr.f32.mxu0 0.0
        %1334 = vmatmul.mubr.f32.gmra.mrb[0].mxu0 %v1044
        %v1335 = vpop.f32.mrb[0].mxu0
        %v1336 = vadd.f32 %v863, %v1335
        %v1337 = vpop.f32.mrb[0].mxu0
        %1338 = vmatprep.mubr.f32.mxu0 0.0
        %1339 = vmatmul.mubr.f32.gmra.mrb[0].mxu0 %v1047
        %v1340 = vpop.f32.mrb[0].mxu0
        %v1341 = vadd.f32 %v868, %v1340
        %v1342 = vpop.f32.mrb[0].mxu0
        %1343 = vmatprep.mubr.f32.mxu0 0.0
        %1344 = vmatmul.mubr.f32.gmra.mrb[0].mxu0 %v1049
        %v1345 = vpop.f32.mrb[0].mxu0
        %v1346 = vadd.f32 %v873, %v1345
        %v1347 = vpop.f32.mrb[0].mxu0
        %1348 = vmatprep.mubr.f32.mxu0 0.0
        %1349 = vmatmul.mubr.f32.gmra.mrb[0].mxu0 %v1047
        %v1350 = vpop.f32.mrb[0].mxu0
        %v1351 = vadd.f32 %v878, %v1350
        %v1352 = vpop.f32.mrb[0].mxu0
        %1353 = vmatprep.mubr.f32.mxu0 0.0
        %1354 = vmatmul.mubr.f32.gmra.mrb[0].mxu0 %v1049
        %v1355 = vpop.f32.mrb[0].mxu0
        %v1356 = vadd.f32 %v883, %v1355
        %v1357 = vpop.f32.mrb[0].mxu0
        %1358 = vmatprep.mubr.f32.mxu0 0.0
        %1359 = vmatmul.mubr.f32.gmra.mrb[0].mxu0 %v1052
        %v1360 = vpop.f32.mrb[0].mxu0
        %v1361 = vadd.f32 %v888, %v1360
        %v1362 = vpop.f32.mrb[0].mxu0
        %1363 = vmatprep.mubr.f32.mxu0 0.0
        %1364 = vmatmul.mubr.f32.gmra.mrb[0].mxu0 %v1054
        %v1365 = vpop.f32.mrb[0].mxu0
        %v1366 = vadd.f32 %v893, %v1365
        %v1367 = vpop.f32.mrb[0].mxu0
        %1368 = vmatprep.mubr.f32.mxu0 0.0
        %1369 = vmatmul.mubr.f32.gmra.mrb[0].mxu0 %v1052
        %v1370 = vpop.f32.mrb[0].mxu0
        %v1371 = vadd.f32 %v898, %v1370
        %v1372 = vpop.f32.mrb[0].mxu0
        %1373 = vmatprep.mubr.f32.mxu0 0.0
        %1374 = vmatmul.mubr.f32.gmra.mrb[0].mxu0 %v1054
        %v1375 = vpop.f32.mrb[0].mxu0
        %v1376 = vadd.f32 %v903, %v1375
        %v1377 = vpop.f32.mrb[0].mxu0
        %1378 = vmatprep.mubr.f32.mxu0 0.0
        %1379 = vmatmul.mubr.f32.gmra.mrb[0].mxu0 %v1057
        %v1380 = vpop.f32.mrb[0].mxu0
        %v1381 = vadd.f32 %v908, %v1380
        %v1382 = vpop.f32.mrb[0].mxu0
        %1383 = vmatprep.mubr.f32.mxu0 0.0
        %1384 = vmatmul.mubr.f32.gmra.mrb[0].mxu0 %v1059
        %v1385 = vpop.f32.mrb[0].mxu0
        %v1386 = vadd.f32 %v913, %v1385
        %v1387 = vpop.f32.mrb[0].mxu0
        %1388 = vmatprep.mubr.f32.mxu0 0.0
        %1389 = vmatmul.mubr.f32.gmra.mrb[0].mxu0 %v1057
        %v1390 = vpop.f32.mrb[0].mxu0
        %v1391 = vadd.f32 %v918, %v1390
        %v1392 = vpop.f32.mrb[0].mxu0
        %1393 = vmatprep.mubr.f32.mxu0 0.0
        %1394 = vmatmul.mubr.f32.gmra.mrb[0].mxu0 %v1059
        %v1395 = vpop.f32.mrb[0].mxu0
        %v1396 = vadd.f32 %v923, %v1395
        %v1397 = vpop.f32.mrb[0].mxu0
        %1398 = vmatprep.mubr.f32.mxu0 0.0
        %1399 = vmatmul.mubr.f32.gmra.mrb[0].mxu0 %v1062
        %v1400 = vpop.f32.mrb[0].mxu0
        %v1401 = vadd.f32 %v928, %v1400
        %v1402 = vpop.f32.mrb[0].mxu0
        %1403 = vmatprep.mubr.f32.mxu0 0.0
        %1404 = vmatmul.mubr.f32.gmra.mrb[0].mxu0 %v1064
        %v1405 = vpop.f32.mrb[0].mxu0
        %v1406 = vadd.f32 %v933, %v1405
        %v1407 = vpop.f32.mrb[0].mxu0
        %1408 = vmatprep.mubr.f32.mxu0 0.0
        %1409 = vmatmul.mubr.f32.gmra.mrb[0].mxu0 %v1062
        %v1410 = vpop.f32.mrb[0].mxu0
        %v1411 = vadd.f32 %v938, %v1410
        %v1412 = vpop.f32.mrb[0].mxu0
        %1413 = vmatprep.mubr.f32.mxu0 0.0
        %1414 = vmatmul.mubr.f32.gmra.mrb[0].mxu0 %v1064
        %v1415 = vpop.f32.mrb[0].mxu0
        %v1416 = vadd.f32 %v943, %v1415
        %v1417 = vpop.f32.mrb[0].mxu0
        %1418 = vmatprep.mubr.f32.mxu0 0.0
        %1419 = vmatmul.mubr.f32.gmra.mrb[0].mxu0 %v1067
        %v1420 = vpop.f32.mrb[0].mxu0
        %v1421 = vadd.f32 %v948, %v1420
        %v1422 = vpop.f32.mrb[0].mxu0
        %1423 = vmatprep.mubr.f32.mxu0 0.0
        %1424 = vmatmul.mubr.f32.gmra.mrb[0].mxu0 %v1069
        %v1425 = vpop.f32.mrb[0].mxu0
        %v1426 = vadd.f32 %v953, %v1425
        %v1427 = vpop.f32.mrb[0].mxu0
        %1428 = vmatprep.mubr.f32.mxu0 0.0
        %1429 = vmatmul.mubr.f32.gmra.mrb[0].mxu0 %v1067
        %v1430 = vpop.f32.mrb[0].mxu0
        %v1431 = vadd.f32 %v958, %v1430
        %v1432 = vpop.f32.mrb[0].mxu0
        %1433 = vmatprep.mubr.f32.mxu0 0.0
        %1434 = vmatmul.mubr.f32.gmra.mrb[0].mxu0 %v1069
        %v1435 = vpop.f32.mrb[0].mxu0
        %v1436 = vadd.f32 %v963, %v1435
        %v1437 = vpop.f32.mrb[0].mxu0
        %1438 = vmatprep.mubr.f32.mxu0 0.0
        %1439 = vmatmul.mubr.f32.gmra.mrb[0].mxu0 %v1072
        %v1440 = vpop.f32.mrb[0].mxu0
        %v1441 = vadd.f32 %v968, %v1440
        %v1442 = vpop.f32.mrb[0].mxu0
        %1443 = vmatprep.mubr.f32.mxu0 0.0
        %1444 = vmatmul.mubr.f32.gmra.mrb[0].mxu0 %v1074
        %v1445 = vpop.f32.mrb[0].mxu0
        %v1446 = vadd.f32 %v973, %v1445
        %v1447 = vpop.f32.mrb[0].mxu0
        %1448 = vmatprep.mubr.f32.mxu0 0.0
        %1449 = vmatmul.mubr.f32.gmra.mrb[0].mxu0 %v1072
        %v1450 = vpop.f32.mrb[0].mxu0
        %v1451 = vadd.f32 %v978, %v1450
        %v1452 = vpop.f32.mrb[0].mxu0
        %1453 = vmatprep.mubr.f32.mxu0 0.0
        %1454 = vmatmul.mubr.f32.gmra.mrb[0].mxu0 %v1074
        %v1455 = vpop.f32.mrb[0].mxu0
        %v1456 = vadd.f32 %v983, %v1455
        %v1457 = vpop.f32.mrb[0].mxu0
        %1458 = vmatprep.mubr.f32.mxu0 0.0
        %1459 = vmatmul.mubr.f32.gmra.mrb[0].mxu0 %v1077
        %v1460 = vpop.f32.mrb[0].mxu0
        %v1461 = vadd.f32 %v988, %v1460
        %v1462 = vpop.f32.mrb[0].mxu0
        %1463 = vmatprep.mubr.f32.mxu0 0.0
        %1464 = vmatmul.mubr.f32.gmra.mrb[0].mxu0 %v1079
        %v1465 = vpop.f32.mrb[0].mxu0
        %v1466 = vadd.f32 %v993, %v1465
        %v1467 = vpop.f32.mrb[0].mxu0
        %1468 = vdwg.mxu0
        %v1469 = vadd.f32 %v532, %v534
        %v1470 = vsel %vm538, %v444, 0
        %v1473 = vsel %vm538, %v514, 0
        %v1475 = vsel %vm538, %v447, 0
        %v1478 = vsel %vm538, %v515, 0
        %v1480 = vsel %vm538, %v450, 0
        %v1483 = vsel %vm538, %v516, 0
        %v1485 = vsel %vm538, %v453, 0
        %v1488 = vsel %vm538, %v517, 0
        %v1490 = vsel %vm538, %v456, 0
        %v1493 = vsel %vm538, %v518, 0
        %v1495 = vsel %vm538, %v459, 0
        %v1498 = vsel %vm538, %v519, 0
        %v1500 = vsel %vm538, %v462, 0
        %v1503 = vsel %vm538, %v520, 0
        %v1505 = vsel %vm538, %v465, 0
        %v1508 = vsel %vm538, %v521, 0
        %v1510 = vsel %vm538, %v468, 0
        %v1513 = vsel %vm538, %v522, 0
        %v1515 = vsel %vm538, %v471, 0
        %v1518 = vsel %vm538, %v523, 0
        %v1520 = vsel %vm538, %v474, 0
        %v1523 = vsel %vm538, %v524, 0
        %v1525 = vsel %vm538, %v477, 0
        %v1528 = vsel %vm538, %v525, 0
        %v1530 = vsel %vm538, %v480, 0
        %v1533 = vsel %vm538, %v526, 0
        %v1535 = vsel %vm538, %v483, 0
        %v1538 = vsel %vm538, %v527, 0
        %v1540 = vsel %vm538, %v486, 0
        %v1543 = vsel %vm538, %v528, 0
        %v1545 = vsel %vm538, %v489, 0
        %v1548 = vsel %vm538, %v529, 0
        %v1550 = vsel %vm538, %v492, 0
        %v1553 = vsel %vm538, %v530, 0
        %v1556 = vsel %vm607, %v536, 0
        %1558 = vmatprep.subr.mxu0 0.0
        %1559 = vmatpush1.msra.mxu0 %v1556
        %1560 = vmatprep.subr.mxu0 0.0
        %1561 = vmatpush1.msra.mxu0 0.0
        %1562 = vmatprep.subr.mxu0 0.0
        %1563 = vmatpush1.msra.mxu0 0.0
        %1564 = vmatprep.subr.mxu0 0.0
        %1565 = vmatpush1.msra.mxu0 0.0
        %1566 = vmatprep.subr.mxu0 0.0
        %1567 = vmatpush1.msra.mxu0 0.0
        %1568 = vmatprep.subr.mxu0 0.0
        %1569 = vmatpush1.msra.mxu0 0.0
        %1570 = vmatprep.subr.mxu0 0.0
        %1571 = vmatpush1.msra.mxu0 0.0
        %1572 = vmatprep.subr.mxu0 0.0
        %1573 = vmatpush1.msra.mxu0 0.0
        %1574 = vmatprep.subr.mxu0 0.0
        %1575 = vmatpush1.msra.mxu0 0.0
        %1576 = vmatprep.subr.mxu0 0.0
        %1577 = vmatpush1.msra.mxu0 0.0
        %1578 = vmatprep.subr.mxu0 0.0
        %1579 = vmatpush1.msra.mxu0 0.0
        %1580 = vmatprep.subr.mxu0 0.0
        %1581 = vmatpush1.msra.mxu0 0.0
        %1582 = vmatprep.subr.mxu0 0.0
        %1583 = vmatpush1.msra.mxu0 0.0
        %1584 = vmatprep.subr.mxu0 0.0
        %1585 = vmatpush1.msra.mxu0 0.0
        %1586 = vmatprep.subr.mxu0 0.0
        %1587 = vmatpush1.msra.mxu0 0.0
        %1588 = vmatprep.subr.mxu0 0.0
        %1589 = vmatpush1.msra.mxu0 0.0
        %1590 = vmatprep.subr.mxu0 0.0
        %1591 = vmatpush1.msra.mxu0 0.0
        %1592 = vmatprep.subr.mxu0 0.0
        %1593 = vmatpush1.msra.mxu0 0.0
        %1594 = vmatprep.subr.mxu0 0.0
        %1595 = vmatpush1.msra.mxu0 0.0
        %1596 = vmatprep.subr.mxu0 0.0
        %1597 = vmatpush1.msra.mxu0 0.0
        %1598 = vmatprep.subr.mxu0 0.0
        %1599 = vmatpush1.msra.mxu0 0.0
        %1600 = vmatprep.subr.mxu0 0.0
        %1601 = vmatpush1.msra.mxu0 0.0
        %1602 = vmatprep.subr.mxu0 0.0
        %1603 = vmatpush1.msra.mxu0 0.0
        %1604 = vmatprep.subr.mxu0 0.0
        %1605 = vmatpush1.msra.mxu0 0.0
        %1606 = vmatprep.subr.mxu0 0.0
        %1607 = vmatpush1.msra.mxu0 0.0
        %1608 = vmatprep.subr.mxu0 0.0
        %1609 = vmatpush1.msra.mxu0 0.0
        %1610 = vmatprep.subr.mxu0 0.0
        %1611 = vmatpush1.msra.mxu0 0.0
        %1612 = vmatprep.subr.mxu0 0.0
        %1613 = vmatpush1.msra.mxu0 0.0
        %1614 = vmatprep.subr.mxu0 0.0
        %1615 = vmatpush1.msra.mxu0 0.0
        %1616 = vmatprep.subr.mxu0 0.0
        %1617 = vmatpush1.msra.mxu0 0.0
        %1618 = vmatprep.subr.mxu0 0.0
        %1619 = vmatpush1.msra.mxu0 0.0
        %1620 = vmatprep.subr.mxu0 0.0
        %1621 = vmatpush1.msra.mxu0 0.0
        %1622 = vmatprep.mubr.f32.mxu0 0.0
        %1623 = vmatmul.mubr.f32.gmra.mrb[0].mxu0 %v1470
        %v1624 = vpop.f32.mrb[0].mxu0
        %v1625 = vadd.f32 0.0, %v1624
        %v1626 = vpop.f32.mrb[0].mxu0
        %1627 = vmatprep.mubr.f32.mxu0 0.0
        %1628 = vmatmul.mubr.f32.gmra.mrb[0].mxu0 %v1473
        %v1629 = vpop.f32.mrb[0].mxu0
        %v1630 = vadd.f32 0.0, %v1629
        %v1631 = vpop.f32.mrb[0].mxu0
        %1632 = vmatprep.mubr.f32.mxu0 0.0
        %1633 = vmatmul.mubr.f32.gmra.mrb[0].mxu0 %v1475
        %v1634 = vpop.f32.mrb[0].mxu0
        %v1635 = vadd.f32 0.0, %v1634
        %v1636 = vpop.f32.mrb[0].mxu0
        %1637 = vmatprep.mubr.f32.mxu0 0.0
        %1638 = vmatmul.mubr.f32.gmra.mrb[0].mxu0 %v1478
        %v1639 = vpop.f32.mrb[0].mxu0
        %v1640 = vadd.f32 0.0, %v1639
        %v1641 = vpop.f32.mrb[0].mxu0
        %1642 = vmatprep.mubr.f32.mxu0 0.0
        %1643 = vmatmul.mubr.f32.gmra.mrb[0].mxu0 %v1475
        %v1644 = vpop.f32.mrb[0].mxu0
        %v1645 = vadd.f32 0.0, %v1644
        %v1646 = vpop.f32.mrb[0].mxu0
        %1647 = vmatprep.mubr.f32.mxu0 0.0
        %1648 = vmatmul.mubr.f32.gmra.mrb[0].mxu0 %v1478
        %v1649 = vpop.f32.mrb[0].mxu0
        %v1650 = vadd.f32 0.0, %v1649
        %v1651 = vpop.f32.mrb[0].mxu0
        %1652 = vmatprep.mubr.f32.mxu0 0.0
        %1653 = vmatmul.mubr.f32.gmra.mrb[0].mxu0 %v1480
        %v1654 = vpop.f32.mrb[0].mxu0
        %v1655 = vadd.f32 0.0, %v1654
        %v1656 = vpop.f32.mrb[0].mxu0
        %1657 = vmatprep.mubr.f32.mxu0 0.0
        %1658 = vmatmul.mubr.f32.gmra.mrb[0].mxu0 %v1483
        %v1659 = vpop.f32.mrb[0].mxu0
        %v1660 = vadd.f32 0.0, %v1659
        %v1661 = vpop.f32.mrb[0].mxu0
        %1662 = vmatprep.mubr.f32.mxu0 0.0
        %1663 = vmatmul.mubr.f32.gmra.mrb[0].mxu0 %v1480
        %v1664 = vpop.f32.mrb[0].mxu0
        %v1665 = vadd.f32 0.0, %v1664
        %v1666 = vpop.f32.mrb[0].mxu0
        %1667 = vmatprep.mubr.f32.mxu0 0.0
        %1668 = vmatmul.mubr.f32.gmra.mrb[0].mxu0 %v1483
        %v1669 = vpop.f32.mrb[0].mxu0
        %v1670 = vadd.f32 0.0, %v1669
        %v1671 = vpop.f32.mrb[0].mxu0
        %1672 = vmatprep.mubr.f32.mxu0 0.0
        %1673 = vmatmul.mubr.f32.gmra.mrb[0].mxu0 %v1485
        %v1674 = vpop.f32.mrb[0].mxu0
        %v1675 = vadd.f32 0.0, %v1674
        %v1676 = vpop.f32.mrb[0].mxu0
        %1677 = vmatprep.mubr.f32.mxu0 0.0
        %1678 = vmatmul.mubr.f32.gmra.mrb[0].mxu0 %v1488
        %v1679 = vpop.f32.mrb[0].mxu0
        %v1680 = vadd.f32 0.0, %v1679
        %v1681 = vpop.f32.mrb[0].mxu0
        %1682 = vmatprep.mubr.f32.mxu0 0.0
        %1683 = vmatmul.mubr.f32.gmra.mrb[0].mxu0 %v1485
        %v1684 = vpop.f32.mrb[0].mxu0
        %v1685 = vadd.f32 0.0, %v1684
        %v1686 = vpop.f32.mrb[0].mxu0
        %1687 = vmatprep.mubr.f32.mxu0 0.0
        %1688 = vmatmul.mubr.f32.gmra.mrb[0].mxu0 %v1488
        %v1689 = vpop.f32.mrb[0].mxu0
        %v1690 = vadd.f32 0.0, %v1689
        %v1691 = vpop.f32.mrb[0].mxu0
        %1692 = vmatprep.mubr.f32.mxu0 0.0
        %1693 = vmatmul.mubr.f32.gmra.mrb[0].mxu0 %v1490
        %v1694 = vpop.f32.mrb[0].mxu0
        %v1695 = vadd.f32 0.0, %v1694
        %v1696 = vpop.f32.mrb[0].mxu0
        %1697 = vmatprep.mubr.f32.mxu0 0.0
        %1698 = vmatmul.mubr.f32.gmra.mrb[0].mxu0 %v1493
        %v1699 = vpop.f32.mrb[0].mxu0
        %v1700 = vadd.f32 0.0, %v1699
        %v1701 = vpop.f32.mrb[0].mxu0
        %1702 = vmatprep.mubr.f32.mxu0 0.0
        %1703 = vmatmul.mubr.f32.gmra.mrb[0].mxu0 %v1490
        %v1704 = vpop.f32.mrb[0].mxu0
        %v1705 = vadd.f32 0.0, %v1704
        %v1706 = vpop.f32.mrb[0].mxu0
        %1707 = vmatprep.mubr.f32.mxu0 0.0
        %1708 = vmatmul.mubr.f32.gmra.mrb[0].mxu0 %v1493
        %v1709 = vpop.f32.mrb[0].mxu0
        %v1710 = vadd.f32 0.0, %v1709
        %v1711 = vpop.f32.mrb[0].mxu0
        %1712 = vmatprep.mubr.f32.mxu0 0.0
        %1713 = vmatmul.mubr.f32.gmra.mrb[0].mxu0 %v1495
        %v1714 = vpop.f32.mrb[0].mxu0
        %v1715 = vadd.f32 0.0, %v1714
        %v1716 = vpop.f32.mrb[0].mxu0
        %1717 = vmatprep.mubr.f32.mxu0 0.0
        %1718 = vmatmul.mubr.f32.gmra.mrb[0].mxu0 %v1498
        %v1719 = vpop.f32.mrb[0].mxu0
        %v1720 = vadd.f32 0.0, %v1719
        %v1721 = vpop.f32.mrb[0].mxu0
        %1722 = vmatprep.mubr.f32.mxu0 0.0
        %1723 = vmatmul.mubr.f32.gmra.mrb[0].mxu0 %v1495
        %v1724 = vpop.f32.mrb[0].mxu0
        %v1725 = vadd.f32 0.0, %v1724
        %v1726 = vpop.f32.mrb[0].mxu0
        %1727 = vmatprep.mubr.f32.mxu0 0.0
        %1728 = vmatmul.mubr.f32.gmra.mrb[0].mxu0 %v1498
        %v1729 = vpop.f32.mrb[0].mxu0
        %v1730 = vadd.f32 0.0, %v1729
        %v1731 = vpop.f32.mrb[0].mxu0
        %1732 = vmatprep.mubr.f32.mxu0 0.0
        %1733 = vmatmul.mubr.f32.gmra.mrb[0].mxu0 %v1500
        %v1734 = vpop.f32.mrb[0].mxu0
        %v1735 = vadd.f32 0.0, %v1734
        %v1736 = vpop.f32.mrb[0].mxu0
        %1737 = vmatprep.mubr.f32.mxu0 0.0
        %1738 = vmatmul.mubr.f32.gmra.mrb[0].mxu0 %v1503
        %v1739 = vpop.f32.mrb[0].mxu0
        %v1740 = vadd.f32 0.0, %v1739
        %v1741 = vpop.f32.mrb[0].mxu0
        %1742 = vmatprep.mubr.f32.mxu0 0.0
        %1743 = vmatmul.mubr.f32.gmra.mrb[0].mxu0 %v1500
        %v1744 = vpop.f32.mrb[0].mxu0
        %v1745 = vadd.f32 0.0, %v1744
        %v1746 = vpop.f32.mrb[0].mxu0
        %1747 = vmatprep.mubr.f32.mxu0 0.0
        %1748 = vmatmul.mubr.f32.gmra.mrb[0].mxu0 %v1503
        %v1749 = vpop.f32.mrb[0].mxu0
        %v1750 = vadd.f32 0.0, %v1749
        %v1751 = vpop.f32.mrb[0].mxu0
        %1752 = vmatprep.mubr.f32.mxu0 0.0
        %1753 = vmatmul.mubr.f32.gmra.mrb[0].mxu0 %v1505
        %v1754 = vpop.f32.mrb[0].mxu0
        %v1755 = vadd.f32 0.0, %v1754
        %v1756 = vpop.f32.mrb[0].mxu0
        %1757 = vmatprep.mubr.f32.mxu0 0.0
        %1758 = vmatmul.mubr.f32.gmra.mrb[0].mxu0 %v1508
        %v1759 = vpop.f32.mrb[0].mxu0
        %v1760 = vadd.f32 0.0, %v1759
        %v1761 = vpop.f32.mrb[0].mxu0
        %1762 = vmatprep.mubr.f32.mxu0 0.0
        %1763 = vmatmul.mubr.f32.gmra.mrb[0].mxu0 %v1505
        %v1764 = vpop.f32.mrb[0].mxu0
        %v1765 = vadd.f32 0.0, %v1764
        %v1766 = vpop.f32.mrb[0].mxu0
        %1767 = vmatprep.mubr.f32.mxu0 0.0
        %1768 = vmatmul.mubr.f32.gmra.mrb[0].mxu0 %v1508
        %v1769 = vpop.f32.mrb[0].mxu0
        %v1770 = vadd.f32 0.0, %v1769
        %v1771 = vpop.f32.mrb[0].mxu0
        %1772 = vmatprep.mubr.f32.mxu0 0.0
        %1773 = vmatmul.mubr.f32.gmra.mrb[0].mxu0 %v1510
        %v1774 = vpop.f32.mrb[0].mxu0
        %v1775 = vadd.f32 0.0, %v1774
        %v1776 = vpop.f32.mrb[0].mxu0
        %1777 = vmatprep.mubr.f32.mxu0 0.0
        %1778 = vmatmul.mubr.f32.gmra.mrb[0].mxu0 %v1513
        %v1779 = vpop.f32.mrb[0].mxu0
        %v1780 = vadd.f32 0.0, %v1779
        %v1781 = vpop.f32.mrb[0].mxu0
        %1782 = vmatprep.mubr.f32.mxu0 0.0
        %1783 = vmatmul.mubr.f32.gmra.mrb[0].mxu0 %v1510
        %v1784 = vpop.f32.mrb[0].mxu0
        %v1785 = vadd.f32 0.0, %v1784
        %v1786 = vpop.f32.mrb[0].mxu0
        %1787 = vmatprep.mubr.f32.mxu0 0.0
        %1788 = vmatmul.mubr.f32.gmra.mrb[0].mxu0 %v1513
        %v1789 = vpop.f32.mrb[0].mxu0
        %v1790 = vadd.f32 0.0, %v1789
        %v1791 = vpop.f32.mrb[0].mxu0
        %1792 = vmatprep.mubr.f32.mxu0 0.0
        %1793 = vmatmul.mubr.f32.gmra.mrb[0].mxu0 %v1515
        %v1794 = vpop.f32.mrb[0].mxu0
        %v1795 = vadd.f32 0.0, %v1794
        %v1796 = vpop.f32.mrb[0].mxu0
        %1797 = vmatprep.mubr.f32.mxu0 0.0
        %1798 = vmatmul.mubr.f32.gmra.mrb[0].mxu0 %v1518
        %v1799 = vpop.f32.mrb[0].mxu0
        %v1800 = vadd.f32 0.0, %v1799
        %v1801 = vpop.f32.mrb[0].mxu0
        %1802 = vmatprep.mubr.f32.mxu0 0.0
        %1803 = vmatmul.mubr.f32.gmra.mrb[0].mxu0 %v1515
        %v1804 = vpop.f32.mrb[0].mxu0
        %v1805 = vadd.f32 0.0, %v1804
        %v1806 = vpop.f32.mrb[0].mxu0
        %1807 = vmatprep.mubr.f32.mxu0 0.0
        %1808 = vmatmul.mubr.f32.gmra.mrb[0].mxu0 %v1518
        %v1809 = vpop.f32.mrb[0].mxu0
        %v1810 = vadd.f32 0.0, %v1809
        %v1811 = vpop.f32.mrb[0].mxu0
        %1812 = vmatprep.mubr.f32.mxu0 0.0
        %1813 = vmatmul.mubr.f32.gmra.mrb[0].mxu0 %v1520
        %v1814 = vpop.f32.mrb[0].mxu0
        %v1815 = vadd.f32 0.0, %v1814
        %v1816 = vpop.f32.mrb[0].mxu0
        %1817 = vmatprep.mubr.f32.mxu0 0.0
        %1818 = vmatmul.mubr.f32.gmra.mrb[0].mxu0 %v1523
        %v1819 = vpop.f32.mrb[0].mxu0
        %v1820 = vadd.f32 0.0, %v1819
        %v1821 = vpop.f32.mrb[0].mxu0
        %1822 = vmatprep.mubr.f32.mxu0 0.0
        %1823 = vmatmul.mubr.f32.gmra.mrb[0].mxu0 %v1520
        %v1824 = vpop.f32.mrb[0].mxu0
        %v1825 = vadd.f32 0.0, %v1824
        %v1826 = vpop.f32.mrb[0].mxu0
        %1827 = vmatprep.mubr.f32.mxu0 0.0
        %1828 = vmatmul.mubr.f32.gmra.mrb[0].mxu0 %v1523
        %v1829 = vpop.f32.mrb[0].mxu0
        %v1830 = vadd.f32 0.0, %v1829
        %v1831 = vpop.f32.mrb[0].mxu0
        %1832 = vmatprep.mubr.f32.mxu0 0.0
        %1833 = vmatmul.mubr.f32.gmra.mrb[0].mxu0 %v1525
        %v1834 = vpop.f32.mrb[0].mxu0
        %v1835 = vadd.f32 0.0, %v1834
        %v1836 = vpop.f32.mrb[0].mxu0
        %1837 = vmatprep.mubr.f32.mxu0 0.0
        %1838 = vmatmul.mubr.f32.gmra.mrb[0].mxu0 %v1528
        %v1839 = vpop.f32.mrb[0].mxu0
        %v1840 = vadd.f32 0.0, %v1839
        %v1841 = vpop.f32.mrb[0].mxu0
        %1842 = vmatprep.mubr.f32.mxu0 0.0
        %1843 = vmatmul.mubr.f32.gmra.mrb[0].mxu0 %v1525
        %v1844 = vpop.f32.mrb[0].mxu0
        %v1845 = vadd.f32 0.0, %v1844
        %v1846 = vpop.f32.mrb[0].mxu0
        %1847 = vmatprep.mubr.f32.mxu0 0.0
        %1848 = vmatmul.mubr.f32.gmra.mrb[0].mxu0 %v1528
        %v1849 = vpop.f32.mrb[0].mxu0
        %v1850 = vadd.f32 0.0, %v1849
        %v1851 = vpop.f32.mrb[0].mxu0
        %1852 = vmatprep.mubr.f32.mxu0 0.0
        %1853 = vmatmul.mubr.f32.gmra.mrb[0].mxu0 %v1530
        %v1854 = vpop.f32.mrb[0].mxu0
        %v1855 = vadd.f32 0.0, %v1854
        %v1856 = vpop.f32.mrb[0].mxu0
        %1857 = vmatprep.mubr.f32.mxu0 0.0
        %1858 = vmatmul.mubr.f32.gmra.mrb[0].mxu0 %v1533
        %v1859 = vpop.f32.mrb[0].mxu0
        %v1860 = vadd.f32 0.0, %v1859
        %v1861 = vpop.f32.mrb[0].mxu0
        %1862 = vmatprep.mubr.f32.mxu0 0.0
        %1863 = vmatmul.mubr.f32.gmra.mrb[0].mxu0 %v1530
        %v1864 = vpop.f32.mrb[0].mxu0
        %v1865 = vadd.f32 0.0, %v1864
        %v1866 = vpop.f32.mrb[0].mxu0
        %1867 = vmatprep.mubr.f32.mxu0 0.0
        %1868 = vmatmul.mubr.f32.gmra.mrb[0].mxu0 %v1533
        %v1869 = vpop.f32.mrb[0].mxu0
        %v1870 = vadd.f32 0.0, %v1869
        %v1871 = vpop.f32.mrb[0].mxu0
        %1872 = vmatprep.mubr.f32.mxu0 0.0
        %1873 = vmatmul.mubr.f32.gmra.mrb[0].mxu0 %v1535
        %v1874 = vpop.f32.mrb[0].mxu0
        %v1875 = vadd.f32 0.0, %v1874
        %v1876 = vpop.f32.mrb[0].mxu0
        %1877 = vmatprep.mubr.f32.mxu0 0.0
        %1878 = vmatmul.mubr.f32.gmra.mrb[0].mxu0 %v1538
        %v1879 = vpop.f32.mrb[0].mxu0
        %v1880 = vadd.f32 0.0, %v1879
        %v1881 = vpop.f32.mrb[0].mxu0
        %1882 = vmatprep.mubr.f32.mxu0 0.0
        %1883 = vmatmul.mubr.f32.gmra.mrb[0].mxu0 %v1535
        %v1884 = vpop.f32.mrb[0].mxu0
        %v1885 = vadd.f32 0.0, %v1884
        %v1886 = vpop.f32.mrb[0].mxu0
        %1887 = vmatprep.mubr.f32.mxu0 0.0
        %1888 = vmatmul.mubr.f32.gmra.mrb[0].mxu0 %v1538
        %v1889 = vpop.f32.mrb[0].mxu0
        %v1890 = vadd.f32 0.0, %v1889
        %v1891 = vpop.f32.mrb[0].mxu0
        %1892 = vmatprep.mubr.f32.mxu0 0.0
        %1893 = vmatmul.mubr.f32.gmra.mrb[0].mxu0 %v1540
        %v1894 = vpop.f32.mrb[0].mxu0
        %v1895 = vadd.f32 0.0, %v1894
        %v1896 = vpop.f32.mrb[0].mxu0
        %1897 = vmatprep.mubr.f32.mxu0 0.0
        %1898 = vmatmul.mubr.f32.gmra.mrb[0].mxu0 %v1543
        %v1899 = vpop.f32.mrb[0].mxu0
        %v1900 = vadd.f32 0.0, %v1899
        %v1901 = vpop.f32.mrb[0].mxu0
        %1902 = vmatprep.mubr.f32.mxu0 0.0
        %1903 = vmatmul.mubr.f32.gmra.mrb[0].mxu0 %v1540
        %v1904 = vpop.f32.mrb[0].mxu0
        %v1905 = vadd.f32 0.0, %v1904
        %v1906 = vpop.f32.mrb[0].mxu0
        %1907 = vmatprep.mubr.f32.mxu0 0.0
        %1908 = vmatmul.mubr.f32.gmra.mrb[0].mxu0 %v1543
        %v1909 = vpop.f32.mrb[0].mxu0
        %v1910 = vadd.f32 0.0, %v1909
        %v1911 = vpop.f32.mrb[0].mxu0
        %1912 = vmatprep.mubr.f32.mxu0 0.0
        %1913 = vmatmul.mubr.f32.gmra.mrb[0].mxu0 %v1545
        %v1914 = vpop.f32.mrb[0].mxu0
        %v1915 = vadd.f32 0.0, %v1914
        %v1916 = vpop.f32.mrb[0].mxu0
        %1917 = vmatprep.mubr.f32.mxu0 0.0
        %1918 = vmatmul.mubr.f32.gmra.mrb[0].mxu0 %v1548
        %v1919 = vpop.f32.mrb[0].mxu0
        %v1920 = vadd.f32 0.0, %v1919
        %v1921 = vpop.f32.mrb[0].mxu0
        %1922 = vmatprep.mubr.f32.mxu0 0.0
        %1923 = vmatmul.mubr.f32.gmra.mrb[0].mxu0 %v1545
        %v1924 = vpop.f32.mrb[0].mxu0
        %v1925 = vadd.f32 0.0, %v1924
        %v1926 = vpop.f32.mrb[0].mxu0
        %1927 = vmatprep.mubr.f32.mxu0 0.0
        %1928 = vmatmul.mubr.f32.gmra.mrb[0].mxu0 %v1548
        %v1929 = vpop.f32.mrb[0].mxu0
        %v1930 = vadd.f32 0.0, %v1929
        %v1931 = vpop.f32.mrb[0].mxu0
        %1932 = vmatprep.mubr.f32.mxu0 0.0
        %1933 = vmatmul.mubr.f32.gmra.mrb[0].mxu0 %v1550
        %v1934 = vpop.f32.mrb[0].mxu0
        %v1935 = vadd.f32 0.0, %v1934
        %v1936 = vpop.f32.mrb[0].mxu0
        %1937 = vmatprep.mubr.f32.mxu0 0.0
        %1938 = vmatmul.mubr.f32.gmra.mrb[0].mxu0 %v1553
        %v1939 = vpop.f32.mrb[0].mxu0
        %v1940 = vadd.f32 0.0, %v1939
        %v1941 = vpop.f32.mrb[0].mxu0
        %1942 = vdwg.mxu0
        %v1944 = vsel %vm607, %v1469, 0
        %1946 = vmatprep.subr.mxu0 0.0
        %1947 = vmatpush1.msra.mxu0 %v1944
        %1948 = vmatprep.subr.mxu0 0.0
        %1949 = vmatpush1.msra.mxu0 0.0
        %1950 = vmatprep.subr.mxu0 0.0
        %1951 = vmatpush1.msra.mxu0 0.0
        %1952 = vmatprep.subr.mxu0 0.0
        %1953 = vmatpush1.msra.mxu0 0.0
        %1954 = vmatprep.subr.mxu0 0.0
        %1955 = vmatpush1.msra.mxu0 0.0
        %1956 = vmatprep.subr.mxu0 0.0
        %1957 = vmatpush1.msra.mxu0 0.0
        %1958 = vmatprep.subr.mxu0 0.0
        %1959 = vmatpush1.msra.mxu0 0.0
        %1960 = vmatprep.subr.mxu0 0.0
        %1961 = vmatpush1.msra.mxu0 0.0
        %1962 = vmatprep.subr.mxu0 0.0
        %1963 = vmatpush1.msra.mxu0 0.0
        %1964 = vmatprep.subr.mxu0 0.0
        %1965 = vmatpush1.msra.mxu0 0.0
        %1966 = vmatprep.subr.mxu0 0.0
        %1967 = vmatpush1.msra.mxu0 0.0
        %1968 = vmatprep.subr.mxu0 0.0
        %1969 = vmatpush1.msra.mxu0 0.0
        %1970 = vmatprep.subr.mxu0 0.0
        %1971 = vmatpush1.msra.mxu0 0.0
        %1972 = vmatprep.subr.mxu0 0.0
        %1973 = vmatpush1.msra.mxu0 0.0
        %1974 = vmatprep.subr.mxu0 0.0
        %1975 = vmatpush1.msra.mxu0 0.0
        %1976 = vmatprep.subr.mxu0 0.0
        %1977 = vmatpush1.msra.mxu0 0.0
        %1978 = vmatprep.subr.mxu0 0.0
        %1979 = vmatpush1.msra.mxu0 0.0
        %1980 = vmatprep.subr.mxu0 0.0
        %1981 = vmatpush1.msra.mxu0 0.0
        %1982 = vmatprep.subr.mxu0 0.0
        %1983 = vmatpush1.msra.mxu0 0.0
        %1984 = vmatprep.subr.mxu0 0.0
        %1985 = vmatpush1.msra.mxu0 0.0
        %1986 = vmatprep.subr.mxu0 0.0
        %1987 = vmatpush1.msra.mxu0 0.0
        %1988 = vmatprep.subr.mxu0 0.0
        %1989 = vmatpush1.msra.mxu0 0.0
        %1990 = vmatprep.subr.mxu0 0.0
        %1991 = vmatpush1.msra.mxu0 0.0
        %1992 = vmatprep.subr.mxu0 0.0
        %1993 = vmatpush1.msra.mxu0 0.0
        %1994 = vmatprep.subr.mxu0 0.0
        %1995 = vmatpush1.msra.mxu0 0.0
        %1996 = vmatprep.subr.mxu0 0.0
        %1997 = vmatpush1.msra.mxu0 0.0
        %1998 = vmatprep.subr.mxu0 0.0
        %1999 = vmatpush1.msra.mxu0 0.0
        %2000 = vmatprep.subr.mxu0 0.0
        %2001 = vmatpush1.msra.mxu0 0.0
        %2002 = vmatprep.subr.mxu0 0.0
        %2003 = vmatpush1.msra.mxu0 0.0
        %2004 = vmatprep.subr.mxu0 0.0
        %2005 = vmatpush1.msra.mxu0 0.0
        %2006 = vmatprep.subr.mxu0 0.0
        %2007 = vmatpush1.msra.mxu0 0.0
        %2008 = vmatprep.subr.mxu0 0.0
        %2009 = vmatpush1.msra.mxu0 0.0
        %2010 = vmatprep.mubr.f32.mxu0 0.0
        %2011 = vmatmul.mubr.f32.gmra.mrb[0].mxu0 %v539
        %v2012 = vpop.f32.mrb[0].mxu0
        %v2013 = vadd.f32 %v1625, %v2012
        %v2014 = vpop.f32.mrb[0].mxu0
        %2015 = vmatprep.mubr.f32.mxu0 0.0
        %2016 = vmatmul.mubr.f32.gmra.mrb[0].mxu0 %v541
        %v2017 = vpop.f32.mrb[0].mxu0
        %v2018 = vadd.f32 %v1630, %v2017
        %v2019 = vpop.f32.mrb[0].mxu0
        %2020 = vmatprep.mubr.f32.mxu0 0.0
        %2021 = vmatmul.mubr.f32.gmra.mrb[0].mxu0 %v543
        %v2022 = vpop.f32.mrb[0].mxu0
        %v2023 = vadd.f32 %v1635, %v2022
        %v2024 = vpop.f32.mrb[0].mxu0
        %2025 = vmatprep.mubr.f32.mxu0 0.0
        %2026 = vmatmul.mubr.f32.gmra.mrb[0].mxu0 %v545
        %v2027 = vpop.f32.mrb[0].mxu0
        %v2028 = vadd.f32 %v1640, %v2027
        %v2029 = vpop.f32.mrb[0].mxu0
        %2030 = vmatprep.mubr.f32.mxu0 0.0
        %2031 = vmatmul.mubr.f32.gmra.mrb[0].mxu0 %v543
        %v2032 = vpop.f32.mrb[0].mxu0
        %v2033 = vadd.f32 %v1645, %v2032
        %v2034 = vpop.f32.mrb[0].mxu0
        %2035 = vmatprep.mubr.f32.mxu0 0.0
        %2036 = vmatmul.mubr.f32.gmra.mrb[0].mxu0 %v545
        %v2037 = vpop.f32.mrb[0].mxu0
        %v2038 = vadd.f32 %v1650, %v2037
        %v2039 = vpop.f32.mrb[0].mxu0
        %2040 = vmatprep.mubr.f32.mxu0 0.0
        %2041 = vmatmul.mubr.f32.gmra.mrb[0].mxu0 %v547
        %v2042 = vpop.f32.mrb[0].mxu0
        %v2043 = vadd.f32 %v1655, %v2042
        %v2044 = vpop.f32.mrb[0].mxu0
        %2045 = vmatprep.mubr.f32.mxu0 0.0
        %2046 = vmatmul.mubr.f32.gmra.mrb[0].mxu0 %v549
        %v2047 = vpop.f32.mrb[0].mxu0
        %v2048 = vadd.f32 %v1660, %v2047
        %v2049 = vpop.f32.mrb[0].mxu0
        %2050 = vmatprep.mubr.f32.mxu0 0.0
        %2051 = vmatmul.mubr.f32.gmra.mrb[0].mxu0 %v547
        %v2052 = vpop.f32.mrb[0].mxu0
        %v2053 = vadd.f32 %v1665, %v2052
        %v2054 = vpop.f32.mrb[0].mxu0
        %2055 = vmatprep.mubr.f32.mxu0 0.0
        %2056 = vmatmul.mubr.f32.gmra.mrb[0].mxu0 %v549
        %v2057 = vpop.f32.mrb[0].mxu0
        %v2058 = vadd.f32 %v1670, %v2057
        %v2059 = vpop.f32.mrb[0].mxu0
        %2060 = vmatprep.mubr.f32.mxu0 0.0
        %2061 = vmatmul.mubr.f32.gmra.mrb[0].mxu0 %v551
        %v2062 = vpop.f32.mrb[0].mxu0
        %v2063 = vadd.f32 %v1675, %v2062
        %v2064 = vpop.f32.mrb[0].mxu0
        %2065 = vmatprep.mubr.f32.mxu0 0.0
        %2066 = vmatmul.mubr.f32.gmra.mrb[0].mxu0 %v553
        %v2067 = vpop.f32.mrb[0].mxu0
        %v2068 = vadd.f32 %v1680, %v2067
        %v2069 = vpop.f32.mrb[0].mxu0
        %2070 = vmatprep.mubr.f32.mxu0 0.0
        %2071 = vmatmul.mubr.f32.gmra.mrb[0].mxu0 %v551
        %v2072 = vpop.f32.mrb[0].mxu0
        %v2073 = vadd.f32 %v1685, %v2072
        %v2074 = vpop.f32.mrb[0].mxu0
        %2075 = vmatprep.mubr.f32.mxu0 0.0
        %2076 = vmatmul.mubr.f32.gmra.mrb[0].mxu0 %v553
        %v2077 = vpop.f32.mrb[0].mxu0
        %v2078 = vadd.f32 %v1690, %v2077
        %v2079 = vpop.f32.mrb[0].mxu0
        %2080 = vmatprep.mubr.f32.mxu0 0.0
        %2081 = vmatmul.mubr.f32.gmra.mrb[0].mxu0 %v555
        %v2082 = vpop.f32.mrb[0].mxu0
        %v2083 = vadd.f32 %v1695, %v2082
        %v2084 = vpop.f32.mrb[0].mxu0
        %2085 = vmatprep.mubr.f32.mxu0 0.0
        %2086 = vmatmul.mubr.f32.gmra.mrb[0].mxu0 %v557
        %v2087 = vpop.f32.mrb[0].mxu0
        %v2088 = vadd.f32 %v1700, %v2087
        %v2089 = vpop.f32.mrb[0].mxu0
        %2090 = vmatprep.mubr.f32.mxu0 0.0
        %2091 = vmatmul.mubr.f32.gmra.mrb[0].mxu0 %v555
        %v2092 = vpop.f32.mrb[0].mxu0
        %v2093 = vadd.f32 %v1705, %v2092
        %v2094 = vpop.f32.mrb[0].mxu0
        %2095 = vmatprep.mubr.f32.mxu0 0.0
        %2096 = vmatmul.mubr.f32.gmra.mrb[0].mxu0 %v557
        %v2097 = vpop.f32.mrb[0].mxu0
        %v2098 = vadd.f32 %v1710, %v2097
        %v2099 = vpop.f32.mrb[0].mxu0
        %2100 = vmatprep.mubr.f32.mxu0 0.0
        %2101 = vmatmul.mubr.f32.gmra.mrb[0].mxu0 %v559
        %v2102 = vpop.f32.mrb[0].mxu0
        %v2103 = vadd.f32 %v1715, %v2102
        %v2104 = vpop.f32.mrb[0].mxu0
        %2105 = vmatprep.mubr.f32.mxu0 0.0
        %2106 = vmatmul.mubr.f32.gmra.mrb[0].mxu0 %v561
        %v2107 = vpop.f32.mrb[0].mxu0
        %v2108 = vadd.f32 %v1720, %v2107
        %v2109 = vpop.f32.mrb[0].mxu0
        %2110 = vmatprep.mubr.f32.mxu0 0.0
        %2111 = vmatmul.mubr.f32.gmra.mrb[0].mxu0 %v559
        %v2112 = vpop.f32.mrb[0].mxu0
        %v2113 = vadd.f32 %v1725, %v2112
        %v2114 = vpop.f32.mrb[0].mxu0
        %2115 = vmatprep.mubr.f32.mxu0 0.0
        %2116 = vmatmul.mubr.f32.gmra.mrb[0].mxu0 %v561
        %v2117 = vpop.f32.mrb[0].mxu0
        %v2118 = vadd.f32 %v1730, %v2117
        %v2119 = vpop.f32.mrb[0].mxu0
        %2120 = vmatprep.mubr.f32.mxu0 0.0
        %2121 = vmatmul.mubr.f32.gmra.mrb[0].mxu0 %v563
        %v2122 = vpop.f32.mrb[0].mxu0
        %v2123 = vadd.f32 %v1735, %v2122
        %v2124 = vpop.f32.mrb[0].mxu0
        %2125 = vmatprep.mubr.f32.mxu0 0.0
        %2126 = vmatmul.mubr.f32.gmra.mrb[0].mxu0 %v565
        %v2127 = vpop.f32.mrb[0].mxu0
        %v2128 = vadd.f32 %v1740, %v2127
        %v2129 = vpop.f32.mrb[0].mxu0
        %2130 = vmatprep.mubr.f32.mxu0 0.0
        %2131 = vmatmul.mubr.f32.gmra.mrb[0].mxu0 %v563
        %v2132 = vpop.f32.mrb[0].mxu0
        %v2133 = vadd.f32 %v1745, %v2132
        %v2134 = vpop.f32.mrb[0].mxu0
        %2135 = vmatprep.mubr.f32.mxu0 0.0
        %2136 = vmatmul.mubr.f32.gmra.mrb[0].mxu0 %v565
        %v2137 = vpop.f32.mrb[0].mxu0
        %v2138 = vadd.f32 %v1750, %v2137
        %v2139 = vpop.f32.mrb[0].mxu0
        %2140 = vmatprep.mubr.f32.mxu0 0.0
        %2141 = vmatmul.mubr.f32.gmra.mrb[0].mxu0 %v567
        %v2142 = vpop.f32.mrb[0].mxu0
        %v2143 = vadd.f32 %v1755, %v2142
        %v2144 = vpop.f32.mrb[0].mxu0
        %2145 = vmatprep.mubr.f32.mxu0 0.0
        %2146 = vmatmul.mubr.f32.gmra.mrb[0].mxu0 %v569
        %v2147 = vpop.f32.mrb[0].mxu0
        %v2148 = vadd.f32 %v1760, %v2147
        %v2149 = vpop.f32.mrb[0].mxu0
        %2150 = vmatprep.mubr.f32.mxu0 0.0
        %2151 = vmatmul.mubr.f32.gmra.mrb[0].mxu0 %v567
        %v2152 = vpop.f32.mrb[0].mxu0
        %v2153 = vadd.f32 %v1765, %v2152
        %v2154 = vpop.f32.mrb[0].mxu0
        %2155 = vmatprep.mubr.f32.mxu0 0.0
        %2156 = vmatmul.mubr.f32.gmra.mrb[0].mxu0 %v569
        %v2157 = vpop.f32.mrb[0].mxu0
        %v2158 = vadd.f32 %v1770, %v2157
        %v2159 = vpop.f32.mrb[0].mxu0
        %2160 = vmatprep.mubr.f32.mxu0 0.0
        %2161 = vmatmul.mubr.f32.gmra.mrb[0].mxu0 %v571
        %v2162 = vpop.f32.mrb[0].mxu0
        %v2163 = vadd.f32 %v1775, %v2162
        %v2164 = vpop.f32.mrb[0].mxu0
        %2165 = vmatprep.mubr.f32.mxu0 0.0
        %2166 = vmatmul.mubr.f32.gmra.mrb[0].mxu0 %v573
        %v2167 = vpop.f32.mrb[0].mxu0
        %v2168 = vadd.f32 %v1780, %v2167
        %v2169 = vpop.f32.mrb[0].mxu0
        %2170 = vmatprep.mubr.f32.mxu0 0.0
        %2171 = vmatmul.mubr.f32.gmra.mrb[0].mxu0 %v571
        %v2172 = vpop.f32.mrb[0].mxu0
        %v2173 = vadd.f32 %v1785, %v2172
        %v2174 = vpop.f32.mrb[0].mxu0
        %2175 = vmatprep.mubr.f32.mxu0 0.0
        %2176 = vmatmul.mubr.f32.gmra.mrb[0].mxu0 %v573
        %v2177 = vpop.f32.mrb[0].mxu0
        %v2178 = vadd.f32 %v1790, %v2177
        %v2179 = vpop.f32.mrb[0].mxu0
        %2180 = vmatprep.mubr.f32.mxu0 0.0
        %2181 = vmatmul.mubr.f32.gmra.mrb[0].mxu0 %v575
        %v2182 = vpop.f32.mrb[0].mxu0
        %v2183 = vadd.f32 %v1795, %v2182
        %v2184 = vpop.f32.mrb[0].mxu0
        %2185 = vmatprep.mubr.f32.mxu0 0.0
        %2186 = vmatmul.mubr.f32.gmra.mrb[0].mxu0 %v577
        %v2187 = vpop.f32.mrb[0].mxu0
        %v2188 = vadd.f32 %v1800, %v2187
        %v2189 = vpop.f32.mrb[0].mxu0
        %2190 = vmatprep.mubr.f32.mxu0 0.0
        %2191 = vmatmul.mubr.f32.gmra.mrb[0].mxu0 %v575
        %v2192 = vpop.f32.mrb[0].mxu0
        %v2193 = vadd.f32 %v1805, %v2192
        %v2194 = vpop.f32.mrb[0].mxu0
        %2195 = vmatprep.mubr.f32.mxu0 0.0
        %2196 = vmatmul.mubr.f32.gmra.mrb[0].mxu0 %v577
        %v2197 = vpop.f32.mrb[0].mxu0
        %v2198 = vadd.f32 %v1810, %v2197
        %v2199 = vpop.f32.mrb[0].mxu0
        %2200 = vmatprep.mubr.f32.mxu0 0.0
        %2201 = vmatmul.mubr.f32.gmra.mrb[0].mxu0 %v579
        %v2202 = vpop.f32.mrb[0].mxu0
        %v2203 = vadd.f32 %v1815, %v2202
        %v2204 = vpop.f32.mrb[0].mxu0
        %2205 = vmatprep.mubr.f32.mxu0 0.0
        %2206 = vmatmul.mubr.f32.gmra.mrb[0].mxu0 %v581
        %v2207 = vpop.f32.mrb[0].mxu0
        %v2208 = vadd.f32 %v1820, %v2207
        %v2209 = vpop.f32.mrb[0].mxu0
        %2210 = vmatprep.mubr.f32.mxu0 0.0
        %2211 = vmatmul.mubr.f32.gmra.mrb[0].mxu0 %v579
        %v2212 = vpop.f32.mrb[0].mxu0
        %v2213 = vadd.f32 %v1825, %v2212
        %v2214 = vpop.f32.mrb[0].mxu0
        %2215 = vmatprep.mubr.f32.mxu0 0.0
        %2216 = vmatmul.mubr.f32.gmra.mrb[0].mxu0 %v581
        %v2217 = vpop.f32.mrb[0].mxu0
        %v2218 = vadd.f32 %v1830, %v2217
        %v2219 = vpop.f32.mrb[0].mxu0
        %2220 = vmatprep.mubr.f32.mxu0 0.0
        %2221 = vmatmul.mubr.f32.gmra.mrb[0].mxu0 %v583
        %v2222 = vpop.f32.mrb[0].mxu0
        %v2223 = vadd.f32 %v1835, %v2222
        %v2224 = vpop.f32.mrb[0].mxu0
        %2225 = vmatprep.mubr.f32.mxu0 0.0
        %2226 = vmatmul.mubr.f32.gmra.mrb[0].mxu0 %v585
        %v2227 = vpop.f32.mrb[0].mxu0
        %v2228 = vadd.f32 %v1840, %v2227
        %v2229 = vpop.f32.mrb[0].mxu0
        %2230 = vmatprep.mubr.f32.mxu0 0.0
        %2231 = vmatmul.mubr.f32.gmra.mrb[0].mxu0 %v583
        %v2232 = vpop.f32.mrb[0].mxu0
        %v2233 = vadd.f32 %v1845, %v2232
        %v2234 = vpop.f32.mrb[0].mxu0
        %2235 = vmatprep.mubr.f32.mxu0 0.0
        %2236 = vmatmul.mubr.f32.gmra.mrb[0].mxu0 %v585
        %v2237 = vpop.f32.mrb[0].mxu0
        %v2238 = vadd.f32 %v1850, %v2237
        %v2239 = vpop.f32.mrb[0].mxu0
        %2240 = vmatprep.mubr.f32.mxu0 0.0
        %2241 = vmatmul.mubr.f32.gmra.mrb[0].mxu0 %v587
        %v2242 = vpop.f32.mrb[0].mxu0
        %v2243 = vadd.f32 %v1855, %v2242
        %v2244 = vpop.f32.mrb[0].mxu0
        %2245 = vmatprep.mubr.f32.mxu0 0.0
        %2246 = vmatmul.mubr.f32.gmra.mrb[0].mxu0 %v589
        %v2247 = vpop.f32.mrb[0].mxu0
        %v2248 = vadd.f32 %v1860, %v2247
        %v2249 = vpop.f32.mrb[0].mxu0
        %2250 = vmatprep.mubr.f32.mxu0 0.0
        %2251 = vmatmul.mubr.f32.gmra.mrb[0].mxu0 %v587
        %v2252 = vpop.f32.mrb[0].mxu0
        %v2253 = vadd.f32 %v1865, %v2252
        %v2254 = vpop.f32.mrb[0].mxu0
        %2255 = vmatprep.mubr.f32.mxu0 0.0
        %2256 = vmatmul.mubr.f32.gmra.mrb[0].mxu0 %v589
        %v2257 = vpop.f32.mrb[0].mxu0
        %v2258 = vadd.f32 %v1870, %v2257
        %v2259 = vpop.f32.mrb[0].mxu0
        %2260 = vmatprep.mubr.f32.mxu0 0.0
        %2261 = vmatmul.mubr.f32.gmra.mrb[0].mxu0 %v591
        %v2262 = vpop.f32.mrb[0].mxu0
        %v2263 = vadd.f32 %v1875, %v2262
        %v2264 = vpop.f32.mrb[0].mxu0
        %2265 = vmatprep.mubr.f32.mxu0 0.0
        %2266 = vmatmul.mubr.f32.gmra.mrb[0].mxu0 %v593
        %v2267 = vpop.f32.mrb[0].mxu0
        %v2268 = vadd.f32 %v1880, %v2267
        %v2269 = vpop.f32.mrb[0].mxu0
        %2270 = vmatprep.mubr.f32.mxu0 0.0
        %2271 = vmatmul.mubr.f32.gmra.mrb[0].mxu0 %v591
        %v2272 = vpop.f32.mrb[0].mxu0
        %v2273 = vadd.f32 %v1885, %v2272
        %v2274 = vpop.f32.mrb[0].mxu0
        %2275 = vmatprep.mubr.f32.mxu0 0.0
        %2276 = vmatmul.mubr.f32.gmra.mrb[0].mxu0 %v593
        %v2277 = vpop.f32.mrb[0].mxu0
        %v2278 = vadd.f32 %v1890, %v2277
        %v2279 = vpop.f32.mrb[0].mxu0
        %2280 = vmatprep.mubr.f32.mxu0 0.0
        %2281 = vmatmul.mubr.f32.gmra.mrb[0].mxu0 %v595
        %v2282 = vpop.f32.mrb[0].mxu0
        %v2283 = vadd.f32 %v1895, %v2282
        %v2284 = vpop.f32.mrb[0].mxu0
        %2285 = vmatprep.mubr.f32.mxu0 0.0
        %2286 = vmatmul.mubr.f32.gmra.mrb[0].mxu0 %v597
        %v2287 = vpop.f32.mrb[0].mxu0
        %v2288 = vadd.f32 %v1900, %v2287
        %v2289 = vpop.f32.mrb[0].mxu0
        %2290 = vmatprep.mubr.f32.mxu0 0.0
        %2291 = vmatmul.mubr.f32.gmra.mrb[0].mxu0 %v595
        %v2292 = vpop.f32.mrb[0].mxu0
        %v2293 = vadd.f32 %v1905, %v2292
        %v2294 = vpop.f32.mrb[0].mxu0
        %2295 = vmatprep.mubr.f32.mxu0 0.0
        %2296 = vmatmul.mubr.f32.gmra.mrb[0].mxu0 %v597
        %v2297 = vpop.f32.mrb[0].mxu0
        %v2298 = vadd.f32 %v1910, %v2297
        %v2299 = vpop.f32.mrb[0].mxu0
        %2300 = vmatprep.mubr.f32.mxu0 0.0
        %2301 = vmatmul.mubr.f32.gmra.mrb[0].mxu0 %v599
        %v2302 = vpop.f32.mrb[0].mxu0
        %v2303 = vadd.f32 %v1915, %v2302
        %v2304 = vpop.f32.mrb[0].mxu0
        %2305 = vmatprep.mubr.f32.mxu0 0.0
        %2306 = vmatmul.mubr.f32.gmra.mrb[0].mxu0 %v601
        %v2307 = vpop.f32.mrb[0].mxu0
        %v2308 = vadd.f32 %v1920, %v2307
        %v2309 = vpop.f32.mrb[0].mxu0
        %2310 = vmatprep.mubr.f32.mxu0 0.0
        %2311 = vmatmul.mubr.f32.gmra.mrb[0].mxu0 %v599
        %v2312 = vpop.f32.mrb[0].mxu0
        %v2313 = vadd.f32 %v1925, %v2312
        %v2314 = vpop.f32.mrb[0].mxu0
        %2315 = vmatprep.mubr.f32.mxu0 0.0
        %2316 = vmatmul.mubr.f32.gmra.mrb[0].mxu0 %v601
        %v2317 = vpop.f32.mrb[0].mxu0
        %v2318 = vadd.f32 %v1930, %v2317
        %v2319 = vpop.f32.mrb[0].mxu0
        %2320 = vmatprep.mubr.f32.mxu0 0.0
        %2321 = vmatmul.mubr.f32.gmra.mrb[0].mxu0 %v603
        %v2322 = vpop.f32.mrb[0].mxu0
        %v2323 = vadd.f32 %v1935, %v2322
        %v2324 = vpop.f32.mrb[0].mxu0
        %2325 = vmatprep.mubr.f32.mxu0 0.0
        %2326 = vmatmul.mubr.f32.gmra.mrb[0].mxu0 %v605
        %v2327 = vpop.f32.mrb[0].mxu0
        %v2328 = vadd.f32 %v1940, %v2327
        %v2329 = vpop.f32.mrb[0].mxu0
        %2330 = vdwg.mxu0
        %2331 = vst.msk [vmem:[#allocation2] sm:$0xff] %vm538, %v1151
        %2332 = vst.msk [vmem:[#allocation2 + $0x8] sm:$0xff] %vm538, %v1156
        %2333 = vst.msk [vmem:[#allocation2 + $0x10] sm:$0xff] %vm538, %v1161
        %2334 = vst.msk [vmem:[#allocation2 + $0x18] sm:$0xff] %vm538, %v1166
        %2335 = vst.msk [vmem:[#allocation2 + $0x20] sm:$0xff] %vm538, %v1171
        %2336 = vst.msk [vmem:[#allocation2 + $0x28] sm:$0xff] %vm538, %v1176
        %2337 = vst.msk [vmem:[#allocation2 + $0x30] sm:$0xff] %vm538, %v1181
        %2338 = vst.msk [vmem:[#allocation2 + $0x38] sm:$0xff] %vm538, %v1186
        %2339 = vst.msk [vmem:[#allocation2 + $0x40] sm:$0xff] %vm538, %v1191
        %2340 = vst.msk [vmem:[#allocation2 + $0x48] sm:$0xff] %vm538, %v1196
        %2341 = vst.msk [vmem:[#allocation2 + $0x50] sm:$0xff] %vm538, %v1201
        %2342 = vst.msk [vmem:[#allocation2 + $0x58] sm:$0xff] %vm538, %v1206
        %2343 = vst.msk [vmem:[#allocation2 + $0x60] sm:$0xff] %vm538, %v1211
        %2344 = vst.msk [vmem:[#allocation2 + $0x68] sm:$0xff] %vm538, %v1216
        %2345 = vst.msk [vmem:[#allocation2 + $0x70] sm:$0xff] %vm538, %v1221
        %2346 = vst.msk [vmem:[#allocation2 + $0x78] sm:$0xff] %vm538, %v1226
        %2347 = vst.msk [vmem:[#allocation2 + $0x80] sm:$0xff] %vm538, %v1231
        %2348 = vst.msk [vmem:[#allocation2 + $0x88] sm:$0xff] %vm538, %v1236
        %2349 = vst.msk [vmem:[#allocation2 + $0x90] sm:$0xff] %vm538, %v1241
        %2350 = vst.msk [vmem:[#allocation2 + $0x98] sm:$0xff] %vm538, %v1246
        %2351 = vst.msk [vmem:[#allocation2 + $0xa0] sm:$0xff] %vm538, %v1251
        %2352 = vst.msk [vmem:[#allocation2 + $0xa8] sm:$0xff] %vm538, %v1256
        %2353 = vst.msk [vmem:[#allocation2 + $0xb0] sm:$0xff] %vm538, %v1261
        %2354 = vst.msk [vmem:[#allocation2 + $0xb8] sm:$0xff] %vm538, %v1266
        %2355 = vst.msk [vmem:[#allocation2 + $0xc0] sm:$0xff] %vm538, %v1271
        %2356 = vst.msk [vmem:[#allocation2 + $0xc8] sm:$0xff] %vm538, %v1276
        %2357 = vst.msk [vmem:[#allocation2 + $0xd0] sm:$0xff] %vm538, %v1281
        %2358 = vst.msk [vmem:[#allocation2 + $0xd8] sm:$0xff] %vm538, %v1286
        %2359 = vst.msk [vmem:[#allocation2 + $0xe0] sm:$0xff] %vm538, %v1291
        %2360 = vst.msk [vmem:[#allocation2 + $0xe8] sm:$0xff] %vm538, %v1296
        %2361 = vst.msk [vmem:[#allocation2 + $0xf0] sm:$0xff] %vm538, %v1301
        %2362 = vst.msk [vmem:[#allocation2 + $0xf8] sm:$0xff] %vm538, %v1306
        %2363 = vst.msk [vmem:[#allocation2 + $0x100] sm:$0xff] %vm538, %v1311
        %2364 = vst.msk [vmem:[#allocation2 + $0x108] sm:$0xff] %vm538, %v1316
        %2365 = vst.msk [vmem:[#allocation2 + $0x110] sm:$0xff] %vm538, %v1321
        %2366 = vst.msk [vmem:[#allocation2 + $0x118] sm:$0xff] %vm538, %v1326
        %2367 = vst.msk [vmem:[#allocation2 + $0x120] sm:$0xff] %vm538, %v1331
        %2368 = vst.msk [vmem:[#allocation2 + $0x128] sm:$0xff] %vm538, %v1336
        %2369 = vst.msk [vmem:[#allocation2 + $0x130] sm:$0xff] %vm538, %v1341
        %2370 = vst.msk [vmem:[#allocation2 + $0x138] sm:$0xff] %vm538, %v1346
        %2371 = vst.msk [vmem:[#allocation2 + $0x140] sm:$0xff] %vm538, %v1351
        %2372 = vst.msk [vmem:[#allocation2 + $0x148] sm:$0xff] %vm538, %v1356
        %2373 = vst.msk [vmem:[#allocation2 + $0x150] sm:$0xff] %vm538, %v1361
        %2374 = vst.msk [vmem:[#allocation2 + $0x158] sm:$0xff] %vm538, %v1366
        %2375 = vst.msk [vmem:[#allocation2 + $0x160] sm:$0xff] %vm538, %v1371
        %2376 = vst.msk [vmem:[#allocation2 + $0x168] sm:$0xff] %vm538, %v1376
        %2377 = vst.msk [vmem:[#allocation2 + $0x170] sm:$0xff] %vm538, %v1381
        %2378 = vst.msk [vmem:[#allocation2 + $0x178] sm:$0xff] %vm538, %v1386
        %2379 = vst.msk [vmem:[#allocation2 + $0x180] sm:$0xff] %vm538, %v1391
        %2380 = vst.msk [vmem:[#allocation2 + $0x188] sm:$0xff] %vm538, %v1396
        %2381 = vst.msk [vmem:[#allocation2 + $0x190] sm:$0xff] %vm538, %v1401
        %2382 = vst.msk [vmem:[#allocation2 + $0x198] sm:$0xff] %vm538, %v1406
        %2383 = vst.msk [vmem:[#allocation2 + $0x1a0] sm:$0xff] %vm538, %v1411
        %2384 = vst.msk [vmem:[#allocation2 + $0x1a8] sm:$0xff] %vm538, %v1416
        %2385 = vst.msk [vmem:[#allocation2 + $0x1b0] sm:$0xff] %vm538, %v1421
        %2386 = vst.msk [vmem:[#allocation2 + $0x1b8] sm:$0xff] %vm538, %v1426
        %2387 = vst.msk [vmem:[#allocation2 + $0x1c0] sm:$0xff] %vm538, %v1431
        %2388 = vst.msk [vmem:[#allocation2 + $0x1c8] sm:$0xff] %vm538, %v1436
        %2389 = vst.msk [vmem:[#allocation2 + $0x1d0] sm:$0xff] %vm538, %v1441
        %2390 = vst.msk [vmem:[#allocation2 + $0x1d8] sm:$0xff] %vm538, %v1446
        %2391 = vst.msk [vmem:[#allocation2 + $0x1e0] sm:$0xff] %vm538, %v1451
        %2392 = vst.msk [vmem:[#allocation2 + $0x1e8] sm:$0xff] %vm538, %v1456
        %2393 = vst.msk [vmem:[#allocation2 + $0x1f0] sm:$0xff] %vm538, %v1461
        %2394 = vst.msk [vmem:[#allocation2 + $0x1f8] sm:$0xff] %vm538, %v1466
        %2395 = vst.msk [vmem:[#allocation3] sm:$0xff] %vm538, %v2013
        %2396 = vst.msk [vmem:[#allocation3 + $0x8] sm:$0xff] %vm538, %v2018
        %2397 = vst.msk [vmem:[#allocation3 + $0x10] sm:$0xff] %vm538, %v2023
        %2398 = vst.msk [vmem:[#allocation3 + $0x18] sm:$0xff] %vm538, %v2028
        %2399 = vst.msk [vmem:[#allocation3 + $0x20] sm:$0xff] %vm538, %v2033
        %2400 = vst.msk [vmem:[#allocation3 + $0x28] sm:$0xff] %vm538, %v2038
        %2401 = vst.msk [vmem:[#allocation3 + $0x30] sm:$0xff] %vm538, %v2043
        %2402 = vst.msk [vmem:[#allocation3 + $0x38] sm:$0xff] %vm538, %v2048
        %2403 = vst.msk [vmem:[#allocation3 + $0x40] sm:$0xff] %vm538, %v2053
        %2404 = vst.msk [vmem:[#allocation3 + $0x48] sm:$0xff] %vm538, %v2058
        %2405 = vst.msk [vmem:[#allocation3 + $0x50] sm:$0xff] %vm538, %v2063
        %2406 = vst.msk [vmem:[#allocation3 + $0x58] sm:$0xff] %vm538, %v2068
        %2407 = vst.msk [vmem:[#allocation3 + $0x60] sm:$0xff] %vm538, %v2073
        %2408 = vst.msk [vmem:[#allocation3 + $0x68] sm:$0xff] %vm538, %v2078
        %2409 = vst.msk [vmem:[#allocation3 + $0x70] sm:$0xff] %vm538, %v2083
        %2410 = vst.msk [vmem:[#allocation3 + $0x78] sm:$0xff] %vm538, %v2088
        %2411 = vst.msk [vmem:[#allocation3 + $0x80] sm:$0xff] %vm538, %v2093
        %2412 = vst.msk [vmem:[#allocation3 + $0x88] sm:$0xff] %vm538, %v2098
        %2413 = vst.msk [vmem:[#allocation3 + $0x90] sm:$0xff] %vm538, %v2103
        %2414 = vst.msk [vmem:[#allocation3 + $0x98] sm:$0xff] %vm538, %v2108
        %2415 = vst.msk [vmem:[#allocation3 + $0xa0] sm:$0xff] %vm538, %v2113
        %2416 = vst.msk [vmem:[#allocation3 + $0xa8] sm:$0xff] %vm538, %v2118
        %2417 = vst.msk [vmem:[#allocation3 + $0xb0] sm:$0xff] %vm538, %v2123
        %2418 = vst.msk [vmem:[#allocation3 + $0xb8] sm:$0xff] %vm538, %v2128
        %2419 = vst.msk [vmem:[#allocation3 + $0xc0] sm:$0xff] %vm538, %v2133
        %2420 = vst.msk [vmem:[#allocation3 + $0xc8] sm:$0xff] %vm538, %v2138
        %2421 = vst.msk [vmem:[#allocation3 + $0xd0] sm:$0xff] %vm538, %v2143
        %2422 = vst.msk [vmem:[#allocation3 + $0xd8] sm:$0xff] %vm538, %v2148
        %2423 = vst.msk [vmem:[#allocation3 + $0xe0] sm:$0xff] %vm538, %v2153
        %2424 = vst.msk [vmem:[#allocation3 + $0xe8] sm:$0xff] %vm538, %v2158
        %2425 = vst.msk [vmem:[#allocation3 + $0xf0] sm:$0xff] %vm538, %v2163
        %2426 = vst.msk [vmem:[#allocation3 + $0xf8] sm:$0xff] %vm538, %v2168
        %2427 = vst.msk [vmem:[#allocation3 + $0x100] sm:$0xff] %vm538, %v2173
        %2428 = vst.msk [vmem:[#allocation3 + $0x108] sm:$0xff] %vm538, %v2178
        %2429 = vst.msk [vmem:[#allocation3 + $0x110] sm:$0xff] %vm538, %v2183
        %2430 = vst.msk [vmem:[#allocation3 + $0x118] sm:$0xff] %vm538, %v2188
        %2431 = vst.msk [vmem:[#allocation3 + $0x120] sm:$0xff] %vm538, %v2193
        %2432 = vst.msk [vmem:[#allocation3 + $0x128] sm:$0xff] %vm538, %v2198
        %2433 = vst.msk [vmem:[#allocation3 + $0x130] sm:$0xff] %vm538, %v2203
        %2434 = vst.msk [vmem:[#allocation3 + $0x138] sm:$0xff] %vm538, %v2208
        %2435 = vst.msk [vmem:[#allocation3 + $0x140] sm:$0xff] %vm538, %v2213
        %2436 = vst.msk [vmem:[#allocation3 + $0x148] sm:$0xff] %vm538, %v2218
        %2437 = vst.msk [vmem:[#allocation3 + $0x150] sm:$0xff] %vm538, %v2223
        %2438 = vst.msk [vmem:[#allocation3 + $0x158] sm:$0xff] %vm538, %v2228
        %2439 = vst.msk [vmem:[#allocation3 + $0x160] sm:$0xff] %vm538, %v2233
        %2440 = vst.msk [vmem:[#allocation3 + $0x168] sm:$0xff] %vm538, %v2238
        %2441 = vst.msk [vmem:[#allocation3 + $0x170] sm:$0xff] %vm538, %v2243
        %2442 = vst.msk [vmem:[#allocation3 + $0x178] sm:$0xff] %vm538, %v2248
        %2443 = vst.msk [vmem:[#allocation3 + $0x180] sm:$0xff] %vm538, %v2253
        %2444 = vst.msk [vmem:[#allocation3 + $0x188] sm:$0xff] %vm538, %v2258
        %2445 = vst.msk [vmem:[#allocation3 + $0x190] sm:$0xff] %vm538, %v2263
        %2446 = vst.msk [vmem:[#allocation3 + $0x198] sm:$0xff] %vm538, %v2268
        %2447 = vst.msk [vmem:[#allocation3 + $0x1a0] sm:$0xff] %vm538, %v2273
        %2448 = vst.msk [vmem:[#allocation3 + $0x1a8] sm:$0xff] %vm538, %v2278
        %2449 = vst.msk [vmem:[#allocation3 + $0x1b0] sm:$0xff] %vm538, %v2283
        %2450 = vst.msk [vmem:[#allocation3 + $0x1b8] sm:$0xff] %vm538, %v2288
        %2451 = vst.msk [vmem:[#allocation3 + $0x1c0] sm:$0xff] %vm538, %v2293
        %2452 = vst.msk [vmem:[#allocation3 + $0x1c8] sm:$0xff] %vm538, %v2298
        %2453 = vst.msk [vmem:[#allocation3 + $0x1d0] sm:$0xff] %vm538, %v2303
        %2454 = vst.msk [vmem:[#allocation3 + $0x1d8] sm:$0xff] %vm538, %v2308
        %2455 = vst.msk [vmem:[#allocation3 + $0x1e0] sm:$0xff] %vm538, %v2313
        %2456 = vst.msk [vmem:[#allocation3 + $0x1e8] sm:$0xff] %vm538, %v2318
        %2457 = vst.msk [vmem:[#allocation3 + $0x1f0] sm:$0xff] %vm538, %v2323
        %2458 = vst.msk [vmem:[#allocation3 + $0x1f8] sm:$0xff] %vm538, %v2328
        %s2459 = scalar_lea.vmem [#allocation4], 12
        %v2460 = vld [vmem:[%s2459] sm:$0xf]
        %s2461 = scalar_lea.vmem [#allocation4], 16
        %v2462 = vld [vmem:[%s2461] sm:$0xf]
        %s2463 = scalar_lea.vmem [#allocation4], 20
        %v2464 = vld [vmem:[%s2463] sm:$0xf]
        %v2465 = vadd.f32 %v2462, %v2464
        %v2467 = vsel %vm607, %v2465, 0
        %2469 = vmatprep.subr.mxu0 0.0
        %2470 = vmatpush1.msra.mxu0 %v2467
        %2471 = vmatprep.subr.mxu0 0.0
        %2472 = vmatpush1.msra.mxu0 0.0
        %2473 = vmatprep.subr.mxu0 0.0
        %2474 = vmatpush1.msra.mxu0 0.0
        %2475 = vmatprep.subr.mxu0 0.0
        %2476 = vmatpush1.msra.mxu0 0.0
        %2477 = vmatprep.subr.mxu0 0.0
        %2478 = vmatpush1.msra.mxu0 0.0
        %2479 = vmatprep.subr.mxu0 0.0
        %2480 = vmatpush1.msra.mxu0 0.0
        %2481 = vmatprep.subr.mxu0 0.0
        %2482 = vmatpush1.msra.mxu0 0.0
        %2483 = vmatprep.subr.mxu0 0.0
        %2484 = vmatpush1.msra.mxu0 0.0
        %2485 = vmatprep.subr.mxu0 0.0
        %2486 = vmatpush1.msra.mxu0 0.0
        %2487 = vmatprep.subr.mxu0 0.0
        %2488 = vmatpush1.msra.mxu0 0.0
        %2489 = vmatprep.subr.mxu0 0.0
        %2490 = vmatpush1.msra.mxu0 0.0
        %2491 = vmatprep.subr.mxu0 0.0
        %2492 = vmatpush1.msra.mxu0 0.0
        %2493 = vmatprep.subr.mxu0 0.0
        %2494 = vmatpush1.msra.mxu0 0.0
        %2495 = vmatprep.subr.mxu0 0.0
        %2496 = vmatpush1.msra.mxu0 0.0
        %2497 = vmatprep.subr.mxu0 0.0
        %2498 = vmatpush1.msra.mxu0 0.0
        %2499 = vmatprep.subr.mxu0 0.0
        %2500 = vmatpush1.msra.mxu0 0.0
        %2501 = vmatprep.subr.mxu0 0.0
        %2502 = vmatpush1.msra.mxu0 0.0
        %2503 = vmatprep.subr.mxu0 0.0
        %2504 = vmatpush1.msra.mxu0 0.0
        %2505 = vmatprep.subr.mxu0 0.0
        %2506 = vmatpush1.msra.mxu0 0.0
        %2507 = vmatprep.subr.mxu0 0.0
        %2508 = vmatpush1.msra.mxu0 0.0
        %2509 = vmatprep.subr.mxu0 0.0
        %2510 = vmatpush1.msra.mxu0 0.0
        %2511 = vmatprep.subr.mxu0 0.0
        %2512 = vmatpush1.msra.mxu0 0.0
        %2513 = vmatprep.subr.mxu0 0.0
        %2514 = vmatpush1.msra.mxu0 0.0
        %2515 = vmatprep.subr.mxu0 0.0
        %2516 = vmatpush1.msra.mxu0 0.0
        %2517 = vmatprep.subr.mxu0 0.0
        %2518 = vmatpush1.msra.mxu0 0.0
        %2519 = vmatprep.subr.mxu0 0.0
        %2520 = vmatpush1.msra.mxu0 0.0
        %2521 = vmatprep.subr.mxu0 0.0
        %2522 = vmatpush1.msra.mxu0 0.0
        %2523 = vmatprep.subr.mxu0 0.0
        %2524 = vmatpush1.msra.mxu0 0.0
        %2525 = vmatprep.subr.mxu0 0.0
        %2526 = vmatpush1.msra.mxu0 0.0
        %2527 = vmatprep.subr.mxu0 0.0
        %2528 = vmatpush1.msra.mxu0 0.0
        %2529 = vmatprep.subr.mxu0 0.0
        %2530 = vmatpush1.msra.mxu0 0.0
        %2531 = vmatprep.subr.mxu0 0.0
        %2532 = vmatpush1.msra.mxu0 0.0
        %2533 = vmatprep.mubr.f32.mxu0 0.0
        %2534 = vmatmul.mubr.f32.gmra.mrb[0].mxu0 %v543
        %v2535 = vpop.f32.mrb[0].mxu0
        %v2536 = vadd.f32 0.0, %v2535
        %v2537 = vpop.f32.mrb[0].mxu0
        %2538 = vmatprep.mubr.f32.mxu0 0.0
        %2539 = vmatmul.mubr.f32.gmra.mrb[0].mxu0 %v545
        %v2540 = vpop.f32.mrb[0].mxu0
        %v2541 = vadd.f32 0.0, %v2540
        %v2542 = vpop.f32.mrb[0].mxu0
        %2543 = vmatprep.mubr.f32.mxu0 0.0
        %2544 = vmatmul.mubr.f32.gmra.mrb[0].mxu0 %v543
        %v2545 = vpop.f32.mrb[0].mxu0
        %v2546 = vadd.f32 0.0, %v2545
        %v2547 = vpop.f32.mrb[0].mxu0
        %2548 = vmatprep.mubr.f32.mxu0 0.0
        %2549 = vmatmul.mubr.f32.gmra.mrb[0].mxu0 %v545
        %v2550 = vpop.f32.mrb[0].mxu0
        %v2551 = vadd.f32 0.0, %v2550
        %v2552 = vpop.f32.mrb[0].mxu0
        %2553 = vmatprep.mubr.f32.mxu0 0.0
        %2554 = vmatmul.mubr.f32.gmra.mrb[0].mxu0 %v547
        %v2555 = vpop.f32.mrb[0].mxu0
        %v2556 = vadd.f32 0.0, %v2555
        %v2557 = vpop.f32.mrb[0].mxu0
        %2558 = vmatprep.mubr.f32.mxu0 0.0
        %2559 = vmatmul.mubr.f32.gmra.mrb[0].mxu0 %v549
        %v2560 = vpop.f32.mrb[0].mxu0
        %v2561 = vadd.f32 0.0, %v2560
        %v2562 = vpop.f32.mrb[0].mxu0
        %2563 = vmatprep.mubr.f32.mxu0 0.0
        %2564 = vmatmul.mubr.f32.gmra.mrb[0].mxu0 %v547
        %v2565 = vpop.f32.mrb[0].mxu0
        %v2566 = vadd.f32 0.0, %v2565
        %v2567 = vpop.f32.mrb[0].mxu0
        %2568 = vmatprep.mubr.f32.mxu0 0.0
        %2569 = vmatmul.mubr.f32.gmra.mrb[0].mxu0 %v549
        %v2570 = vpop.f32.mrb[0].mxu0
        %v2571 = vadd.f32 0.0, %v2570
        %v2572 = vpop.f32.mrb[0].mxu0
        %2573 = vmatprep.mubr.f32.mxu0 0.0
        %2574 = vmatmul.mubr.f32.gmra.mrb[0].mxu0 %v551
        %v2575 = vpop.f32.mrb[0].mxu0
        %v2576 = vadd.f32 0.0, %v2575
        %v2577 = vpop.f32.mrb[0].mxu0
        %2578 = vmatprep.mubr.f32.mxu0 0.0
        %2579 = vmatmul.mubr.f32.gmra.mrb[0].mxu0 %v553
        %v2580 = vpop.f32.mrb[0].mxu0
        %v2581 = vadd.f32 0.0, %v2580
        %v2582 = vpop.f32.mrb[0].mxu0
        %2583 = vmatprep.mubr.f32.mxu0 0.0
        %2584 = vmatmul.mubr.f32.gmra.mrb[0].mxu0 %v551
        %v2585 = vpop.f32.mrb[0].mxu0
        %v2586 = vadd.f32 0.0, %v2585
        %v2587 = vpop.f32.mrb[0].mxu0
        %2588 = vmatprep.mubr.f32.mxu0 0.0
        %2589 = vmatmul.mubr.f32.gmra.mrb[0].mxu0 %v553
        %v2590 = vpop.f32.mrb[0].mxu0
        %v2591 = vadd.f32 0.0, %v2590
        %v2592 = vpop.f32.mrb[0].mxu0
        %2593 = vmatprep.mubr.f32.mxu0 0.0
        %2594 = vmatmul.mubr.f32.gmra.mrb[0].mxu0 %v555
        %v2595 = vpop.f32.mrb[0].mxu0
        %v2596 = vadd.f32 0.0, %v2595
        %v2597 = vpop.f32.mrb[0].mxu0
        %2598 = vmatprep.mubr.f32.mxu0 0.0
        %2599 = vmatmul.mubr.f32.gmra.mrb[0].mxu0 %v557
        %v2600 = vpop.f32.mrb[0].mxu0
        %v2601 = vadd.f32 0.0, %v2600
        %v2602 = vpop.f32.mrb[0].mxu0
        %2603 = vmatprep.mubr.f32.mxu0 0.0
        %2604 = vmatmul.mubr.f32.gmra.mrb[0].mxu0 %v555
        %v2605 = vpop.f32.mrb[0].mxu0
        %v2606 = vadd.f32 0.0, %v2605
        %v2607 = vpop.f32.mrb[0].mxu0
        %2608 = vmatprep.mubr.f32.mxu0 0.0
        %2609 = vmatmul.mubr.f32.gmra.mrb[0].mxu0 %v557
        %v2610 = vpop.f32.mrb[0].mxu0
        %v2611 = vadd.f32 0.0, %v2610
        %v2612 = vpop.f32.mrb[0].mxu0
        %2613 = vmatprep.mubr.f32.mxu0 0.0
        %2614 = vmatmul.mubr.f32.gmra.mrb[0].mxu0 %v559
        %v2615 = vpop.f32.mrb[0].mxu0
        %v2616 = vadd.f32 0.0, %v2615
        %v2617 = vpop.f32.mrb[0].mxu0
        %2618 = vmatprep.mubr.f32.mxu0 0.0
        %2619 = vmatmul.mubr.f32.gmra.mrb[0].mxu0 %v561
        %v2620 = vpop.f32.mrb[0].mxu0
        %v2621 = vadd.f32 0.0, %v2620
        %v2622 = vpop.f32.mrb[0].mxu0
        %2623 = vmatprep.mubr.f32.mxu0 0.0
        %2624 = vmatmul.mubr.f32.gmra.mrb[0].mxu0 %v559
        %v2625 = vpop.f32.mrb[0].mxu0
        %v2626 = vadd.f32 0.0, %v2625
        %v2627 = vpop.f32.mrb[0].mxu0
        %2628 = vmatprep.mubr.f32.mxu0 0.0
        %2629 = vmatmul.mubr.f32.gmra.mrb[0].mxu0 %v561
        %v2630 = vpop.f32.mrb[0].mxu0
        %v2631 = vadd.f32 0.0, %v2630
        %v2632 = vpop.f32.mrb[0].mxu0
        %2633 = vmatprep.mubr.f32.mxu0 0.0
        %2634 = vmatmul.mubr.f32.gmra.mrb[0].mxu0 %v563
        %v2635 = vpop.f32.mrb[0].mxu0
        %v2636 = vadd.f32 0.0, %v2635
        %v2637 = vpop.f32.mrb[0].mxu0
        %2638 = vmatprep.mubr.f32.mxu0 0.0
        %2639 = vmatmul.mubr.f32.gmra.mrb[0].mxu0 %v565
        %v2640 = vpop.f32.mrb[0].mxu0
        %v2641 = vadd.f32 0.0, %v2640
        %v2642 = vpop.f32.mrb[0].mxu0
        %2643 = vmatprep.mubr.f32.mxu0 0.0
        %2644 = vmatmul.mubr.f32.gmra.mrb[0].mxu0 %v563
        %v2645 = vpop.f32.mrb[0].mxu0
        %v2646 = vadd.f32 0.0, %v2645
        %v2647 = vpop.f32.mrb[0].mxu0
        %2648 = vmatprep.mubr.f32.mxu0 0.0
        %2649 = vmatmul.mubr.f32.gmra.mrb[0].mxu0 %v565
        %v2650 = vpop.f32.mrb[0].mxu0
        %v2651 = vadd.f32 0.0, %v2650
        %v2652 = vpop.f32.mrb[0].mxu0
        %2653 = vmatprep.mubr.f32.mxu0 0.0
        %2654 = vmatmul.mubr.f32.gmra.mrb[0].mxu0 %v567
        %v2655 = vpop.f32.mrb[0].mxu0
        %v2656 = vadd.f32 0.0, %v2655
        %v2657 = vpop.f32.mrb[0].mxu0
        %2658 = vmatprep.mubr.f32.mxu0 0.0
        %2659 = vmatmul.mubr.f32.gmra.mrb[0].mxu0 %v569
        %v2660 = vpop.f32.mrb[0].mxu0
        %v2661 = vadd.f32 0.0, %v2660
        %v2662 = vpop.f32.mrb[0].mxu0
        %2663 = vmatprep.mubr.f32.mxu0 0.0
        %2664 = vmatmul.mubr.f32.gmra.mrb[0].mxu0 %v567
        %v2665 = vpop.f32.mrb[0].mxu0
        %v2666 = vadd.f32 0.0, %v2665
        %v2667 = vpop.f32.mrb[0].mxu0
        %2668 = vmatprep.mubr.f32.mxu0 0.0
        %2669 = vmatmul.mubr.f32.gmra.mrb[0].mxu0 %v569
        %v2670 = vpop.f32.mrb[0].mxu0
        %v2671 = vadd.f32 0.0, %v2670
        %v2672 = vpop.f32.mrb[0].mxu0
        %2673 = vmatprep.mubr.f32.mxu0 0.0
        %2674 = vmatmul.mubr.f32.gmra.mrb[0].mxu0 %v571
        %v2675 = vpop.f32.mrb[0].mxu0
        %v2676 = vadd.f32 0.0, %v2675
        %v2677 = vpop.f32.mrb[0].mxu0
        %2678 = vmatprep.mubr.f32.mxu0 0.0
        %2679 = vmatmul.mubr.f32.gmra.mrb[0].mxu0 %v573
        %v2680 = vpop.f32.mrb[0].mxu0
        %v2681 = vadd.f32 0.0, %v2680
        %v2682 = vpop.f32.mrb[0].mxu0
        %2683 = vmatprep.mubr.f32.mxu0 0.0
        %2684 = vmatmul.mubr.f32.gmra.mrb[0].mxu0 %v571
        %v2685 = vpop.f32.mrb[0].mxu0
        %v2686 = vadd.f32 0.0, %v2685
        %v2687 = vpop.f32.mrb[0].mxu0
        %2688 = vmatprep.mubr.f32.mxu0 0.0
        %2689 = vmatmul.mubr.f32.gmra.mrb[0].mxu0 %v573
        %v2690 = vpop.f32.mrb[0].mxu0
        %v2691 = vadd.f32 0.0, %v2690
        %v2692 = vpop.f32.mrb[0].mxu0
        %2693 = vmatprep.mubr.f32.mxu0 0.0
        %2694 = vmatmul.mubr.f32.gmra.mrb[0].mxu0 %v575
        %v2695 = vpop.f32.mrb[0].mxu0
        %v2696 = vadd.f32 0.0, %v2695
        %v2697 = vpop.f32.mrb[0].mxu0
        %2698 = vmatprep.mubr.f32.mxu0 0.0
        %2699 = vmatmul.mubr.f32.gmra.mrb[0].mxu0 %v577
        %v2700 = vpop.f32.mrb[0].mxu0
        %v2701 = vadd.f32 0.0, %v2700
        %v2702 = vpop.f32.mrb[0].mxu0
        %2703 = vmatprep.mubr.f32.mxu0 0.0
        %2704 = vmatmul.mubr.f32.gmra.mrb[0].mxu0 %v575
        %v2705 = vpop.f32.mrb[0].mxu0
        %v2706 = vadd.f32 0.0, %v2705
        %v2707 = vpop.f32.mrb[0].mxu0
        %2708 = vmatprep.mubr.f32.mxu0 0.0
        %2709 = vmatmul.mubr.f32.gmra.mrb[0].mxu0 %v577
        %v2710 = vpop.f32.mrb[0].mxu0
        %v2711 = vadd.f32 0.0, %v2710
        %v2712 = vpop.f32.mrb[0].mxu0
        %2713 = vmatprep.mubr.f32.mxu0 0.0
        %2714 = vmatmul.mubr.f32.gmra.mrb[0].mxu0 %v579
        %v2715 = vpop.f32.mrb[0].mxu0
        %v2716 = vadd.f32 0.0, %v2715
        %v2717 = vpop.f32.mrb[0].mxu0
        %2718 = vmatprep.mubr.f32.mxu0 0.0
        %2719 = vmatmul.mubr.f32.gmra.mrb[0].mxu0 %v581
        %v2720 = vpop.f32.mrb[0].mxu0
        %v2721 = vadd.f32 0.0, %v2720
        %v2722 = vpop.f32.mrb[0].mxu0
        %2723 = vmatprep.mubr.f32.mxu0 0.0
        %2724 = vmatmul.mubr.f32.gmra.mrb[0].mxu0 %v579
        %v2725 = vpop.f32.mrb[0].mxu0
        %v2726 = vadd.f32 0.0, %v2725
        %v2727 = vpop.f32.mrb[0].mxu0
        %2728 = vmatprep.mubr.f32.mxu0 0.0
        %2729 = vmatmul.mubr.f32.gmra.mrb[0].mxu0 %v581
        %v2730 = vpop.f32.mrb[0].mxu0
        %v2731 = vadd.f32 0.0, %v2730
        %v2732 = vpop.f32.mrb[0].mxu0
        %2733 = vmatprep.mubr.f32.mxu0 0.0
        %2734 = vmatmul.mubr.f32.gmra.mrb[0].mxu0 %v583
        %v2735 = vpop.f32.mrb[0].mxu0
        %v2736 = vadd.f32 0.0, %v2735
        %v2737 = vpop.f32.mrb[0].mxu0
        %2738 = vmatprep.mubr.f32.mxu0 0.0
        %2739 = vmatmul.mubr.f32.gmra.mrb[0].mxu0 %v585
        %v2740 = vpop.f32.mrb[0].mxu0
        %v2741 = vadd.f32 0.0, %v2740
        %v2742 = vpop.f32.mrb[0].mxu0
        %2743 = vmatprep.mubr.f32.mxu0 0.0
        %2744 = vmatmul.mubr.f32.gmra.mrb[0].mxu0 %v583
        %v2745 = vpop.f32.mrb[0].mxu0
        %v2746 = vadd.f32 0.0, %v2745
        %v2747 = vpop.f32.mrb[0].mxu0
        %2748 = vmatprep.mubr.f32.mxu0 0.0
        %2749 = vmatmul.mubr.f32.gmra.mrb[0].mxu0 %v585
        %v2750 = vpop.f32.mrb[0].mxu0
        %v2751 = vadd.f32 0.0, %v2750
        %v2752 = vpop.f32.mrb[0].mxu0
        %2753 = vmatprep.mubr.f32.mxu0 0.0
        %2754 = vmatmul.mubr.f32.gmra.mrb[0].mxu0 %v587
        %v2755 = vpop.f32.mrb[0].mxu0
        %v2756 = vadd.f32 0.0, %v2755
        %v2757 = vpop.f32.mrb[0].mxu0
        %2758 = vmatprep.mubr.f32.mxu0 0.0
        %2759 = vmatmul.mubr.f32.gmra.mrb[0].mxu0 %v589
        %v2760 = vpop.f32.mrb[0].mxu0
        %v2761 = vadd.f32 0.0, %v2760
        %v2762 = vpop.f32.mrb[0].mxu0
        %2763 = vmatprep.mubr.f32.mxu0 0.0
        %2764 = vmatmul.mubr.f32.gmra.mrb[0].mxu0 %v587
        %v2765 = vpop.f32.mrb[0].mxu0
        %v2766 = vadd.f32 0.0, %v2765
        %v2767 = vpop.f32.mrb[0].mxu0
        %2768 = vmatprep.mubr.f32.mxu0 0.0
        %2769 = vmatmul.mubr.f32.gmra.mrb[0].mxu0 %v589
        %v2770 = vpop.f32.mrb[0].mxu0
        %v2771 = vadd.f32 0.0, %v2770
        %v2772 = vpop.f32.mrb[0].mxu0
        %2773 = vmatprep.mubr.f32.mxu0 0.0
        %2774 = vmatmul.mubr.f32.gmra.mrb[0].mxu0 %v591
        %v2775 = vpop.f32.mrb[0].mxu0
        %v2776 = vadd.f32 0.0, %v2775
        %v2777 = vpop.f32.mrb[0].mxu0
        %2778 = vmatprep.mubr.f32.mxu0 0.0
        %2779 = vmatmul.mubr.f32.gmra.mrb[0].mxu0 %v593
        %v2780 = vpop.f32.mrb[0].mxu0
        %v2781 = vadd.f32 0.0, %v2780
        %v2782 = vpop.f32.mrb[0].mxu0
        %2783 = vmatprep.mubr.f32.mxu0 0.0
        %2784 = vmatmul.mubr.f32.gmra.mrb[0].mxu0 %v591
        %v2785 = vpop.f32.mrb[0].mxu0
        %v2786 = vadd.f32 0.0, %v2785
        %v2787 = vpop.f32.mrb[0].mxu0
        %2788 = vmatprep.mubr.f32.mxu0 0.0
        %2789 = vmatmul.mubr.f32.gmra.mrb[0].mxu0 %v593
        %v2790 = vpop.f32.mrb[0].mxu0
        %v2791 = vadd.f32 0.0, %v2790
        %v2792 = vpop.f32.mrb[0].mxu0
        %2793 = vmatprep.mubr.f32.mxu0 0.0
        %2794 = vmatmul.mubr.f32.gmra.mrb[0].mxu0 %v595
        %v2795 = vpop.f32.mrb[0].mxu0
        %v2796 = vadd.f32 0.0, %v2795
        %v2797 = vpop.f32.mrb[0].mxu0
        %2798 = vmatprep.mubr.f32.mxu0 0.0
        %2799 = vmatmul.mubr.f32.gmra.mrb[0].mxu0 %v597
        %v2800 = vpop.f32.mrb[0].mxu0
        %v2801 = vadd.f32 0.0, %v2800
        %v2802 = vpop.f32.mrb[0].mxu0
        %2803 = vmatprep.mubr.f32.mxu0 0.0
        %2804 = vmatmul.mubr.f32.gmra.mrb[0].mxu0 %v595
        %v2805 = vpop.f32.mrb[0].mxu0
        %v2806 = vadd.f32 0.0, %v2805
        %v2807 = vpop.f32.mrb[0].mxu0
        %2808 = vmatprep.mubr.f32.mxu0 0.0
        %2809 = vmatmul.mubr.f32.gmra.mrb[0].mxu0 %v597
        %v2810 = vpop.f32.mrb[0].mxu0
        %v2811 = vadd.f32 0.0, %v2810
        %v2812 = vpop.f32.mrb[0].mxu0
        %2813 = vmatprep.mubr.f32.mxu0 0.0
        %2814 = vmatmul.mubr.f32.gmra.mrb[0].mxu0 %v599
        %v2815 = vpop.f32.mrb[0].mxu0
        %v2816 = vadd.f32 0.0, %v2815
        %v2817 = vpop.f32.mrb[0].mxu0
        %2818 = vmatprep.mubr.f32.mxu0 0.0
        %2819 = vmatmul.mubr.f32.gmra.mrb[0].mxu0 %v601
        %v2820 = vpop.f32.mrb[0].mxu0
        %v2821 = vadd.f32 0.0, %v2820
        %v2822 = vpop.f32.mrb[0].mxu0
        %2823 = vmatprep.mubr.f32.mxu0 0.0
        %2824 = vmatmul.mubr.f32.gmra.mrb[0].mxu0 %v599
        %v2825 = vpop.f32.mrb[0].mxu0
        %v2826 = vadd.f32 0.0, %v2825
        %v2827 = vpop.f32.mrb[0].mxu0
        %2828 = vmatprep.mubr.f32.mxu0 0.0
        %2829 = vmatmul.mubr.f32.gmra.mrb[0].mxu0 %v601
        %v2830 = vpop.f32.mrb[0].mxu0
        %v2831 = vadd.f32 0.0, %v2830
        %v2832 = vpop.f32.mrb[0].mxu0
        %2833 = vmatprep.mubr.f32.mxu0 0.0
        %2834 = vmatmul.mubr.f32.gmra.mrb[0].mxu0 %v603
        %v2835 = vpop.f32.mrb[0].mxu0
        %v2836 = vadd.f32 0.0, %v2835
        %v2837 = vpop.f32.mrb[0].mxu0
        %2838 = vmatprep.mubr.f32.mxu0 0.0
        %2839 = vmatmul.mubr.f32.gmra.mrb[0].mxu0 %v605
        %v2840 = vpop.f32.mrb[0].mxu0
        %v2841 = vadd.f32 0.0, %v2840
        %v2842 = vpop.f32.mrb[0].mxu0
        %2843 = vmatprep.mubr.f32.mxu0 0.0
        %2844 = vmatmul.mubr.f32.gmra.mrb[0].mxu0 %v603
        %v2845 = vpop.f32.mrb[0].mxu0
        %v2846 = vadd.f32 0.0, %v2845
        %v2847 = vpop.f32.mrb[0].mxu0
        %2848 = vmatprep.mubr.f32.mxu0 0.0
        %2849 = vmatmul.mubr.f32.gmra.mrb[0].mxu0 %v605
        %v2850 = vpop.f32.mrb[0].mxu0
        %v2851 = vadd.f32 0.0, %v2850
        %v2852 = vpop.f32.mrb[0].mxu0
        %2853 = vdwg.mxu0
        %v2855 = vsel %vm607, %v2460, 0
        %2857 = vmatprep.subr.mxu0 0.0
        %2858 = vmatpush1.msra.mxu0 %v2855
        %2859 = vmatprep.subr.mxu0 0.0
        %2860 = vmatpush1.msra.mxu0 0.0
        %2861 = vmatprep.subr.mxu0 0.0
        %2862 = vmatpush1.msra.mxu0 0.0
        %2863 = vmatprep.subr.mxu0 0.0
        %2864 = vmatpush1.msra.mxu0 0.0
        %2865 = vmatprep.subr.mxu0 0.0
        %2866 = vmatpush1.msra.mxu0 0.0
        %2867 = vmatprep.subr.mxu0 0.0
        %2868 = vmatpush1.msra.mxu0 0.0
        %2869 = vmatprep.subr.mxu0 0.0
        %2870 = vmatpush1.msra.mxu0 0.0
        %2871 = vmatprep.subr.mxu0 0.0
        %2872 = vmatpush1.msra.mxu0 0.0
        %2873 = vmatprep.subr.mxu0 0.0
        %2874 = vmatpush1.msra.mxu0 0.0
        %2875 = vmatprep.subr.mxu0 0.0
        %2876 = vmatpush1.msra.mxu0 0.0
        %2877 = vmatprep.subr.mxu0 0.0
        %2878 = vmatpush1.msra.mxu0 0.0
        %2879 = vmatprep.subr.mxu0 0.0
        %2880 = vmatpush1.msra.mxu0 0.0
        %2881 = vmatprep.subr.mxu0 0.0
        %2882 = vmatpush1.msra.mxu0 0.0
        %2883 = vmatprep.subr.mxu0 0.0
        %2884 = vmatpush1.msra.mxu0 0.0
        %2885 = vmatprep.subr.mxu0 0.0
        %2886 = vmatpush1.msra.mxu0 0.0
        %2887 = vmatprep.subr.mxu0 0.0
        %2888 = vmatpush1.msra.mxu0 0.0
        %2889 = vmatprep.subr.mxu0 0.0
        %2890 = vmatpush1.msra.mxu0 0.0
        %2891 = vmatprep.subr.mxu0 0.0
        %2892 = vmatpush1.msra.mxu0 0.0
        %2893 = vmatprep.subr.mxu0 0.0
        %2894 = vmatpush1.msra.mxu0 0.0
        %2895 = vmatprep.subr.mxu0 0.0
        %2896 = vmatpush1.msra.mxu0 0.0
        %2897 = vmatprep.subr.mxu0 0.0
        %2898 = vmatpush1.msra.mxu0 0.0
        %2899 = vmatprep.subr.mxu0 0.0
        %2900 = vmatpush1.msra.mxu0 0.0
        %2901 = vmatprep.subr.mxu0 0.0
        %2902 = vmatpush1.msra.mxu0 0.0
        %2903 = vmatprep.subr.mxu0 0.0
        %2904 = vmatpush1.msra.mxu0 0.0
        %2905 = vmatprep.subr.mxu0 0.0
        %2906 = vmatpush1.msra.mxu0 0.0
        %2907 = vmatprep.subr.mxu0 0.0
        %2908 = vmatpush1.msra.mxu0 0.0
        %2909 = vmatprep.subr.mxu0 0.0
        %2910 = vmatpush1.msra.mxu0 0.0
        %2911 = vmatprep.subr.mxu0 0.0
        %2912 = vmatpush1.msra.mxu0 0.0
        %2913 = vmatprep.subr.mxu0 0.0
        %2914 = vmatpush1.msra.mxu0 0.0
        %2915 = vmatprep.subr.mxu0 0.0
        %2916 = vmatpush1.msra.mxu0 0.0
        %2917 = vmatprep.subr.mxu0 0.0
        %2918 = vmatpush1.msra.mxu0 0.0
        %2919 = vmatprep.subr.mxu0 0.0
        %2920 = vmatpush1.msra.mxu0 0.0
        %2921 = vmatprep.mubr.f32.mxu0 0.0
        %2922 = vmatmul.mubr.f32.gmra.mrb[0].mxu0 %v1002
        %v2923 = vpop.f32.mrb[0].mxu0
        %v2924 = vadd.f32 %v2536, %v2923
        %v2925 = vpop.f32.mrb[0].mxu0
        %2926 = vmatprep.mubr.f32.mxu0 0.0
        %2927 = vmatmul.mubr.f32.gmra.mrb[0].mxu0 %v1004
        %v2928 = vpop.f32.mrb[0].mxu0
        %v2929 = vadd.f32 %v2541, %v2928
        %v2930 = vpop.f32.mrb[0].mxu0
        %2931 = vmatprep.mubr.f32.mxu0 0.0
        %2932 = vmatmul.mubr.f32.gmra.mrb[0].mxu0 %v1002
        %v2933 = vpop.f32.mrb[0].mxu0
        %v2934 = vadd.f32 %v2546, %v2933
        %v2935 = vpop.f32.mrb[0].mxu0
        %2936 = vmatprep.mubr.f32.mxu0 0.0
        %2937 = vmatmul.mubr.f32.gmra.mrb[0].mxu0 %v1004
        %v2938 = vpop.f32.mrb[0].mxu0
        %v2939 = vadd.f32 %v2551, %v2938
        %v2940 = vpop.f32.mrb[0].mxu0
        %2941 = vmatprep.mubr.f32.mxu0 0.0
        %2942 = vmatmul.mubr.f32.gmra.mrb[0].mxu0 %v1007
        %v2943 = vpop.f32.mrb[0].mxu0
        %v2944 = vadd.f32 %v2556, %v2943
        %v2945 = vpop.f32.mrb[0].mxu0
        %2946 = vmatprep.mubr.f32.mxu0 0.0
        %2947 = vmatmul.mubr.f32.gmra.mrb[0].mxu0 %v1009
        %v2948 = vpop.f32.mrb[0].mxu0
        %v2949 = vadd.f32 %v2561, %v2948
        %v2950 = vpop.f32.mrb[0].mxu0
        %2951 = vmatprep.mubr.f32.mxu0 0.0
        %2952 = vmatmul.mubr.f32.gmra.mrb[0].mxu0 %v1007
        %v2953 = vpop.f32.mrb[0].mxu0
        %v2954 = vadd.f32 %v2566, %v2953
        %v2955 = vpop.f32.mrb[0].mxu0
        %2956 = vmatprep.mubr.f32.mxu0 0.0
        %2957 = vmatmul.mubr.f32.gmra.mrb[0].mxu0 %v1009
        %v2958 = vpop.f32.mrb[0].mxu0
        %v2959 = vadd.f32 %v2571, %v2958
        %v2960 = vpop.f32.mrb[0].mxu0
        %2961 = vmatprep.mubr.f32.mxu0 0.0
        %2962 = vmatmul.mubr.f32.gmra.mrb[0].mxu0 %v1012
        %v2963 = vpop.f32.mrb[0].mxu0
        %v2964 = vadd.f32 %v2576, %v2963
        %v2965 = vpop.f32.mrb[0].mxu0
        %2966 = vmatprep.mubr.f32.mxu0 0.0
        %2967 = vmatmul.mubr.f32.gmra.mrb[0].mxu0 %v1014
        %v2968 = vpop.f32.mrb[0].mxu0
        %v2969 = vadd.f32 %v2581, %v2968
        %v2970 = vpop.f32.mrb[0].mxu0
        %2971 = vmatprep.mubr.f32.mxu0 0.0
        %2972 = vmatmul.mubr.f32.gmra.mrb[0].mxu0 %v1012
        %v2973 = vpop.f32.mrb[0].mxu0
        %v2974 = vadd.f32 %v2586, %v2973
        %v2975 = vpop.f32.mrb[0].mxu0
        %2976 = vmatprep.mubr.f32.mxu0 0.0
        %2977 = vmatmul.mubr.f32.gmra.mrb[0].mxu0 %v1014
        %v2978 = vpop.f32.mrb[0].mxu0
        %v2979 = vadd.f32 %v2591, %v2978
        %v2980 = vpop.f32.mrb[0].mxu0
        %2981 = vmatprep.mubr.f32.mxu0 0.0
        %2982 = vmatmul.mubr.f32.gmra.mrb[0].mxu0 %v1017
        %v2983 = vpop.f32.mrb[0].mxu0
        %v2984 = vadd.f32 %v2596, %v2983
        %v2985 = vpop.f32.mrb[0].mxu0
        %2986 = vmatprep.mubr.f32.mxu0 0.0
        %2987 = vmatmul.mubr.f32.gmra.mrb[0].mxu0 %v1019
        %v2988 = vpop.f32.mrb[0].mxu0
        %v2989 = vadd.f32 %v2601, %v2988
        %v2990 = vpop.f32.mrb[0].mxu0
        %2991 = vmatprep.mubr.f32.mxu0 0.0
        %2992 = vmatmul.mubr.f32.gmra.mrb[0].mxu0 %v1017
        %v2993 = vpop.f32.mrb[0].mxu0
        %v2994 = vadd.f32 %v2606, %v2993
        %v2995 = vpop.f32.mrb[0].mxu0
        %2996 = vmatprep.mubr.f32.mxu0 0.0
        %2997 = vmatmul.mubr.f32.gmra.mrb[0].mxu0 %v1019
        %v2998 = vpop.f32.mrb[0].mxu0
        %v2999 = vadd.f32 %v2611, %v2998
        %v3000 = vpop.f32.mrb[0].mxu0
        %3001 = vmatprep.mubr.f32.mxu0 0.0
        %3002 = vmatmul.mubr.f32.gmra.mrb[0].mxu0 %v1022
        %v3003 = vpop.f32.mrb[0].mxu0
        %v3004 = vadd.f32 %v2616, %v3003
        %v3005 = vpop.f32.mrb[0].mxu0
        %3006 = vmatprep.mubr.f32.mxu0 0.0
        %3007 = vmatmul.mubr.f32.gmra.mrb[0].mxu0 %v1024
        %v3008 = vpop.f32.mrb[0].mxu0
        %v3009 = vadd.f32 %v2621, %v3008
        %v3010 = vpop.f32.mrb[0].mxu0
        %3011 = vmatprep.mubr.f32.mxu0 0.0
        %3012 = vmatmul.mubr.f32.gmra.mrb[0].mxu0 %v1022
        %v3013 = vpop.f32.mrb[0].mxu0
        %v3014 = vadd.f32 %v2626, %v3013
        %v3015 = vpop.f32.mrb[0].mxu0
        %3016 = vmatprep.mubr.f32.mxu0 0.0
        %3017 = vmatmul.mubr.f32.gmra.mrb[0].mxu0 %v1024
        %v3018 = vpop.f32.mrb[0].mxu0
        %v3019 = vadd.f32 %v2631, %v3018
        %v3020 = vpop.f32.mrb[0].mxu0
        %3021 = vmatprep.mubr.f32.mxu0 0.0
        %3022 = vmatmul.mubr.f32.gmra.mrb[0].mxu0 %v1027
        %v3023 = vpop.f32.mrb[0].mxu0
        %v3024 = vadd.f32 %v2636, %v3023
        %v3025 = vpop.f32.mrb[0].mxu0
        %3026 = vmatprep.mubr.f32.mxu0 0.0
        %3027 = vmatmul.mubr.f32.gmra.mrb[0].mxu0 %v1029
        %v3028 = vpop.f32.mrb[0].mxu0
        %v3029 = vadd.f32 %v2641, %v3028
        %v3030 = vpop.f32.mrb[0].mxu0
        %3031 = vmatprep.mubr.f32.mxu0 0.0
        %3032 = vmatmul.mubr.f32.gmra.mrb[0].mxu0 %v1027
        %v3033 = vpop.f32.mrb[0].mxu0
        %v3034 = vadd.f32 %v2646, %v3033
        %v3035 = vpop.f32.mrb[0].mxu0
        %3036 = vmatprep.mubr.f32.mxu0 0.0
        %3037 = vmatmul.mubr.f32.gmra.mrb[0].mxu0 %v1029
        %v3038 = vpop.f32.mrb[0].mxu0
        %v3039 = vadd.f32 %v2651, %v3038
        %v3040 = vpop.f32.mrb[0].mxu0
        %3041 = vmatprep.mubr.f32.mxu0 0.0
        %3042 = vmatmul.mubr.f32.gmra.mrb[0].mxu0 %v1032
        %v3043 = vpop.f32.mrb[0].mxu0
        %v3044 = vadd.f32 %v2656, %v3043
        %v3045 = vpop.f32.mrb[0].mxu0
        %3046 = vmatprep.mubr.f32.mxu0 0.0
        %3047 = vmatmul.mubr.f32.gmra.mrb[0].mxu0 %v1034
        %v3048 = vpop.f32.mrb[0].mxu0
        %v3049 = vadd.f32 %v2661, %v3048
        %v3050 = vpop.f32.mrb[0].mxu0
        %3051 = vmatprep.mubr.f32.mxu0 0.0
        %3052 = vmatmul.mubr.f32.gmra.mrb[0].mxu0 %v1032
        %v3053 = vpop.f32.mrb[0].mxu0
        %v3054 = vadd.f32 %v2666, %v3053
        %v3055 = vpop.f32.mrb[0].mxu0
        %3056 = vmatprep.mubr.f32.mxu0 0.0
        %3057 = vmatmul.mubr.f32.gmra.mrb[0].mxu0 %v1034
        %v3058 = vpop.f32.mrb[0].mxu0
        %v3059 = vadd.f32 %v2671, %v3058
        %v3060 = vpop.f32.mrb[0].mxu0
        %3061 = vmatprep.mubr.f32.mxu0 0.0
        %3062 = vmatmul.mubr.f32.gmra.mrb[0].mxu0 %v1037
        %v3063 = vpop.f32.mrb[0].mxu0
        %v3064 = vadd.f32 %v2676, %v3063
        %v3065 = vpop.f32.mrb[0].mxu0
        %3066 = vmatprep.mubr.f32.mxu0 0.0
        %3067 = vmatmul.mubr.f32.gmra.mrb[0].mxu0 %v1039
        %v3068 = vpop.f32.mrb[0].mxu0
        %v3069 = vadd.f32 %v2681, %v3068
        %v3070 = vpop.f32.mrb[0].mxu0
        %3071 = vmatprep.mubr.f32.mxu0 0.0
        %3072 = vmatmul.mubr.f32.gmra.mrb[0].mxu0 %v1037
        %v3073 = vpop.f32.mrb[0].mxu0
        %v3074 = vadd.f32 %v2686, %v3073
        %v3075 = vpop.f32.mrb[0].mxu0
        %3076 = vmatprep.mubr.f32.mxu0 0.0
        %3077 = vmatmul.mubr.f32.gmra.mrb[0].mxu0 %v1039
        %v3078 = vpop.f32.mrb[0].mxu0
        %v3079 = vadd.f32 %v2691, %v3078
        %v3080 = vpop.f32.mrb[0].mxu0
        %3081 = vmatprep.mubr.f32.mxu0 0.0
        %3082 = vmatmul.mubr.f32.gmra.mrb[0].mxu0 %v1042
        %v3083 = vpop.f32.mrb[0].mxu0
        %v3084 = vadd.f32 %v2696, %v3083
        %v3085 = vpop.f32.mrb[0].mxu0
        %3086 = vmatprep.mubr.f32.mxu0 0.0
        %3087 = vmatmul.mubr.f32.gmra.mrb[0].mxu0 %v1044
        %v3088 = vpop.f32.mrb[0].mxu0
        %v3089 = vadd.f32 %v2701, %v3088
        %v3090 = vpop.f32.mrb[0].mxu0
        %3091 = vmatprep.mubr.f32.mxu0 0.0
        %3092 = vmatmul.mubr.f32.gmra.mrb[0].mxu0 %v1042
        %v3093 = vpop.f32.mrb[0].mxu0
        %v3094 = vadd.f32 %v2706, %v3093
        %v3095 = vpop.f32.mrb[0].mxu0
        %3096 = vmatprep.mubr.f32.mxu0 0.0
        %3097 = vmatmul.mubr.f32.gmra.mrb[0].mxu0 %v1044
        %v3098 = vpop.f32.mrb[0].mxu0
        %v3099 = vadd.f32 %v2711, %v3098
        %v3100 = vpop.f32.mrb[0].mxu0
        %3101 = vmatprep.mubr.f32.mxu0 0.0
        %3102 = vmatmul.mubr.f32.gmra.mrb[0].mxu0 %v1047
        %v3103 = vpop.f32.mrb[0].mxu0
        %v3104 = vadd.f32 %v2716, %v3103
        %v3105 = vpop.f32.mrb[0].mxu0
        %3106 = vmatprep.mubr.f32.mxu0 0.0
        %3107 = vmatmul.mubr.f32.gmra.mrb[0].mxu0 %v1049
        %v3108 = vpop.f32.mrb[0].mxu0
        %v3109 = vadd.f32 %v2721, %v3108
        %v3110 = vpop.f32.mrb[0].mxu0
        %3111 = vmatprep.mubr.f32.mxu0 0.0
        %3112 = vmatmul.mubr.f32.gmra.mrb[0].mxu0 %v1047
        %v3113 = vpop.f32.mrb[0].mxu0
        %v3114 = vadd.f32 %v2726, %v3113
        %v3115 = vpop.f32.mrb[0].mxu0
        %3116 = vmatprep.mubr.f32.mxu0 0.0
        %3117 = vmatmul.mubr.f32.gmra.mrb[0].mxu0 %v1049
        %v3118 = vpop.f32.mrb[0].mxu0
        %v3119 = vadd.f32 %v2731, %v3118
        %v3120 = vpop.f32.mrb[0].mxu0
        %3121 = vmatprep.mubr.f32.mxu0 0.0
        %3122 = vmatmul.mubr.f32.gmra.mrb[0].mxu0 %v1052
        %v3123 = vpop.f32.mrb[0].mxu0
        %v3124 = vadd.f32 %v2736, %v3123
        %v3125 = vpop.f32.mrb[0].mxu0
        %3126 = vmatprep.mubr.f32.mxu0 0.0
        %3127 = vmatmul.mubr.f32.gmra.mrb[0].mxu0 %v1054
        %v3128 = vpop.f32.mrb[0].mxu0
        %v3129 = vadd.f32 %v2741, %v3128
        %v3130 = vpop.f32.mrb[0].mxu0
        %3131 = vmatprep.mubr.f32.mxu0 0.0
        %3132 = vmatmul.mubr.f32.gmra.mrb[0].mxu0 %v1052
        %v3133 = vpop.f32.mrb[0].mxu0
        %v3134 = vadd.f32 %v2746, %v3133
        %v3135 = vpop.f32.mrb[0].mxu0
        %3136 = vmatprep.mubr.f32.mxu0 0.0
        %3137 = vmatmul.mubr.f32.gmra.mrb[0].mxu0 %v1054
        %v3138 = vpop.f32.mrb[0].mxu0
        %v3139 = vadd.f32 %v2751, %v3138
        %v3140 = vpop.f32.mrb[0].mxu0
        %3141 = vmatprep.mubr.f32.mxu0 0.0
        %3142 = vmatmul.mubr.f32.gmra.mrb[0].mxu0 %v1057
        %v3143 = vpop.f32.mrb[0].mxu0
        %v3144 = vadd.f32 %v2756, %v3143
        %v3145 = vpop.f32.mrb[0].mxu0
        %3146 = vmatprep.mubr.f32.mxu0 0.0
        %3147 = vmatmul.mubr.f32.gmra.mrb[0].mxu0 %v1059
        %v3148 = vpop.f32.mrb[0].mxu0
        %v3149 = vadd.f32 %v2761, %v3148
        %v3150 = vpop.f32.mrb[0].mxu0
        %3151 = vmatprep.mubr.f32.mxu0 0.0
        %3152 = vmatmul.mubr.f32.gmra.mrb[0].mxu0 %v1057
        %v3153 = vpop.f32.mrb[0].mxu0
        %v3154 = vadd.f32 %v2766, %v3153
        %v3155 = vpop.f32.mrb[0].mxu0
        %3156 = vmatprep.mubr.f32.mxu0 0.0
        %3157 = vmatmul.mubr.f32.gmra.mrb[0].mxu0 %v1059
        %v3158 = vpop.f32.mrb[0].mxu0
        %v3159 = vadd.f32 %v2771, %v3158
        %v3160 = vpop.f32.mrb[0].mxu0
        %3161 = vmatprep.mubr.f32.mxu0 0.0
        %3162 = vmatmul.mubr.f32.gmra.mrb[0].mxu0 %v1062
        %v3163 = vpop.f32.mrb[0].mxu0
        %v3164 = vadd.f32 %v2776, %v3163
        %v3165 = vpop.f32.mrb[0].mxu0
        %3166 = vmatprep.mubr.f32.mxu0 0.0
        %3167 = vmatmul.mubr.f32.gmra.mrb[0].mxu0 %v1064
        %v3168 = vpop.f32.mrb[0].mxu0
        %v3169 = vadd.f32 %v2781, %v3168
        %v3170 = vpop.f32.mrb[0].mxu0
        %3171 = vmatprep.mubr.f32.mxu0 0.0
        %3172 = vmatmul.mubr.f32.gmra.mrb[0].mxu0 %v1062
        %v3173 = vpop.f32.mrb[0].mxu0
        %v3174 = vadd.f32 %v2786, %v3173
        %v3175 = vpop.f32.mrb[0].mxu0
        %3176 = vmatprep.mubr.f32.mxu0 0.0
        %3177 = vmatmul.mubr.f32.gmra.mrb[0].mxu0 %v1064
        %v3178 = vpop.f32.mrb[0].mxu0
        %v3179 = vadd.f32 %v2791, %v3178
        %v3180 = vpop.f32.mrb[0].mxu0
        %3181 = vmatprep.mubr.f32.mxu0 0.0
        %3182 = vmatmul.mubr.f32.gmra.mrb[0].mxu0 %v1067
        %v3183 = vpop.f32.mrb[0].mxu0
        %v3184 = vadd.f32 %v2796, %v3183
        %v3185 = vpop.f32.mrb[0].mxu0
        %3186 = vmatprep.mubr.f32.mxu0 0.0
        %3187 = vmatmul.mubr.f32.gmra.mrb[0].mxu0 %v1069
        %v3188 = vpop.f32.mrb[0].mxu0
        %v3189 = vadd.f32 %v2801, %v3188
        %v3190 = vpop.f32.mrb[0].mxu0
        %3191 = vmatprep.mubr.f32.mxu0 0.0
        %3192 = vmatmul.mubr.f32.gmra.mrb[0].mxu0 %v1067
        %v3193 = vpop.f32.mrb[0].mxu0
        %v3194 = vadd.f32 %v2806, %v3193
        %v3195 = vpop.f32.mrb[0].mxu0
        %3196 = vmatprep.mubr.f32.mxu0 0.0
        %3197 = vmatmul.mubr.f32.gmra.mrb[0].mxu0 %v1069
        %v3198 = vpop.f32.mrb[0].mxu0
        %v3199 = vadd.f32 %v2811, %v3198
        %v3200 = vpop.f32.mrb[0].mxu0
        %3201 = vmatprep.mubr.f32.mxu0 0.0
        %3202 = vmatmul.mubr.f32.gmra.mrb[0].mxu0 %v1072
        %v3203 = vpop.f32.mrb[0].mxu0
        %v3204 = vadd.f32 %v2816, %v3203
        %v3205 = vpop.f32.mrb[0].mxu0
        %3206 = vmatprep.mubr.f32.mxu0 0.0
        %3207 = vmatmul.mubr.f32.gmra.mrb[0].mxu0 %v1074
        %v3208 = vpop.f32.mrb[0].mxu0
        %v3209 = vadd.f32 %v2821, %v3208
        %v3210 = vpop.f32.mrb[0].mxu0
        %3211 = vmatprep.mubr.f32.mxu0 0.0
        %3212 = vmatmul.mubr.f32.gmra.mrb[0].mxu0 %v1072
        %v3213 = vpop.f32.mrb[0].mxu0
        %v3214 = vadd.f32 %v2826, %v3213
        %v3215 = vpop.f32.mrb[0].mxu0
        %3216 = vmatprep.mubr.f32.mxu0 0.0
        %3217 = vmatmul.mubr.f32.gmra.mrb[0].mxu0 %v1074
        %v3218 = vpop.f32.mrb[0].mxu0
        %v3219 = vadd.f32 %v2831, %v3218
        %v3220 = vpop.f32.mrb[0].mxu0
        %3221 = vmatprep.mubr.f32.mxu0 0.0
        %3222 = vmatmul.mubr.f32.gmra.mrb[0].mxu0 %v1077
        %v3223 = vpop.f32.mrb[0].mxu0
        %v3224 = vadd.f32 %v2836, %v3223
        %v3225 = vpop.f32.mrb[0].mxu0
        %3226 = vmatprep.mubr.f32.mxu0 0.0
        %3227 = vmatmul.mubr.f32.gmra.mrb[0].mxu0 %v1079
        %v3228 = vpop.f32.mrb[0].mxu0
        %v3229 = vadd.f32 %v2841, %v3228
        %v3230 = vpop.f32.mrb[0].mxu0
        %3231 = vmatprep.mubr.f32.mxu0 0.0
        %3232 = vmatmul.mubr.f32.gmra.mrb[0].mxu0 %v1077
        %v3233 = vpop.f32.mrb[0].mxu0
        %v3234 = vadd.f32 %v2846, %v3233
        %v3235 = vpop.f32.mrb[0].mxu0
        %3236 = vmatprep.mubr.f32.mxu0 0.0
        %3237 = vmatmul.mubr.f32.gmra.mrb[0].mxu0 %v1079
        %v3238 = vpop.f32.mrb[0].mxu0
        %v3239 = vadd.f32 %v2851, %v3238
        %v3240 = vpop.f32.mrb[0].mxu0
        %3241 = vdwg.mxu0
        %v3242 = vadd.f32 %v2460, %v2462
        %v3244 = vsel %vm607, %v2464, 0
        %3246 = vmatprep.subr.mxu0 0.0
        %3247 = vmatpush1.msra.mxu0 %v3244
        %3248 = vmatprep.subr.mxu0 0.0
        %3249 = vmatpush1.msra.mxu0 0.0
        %3250 = vmatprep.subr.mxu0 0.0
        %3251 = vmatpush1.msra.mxu0 0.0
        %3252 = vmatprep.subr.mxu0 0.0
        %3253 = vmatpush1.msra.mxu0 0.0
        %3254 = vmatprep.subr.mxu0 0.0
        %3255 = vmatpush1.msra.mxu0 0.0
        %3256 = vmatprep.subr.mxu0 0.0
        %3257 = vmatpush1.msra.mxu0 0.0
        %3258 = vmatprep.subr.mxu0 0.0
        %3259 = vmatpush1.msra.mxu0 0.0
        %3260 = vmatprep.subr.mxu0 0.0
        %3261 = vmatpush1.msra.mxu0 0.0
        %3262 = vmatprep.subr.mxu0 0.0
        %3263 = vmatpush1.msra.mxu0 0.0
        %3264 = vmatprep.subr.mxu0 0.0
        %3265 = vmatpush1.msra.mxu0 0.0
        %3266 = vmatprep.subr.mxu0 0.0
        %3267 = vmatpush1.msra.mxu0 0.0
        %3268 = vmatprep.subr.mxu0 0.0
        %3269 = vmatpush1.msra.mxu0 0.0
        %3270 = vmatprep.subr.mxu0 0.0
        %3271 = vmatpush1.msra.mxu0 0.0
        %3272 = vmatprep.subr.mxu0 0.0
        %3273 = vmatpush1.msra.mxu0 0.0
        %3274 = vmatprep.subr.mxu0 0.0
        %3275 = vmatpush1.msra.mxu0 0.0
        %3276 = vmatprep.subr.mxu0 0.0
        %3277 = vmatpush1.msra.mxu0 0.0
        %3278 = vmatprep.subr.mxu0 0.0
        %3279 = vmatpush1.msra.mxu0 0.0
        %3280 = vmatprep.subr.mxu0 0.0
        %3281 = vmatpush1.msra.mxu0 0.0
        %3282 = vmatprep.subr.mxu0 0.0
        %3283 = vmatpush1.msra.mxu0 0.0
        %3284 = vmatprep.subr.mxu0 0.0
        %3285 = vmatpush1.msra.mxu0 0.0
        %3286 = vmatprep.subr.mxu0 0.0
        %3287 = vmatpush1.msra.mxu0 0.0
        %3288 = vmatprep.subr.mxu0 0.0
        %3289 = vmatpush1.msra.mxu0 0.0
        %3290 = vmatprep.subr.mxu0 0.0
        %3291 = vmatpush1.msra.mxu0 0.0
        %3292 = vmatprep.subr.mxu0 0.0
        %3293 = vmatpush1.msra.mxu0 0.0
        %3294 = vmatprep.subr.mxu0 0.0
        %3295 = vmatpush1.msra.mxu0 0.0
        %3296 = vmatprep.subr.mxu0 0.0
        %3297 = vmatpush1.msra.mxu0 0.0
        %3298 = vmatprep.subr.mxu0 0.0
        %3299 = vmatpush1.msra.mxu0 0.0
        %3300 = vmatprep.subr.mxu0 0.0
        %3301 = vmatpush1.msra.mxu0 0.0
        %3302 = vmatprep.subr.mxu0 0.0
        %3303 = vmatpush1.msra.mxu0 0.0
        %3304 = vmatprep.subr.mxu0 0.0
        %3305 = vmatpush1.msra.mxu0 0.0
        %3306 = vmatprep.subr.mxu0 0.0
        %3307 = vmatpush1.msra.mxu0 0.0
        %3308 = vmatprep.subr.mxu0 0.0
        %3309 = vmatpush1.msra.mxu0 0.0
        %3310 = vmatprep.mubr.f32.mxu0 0.0
        %3311 = vmatmul.mubr.f32.gmra.mrb[0].mxu0 %v1475
        %v3312 = vpop.f32.mrb[0].mxu0
        %v3313 = vadd.f32 0.0, %v3312
        %v3314 = vpop.f32.mrb[0].mxu0
        %3315 = vmatprep.mubr.f32.mxu0 0.0
        %3316 = vmatmul.mubr.f32.gmra.mrb[0].mxu0 %v1478
        %v3317 = vpop.f32.mrb[0].mxu0
        %v3318 = vadd.f32 0.0, %v3317
        %v3319 = vpop.f32.mrb[0].mxu0
        %3320 = vmatprep.mubr.f32.mxu0 0.0
        %3321 = vmatmul.mubr.f32.gmra.mrb[0].mxu0 %v1475
        %v3322 = vpop.f32.mrb[0].mxu0
        %v3323 = vadd.f32 0.0, %v3322
        %v3324 = vpop.f32.mrb[0].mxu0
        %3325 = vmatprep.mubr.f32.mxu0 0.0
        %3326 = vmatmul.mubr.f32.gmra.mrb[0].mxu0 %v1478
        %v3327 = vpop.f32.mrb[0].mxu0
        %v3328 = vadd.f32 0.0, %v3327
        %v3329 = vpop.f32.mrb[0].mxu0
        %3330 = vmatprep.mubr.f32.mxu0 0.0
        %3331 = vmatmul.mubr.f32.gmra.mrb[0].mxu0 %v1480
        %v3332 = vpop.f32.mrb[0].mxu0
        %v3333 = vadd.f32 0.0, %v3332
        %v3334 = vpop.f32.mrb[0].mxu0
        %3335 = vmatprep.mubr.f32.mxu0 0.0
        %3336 = vmatmul.mubr.f32.gmra.mrb[0].mxu0 %v1483
        %v3337 = vpop.f32.mrb[0].mxu0
        %v3338 = vadd.f32 0.0, %v3337
        %v3339 = vpop.f32.mrb[0].mxu0
        %3340 = vmatprep.mubr.f32.mxu0 0.0
        %3341 = vmatmul.mubr.f32.gmra.mrb[0].mxu0 %v1480
        %v3342 = vpop.f32.mrb[0].mxu0
        %v3343 = vadd.f32 0.0, %v3342
        %v3344 = vpop.f32.mrb[0].mxu0
        %3345 = vmatprep.mubr.f32.mxu0 0.0
        %3346 = vmatmul.mubr.f32.gmra.mrb[0].mxu0 %v1483
        %v3347 = vpop.f32.mrb[0].mxu0
        %v3348 = vadd.f32 0.0, %v3347
        %v3349 = vpop.f32.mrb[0].mxu0
        %3350 = vmatprep.mubr.f32.mxu0 0.0
        %3351 = vmatmul.mubr.f32.gmra.mrb[0].mxu0 %v1485
        %v3352 = vpop.f32.mrb[0].mxu0
        %v3353 = vadd.f32 0.0, %v3352
        %v3354 = vpop.f32.mrb[0].mxu0
        %3355 = vmatprep.mubr.f32.mxu0 0.0
        %3356 = vmatmul.mubr.f32.gmra.mrb[0].mxu0 %v1488
        %v3357 = vpop.f32.mrb[0].mxu0
        %v3358 = vadd.f32 0.0, %v3357
        %v3359 = vpop.f32.mrb[0].mxu0
        %3360 = vmatprep.mubr.f32.mxu0 0.0
        %3361 = vmatmul.mubr.f32.gmra.mrb[0].mxu0 %v1485
        %v3362 = vpop.f32.mrb[0].mxu0
        %v3363 = vadd.f32 0.0, %v3362
        %v3364 = vpop.f32.mrb[0].mxu0
        %3365 = vmatprep.mubr.f32.mxu0 0.0
        %3366 = vmatmul.mubr.f32.gmra.mrb[0].mxu0 %v1488
        %v3367 = vpop.f32.mrb[0].mxu0
        %v3368 = vadd.f32 0.0, %v3367
        %v3369 = vpop.f32.mrb[0].mxu0
        %3370 = vmatprep.mubr.f32.mxu0 0.0
        %3371 = vmatmul.mubr.f32.gmra.mrb[0].mxu0 %v1490
        %v3372 = vpop.f32.mrb[0].mxu0
        %v3373 = vadd.f32 0.0, %v3372
        %v3374 = vpop.f32.mrb[0].mxu0
        %3375 = vmatprep.mubr.f32.mxu0 0.0
        %3376 = vmatmul.mubr.f32.gmra.mrb[0].mxu0 %v1493
        %v3377 = vpop.f32.mrb[0].mxu0
        %v3378 = vadd.f32 0.0, %v3377
        %v3379 = vpop.f32.mrb[0].mxu0
        %3380 = vmatprep.mubr.f32.mxu0 0.0
        %3381 = vmatmul.mubr.f32.gmra.mrb[0].mxu0 %v1490
        %v3382 = vpop.f32.mrb[0].mxu0
        %v3383 = vadd.f32 0.0, %v3382
        %v3384 = vpop.f32.mrb[0].mxu0
        %3385 = vmatprep.mubr.f32.mxu0 0.0
        %3386 = vmatmul.mubr.f32.gmra.mrb[0].mxu0 %v1493
        %v3387 = vpop.f32.mrb[0].mxu0
        %v3388 = vadd.f32 0.0, %v3387
        %v3389 = vpop.f32.mrb[0].mxu0
        %3390 = vmatprep.mubr.f32.mxu0 0.0
        %3391 = vmatmul.mubr.f32.gmra.mrb[0].mxu0 %v1495
        %v3392 = vpop.f32.mrb[0].mxu0
        %v3393 = vadd.f32 0.0, %v3392
        %v3394 = vpop.f32.mrb[0].mxu0
        %3395 = vmatprep.mubr.f32.mxu0 0.0
        %3396 = vmatmul.mubr.f32.gmra.mrb[0].mxu0 %v1498
        %v3397 = vpop.f32.mrb[0].mxu0
        %v3398 = vadd.f32 0.0, %v3397
        %v3399 = vpop.f32.mrb[0].mxu0
        %3400 = vmatprep.mubr.f32.mxu0 0.0
        %3401 = vmatmul.mubr.f32.gmra.mrb[0].mxu0 %v1495
        %v3402 = vpop.f32.mrb[0].mxu0
        %v3403 = vadd.f32 0.0, %v3402
        %v3404 = vpop.f32.mrb[0].mxu0
        %3405 = vmatprep.mubr.f32.mxu0 0.0
        %3406 = vmatmul.mubr.f32.gmra.mrb[0].mxu0 %v1498
        %v3407 = vpop.f32.mrb[0].mxu0
        %v3408 = vadd.f32 0.0, %v3407
        %v3409 = vpop.f32.mrb[0].mxu0
        %3410 = vmatprep.mubr.f32.mxu0 0.0
        %3411 = vmatmul.mubr.f32.gmra.mrb[0].mxu0 %v1500
        %v3412 = vpop.f32.mrb[0].mxu0
        %v3413 = vadd.f32 0.0, %v3412
        %v3414 = vpop.f32.mrb[0].mxu0
        %3415 = vmatprep.mubr.f32.mxu0 0.0
        %3416 = vmatmul.mubr.f32.gmra.mrb[0].mxu0 %v1503
        %v3417 = vpop.f32.mrb[0].mxu0
        %v3418 = vadd.f32 0.0, %v3417
        %v3419 = vpop.f32.mrb[0].mxu0
        %3420 = vmatprep.mubr.f32.mxu0 0.0
        %3421 = vmatmul.mubr.f32.gmra.mrb[0].mxu0 %v1500
        %v3422 = vpop.f32.mrb[0].mxu0
        %v3423 = vadd.f32 0.0, %v3422
        %v3424 = vpop.f32.mrb[0].mxu0
        %3425 = vmatprep.mubr.f32.mxu0 0.0
        %3426 = vmatmul.mubr.f32.gmra.mrb[0].mxu0 %v1503
        %v3427 = vpop.f32.mrb[0].mxu0
        %v3428 = vadd.f32 0.0, %v3427
        %v3429 = vpop.f32.mrb[0].mxu0
        %3430 = vmatprep.mubr.f32.mxu0 0.0
        %3431 = vmatmul.mubr.f32.gmra.mrb[0].mxu0 %v1505
        %v3432 = vpop.f32.mrb[0].mxu0
        %v3433 = vadd.f32 0.0, %v3432
        %v3434 = vpop.f32.mrb[0].mxu0
        %3435 = vmatprep.mubr.f32.mxu0 0.0
        %3436 = vmatmul.mubr.f32.gmra.mrb[0].mxu0 %v1508
        %v3437 = vpop.f32.mrb[0].mxu0
        %v3438 = vadd.f32 0.0, %v3437
        %v3439 = vpop.f32.mrb[0].mxu0
        %3440 = vmatprep.mubr.f32.mxu0 0.0
        %3441 = vmatmul.mubr.f32.gmra.mrb[0].mxu0 %v1505
        %v3442 = vpop.f32.mrb[0].mxu0
        %v3443 = vadd.f32 0.0, %v3442
        %v3444 = vpop.f32.mrb[0].mxu0
        %3445 = vmatprep.mubr.f32.mxu0 0.0
        %3446 = vmatmul.mubr.f32.gmra.mrb[0].mxu0 %v1508
        %v3447 = vpop.f32.mrb[0].mxu0
        %v3448 = vadd.f32 0.0, %v3447
        %v3449 = vpop.f32.mrb[0].mxu0
        %3450 = vmatprep.mubr.f32.mxu0 0.0
        %3451 = vmatmul.mubr.f32.gmra.mrb[0].mxu0 %v1510
        %v3452 = vpop.f32.mrb[0].mxu0
        %v3453 = vadd.f32 0.0, %v3452
        %v3454 = vpop.f32.mrb[0].mxu0
        %3455 = vmatprep.mubr.f32.mxu0 0.0
        %3456 = vmatmul.mubr.f32.gmra.mrb[0].mxu0 %v1513
        %v3457 = vpop.f32.mrb[0].mxu0
        %v3458 = vadd.f32 0.0, %v3457
        %v3459 = vpop.f32.mrb[0].mxu0
        %3460 = vmatprep.mubr.f32.mxu0 0.0
        %3461 = vmatmul.mubr.f32.gmra.mrb[0].mxu0 %v1510
        %v3462 = vpop.f32.mrb[0].mxu0
        %v3463 = vadd.f32 0.0, %v3462
        %v3464 = vpop.f32.mrb[0].mxu0
        %3465 = vmatprep.mubr.f32.mxu0 0.0
        %3466 = vmatmul.mubr.f32.gmra.mrb[0].mxu0 %v1513
        %v3467 = vpop.f32.mrb[0].mxu0
        %v3468 = vadd.f32 0.0, %v3467
        %v3469 = vpop.f32.mrb[0].mxu0
        %3470 = vmatprep.mubr.f32.mxu0 0.0
        %3471 = vmatmul.mubr.f32.gmra.mrb[0].mxu0 %v1515
        %v3472 = vpop.f32.mrb[0].mxu0
        %v3473 = vadd.f32 0.0, %v3472
        %v3474 = vpop.f32.mrb[0].mxu0
        %3475 = vmatprep.mubr.f32.mxu0 0.0
        %3476 = vmatmul.mubr.f32.gmra.mrb[0].mxu0 %v1518
        %v3477 = vpop.f32.mrb[0].mxu0
        %v3478 = vadd.f32 0.0, %v3477
        %v3479 = vpop.f32.mrb[0].mxu0
        %3480 = vmatprep.mubr.f32.mxu0 0.0
        %3481 = vmatmul.mubr.f32.gmra.mrb[0].mxu0 %v1515
        %v3482 = vpop.f32.mrb[0].mxu0
        %v3483 = vadd.f32 0.0, %v3482
        %v3484 = vpop.f32.mrb[0].mxu0
        %3485 = vmatprep.mubr.f32.mxu0 0.0
        %3486 = vmatmul.mubr.f32.gmra.mrb[0].mxu0 %v1518
        %v3487 = vpop.f32.mrb[0].mxu0
        %v3488 = vadd.f32 0.0, %v3487
        %v3489 = vpop.f32.mrb[0].mxu0
        %3490 = vmatprep.mubr.f32.mxu0 0.0
        %3491 = vmatmul.mubr.f32.gmra.mrb[0].mxu0 %v1520
        %v3492 = vpop.f32.mrb[0].mxu0
        %v3493 = vadd.f32 0.0, %v3492
        %v3494 = vpop.f32.mrb[0].mxu0
        %3495 = vmatprep.mubr.f32.mxu0 0.0
        %3496 = vmatmul.mubr.f32.gmra.mrb[0].mxu0 %v1523
        %v3497 = vpop.f32.mrb[0].mxu0
        %v3498 = vadd.f32 0.0, %v3497
        %v3499 = vpop.f32.mrb[0].mxu0
        %3500 = vmatprep.mubr.f32.mxu0 0.0
        %3501 = vmatmul.mubr.f32.gmra.mrb[0].mxu0 %v1520
        %v3502 = vpop.f32.mrb[0].mxu0
        %v3503 = vadd.f32 0.0, %v3502
        %v3504 = vpop.f32.mrb[0].mxu0
        %3505 = vmatprep.mubr.f32.mxu0 0.0
        %3506 = vmatmul.mubr.f32.gmra.mrb[0].mxu0 %v1523
        %v3507 = vpop.f32.mrb[0].mxu0
        %v3508 = vadd.f32 0.0, %v3507
        %v3509 = vpop.f32.mrb[0].mxu0
        %3510 = vmatprep.mubr.f32.mxu0 0.0
        %3511 = vmatmul.mubr.f32.gmra.mrb[0].mxu0 %v1525
        %v3512 = vpop.f32.mrb[0].mxu0
        %v3513 = vadd.f32 0.0, %v3512
        %v3514 = vpop.f32.mrb[0].mxu0
        %3515 = vmatprep.mubr.f32.mxu0 0.0
        %3516 = vmatmul.mubr.f32.gmra.mrb[0].mxu0 %v1528
        %v3517 = vpop.f32.mrb[0].mxu0
        %v3518 = vadd.f32 0.0, %v3517
        %v3519 = vpop.f32.mrb[0].mxu0
        %3520 = vmatprep.mubr.f32.mxu0 0.0
        %3521 = vmatmul.mubr.f32.gmra.mrb[0].mxu0 %v1525
        %v3522 = vpop.f32.mrb[0].mxu0
        %v3523 = vadd.f32 0.0, %v3522
        %v3524 = vpop.f32.mrb[0].mxu0
        %3525 = vmatprep.mubr.f32.mxu0 0.0
        %3526 = vmatmul.mubr.f32.gmra.mrb[0].mxu0 %v1528
        %v3527 = vpop.f32.mrb[0].mxu0
        %v3528 = vadd.f32 0.0, %v3527
        %v3529 = vpop.f32.mrb[0].mxu0
        %3530 = vmatprep.mubr.f32.mxu0 0.0
        %3531 = vmatmul.mubr.f32.gmra.mrb[0].mxu0 %v1530
        %v3532 = vpop.f32.mrb[0].mxu0
        %v3533 = vadd.f32 0.0, %v3532
        %v3534 = vpop.f32.mrb[0].mxu0
        %3535 = vmatprep.mubr.f32.mxu0 0.0
        %3536 = vmatmul.mubr.f32.gmra.mrb[0].mxu0 %v1533
        %v3537 = vpop.f32.mrb[0].mxu0
        %v3538 = vadd.f32 0.0, %v3537
        %v3539 = vpop.f32.mrb[0].mxu0
        %3540 = vmatprep.mubr.f32.mxu0 0.0
        %3541 = vmatmul.mubr.f32.gmra.mrb[0].mxu0 %v1530
        %v3542 = vpop.f32.mrb[0].mxu0
        %v3543 = vadd.f32 0.0, %v3542
        %v3544 = vpop.f32.mrb[0].mxu0
        %3545 = vmatprep.mubr.f32.mxu0 0.0
        %3546 = vmatmul.mubr.f32.gmra.mrb[0].mxu0 %v1533
        %v3547 = vpop.f32.mrb[0].mxu0
        %v3548 = vadd.f32 0.0, %v3547
        %v3549 = vpop.f32.mrb[0].mxu0
        %3550 = vmatprep.mubr.f32.mxu0 0.0
        %3551 = vmatmul.mubr.f32.gmra.mrb[0].mxu0 %v1535
        %v3552 = vpop.f32.mrb[0].mxu0
        %v3553 = vadd.f32 0.0, %v3552
        %v3554 = vpop.f32.mrb[0].mxu0
        %3555 = vmatprep.mubr.f32.mxu0 0.0
        %3556 = vmatmul.mubr.f32.gmra.mrb[0].mxu0 %v1538
        %v3557 = vpop.f32.mrb[0].mxu0
        %v3558 = vadd.f32 0.0, %v3557
        %v3559 = vpop.f32.mrb[0].mxu0
        %3560 = vmatprep.mubr.f32.mxu0 0.0
        %3561 = vmatmul.mubr.f32.gmra.mrb[0].mxu0 %v1535
        %v3562 = vpop.f32.mrb[0].mxu0
        %v3563 = vadd.f32 0.0, %v3562
        %v3564 = vpop.f32.mrb[0].mxu0
        %3565 = vmatprep.mubr.f32.mxu0 0.0
        %3566 = vmatmul.mubr.f32.gmra.mrb[0].mxu0 %v1538
        %v3567 = vpop.f32.mrb[0].mxu0
        %v3568 = vadd.f32 0.0, %v3567
        %v3569 = vpop.f32.mrb[0].mxu0
        %3570 = vmatprep.mubr.f32.mxu0 0.0
        %3571 = vmatmul.mubr.f32.gmra.mrb[0].mxu0 %v1540
        %v3572 = vpop.f32.mrb[0].mxu0
        %v3573 = vadd.f32 0.0, %v3572
        %v3574 = vpop.f32.mrb[0].mxu0
        %3575 = vmatprep.mubr.f32.mxu0 0.0
        %3576 = vmatmul.mubr.f32.gmra.mrb[0].mxu0 %v1543
        %v3577 = vpop.f32.mrb[0].mxu0
        %v3578 = vadd.f32 0.0, %v3577
        %v3579 = vpop.f32.mrb[0].mxu0
        %3580 = vmatprep.mubr.f32.mxu0 0.0
        %3581 = vmatmul.mubr.f32.gmra.mrb[0].mxu0 %v1540
        %v3582 = vpop.f32.mrb[0].mxu0
        %v3583 = vadd.f32 0.0, %v3582
        %v3584 = vpop.f32.mrb[0].mxu0
        %3585 = vmatprep.mubr.f32.mxu0 0.0
        %3586 = vmatmul.mubr.f32.gmra.mrb[0].mxu0 %v1543
        %v3587 = vpop.f32.mrb[0].mxu0
        %v3588 = vadd.f32 0.0, %v3587
        %v3589 = vpop.f32.mrb[0].mxu0
        %3590 = vmatprep.mubr.f32.mxu0 0.0
        %3591 = vmatmul.mubr.f32.gmra.mrb[0].mxu0 %v1545
        %v3592 = vpop.f32.mrb[0].mxu0
        %v3593 = vadd.f32 0.0, %v3592
        %v3594 = vpop.f32.mrb[0].mxu0
        %3595 = vmatprep.mubr.f32.mxu0 0.0
        %3596 = vmatmul.mubr.f32.gmra.mrb[0].mxu0 %v1548
        %v3597 = vpop.f32.mrb[0].mxu0
        %v3598 = vadd.f32 0.0, %v3597
        %v3599 = vpop.f32.mrb[0].mxu0
        %3600 = vmatprep.mubr.f32.mxu0 0.0
        %3601 = vmatmul.mubr.f32.gmra.mrb[0].mxu0 %v1545
        %v3602 = vpop.f32.mrb[0].mxu0
        %v3603 = vadd.f32 0.0, %v3602
        %v3604 = vpop.f32.mrb[0].mxu0
        %3605 = vmatprep.mubr.f32.mxu0 0.0
        %3606 = vmatmul.mubr.f32.gmra.mrb[0].mxu0 %v1548
        %v3607 = vpop.f32.mrb[0].mxu0
        %v3608 = vadd.f32 0.0, %v3607
        %v3609 = vpop.f32.mrb[0].mxu0
        %3610 = vmatprep.mubr.f32.mxu0 0.0
        %3611 = vmatmul.mubr.f32.gmra.mrb[0].mxu0 %v1550
        %v3612 = vpop.f32.mrb[0].mxu0
        %v3613 = vadd.f32 0.0, %v3612
        %v3614 = vpop.f32.mrb[0].mxu0
        %3615 = vmatprep.mubr.f32.mxu0 0.0
        %3616 = vmatmul.mubr.f32.gmra.mrb[0].mxu0 %v1553
        %v3617 = vpop.f32.mrb[0].mxu0
        %v3618 = vadd.f32 0.0, %v3617
        %v3619 = vpop.f32.mrb[0].mxu0
        %3620 = vmatprep.mubr.f32.mxu0 0.0
        %3621 = vmatmul.mubr.f32.gmra.mrb[0].mxu0 %v1550
        %v3622 = vpop.f32.mrb[0].mxu0
        %v3623 = vadd.f32 0.0, %v3622
        %v3624 = vpop.f32.mrb[0].mxu0
        %3625 = vmatprep.mubr.f32.mxu0 0.0
        %3626 = vmatmul.mubr.f32.gmra.mrb[0].mxu0 %v1553
        %v3627 = vpop.f32.mrb[0].mxu0
        %v3628 = vadd.f32 0.0, %v3627
        %v3629 = vpop.f32.mrb[0].mxu0
        %3630 = vdwg.mxu0
        %v3632 = vsel %vm607, %v3242, 0
        %3634 = vmatprep.subr.mxu0 0.0
        %3635 = vmatpush1.msra.mxu0 %v3632
        %3636 = vmatprep.subr.mxu0 0.0
        %3637 = vmatpush1.msra.mxu0 0.0
        %3638 = vmatprep.subr.mxu0 0.0
        %3639 = vmatpush1.msra.mxu0 0.0
        %3640 = vmatprep.subr.mxu0 0.0
        %3641 = vmatpush1.msra.mxu0 0.0
        %3642 = vmatprep.subr.mxu0 0.0
        %3643 = vmatpush1.msra.mxu0 0.0
        %3644 = vmatprep.subr.mxu0 0.0
        %3645 = vmatpush1.msra.mxu0 0.0
        %3646 = vmatprep.subr.mxu0 0.0
        %3647 = vmatpush1.msra.mxu0 0.0
        %3648 = vmatprep.subr.mxu0 0.0
        %3649 = vmatpush1.msra.mxu0 0.0
        %3650 = vmatprep.subr.mxu0 0.0
        %3651 = vmatpush1.msra.mxu0 0.0
        %3652 = vmatprep.subr.mxu0 0.0
        %3653 = vmatpush1.msra.mxu0 0.0
        %3654 = vmatprep.subr.mxu0 0.0
        %3655 = vmatpush1.msra.mxu0 0.0
        %3656 = vmatprep.subr.mxu0 0.0
        %3657 = vmatpush1.msra.mxu0 0.0
        %3658 = vmatprep.subr.mxu0 0.0
        %3659 = vmatpush1.msra.mxu0 0.0
        %3660 = vmatprep.subr.mxu0 0.0
        %3661 = vmatpush1.msra.mxu0 0.0
        %3662 = vmatprep.subr.mxu0 0.0
        %3663 = vmatpush1.msra.mxu0 0.0
        %3664 = vmatprep.subr.mxu0 0.0
        %3665 = vmatpush1.msra.mxu0 0.0
        %3666 = vmatprep.subr.mxu0 0.0
        %3667 = vmatpush1.msra.mxu0 0.0
        %3668 = vmatprep.subr.mxu0 0.0
        %3669 = vmatpush1.msra.mxu0 0.0
        %3670 = vmatprep.subr.mxu0 0.0
        %3671 = vmatpush1.msra.mxu0 0.0
        %3672 = vmatprep.subr.mxu0 0.0
        %3673 = vmatpush1.msra.mxu0 0.0
        %3674 = vmatprep.subr.mxu0 0.0
        %3675 = vmatpush1.msra.mxu0 0.0
        %3676 = vmatprep.subr.mxu0 0.0
        %3677 = vmatpush1.msra.mxu0 0.0
        %3678 = vmatprep.subr.mxu0 0.0
        %3679 = vmatpush1.msra.mxu0 0.0
        %3680 = vmatprep.subr.mxu0 0.0
        %3681 = vmatpush1.msra.mxu0 0.0
        %3682 = vmatprep.subr.mxu0 0.0
        %3683 = vmatpush1.msra.mxu0 0.0
        %3684 = vmatprep.subr.mxu0 0.0
        %3685 = vmatpush1.msra.mxu0 0.0
        %3686 = vmatprep.subr.mxu0 0.0
        %3687 = vmatpush1.msra.mxu0 0.0
        %3688 = vmatprep.subr.mxu0 0.0
        %3689 = vmatpush1.msra.mxu0 0.0
        %3690 = vmatprep.subr.mxu0 0.0
        %3691 = vmatpush1.msra.mxu0 0.0
        %3692 = vmatprep.subr.mxu0 0.0
        %3693 = vmatpush1.msra.mxu0 0.0
        %3694 = vmatprep.subr.mxu0 0.0
        %3695 = vmatpush1.msra.mxu0 0.0
        %3696 = vmatprep.subr.mxu0 0.0
        %3697 = vmatpush1.msra.mxu0 0.0
        %3698 = vmatprep.mubr.f32.mxu0 0.0
        %3699 = vmatmul.mubr.f32.gmra.mrb[0].mxu0 %v543
        %v3700 = vpop.f32.mrb[0].mxu0
        %v3701 = vadd.f32 %v3313, %v3700
        %v3702 = vpop.f32.mrb[0].mxu0
        %3703 = vmatprep.mubr.f32.mxu0 0.0
        %3704 = vmatmul.mubr.f32.gmra.mrb[0].mxu0 %v545
        %v3705 = vpop.f32.mrb[0].mxu0
        %v3706 = vadd.f32 %v3318, %v3705
        %v3707 = vpop.f32.mrb[0].mxu0
        %3708 = vmatprep.mubr.f32.mxu0 0.0
        %3709 = vmatmul.mubr.f32.gmra.mrb[0].mxu0 %v543
        %v3710 = vpop.f32.mrb[0].mxu0
        %v3711 = vadd.f32 %v3323, %v3710
        %v3712 = vpop.f32.mrb[0].mxu0
        %3713 = vmatprep.mubr.f32.mxu0 0.0
        %3714 = vmatmul.mubr.f32.gmra.mrb[0].mxu0 %v545
        %v3715 = vpop.f32.mrb[0].mxu0
        %v3716 = vadd.f32 %v3328, %v3715
        %v3717 = vpop.f32.mrb[0].mxu0
        %3718 = vmatprep.mubr.f32.mxu0 0.0
        %3719 = vmatmul.mubr.f32.gmra.mrb[0].mxu0 %v547
        %v3720 = vpop.f32.mrb[0].mxu0
        %v3721 = vadd.f32 %v3333, %v3720
        %v3722 = vpop.f32.mrb[0].mxu0
        %3723 = vmatprep.mubr.f32.mxu0 0.0
        %3724 = vmatmul.mubr.f32.gmra.mrb[0].mxu0 %v549
        %v3725 = vpop.f32.mrb[0].mxu0
        %v3726 = vadd.f32 %v3338, %v3725
        %v3727 = vpop.f32.mrb[0].mxu0
        %3728 = vmatprep.mubr.f32.mxu0 0.0
        %3729 = vmatmul.mubr.f32.gmra.mrb[0].mxu0 %v547
        %v3730 = vpop.f32.mrb[0].mxu0
        %v3731 = vadd.f32 %v3343, %v3730
        %v3732 = vpop.f32.mrb[0].mxu0
        %3733 = vmatprep.mubr.f32.mxu0 0.0
        %3734 = vmatmul.mubr.f32.gmra.mrb[0].mxu0 %v549
        %v3735 = vpop.f32.mrb[0].mxu0
        %v3736 = vadd.f32 %v3348, %v3735
        %v3737 = vpop.f32.mrb[0].mxu0
        %3738 = vmatprep.mubr.f32.mxu0 0.0
        %3739 = vmatmul.mubr.f32.gmra.mrb[0].mxu0 %v551
        %v3740 = vpop.f32.mrb[0].mxu0
        %v3741 = vadd.f32 %v3353, %v3740
        %v3742 = vpop.f32.mrb[0].mxu0
        %3743 = vmatprep.mubr.f32.mxu0 0.0
        %3744 = vmatmul.mubr.f32.gmra.mrb[0].mxu0 %v553
        %v3745 = vpop.f32.mrb[0].mxu0
        %v3746 = vadd.f32 %v3358, %v3745
        %v3747 = vpop.f32.mrb[0].mxu0
        %3748 = vmatprep.mubr.f32.mxu0 0.0
        %3749 = vmatmul.mubr.f32.gmra.mrb[0].mxu0 %v551
        %v3750 = vpop.f32.mrb[0].mxu0
        %v3751 = vadd.f32 %v3363, %v3750
        %v3752 = vpop.f32.mrb[0].mxu0
        %3753 = vmatprep.mubr.f32.mxu0 0.0
        %3754 = vmatmul.mubr.f32.gmra.mrb[0].mxu0 %v553
        %v3755 = vpop.f32.mrb[0].mxu0
        %v3756 = vadd.f32 %v3368, %v3755
        %v3757 = vpop.f32.mrb[0].mxu0
        %3758 = vmatprep.mubr.f32.mxu0 0.0
        %3759 = vmatmul.mubr.f32.gmra.mrb[0].mxu0 %v555
        %v3760 = vpop.f32.mrb[0].mxu0
        %v3761 = vadd.f32 %v3373, %v3760
        %v3762 = vpop.f32.mrb[0].mxu0
        %3763 = vmatprep.mubr.f32.mxu0 0.0
        %3764 = vmatmul.mubr.f32.gmra.mrb[0].mxu0 %v557
        %v3765 = vpop.f32.mrb[0].mxu0
        %v3766 = vadd.f32 %v3378, %v3765
        %v3767 = vpop.f32.mrb[0].mxu0
        %3768 = vmatprep.mubr.f32.mxu0 0.0
        %3769 = vmatmul.mubr.f32.gmra.mrb[0].mxu0 %v555
        %v3770 = vpop.f32.mrb[0].mxu0
        %v3771 = vadd.f32 %v3383, %v3770
        %v3772 = vpop.f32.mrb[0].mxu0
        %3773 = vmatprep.mubr.f32.mxu0 0.0
        %3774 = vmatmul.mubr.f32.gmra.mrb[0].mxu0 %v557
        %v3775 = vpop.f32.mrb[0].mxu0
        %v3776 = vadd.f32 %v3388, %v3775
        %v3777 = vpop.f32.mrb[0].mxu0
        %3778 = vmatprep.mubr.f32.mxu0 0.0
        %3779 = vmatmul.mubr.f32.gmra.mrb[0].mxu0 %v559
        %v3780 = vpop.f32.mrb[0].mxu0
        %v3781 = vadd.f32 %v3393, %v3780
        %v3782 = vpop.f32.mrb[0].mxu0
        %3783 = vmatprep.mubr.f32.mxu0 0.0
        %3784 = vmatmul.mubr.f32.gmra.mrb[0].mxu0 %v561
        %v3785 = vpop.f32.mrb[0].mxu0
        %v3786 = vadd.f32 %v3398, %v3785
        %v3787 = vpop.f32.mrb[0].mxu0
        %3788 = vmatprep.mubr.f32.mxu0 0.0
        %3789 = vmatmul.mubr.f32.gmra.mrb[0].mxu0 %v559
        %v3790 = vpop.f32.mrb[0].mxu0
        %v3791 = vadd.f32 %v3403, %v3790
        %v3792 = vpop.f32.mrb[0].mxu0
        %3793 = vmatprep.mubr.f32.mxu0 0.0
        %3794 = vmatmul.mubr.f32.gmra.mrb[0].mxu0 %v561
        %v3795 = vpop.f32.mrb[0].mxu0
        %v3796 = vadd.f32 %v3408, %v3795
        %v3797 = vpop.f32.mrb[0].mxu0
        %3798 = vmatprep.mubr.f32.mxu0 0.0
        %3799 = vmatmul.mubr.f32.gmra.mrb[0].mxu0 %v563
        %v3800 = vpop.f32.mrb[0].mxu0
        %v3801 = vadd.f32 %v3413, %v3800
        %v3802 = vpop.f32.mrb[0].mxu0
        %3803 = vmatprep.mubr.f32.mxu0 0.0
        %3804 = vmatmul.mubr.f32.gmra.mrb[0].mxu0 %v565
        %v3805 = vpop.f32.mrb[0].mxu0
        %v3806 = vadd.f32 %v3418, %v3805
        %v3807 = vpop.f32.mrb[0].mxu0
        %3808 = vmatprep.mubr.f32.mxu0 0.0
        %3809 = vmatmul.mubr.f32.gmra.mrb[0].mxu0 %v563
        %v3810 = vpop.f32.mrb[0].mxu0
        %v3811 = vadd.f32 %v3423, %v3810
        %v3812 = vpop.f32.mrb[0].mxu0
        %3813 = vmatprep.mubr.f32.mxu0 0.0
        %3814 = vmatmul.mubr.f32.gmra.mrb[0].mxu0 %v565
        %v3815 = vpop.f32.mrb[0].mxu0
        %v3816 = vadd.f32 %v3428, %v3815
        %v3817 = vpop.f32.mrb[0].mxu0
        %3818 = vmatprep.mubr.f32.mxu0 0.0
        %3819 = vmatmul.mubr.f32.gmra.mrb[0].mxu0 %v567
        %v3820 = vpop.f32.mrb[0].mxu0
        %v3821 = vadd.f32 %v3433, %v3820
        %v3822 = vpop.f32.mrb[0].mxu0
        %3823 = vmatprep.mubr.f32.mxu0 0.0
        %3824 = vmatmul.mubr.f32.gmra.mrb[0].mxu0 %v569
        %v3825 = vpop.f32.mrb[0].mxu0
        %v3826 = vadd.f32 %v3438, %v3825
        %v3827 = vpop.f32.mrb[0].mxu0
        %3828 = vmatprep.mubr.f32.mxu0 0.0
        %3829 = vmatmul.mubr.f32.gmra.mrb[0].mxu0 %v567
        %v3830 = vpop.f32.mrb[0].mxu0
        %v3831 = vadd.f32 %v3443, %v3830
        %v3832 = vpop.f32.mrb[0].mxu0
        %3833 = vmatprep.mubr.f32.mxu0 0.0
        %3834 = vmatmul.mubr.f32.gmra.mrb[0].mxu0 %v569
        %v3835 = vpop.f32.mrb[0].mxu0
        %v3836 = vadd.f32 %v3448, %v3835
        %v3837 = vpop.f32.mrb[0].mxu0
        %3838 = vmatprep.mubr.f32.mxu0 0.0
        %3839 = vmatmul.mubr.f32.gmra.mrb[0].mxu0 %v571
        %v3840 = vpop.f32.mrb[0].mxu0
        %v3841 = vadd.f32 %v3453, %v3840
        %v3842 = vpop.f32.mrb[0].mxu0
        %3843 = vmatprep.mubr.f32.mxu0 0.0
        %3844 = vmatmul.mubr.f32.gmra.mrb[0].mxu0 %v573
        %v3845 = vpop.f32.mrb[0].mxu0
        %v3846 = vadd.f32 %v3458, %v3845
        %v3847 = vpop.f32.mrb[0].mxu0
        %3848 = vmatprep.mubr.f32.mxu0 0.0
        %3849 = vmatmul.mubr.f32.gmra.mrb[0].mxu0 %v571
        %v3850 = vpop.f32.mrb[0].mxu0
        %v3851 = vadd.f32 %v3463, %v3850
        %v3852 = vpop.f32.mrb[0].mxu0
        %3853 = vmatprep.mubr.f32.mxu0 0.0
        %3854 = vmatmul.mubr.f32.gmra.mrb[0].mxu0 %v573
        %v3855 = vpop.f32.mrb[0].mxu0
        %v3856 = vadd.f32 %v3468, %v3855
        %v3857 = vpop.f32.mrb[0].mxu0
        %3858 = vmatprep.mubr.f32.mxu0 0.0
        %3859 = vmatmul.mubr.f32.gmra.mrb[0].mxu0 %v575
        %v3860 = vpop.f32.mrb[0].mxu0
        %v3861 = vadd.f32 %v3473, %v3860
        %v3862 = vpop.f32.mrb[0].mxu0
        %3863 = vmatprep.mubr.f32.mxu0 0.0
        %3864 = vmatmul.mubr.f32.gmra.mrb[0].mxu0 %v577
        %v3865 = vpop.f32.mrb[0].mxu0
        %v3866 = vadd.f32 %v3478, %v3865
        %v3867 = vpop.f32.mrb[0].mxu0
        %3868 = vmatprep.mubr.f32.mxu0 0.0
        %3869 = vmatmul.mubr.f32.gmra.mrb[0].mxu0 %v575
        %v3870 = vpop.f32.mrb[0].mxu0
        %v3871 = vadd.f32 %v3483, %v3870
        %v3872 = vpop.f32.mrb[0].mxu0
        %3873 = vmatprep.mubr.f32.mxu0 0.0
        %3874 = vmatmul.mubr.f32.gmra.mrb[0].mxu0 %v577
        %v3875 = vpop.f32.mrb[0].mxu0
        %v3876 = vadd.f32 %v3488, %v3875
        %v3877 = vpop.f32.mrb[0].mxu0
        %3878 = vmatprep.mubr.f32.mxu0 0.0
        %3879 = vmatmul.mubr.f32.gmra.mrb[0].mxu0 %v579
        %v3880 = vpop.f32.mrb[0].mxu0
        %v3881 = vadd.f32 %v3493, %v3880
        %v3882 = vpop.f32.mrb[0].mxu0
        %3883 = vmatprep.mubr.f32.mxu0 0.0
        %3884 = vmatmul.mubr.f32.gmra.mrb[0].mxu0 %v581
        %v3885 = vpop.f32.mrb[0].mxu0
        %v3886 = vadd.f32 %v3498, %v3885
        %v3887 = vpop.f32.mrb[0].mxu0
        %3888 = vmatprep.mubr.f32.mxu0 0.0
        %3889 = vmatmul.mubr.f32.gmra.mrb[0].mxu0 %v579
        %v3890 = vpop.f32.mrb[0].mxu0
        %v3891 = vadd.f32 %v3503, %v3890
        %v3892 = vpop.f32.mrb[0].mxu0
        %3893 = vmatprep.mubr.f32.mxu0 0.0
        %3894 = vmatmul.mubr.f32.gmra.mrb[0].mxu0 %v581
        %v3895 = vpop.f32.mrb[0].mxu0
        %v3896 = vadd.f32 %v3508, %v3895
        %v3897 = vpop.f32.mrb[0].mxu0
        %3898 = vmatprep.mubr.f32.mxu0 0.0
        %3899 = vmatmul.mubr.f32.gmra.mrb[0].mxu0 %v583
        %v3900 = vpop.f32.mrb[0].mxu0
        %v3901 = vadd.f32 %v3513, %v3900
        %v3902 = vpop.f32.mrb[0].mxu0
        %3903 = vmatprep.mubr.f32.mxu0 0.0
        %3904 = vmatmul.mubr.f32.gmra.mrb[0].mxu0 %v585
        %v3905 = vpop.f32.mrb[0].mxu0
        %v3906 = vadd.f32 %v3518, %v3905
        %v3907 = vpop.f32.mrb[0].mxu0
        %3908 = vmatprep.mubr.f32.mxu0 0.0
        %3909 = vmatmul.mubr.f32.gmra.mrb[0].mxu0 %v583
        %v3910 = vpop.f32.mrb[0].mxu0
        %v3911 = vadd.f32 %v3523, %v3910
        %v3912 = vpop.f32.mrb[0].mxu0
        %3913 = vmatprep.mubr.f32.mxu0 0.0
        %3914 = vmatmul.mubr.f32.gmra.mrb[0].mxu0 %v585
        %v3915 = vpop.f32.mrb[0].mxu0
        %v3916 = vadd.f32 %v3528, %v3915
        %v3917 = vpop.f32.mrb[0].mxu0
        %3918 = vmatprep.mubr.f32.mxu0 0.0
        %3919 = vmatmul.mubr.f32.gmra.mrb[0].mxu0 %v587
        %v3920 = vpop.f32.mrb[0].mxu0
        %v3921 = vadd.f32 %v3533, %v3920
        %v3922 = vpop.f32.mrb[0].mxu0
        %3923 = vmatprep.mubr.f32.mxu0 0.0
        %3924 = vmatmul.mubr.f32.gmra.mrb[0].mxu0 %v589
        %v3925 = vpop.f32.mrb[0].mxu0
        %v3926 = vadd.f32 %v3538, %v3925
        %v3927 = vpop.f32.mrb[0].mxu0
        %3928 = vmatprep.mubr.f32.mxu0 0.0
        %3929 = vmatmul.mubr.f32.gmra.mrb[0].mxu0 %v587
        %v3930 = vpop.f32.mrb[0].mxu0
        %v3931 = vadd.f32 %v3543, %v3930
        %v3932 = vpop.f32.mrb[0].mxu0
        %3933 = vmatprep.mubr.f32.mxu0 0.0
        %3934 = vmatmul.mubr.f32.gmra.mrb[0].mxu0 %v589
        %v3935 = vpop.f32.mrb[0].mxu0
        %v3936 = vadd.f32 %v3548, %v3935
        %v3937 = vpop.f32.mrb[0].mxu0
        %3938 = vmatprep.mubr.f32.mxu0 0.0
        %3939 = vmatmul.mubr.f32.gmra.mrb[0].mxu0 %v591
        %v3940 = vpop.f32.mrb[0].mxu0
        %v3941 = vadd.f32 %v3553, %v3940
        %v3942 = vpop.f32.mrb[0].mxu0
        %3943 = vmatprep.mubr.f32.mxu0 0.0
        %3944 = vmatmul.mubr.f32.gmra.mrb[0].mxu0 %v593
        %v3945 = vpop.f32.mrb[0].mxu0
        %v3946 = vadd.f32 %v3558, %v3945
        %v3947 = vpop.f32.mrb[0].mxu0
        %3948 = vmatprep.mubr.f32.mxu0 0.0
        %3949 = vmatmul.mubr.f32.gmra.mrb[0].mxu0 %v591
        %v3950 = vpop.f32.mrb[0].mxu0
        %v3951 = vadd.f32 %v3563, %v3950
        %v3952 = vpop.f32.mrb[0].mxu0
        %3953 = vmatprep.mubr.f32.mxu0 0.0
        %3954 = vmatmul.mubr.f32.gmra.mrb[0].mxu0 %v593
        %v3955 = vpop.f32.mrb[0].mxu0
        %v3956 = vadd.f32 %v3568, %v3955
        %v3957 = vpop.f32.mrb[0].mxu0
        %3958 = vmatprep.mubr.f32.mxu0 0.0
        %3959 = vmatmul.mubr.f32.gmra.mrb[0].mxu0 %v595
        %v3960 = vpop.f32.mrb[0].mxu0
        %v3961 = vadd.f32 %v3573, %v3960
        %v3962 = vpop.f32.mrb[0].mxu0
        %3963 = vmatprep.mubr.f32.mxu0 0.0
        %3964 = vmatmul.mubr.f32.gmra.mrb[0].mxu0 %v597
        %v3965 = vpop.f32.mrb[0].mxu0
        %v3966 = vadd.f32 %v3578, %v3965
        %v3967 = vpop.f32.mrb[0].mxu0
        %3968 = vmatprep.mubr.f32.mxu0 0.0
        %3969 = vmatmul.mubr.f32.gmra.mrb[0].mxu0 %v595
        %v3970 = vpop.f32.mrb[0].mxu0
        %v3971 = vadd.f32 %v3583, %v3970
        %v3972 = vpop.f32.mrb[0].mxu0
        %3973 = vmatprep.mubr.f32.mxu0 0.0
        %3974 = vmatmul.mubr.f32.gmra.mrb[0].mxu0 %v597
        %v3975 = vpop.f32.mrb[0].mxu0
        %v3976 = vadd.f32 %v3588, %v3975
        %v3977 = vpop.f32.mrb[0].mxu0
        %3978 = vmatprep.mubr.f32.mxu0 0.0
        %3979 = vmatmul.mubr.f32.gmra.mrb[0].mxu0 %v599
        %v3980 = vpop.f32.mrb[0].mxu0
        %v3981 = vadd.f32 %v3593, %v3980
        %v3982 = vpop.f32.mrb[0].mxu0
        %3983 = vmatprep.mubr.f32.mxu0 0.0
        %3984 = vmatmul.mubr.f32.gmra.mrb[0].mxu0 %v601
        %v3985 = vpop.f32.mrb[0].mxu0
        %v3986 = vadd.f32 %v3598, %v3985
        %v3987 = vpop.f32.mrb[0].mxu0
        %3988 = vmatprep.mubr.f32.mxu0 0.0
        %3989 = vmatmul.mubr.f32.gmra.mrb[0].mxu0 %v599
        %v3990 = vpop.f32.mrb[0].mxu0
        %v3991 = vadd.f32 %v3603, %v3990
        %v3992 = vpop.f32.mrb[0].mxu0
        %3993 = vmatprep.mubr.f32.mxu0 0.0
        %3994 = vmatmul.mubr.f32.gmra.mrb[0].mxu0 %v601
        %v3995 = vpop.f32.mrb[0].mxu0
        %v3996 = vadd.f32 %v3608, %v3995
        %v3997 = vpop.f32.mrb[0].mxu0
        %3998 = vmatprep.mubr.f32.mxu0 0.0
        %3999 = vmatmul.mubr.f32.gmra.mrb[0].mxu0 %v603
        %v4000 = vpop.f32.mrb[0].mxu0
        %v4001 = vadd.f32 %v3613, %v4000
        %v4002 = vpop.f32.mrb[0].mxu0
        %4003 = vmatprep.mubr.f32.mxu0 0.0
        %4004 = vmatmul.mubr.f32.gmra.mrb[0].mxu0 %v605
        %v4005 = vpop.f32.mrb[0].mxu0
        %v4006 = vadd.f32 %v3618, %v4005
        %v4007 = vpop.f32.mrb[0].mxu0
        %4008 = vmatprep.mubr.f32.mxu0 0.0
        %4009 = vmatmul.mubr.f32.gmra.mrb[0].mxu0 %v603
        %v4010 = vpop.f32.mrb[0].mxu0
        %v4011 = vadd.f32 %v3623, %v4010
        %v4012 = vpop.f32.mrb[0].mxu0
        %4013 = vmatprep.mubr.f32.mxu0 0.0
        %4014 = vmatmul.mubr.f32.gmra.mrb[0].mxu0 %v605
        %v4015 = vpop.f32.mrb[0].mxu0
        %v4016 = vadd.f32 %v3628, %v4015
        %v4017 = vpop.f32.mrb[0].mxu0
        %4018 = vdwg.mxu0
        %v4019 = vld [vmem:[#allocation2] sm:$0xff]
        %v4020 = vld [vmem:[#allocation2 + $0x8] sm:$0xff]
        %v4021 = vld [vmem:[#allocation2 + $0x10] sm:$0xff]
        %v4022 = vld [vmem:[#allocation2 + $0x18] sm:$0xff]
        %v4023 = vld [vmem:[#allocation2 + $0x20] sm:$0xff]
        %v4024 = vld [vmem:[#allocation2 + $0x28] sm:$0xff]
        %v4025 = vld [vmem:[#allocation2 + $0x30] sm:$0xff]
        %v4026 = vld [vmem:[#allocation2 + $0x38] sm:$0xff]
        %v4027 = vld [vmem:[#allocation2 + $0x40] sm:$0xff]
        %v4028 = vld [vmem:[#allocation2 + $0x48] sm:$0xff]
        %v4029 = vld [vmem:[#allocation2 + $0x50] sm:$0xff]
        %v4030 = vld [vmem:[#allocation2 + $0x58] sm:$0xff]
        %v4031 = vld [vmem:[#allocation2 + $0x60] sm:$0xff]
        %v4032 = vld [vmem:[#allocation2 + $0x68] sm:$0xff]
        %v4033 = vld [vmem:[#allocation2 + $0x70] sm:$0xff]
        %v4034 = vld [vmem:[#allocation2 + $0x78] sm:$0xff]
        %v4035 = vld [vmem:[#allocation2 + $0x80] sm:$0xff]
        %v4036 = vld [vmem:[#allocation2 + $0x88] sm:$0xff]
        %v4037 = vld [vmem:[#allocation2 + $0x90] sm:$0xff]
        %v4038 = vld [vmem:[#allocation2 + $0x98] sm:$0xff]
        %v4039 = vld [vmem:[#allocation2 + $0xa0] sm:$0xff]
        %v4040 = vld [vmem:[#allocation2 + $0xa8] sm:$0xff]
        %v4041 = vld [vmem:[#allocation2 + $0xb0] sm:$0xff]
        %v4042 = vld [vmem:[#allocation2 + $0xb8] sm:$0xff]
        %v4043 = vld [vmem:[#allocation2 + $0xc0] sm:$0xff]
        %v4044 = vld [vmem:[#allocation2 + $0xc8] sm:$0xff]
        %v4045 = vld [vmem:[#allocation2 + $0xd0] sm:$0xff]
        %v4046 = vld [vmem:[#allocation2 + $0xd8] sm:$0xff]
        %v4047 = vld [vmem:[#allocation2 + $0xe0] sm:$0xff]
        %v4048 = vld [vmem:[#allocation2 + $0xe8] sm:$0xff]
        %v4049 = vld [vmem:[#allocation2 + $0xf0] sm:$0xff]
        %v4050 = vld [vmem:[#allocation2 + $0xf8] sm:$0xff]
        %v4051 = vld [vmem:[#allocation2 + $0x100] sm:$0xff]
        %v4052 = vld [vmem:[#allocation2 + $0x108] sm:$0xff]
        %v4053 = vld [vmem:[#allocation2 + $0x110] sm:$0xff]
        %v4054 = vld [vmem:[#allocation2 + $0x118] sm:$0xff]
        %v4055 = vld [vmem:[#allocation2 + $0x120] sm:$0xff]
        %v4056 = vld [vmem:[#allocation2 + $0x128] sm:$0xff]
        %v4057 = vld [vmem:[#allocation2 + $0x130] sm:$0xff]
        %v4058 = vld [vmem:[#allocation2 + $0x138] sm:$0xff]
        %v4059 = vld [vmem:[#allocation2 + $0x140] sm:$0xff]
        %v4060 = vld [vmem:[#allocation2 + $0x148] sm:$0xff]
        %v4061 = vld [vmem:[#allocation2 + $0x150] sm:$0xff]
        %v4062 = vld [vmem:[#allocation2 + $0x158] sm:$0xff]
        %v4063 = vld [vmem:[#allocation2 + $0x160] sm:$0xff]
        %v4064 = vld [vmem:[#allocation2 + $0x168] sm:$0xff]
        %v4065 = vld [vmem:[#allocation2 + $0x170] sm:$0xff]
        %v4066 = vld [vmem:[#allocation2 + $0x178] sm:$0xff]
        %v4067 = vld [vmem:[#allocation2 + $0x180] sm:$0xff]
        %v4068 = vld [vmem:[#allocation2 + $0x188] sm:$0xff]
        %v4069 = vld [vmem:[#allocation2 + $0x190] sm:$0xff]
        %v4070 = vld [vmem:[#allocation2 + $0x198] sm:$0xff]
        %v4071 = vld [vmem:[#allocation2 + $0x1a0] sm:$0xff]
        %v4072 = vld [vmem:[#allocation2 + $0x1a8] sm:$0xff]
        %v4073 = vld [vmem:[#allocation2 + $0x1b0] sm:$0xff]
        %v4074 = vld [vmem:[#allocation2 + $0x1b8] sm:$0xff]
        %v4075 = vld [vmem:[#allocation2 + $0x1c0] sm:$0xff]
        %v4076 = vld [vmem:[#allocation2 + $0x1c8] sm:$0xff]
        %v4077 = vld [vmem:[#allocation2 + $0x1d0] sm:$0xff]
        %v4078 = vld [vmem:[#allocation2 + $0x1d8] sm:$0xff]
        %v4079 = vld [vmem:[#allocation2 + $0x1e0] sm:$0xff]
        %v4080 = vld [vmem:[#allocation2 + $0x1e8] sm:$0xff]
        %v4081 = vld [vmem:[#allocation2 + $0x1f0] sm:$0xff]
        %v4082 = vld [vmem:[#allocation2 + $0x1f8] sm:$0xff]
        %v4083 = vadd.f32 %v4019, %v2924
        %v4084 = vadd.f32 %v4020, %v2929
        %v4085 = vadd.f32 %v4021, %v2934
        %v4086 = vadd.f32 %v4022, %v2939
        %v4087 = vadd.f32 %v4023, %v2944
        %v4088 = vadd.f32 %v4024, %v2949
        %v4089 = vadd.f32 %v4025, %v2954
        %v4090 = vadd.f32 %v4026, %v2959
        %v4091 = vadd.f32 %v4027, %v2964
        %v4092 = vadd.f32 %v4028, %v2969
        %v4093 = vadd.f32 %v4029, %v2974
        %v4094 = vadd.f32 %v4030, %v2979
        %v4095 = vadd.f32 %v4031, %v2984
        %v4096 = vadd.f32 %v4032, %v2989
        %v4097 = vadd.f32 %v4033, %v2994
        %v4098 = vadd.f32 %v4034, %v2999
        %v4099 = vadd.f32 %v4035, %v3004
        %v4100 = vadd.f32 %v4036, %v3009
        %v4101 = vadd.f32 %v4037, %v3014
        %v4102 = vadd.f32 %v4038, %v3019
        %v4103 = vadd.f32 %v4039, %v3024
        %v4104 = vadd.f32 %v4040, %v3029
        %v4105 = vadd.f32 %v4041, %v3034
        %v4106 = vadd.f32 %v4042, %v3039
        %v4107 = vadd.f32 %v4043, %v3044
        %v4108 = vadd.f32 %v4044, %v3049
        %v4109 = vadd.f32 %v4045, %v3054
        %v4110 = vadd.f32 %v4046, %v3059
        %v4111 = vadd.f32 %v4047, %v3064
        %v4112 = vadd.f32 %v4048, %v3069
        %v4113 = vadd.f32 %v4049, %v3074
        %v4114 = vadd.f32 %v4050, %v3079
        %v4115 = vadd.f32 %v4051, %v3084
        %v4116 = vadd.f32 %v4052, %v3089
        %v4117 = vadd.f32 %v4053, %v3094
        %v4118 = vadd.f32 %v4054, %v3099
        %v4119 = vadd.f32 %v4055, %v3104
        %v4120 = vadd.f32 %v4056, %v3109
        %v4121 = vadd.f32 %v4057, %v3114
        %v4122 = vadd.f32 %v4058, %v3119
        %v4123 = vadd.f32 %v4059, %v3124
        %v4124 = vadd.f32 %v4060, %v3129
        %v4125 = vadd.f32 %v4061, %v3134
        %v4126 = vadd.f32 %v4062, %v3139
        %v4127 = vadd.f32 %v4063, %v3144
        %v4128 = vadd.f32 %v4064, %v3149
        %v4129 = vadd.f32 %v4065, %v3154
        %v4130 = vadd.f32 %v4066, %v3159
        %v4131 = vadd.f32 %v4067, %v3164
        %v4132 = vadd.f32 %v4068, %v3169
        %v4133 = vadd.f32 %v4069, %v3174
        %v4134 = vadd.f32 %v4070, %v3179
        %v4135 = vadd.f32 %v4071, %v3184
        %v4136 = vadd.f32 %v4072, %v3189
        %v4137 = vadd.f32 %v4073, %v3194
        %v4138 = vadd.f32 %v4074, %v3199
        %v4139 = vadd.f32 %v4075, %v3204
        %v4140 = vadd.f32 %v4076, %v3209
        %v4141 = vadd.f32 %v4077, %v3214
        %v4142 = vadd.f32 %v4078, %v3219
        %v4143 = vadd.f32 %v4079, %v3224
        %v4144 = vadd.f32 %v4080, %v3229
        %v4145 = vadd.f32 %v4081, %v3234
        %v4146 = vadd.f32 %v4082, %v3239
        %4147 = vst.msk [vmem:[#allocation2] sm:$0xff] %vm538, %v4083
        %4148 = vst.msk [vmem:[#allocation2 + $0x8] sm:$0xff] %vm538, %v4084
        %4149 = vst.msk [vmem:[#allocation2 + $0x10] sm:$0xff] %vm538, %v4085
        %4150 = vst.msk [vmem:[#allocation2 + $0x18] sm:$0xff] %vm538, %v4086
        %4151 = vst.msk [vmem:[#allocation2 + $0x20] sm:$0xff] %vm538, %v4087
        %4152 = vst.msk [vmem:[#allocation2 + $0x28] sm:$0xff] %vm538, %v4088
        %4153 = vst.msk [vmem:[#allocation2 + $0x30] sm:$0xff] %vm538, %v4089
        %4154 = vst.msk [vmem:[#allocation2 + $0x38] sm:$0xff] %vm538, %v4090
        %4155 = vst.msk [vmem:[#allocation2 + $0x40] sm:$0xff] %vm538, %v4091
        %4156 = vst.msk [vmem:[#allocation2 + $0x48] sm:$0xff] %vm538, %v4092
        %4157 = vst.msk [vmem:[#allocation2 + $0x50] sm:$0xff] %vm538, %v4093
        %4158 = vst.msk [vmem:[#allocation2 + $0x58] sm:$0xff] %vm538, %v4094
        %4159 = vst.msk [vmem:[#allocation2 + $0x60] sm:$0xff] %vm538, %v4095
        %4160 = vst.msk [vmem:[#allocation2 + $0x68] sm:$0xff] %vm538, %v4096
        %4161 = vst.msk [vmem:[#allocation2 + $0x70] sm:$0xff] %vm538, %v4097
        %4162 = vst.msk [vmem:[#allocation2 + $0x78] sm:$0xff] %vm538, %v4098
        %4163 = vst.msk [vmem:[#allocation2 + $0x80] sm:$0xff] %vm538, %v4099
        %4164 = vst.msk [vmem:[#allocation2 + $0x88] sm:$0xff] %vm538, %v4100
        %4165 = vst.msk [vmem:[#allocation2 + $0x90] sm:$0xff] %vm538, %v4101
        %4166 = vst.msk [vmem:[#allocation2 + $0x98] sm:$0xff] %vm538, %v4102
        %4167 = vst.msk [vmem:[#allocation2 + $0xa0] sm:$0xff] %vm538, %v4103
        %4168 = vst.msk [vmem:[#allocation2 + $0xa8] sm:$0xff] %vm538, %v4104
        %4169 = vst.msk [vmem:[#allocation2 + $0xb0] sm:$0xff] %vm538, %v4105
        %4170 = vst.msk [vmem:[#allocation2 + $0xb8] sm:$0xff] %vm538, %v4106
        %4171 = vst.msk [vmem:[#allocation2 + $0xc0] sm:$0xff] %vm538, %v4107
        %4172 = vst.msk [vmem:[#allocation2 + $0xc8] sm:$0xff] %vm538, %v4108
        %4173 = vst.msk [vmem:[#allocation2 + $0xd0] sm:$0xff] %vm538, %v4109
        %4174 = vst.msk [vmem:[#allocation2 + $0xd8] sm:$0xff] %vm538, %v4110
        %4175 = vst.msk [vmem:[#allocation2 + $0xe0] sm:$0xff] %vm538, %v4111
        %4176 = vst.msk [vmem:[#allocation2 + $0xe8] sm:$0xff] %vm538, %v4112
        %4177 = vst.msk [vmem:[#allocation2 + $0xf0] sm:$0xff] %vm538, %v4113
        %4178 = vst.msk [vmem:[#allocation2 + $0xf8] sm:$0xff] %vm538, %v4114
        %4179 = vst.msk [vmem:[#allocation2 + $0x100] sm:$0xff] %vm538, %v4115
        %4180 = vst.msk [vmem:[#allocation2 + $0x108] sm:$0xff] %vm538, %v4116
        %4181 = vst.msk [vmem:[#allocation2 + $0x110] sm:$0xff] %vm538, %v4117
        %4182 = vst.msk [vmem:[#allocation2 + $0x118] sm:$0xff] %vm538, %v4118
        %4183 = vst.msk [vmem:[#allocation2 + $0x120] sm:$0xff] %vm538, %v4119
        %4184 = vst.msk [vmem:[#allocation2 + $0x128] sm:$0xff] %vm538, %v4120
        %4185 = vst.msk [vmem:[#allocation2 + $0x130] sm:$0xff] %vm538, %v4121
        %4186 = vst.msk [vmem:[#allocation2 + $0x138] sm:$0xff] %vm538, %v4122
        %4187 = vst.msk [vmem:[#allocation2 + $0x140] sm:$0xff] %vm538, %v4123
        %4188 = vst.msk [vmem:[#allocation2 + $0x148] sm:$0xff] %vm538, %v4124
        %4189 = vst.msk [vmem:[#allocation2 + $0x150] sm:$0xff] %vm538, %v4125
        %4190 = vst.msk [vmem:[#allocation2 + $0x158] sm:$0xff] %vm538, %v4126
        %4191 = vst.msk [vmem:[#allocation2 + $0x160] sm:$0xff] %vm538, %v4127
        %4192 = vst.msk [vmem:[#allocation2 + $0x168] sm:$0xff] %vm538, %v4128
        %4193 = vst.msk [vmem:[#allocation2 + $0x170] sm:$0xff] %vm538, %v4129
        %4194 = vst.msk [vmem:[#allocation2 + $0x178] sm:$0xff] %vm538, %v4130
        %4195 = vst.msk [vmem:[#allocation2 + $0x180] sm:$0xff] %vm538, %v4131
        %4196 = vst.msk [vmem:[#allocation2 + $0x188] sm:$0xff] %vm538, %v4132
        %4197 = vst.msk [vmem:[#allocation2 + $0x190] sm:$0xff] %vm538, %v4133
        %4198 = vst.msk [vmem:[#allocation2 + $0x198] sm:$0xff] %vm538, %v4134
        %4199 = vst.msk [vmem:[#allocation2 + $0x1a0] sm:$0xff] %vm538, %v4135
        %4200 = vst.msk [vmem:[#allocation2 + $0x1a8] sm:$0xff] %vm538, %v4136
        %4201 = vst.msk [vmem:[#allocation2 + $0x1b0] sm:$0xff] %vm538, %v4137
        %4202 = vst.msk [vmem:[#allocation2 + $0x1b8] sm:$0xff] %vm538, %v4138
        %4203 = vst.msk [vmem:[#allocation2 + $0x1c0] sm:$0xff] %vm538, %v4139
        %4204 = vst.msk [vmem:[#allocation2 + $0x1c8] sm:$0xff] %vm538, %v4140
        %4205 = vst.msk [vmem:[#allocation2 + $0x1d0] sm:$0xff] %vm538, %v4141
        %4206 = vst.msk [vmem:[#allocation2 + $0x1d8] sm:$0xff] %vm538, %v4142
        %4207 = vst.msk [vmem:[#allocation2 + $0x1e0] sm:$0xff] %vm538, %v4143
        %4208 = vst.msk [vmem:[#allocation2 + $0x1e8] sm:$0xff] %vm538, %v4144
        %4209 = vst.msk [vmem:[#allocation2 + $0x1f0] sm:$0xff] %vm538, %v4145
        %4210 = vst.msk [vmem:[#allocation2 + $0x1f8] sm:$0xff] %vm538, %v4146
        %v4211 = vld [vmem:[#allocation3] sm:$0xff]
        %v4212 = vld [vmem:[#allocation3 + $0x8] sm:$0xff]
        %v4213 = vld [vmem:[#allocation3 + $0x10] sm:$0xff]
        %v4214 = vld [vmem:[#allocation3 + $0x18] sm:$0xff]
        %v4215 = vld [vmem:[#allocation3 + $0x20] sm:$0xff]
        %v4216 = vld [vmem:[#allocation3 + $0x28] sm:$0xff]
        %v4217 = vld [vmem:[#allocation3 + $0x30] sm:$0xff]
        %v4218 = vld [vmem:[#allocation3 + $0x38] sm:$0xff]
        %v4219 = vld [vmem:[#allocation3 + $0x40] sm:$0xff]
        %v4220 = vld [vmem:[#allocation3 + $0x48] sm:$0xff]
        %v4221 = vld [vmem:[#allocation3 + $0x50] sm:$0xff]
        %v4222 = vld [vmem:[#allocation3 + $0x58] sm:$0xff]
        %v4223 = vld [vmem:[#allocation3 + $0x60] sm:$0xff]
        %v4224 = vld [vmem:[#allocation3 + $0x68] sm:$0xff]
        %v4225 = vld [vmem:[#allocation3 + $0x70] sm:$0xff]
        %v4226 = vld [vmem:[#allocation3 + $0x78] sm:$0xff]
        %v4227 = vld [vmem:[#allocation3 + $0x80] sm:$0xff]
        %v4228 = vld [vmem:[#allocation3 + $0x88] sm:$0xff]
        %v4229 = vld [vmem:[#allocation3 + $0x90] sm:$0xff]
        %v4230 = vld [vmem:[#allocation3 + $0x98] sm:$0xff]
        %v4231 = vld [vmem:[#allocation3 + $0xa0] sm:$0xff]
        %v4232 = vld [vmem:[#allocation3 + $0xa8] sm:$0xff]
        %v4233 = vld [vmem:[#allocation3 + $0xb0] sm:$0xff]
        %v4234 = vld [vmem:[#allocation3 + $0xb8] sm:$0xff]
        %v4235 = vld [vmem:[#allocation3 + $0xc0] sm:$0xff]
        %v4236 = vld [vmem:[#allocation3 + $0xc8] sm:$0xff]
        %v4237 = vld [vmem:[#allocation3 + $0xd0] sm:$0xff]
        %v4238 = vld [vmem:[#allocation3 + $0xd8] sm:$0xff]
        %v4239 = vld [vmem:[#allocation3 + $0xe0] sm:$0xff]
        %v4240 = vld [vmem:[#allocation3 + $0xe8] sm:$0xff]
        %v4241 = vld [vmem:[#allocation3 + $0xf0] sm:$0xff]
        %v4242 = vld [vmem:[#allocation3 + $0xf8] sm:$0xff]
        %v4243 = vld [vmem:[#allocation3 + $0x100] sm:$0xff]
        %v4244 = vld [vmem:[#allocation3 + $0x108] sm:$0xff]
        %v4245 = vld [vmem:[#allocation3 + $0x110] sm:$0xff]
        %v4246 = vld [vmem:[#allocation3 + $0x118] sm:$0xff]
        %v4247 = vld [vmem:[#allocation3 + $0x120] sm:$0xff]
        %v4248 = vld [vmem:[#allocation3 + $0x128] sm:$0xff]
        %v4249 = vld [vmem:[#allocation3 + $0x130] sm:$0xff]
        %v4250 = vld [vmem:[#allocation3 + $0x138] sm:$0xff]
        %v4251 = vld [vmem:[#allocation3 + $0x140] sm:$0xff]
        %v4252 = vld [vmem:[#allocation3 + $0x148] sm:$0xff]
        %v4253 = vld [vmem:[#allocation3 + $0x150] sm:$0xff]
        %v4254 = vld [vmem:[#allocation3 + $0x158] sm:$0xff]
        %v4255 = vld [vmem:[#allocation3 + $0x160] sm:$0xff]
        %v4256 = vld [vmem:[#allocation3 + $0x168] sm:$0xff]
        %v4257 = vld [vmem:[#allocation3 + $0x170] sm:$0xff]
        %v4258 = vld [vmem:[#allocation3 + $0x178] sm:$0xff]
        %v4259 = vld [vmem:[#allocation3 + $0x180] sm:$0xff]
        %v4260 = vld [vmem:[#allocation3 + $0x188] sm:$0xff]
        %v4261 = vld [vmem:[#allocation3 + $0x190] sm:$0xff]
        %v4262 = vld [vmem:[#allocation3 + $0x198] sm:$0xff]
        %v4263 = vld [vmem:[#allocation3 + $0x1a0] sm:$0xff]
        %v4264 = vld [vmem:[#allocation3 + $0x1a8] sm:$0xff]
        %v4265 = vld [vmem:[#allocation3 + $0x1b0] sm:$0xff]
        %v4266 = vld [vmem:[#allocation3 + $0x1b8] sm:$0xff]
        %v4267 = vld [vmem:[#allocation3 + $0x1c0] sm:$0xff]
        %v4268 = vld [vmem:[#allocation3 + $0x1c8] sm:$0xff]
        %v4269 = vld [vmem:[#allocation3 + $0x1d0] sm:$0xff]
        %v4270 = vld [vmem:[#allocation3 + $0x1d8] sm:$0xff]
        %v4271 = vld [vmem:[#allocation3 + $0x1e0] sm:$0xff]
        %v4272 = vld [vmem:[#allocation3 + $0x1e8] sm:$0xff]
        %v4273 = vld [vmem:[#allocation3 + $0x1f0] sm:$0xff]
        %v4274 = vld [vmem:[#allocation3 + $0x1f8] sm:$0xff]
        %v4275 = vadd.f32 %v4211, %v3701
        %v4276 = vadd.f32 %v4212, %v3706
        %v4277 = vadd.f32 %v4213, %v3711
        %v4278 = vadd.f32 %v4214, %v3716
        %v4279 = vadd.f32 %v4215, %v3721
        %v4280 = vadd.f32 %v4216, %v3726
        %v4281 = vadd.f32 %v4217, %v3731
        %v4282 = vadd.f32 %v4218, %v3736
        %v4283 = vadd.f32 %v4219, %v3741
        %v4284 = vadd.f32 %v4220, %v3746
        %v4285 = vadd.f32 %v4221, %v3751
        %v4286 = vadd.f32 %v4222, %v3756
        %v4287 = vadd.f32 %v4223, %v3761
        %v4288 = vadd.f32 %v4224, %v3766
        %v4289 = vadd.f32 %v4225, %v3771
        %v4290 = vadd.f32 %v4226, %v3776
        %v4291 = vadd.f32 %v4227, %v3781
        %v4292 = vadd.f32 %v4228, %v3786
        %v4293 = vadd.f32 %v4229, %v3791
        %v4294 = vadd.f32 %v4230, %v3796
        %v4295 = vadd.f32 %v4231, %v3801
        %v4296 = vadd.f32 %v4232, %v3806
        %v4297 = vadd.f32 %v4233, %v3811
        %v4298 = vadd.f32 %v4234, %v3816
        %v4299 = vadd.f32 %v4235, %v3821
        %v4300 = vadd.f32 %v4236, %v3826
        %v4301 = vadd.f32 %v4237, %v3831
        %v4302 = vadd.f32 %v4238, %v3836
        %v4303 = vadd.f32 %v4239, %v3841
        %v4304 = vadd.f32 %v4240, %v3846
        %v4305 = vadd.f32 %v4241, %v3851
        %v4306 = vadd.f32 %v4242, %v3856
        %v4307 = vadd.f32 %v4243, %v3861
        %v4308 = vadd.f32 %v4244, %v3866
        %v4309 = vadd.f32 %v4245, %v3871
        %v4310 = vadd.f32 %v4246, %v3876
        %v4311 = vadd.f32 %v4247, %v3881
        %v4312 = vadd.f32 %v4248, %v3886
        %v4313 = vadd.f32 %v4249, %v3891
        %v4314 = vadd.f32 %v4250, %v3896
        %v4315 = vadd.f32 %v4251, %v3901
        %v4316 = vadd.f32 %v4252, %v3906
        %v4317 = vadd.f32 %v4253, %v3911
        %v4318 = vadd.f32 %v4254, %v3916
        %v4319 = vadd.f32 %v4255, %v3921
        %v4320 = vadd.f32 %v4256, %v3926
        %v4321 = vadd.f32 %v4257, %v3931
        %v4322 = vadd.f32 %v4258, %v3936
        %v4323 = vadd.f32 %v4259, %v3941
        %v4324 = vadd.f32 %v4260, %v3946
        %v4325 = vadd.f32 %v4261, %v3951
        %v4326 = vadd.f32 %v4262, %v3956
        %v4327 = vadd.f32 %v4263, %v3961
        %v4328 = vadd.f32 %v4264, %v3966
        %v4329 = vadd.f32 %v4265, %v3971
        %v4330 = vadd.f32 %v4266, %v3976
        %v4331 = vadd.f32 %v4267, %v3981
        %v4332 = vadd.f32 %v4268, %v3986
        %v4333 = vadd.f32 %v4269, %v3991
        %v4334 = vadd.f32 %v4270, %v3996
        %v4335 = vadd.f32 %v4271, %v4001
        %v4336 = vadd.f32 %v4272, %v4006
        %v4337 = vadd.f32 %v4273, %v4011
        %v4338 = vadd.f32 %v4274, %v4016
        %4339 = vst.msk [vmem:[#allocation3] sm:$0xff] %vm538, %v4275
        %4340 = vst.msk [vmem:[#allocation3 + $0x8] sm:$0xff] %vm538, %v4276
        %4341 = vst.msk [vmem:[#allocation3 + $0x10] sm:$0xff] %vm538, %v4277
        %4342 = vst.msk [vmem:[#allocation3 + $0x18] sm:$0xff] %vm538, %v4278
        %4343 = vst.msk [vmem:[#allocation3 + $0x20] sm:$0xff] %vm538, %v4279
        %4344 = vst.msk [vmem:[#allocation3 + $0x28] sm:$0xff] %vm538, %v4280
        %4345 = vst.msk [vmem:[#allocation3 + $0x30] sm:$0xff] %vm538, %v4281
        %4346 = vst.msk [vmem:[#allocation3 + $0x38] sm:$0xff] %vm538, %v4282
        %4347 = vst.msk [vmem:[#allocation3 + $0x40] sm:$0xff] %vm538, %v4283
        %4348 = vst.msk [vmem:[#allocation3 + $0x48] sm:$0xff] %vm538, %v4284
        %4349 = vst.msk [vmem:[#allocation3 + $0x50] sm:$0xff] %vm538, %v4285
        %4350 = vst.msk [vmem:[#allocation3 + $0x58] sm:$0xff] %vm538, %v4286
        %4351 = vst.msk [vmem:[#allocation3 + $0x60] sm:$0xff] %vm538, %v4287
        %4352 = vst.msk [vmem:[#allocation3 + $0x68] sm:$0xff] %vm538, %v4288
        %4353 = vst.msk [vmem:[#allocation3 + $0x70] sm:$0xff] %vm538, %v4289
        %4354 = vst.msk [vmem:[#allocation3 + $0x78] sm:$0xff] %vm538, %v4290
        %4355 = vst.msk [vmem:[#allocation3 + $0x80] sm:$0xff] %vm538, %v4291
        %4356 = vst.msk [vmem:[#allocation3 + $0x88] sm:$0xff] %vm538, %v4292
        %4357 = vst.msk [vmem:[#allocation3 + $0x90] sm:$0xff] %vm538, %v4293
        %4358 = vst.msk [vmem:[#allocation3 + $0x98] sm:$0xff] %vm538, %v4294
        %4359 = vst.msk [vmem:[#allocation3 + $0xa0] sm:$0xff] %vm538, %v4295
        %4360 = vst.msk [vmem:[#allocation3 + $0xa8] sm:$0xff] %vm538, %v4296
        %4361 = vst.msk [vmem:[#allocation3 + $0xb0] sm:$0xff] %vm538, %v4297
        %4362 = vst.msk [vmem:[#allocation3 + $0xb8] sm:$0xff] %vm538, %v4298
        %4363 = vst.msk [vmem:[#allocation3 + $0xc0] sm:$0xff] %vm538, %v4299
        %4364 = vst.msk [vmem:[#allocation3 + $0xc8] sm:$0xff] %vm538, %v4300
        %4365 = vst.msk [vmem:[#allocation3 + $0xd0] sm:$0xff] %vm538, %v4301
        %4366 = vst.msk [vmem:[#allocation3 + $0xd8] sm:$0xff] %vm538, %v4302
        %4367 = vst.msk [vmem:[#allocation3 + $0xe0] sm:$0xff] %vm538, %v4303
        %4368 = vst.msk [vmem:[#allocation3 + $0xe8] sm:$0xff] %vm538, %v4304
        %4369 = vst.msk [vmem:[#allocation3 + $0xf0] sm:$0xff] %vm538, %v4305
        %4370 = vst.msk [vmem:[#allocation3 + $0xf8] sm:$0xff] %vm538, %v4306
        %4371 = vst.msk [vmem:[#allocation3 + $0x100] sm:$0xff] %vm538, %v4307
        %4372 = vst.msk [vmem:[#allocation3 + $0x108] sm:$0xff] %vm538, %v4308
        %4373 = vst.msk [vmem:[#allocation3 + $0x110] sm:$0xff] %vm538, %v4309
        %4374 = vst.msk [vmem:[#allocation3 + $0x118] sm:$0xff] %vm538, %v4310
        %4375 = vst.msk [vmem:[#allocation3 + $0x120] sm:$0xff] %vm538, %v4311
        %4376 = vst.msk [vmem:[#allocation3 + $0x128] sm:$0xff] %vm538, %v4312
        %4377 = vst.msk [vmem:[#allocation3 + $0x130] sm:$0xff] %vm538, %v4313
        %4378 = vst.msk [vmem:[#allocation3 + $0x138] sm:$0xff] %vm538, %v4314
        %4379 = vst.msk [vmem:[#allocation3 + $0x140] sm:$0xff] %vm538, %v4315
        %4380 = vst.msk [vmem:[#allocation3 + $0x148] sm:$0xff] %vm538, %v4316
        %4381 = vst.msk [vmem:[#allocation3 + $0x150] sm:$0xff] %vm538, %v4317
        %4382 = vst.msk [vmem:[#allocation3 + $0x158] sm:$0xff] %vm538, %v4318
        %4383 = vst.msk [vmem:[#allocation3 + $0x160] sm:$0xff] %vm538, %v4319
        %4384 = vst.msk [vmem:[#allocation3 + $0x168] sm:$0xff] %vm538, %v4320
        %4385 = vst.msk [vmem:[#allocation3 + $0x170] sm:$0xff] %vm538, %v4321
        %4386 = vst.msk [vmem:[#allocation3 + $0x178] sm:$0xff] %vm538, %v4322
        %4387 = vst.msk [vmem:[#allocation3 + $0x180] sm:$0xff] %vm538, %v4323
        %4388 = vst.msk [vmem:[#allocation3 + $0x188] sm:$0xff] %vm538, %v4324
        %4389 = vst.msk [vmem:[#allocation3 + $0x190] sm:$0xff] %vm538, %v4325
        %4390 = vst.msk [vmem:[#allocation3 + $0x198] sm:$0xff] %vm538, %v4326
        %4391 = vst.msk [vmem:[#allocation3 + $0x1a0] sm:$0xff] %vm538, %v4327
        %4392 = vst.msk [vmem:[#allocation3 + $0x1a8] sm:$0xff] %vm538, %v4328
        %4393 = vst.msk [vmem:[#allocation3 + $0x1b0] sm:$0xff] %vm538, %v4329
        %4394 = vst.msk [vmem:[#allocation3 + $0x1b8] sm:$0xff] %vm538, %v4330
        %4395 = vst.msk [vmem:[#allocation3 + $0x1c0] sm:$0xff] %vm538, %v4331
        %4396 = vst.msk [vmem:[#allocation3 + $0x1c8] sm:$0xff] %vm538, %v4332
        %4397 = vst.msk [vmem:[#allocation3 + $0x1d0] sm:$0xff] %vm538, %v4333
        %4398 = vst.msk [vmem:[#allocation3 + $0x1d8] sm:$0xff] %vm538, %v4334
        %4399 = vst.msk [vmem:[#allocation3 + $0x1e0] sm:$0xff] %vm538, %v4335
        %4400 = vst.msk [vmem:[#allocation3 + $0x1e8] sm:$0xff] %vm538, %v4336
        %4401 = vst.msk [vmem:[#allocation3 + $0x1f0] sm:$0xff] %vm538, %v4337
        %4402 = vst.msk [vmem:[#allocation3 + $0x1f8] sm:$0xff] %vm538, %v4338
        %s4403 = scalar_lea.vmem [#allocation4], 24
        %v4404 = vld [vmem:[%s4403] sm:$0xf]
        %s4405 = scalar_lea.vmem [#allocation4], 28
        %v4406 = vld [vmem:[%s4405] sm:$0xf]
        %s4407 = scalar_lea.vmem [#allocation4], 32
        %v4408 = vld [vmem:[%s4407] sm:$0xf]
        %v4409 = vadd.f32 %v4406, %v4408
        %v4410 = vsel %vm538, %v312, 0
        %v4412 = vsel %vm538, %v313, 0
        %v4415 = vsel %vm607, %v4409, 0
        %4417 = vmatprep.subr.mxu0 0.0
        %4418 = vmatpush1.msra.mxu0 %v4415
        %4419 = vmatprep.subr.mxu0 0.0
        %4420 = vmatpush1.msra.mxu0 0.0
        %4421 = vmatprep.subr.mxu0 0.0
        %4422 = vmatpush1.msra.mxu0 0.0
        %4423 = vmatprep.subr.mxu0 0.0
        %4424 = vmatpush1.msra.mxu0 0.0
        %4425 = vmatprep.subr.mxu0 0.0
        %4426 = vmatpush1.msra.mxu0 0.0
        %4427 = vmatprep.subr.mxu0 0.0
        %4428 = vmatpush1.msra.mxu0 0.0
        %4429 = vmatprep.subr.mxu0 0.0
        %4430 = vmatpush1.msra.mxu0 0.0
        %4431 = vmatprep.subr.mxu0 0.0
        %4432 = vmatpush1.msra.mxu0 0.0
        %4433 = vmatprep.subr.mxu0 0.0
        %4434 = vmatpush1.msra.mxu0 0.0
        %4435 = vmatprep.subr.mxu0 0.0
        %4436 = vmatpush1.msra.mxu0 0.0
        %4437 = vmatprep.subr.mxu0 0.0
        %4438 = vmatpush1.msra.mxu0 0.0
        %4439 = vmatprep.subr.mxu0 0.0
        %4440 = vmatpush1.msra.mxu0 0.0
        %4441 = vmatprep.subr.mxu0 0.0
        %4442 = vmatpush1.msra.mxu0 0.0
        %4443 = vmatprep.subr.mxu0 0.0
        %4444 = vmatpush1.msra.mxu0 0.0
        %4445 = vmatprep.subr.mxu0 0.0
        %4446 = vmatpush1.msra.mxu0 0.0
        %4447 = vmatprep.subr.mxu0 0.0
        %4448 = vmatpush1.msra.mxu0 0.0
        %4449 = vmatprep.subr.mxu0 0.0
        %4450 = vmatpush1.msra.mxu0 0.0
        %4451 = vmatprep.subr.mxu0 0.0
        %4452 = vmatpush1.msra.mxu0 0.0
        %4453 = vmatprep.subr.mxu0 0.0
        %4454 = vmatpush1.msra.mxu0 0.0
        %4455 = vmatprep.subr.mxu0 0.0
        %4456 = vmatpush1.msra.mxu0 0.0
        %4457 = vmatprep.subr.mxu0 0.0
        %4458 = vmatpush1.msra.mxu0 0.0
        %4459 = vmatprep.subr.mxu0 0.0
        %4460 = vmatpush1.msra.mxu0 0.0
        %4461 = vmatprep.subr.mxu0 0.0
        %4462 = vmatpush1.msra.mxu0 0.0
        %4463 = vmatprep.subr.mxu0 0.0
        %4464 = vmatpush1.msra.mxu0 0.0
        %4465 = vmatprep.subr.mxu0 0.0
        %4466 = vmatpush1.msra.mxu0 0.0
        %4467 = vmatprep.subr.mxu0 0.0
        %4468 = vmatpush1.msra.mxu0 0.0
        %4469 = vmatprep.subr.mxu0 0.0
        %4470 = vmatpush1.msra.mxu0 0.0
        %4471 = vmatprep.subr.mxu0 0.0
        %4472 = vmatpush1.msra.mxu0 0.0
        %4473 = vmatprep.subr.mxu0 0.0
        %4474 = vmatpush1.msra.mxu0 0.0
        %4475 = vmatprep.subr.mxu0 0.0
        %4476 = vmatpush1.msra.mxu0 0.0
        %4477 = vmatprep.subr.mxu0 0.0
        %4478 = vmatpush1.msra.mxu0 0.0
        %4479 = vmatprep.subr.mxu0 0.0
        %4480 = vmatpush1.msra.mxu0 0.0
        %4481 = vmatprep.mubr.f32.mxu0 0.0
        %4482 = vmatmul.mubr.f32.gmra.mrb[0].mxu0 %v543
        %v4483 = vpop.f32.mrb[0].mxu0
        %v4484 = vadd.f32 0.0, %v4483
        %v4485 = vpop.f32.mrb[0].mxu0
        %4486 = vmatprep.mubr.f32.mxu0 0.0
        %4487 = vmatmul.mubr.f32.gmra.mrb[0].mxu0 %v545
        %v4488 = vpop.f32.mrb[0].mxu0
        %v4489 = vadd.f32 0.0, %v4488
        %v4490 = vpop.f32.mrb[0].mxu0
        %4491 = vmatprep.mubr.f32.mxu0 0.0
        %4492 = vmatmul.mubr.f32.gmra.mrb[0].mxu0 %v547
        %v4493 = vpop.f32.mrb[0].mxu0
        %v4494 = vadd.f32 0.0, %v4493
        %v4495 = vpop.f32.mrb[0].mxu0
        %4496 = vmatprep.mubr.f32.mxu0 0.0
        %4497 = vmatmul.mubr.f32.gmra.mrb[0].mxu0 %v549
        %v4498 = vpop.f32.mrb[0].mxu0
        %v4499 = vadd.f32 0.0, %v4498
        %v4500 = vpop.f32.mrb[0].mxu0
        %4501 = vmatprep.mubr.f32.mxu0 0.0
        %4502 = vmatmul.mubr.f32.gmra.mrb[0].mxu0 %v547
        %v4503 = vpop.f32.mrb[0].mxu0
        %v4504 = vadd.f32 0.0, %v4503
        %v4505 = vpop.f32.mrb[0].mxu0
        %4506 = vmatprep.mubr.f32.mxu0 0.0
        %4507 = vmatmul.mubr.f32.gmra.mrb[0].mxu0 %v549
        %v4508 = vpop.f32.mrb[0].mxu0
        %v4509 = vadd.f32 0.0, %v4508
        %v4510 = vpop.f32.mrb[0].mxu0
        %4511 = vmatprep.mubr.f32.mxu0 0.0
        %4512 = vmatmul.mubr.f32.gmra.mrb[0].mxu0 %v551
        %v4513 = vpop.f32.mrb[0].mxu0
        %v4514 = vadd.f32 0.0, %v4513
        %v4515 = vpop.f32.mrb[0].mxu0
        %4516 = vmatprep.mubr.f32.mxu0 0.0
        %4517 = vmatmul.mubr.f32.gmra.mrb[0].mxu0 %v553
        %v4518 = vpop.f32.mrb[0].mxu0
        %v4519 = vadd.f32 0.0, %v4518
        %v4520 = vpop.f32.mrb[0].mxu0
        %4521 = vmatprep.mubr.f32.mxu0 0.0
        %4522 = vmatmul.mubr.f32.gmra.mrb[0].mxu0 %v551
        %v4523 = vpop.f32.mrb[0].mxu0
        %v4524 = vadd.f32 0.0, %v4523
        %v4525 = vpop.f32.mrb[0].mxu0
        %4526 = vmatprep.mubr.f32.mxu0 0.0
        %4527 = vmatmul.mubr.f32.gmra.mrb[0].mxu0 %v553
        %v4528 = vpop.f32.mrb[0].mxu0
        %v4529 = vadd.f32 0.0, %v4528
        %v4530 = vpop.f32.mrb[0].mxu0
        %4531 = vmatprep.mubr.f32.mxu0 0.0
        %4532 = vmatmul.mubr.f32.gmra.mrb[0].mxu0 %v555
        %v4533 = vpop.f32.mrb[0].mxu0
        %v4534 = vadd.f32 0.0, %v4533
        %v4535 = vpop.f32.mrb[0].mxu0
        %4536 = vmatprep.mubr.f32.mxu0 0.0
        %4537 = vmatmul.mubr.f32.gmra.mrb[0].mxu0 %v557
        %v4538 = vpop.f32.mrb[0].mxu0
        %v4539 = vadd.f32 0.0, %v4538
        %v4540 = vpop.f32.mrb[0].mxu0
        %4541 = vmatprep.mubr.f32.mxu0 0.0
        %4542 = vmatmul.mubr.f32.gmra.mrb[0].mxu0 %v555
        %v4543 = vpop.f32.mrb[0].mxu0
        %v4544 = vadd.f32 0.0, %v4543
        %v4545 = vpop.f32.mrb[0].mxu0
        %4546 = vmatprep.mubr.f32.mxu0 0.0
        %4547 = vmatmul.mubr.f32.gmra.mrb[0].mxu0 %v557
        %v4548 = vpop.f32.mrb[0].mxu0
        %v4549 = vadd.f32 0.0, %v4548
        %v4550 = vpop.f32.mrb[0].mxu0
        %4551 = vmatprep.mubr.f32.mxu0 0.0
        %4552 = vmatmul.mubr.f32.gmra.mrb[0].mxu0 %v559
        %v4553 = vpop.f32.mrb[0].mxu0
        %v4554 = vadd.f32 0.0, %v4553
        %v4555 = vpop.f32.mrb[0].mxu0
        %4556 = vmatprep.mubr.f32.mxu0 0.0
        %4557 = vmatmul.mubr.f32.gmra.mrb[0].mxu0 %v561
        %v4558 = vpop.f32.mrb[0].mxu0
        %v4559 = vadd.f32 0.0, %v4558
        %v4560 = vpop.f32.mrb[0].mxu0
        %4561 = vmatprep.mubr.f32.mxu0 0.0
        %4562 = vmatmul.mubr.f32.gmra.mrb[0].mxu0 %v559
        %v4563 = vpop.f32.mrb[0].mxu0
        %v4564 = vadd.f32 0.0, %v4563
        %v4565 = vpop.f32.mrb[0].mxu0
        %4566 = vmatprep.mubr.f32.mxu0 0.0
        %4567 = vmatmul.mubr.f32.gmra.mrb[0].mxu0 %v561
        %v4568 = vpop.f32.mrb[0].mxu0
        %v4569 = vadd.f32 0.0, %v4568
        %v4570 = vpop.f32.mrb[0].mxu0
        %4571 = vmatprep.mubr.f32.mxu0 0.0
        %4572 = vmatmul.mubr.f32.gmra.mrb[0].mxu0 %v563
        %v4573 = vpop.f32.mrb[0].mxu0
        %v4574 = vadd.f32 0.0, %v4573
        %v4575 = vpop.f32.mrb[0].mxu0
        %4576 = vmatprep.mubr.f32.mxu0 0.0
        %4577 = vmatmul.mubr.f32.gmra.mrb[0].mxu0 %v565
        %v4578 = vpop.f32.mrb[0].mxu0
        %v4579 = vadd.f32 0.0, %v4578
        %v4580 = vpop.f32.mrb[0].mxu0
        %4581 = vmatprep.mubr.f32.mxu0 0.0
        %4582 = vmatmul.mubr.f32.gmra.mrb[0].mxu0 %v563
        %v4583 = vpop.f32.mrb[0].mxu0
        %v4584 = vadd.f32 0.0, %v4583
        %v4585 = vpop.f32.mrb[0].mxu0
        %4586 = vmatprep.mubr.f32.mxu0 0.0
        %4587 = vmatmul.mubr.f32.gmra.mrb[0].mxu0 %v565
        %v4588 = vpop.f32.mrb[0].mxu0
        %v4589 = vadd.f32 0.0, %v4588
        %v4590 = vpop.f32.mrb[0].mxu0
        %4591 = vmatprep.mubr.f32.mxu0 0.0
        %4592 = vmatmul.mubr.f32.gmra.mrb[0].mxu0 %v567
        %v4593 = vpop.f32.mrb[0].mxu0
        %v4594 = vadd.f32 0.0, %v4593
        %v4595 = vpop.f32.mrb[0].mxu0
        %4596 = vmatprep.mubr.f32.mxu0 0.0
        %4597 = vmatmul.mubr.f32.gmra.mrb[0].mxu0 %v569
        %v4598 = vpop.f32.mrb[0].mxu0
        %v4599 = vadd.f32 0.0, %v4598
        %v4600 = vpop.f32.mrb[0].mxu0
        %4601 = vmatprep.mubr.f32.mxu0 0.0
        %4602 = vmatmul.mubr.f32.gmra.mrb[0].mxu0 %v567
        %v4603 = vpop.f32.mrb[0].mxu0
        %v4604 = vadd.f32 0.0, %v4603
        %v4605 = vpop.f32.mrb[0].mxu0
        %4606 = vmatprep.mubr.f32.mxu0 0.0
        %4607 = vmatmul.mubr.f32.gmra.mrb[0].mxu0 %v569
        %v4608 = vpop.f32.mrb[0].mxu0
        %v4609 = vadd.f32 0.0, %v4608
        %v4610 = vpop.f32.mrb[0].mxu0
        %4611 = vmatprep.mubr.f32.mxu0 0.0
        %4612 = vmatmul.mubr.f32.gmra.mrb[0].mxu0 %v571
        %v4613 = vpop.f32.mrb[0].mxu0
        %v4614 = vadd.f32 0.0, %v4613
        %v4615 = vpop.f32.mrb[0].mxu0
        %4616 = vmatprep.mubr.f32.mxu0 0.0
        %4617 = vmatmul.mubr.f32.gmra.mrb[0].mxu0 %v573
        %v4618 = vpop.f32.mrb[0].mxu0
        %v4619 = vadd.f32 0.0, %v4618
        %v4620 = vpop.f32.mrb[0].mxu0
        %4621 = vmatprep.mubr.f32.mxu0 0.0
        %4622 = vmatmul.mubr.f32.gmra.mrb[0].mxu0 %v571
        %v4623 = vpop.f32.mrb[0].mxu0
        %v4624 = vadd.f32 0.0, %v4623
        %v4625 = vpop.f32.mrb[0].mxu0
        %4626 = vmatprep.mubr.f32.mxu0 0.0
        %4627 = vmatmul.mubr.f32.gmra.mrb[0].mxu0 %v573
        %v4628 = vpop.f32.mrb[0].mxu0
        %v4629 = vadd.f32 0.0, %v4628
        %v4630 = vpop.f32.mrb[0].mxu0
        %4631 = vmatprep.mubr.f32.mxu0 0.0
        %4632 = vmatmul.mubr.f32.gmra.mrb[0].mxu0 %v575
        %v4633 = vpop.f32.mrb[0].mxu0
        %v4634 = vadd.f32 0.0, %v4633
        %v4635 = vpop.f32.mrb[0].mxu0
        %4636 = vmatprep.mubr.f32.mxu0 0.0
        %4637 = vmatmul.mubr.f32.gmra.mrb[0].mxu0 %v577
        %v4638 = vpop.f32.mrb[0].mxu0
        %v4639 = vadd.f32 0.0, %v4638
        %v4640 = vpop.f32.mrb[0].mxu0
        %4641 = vmatprep.mubr.f32.mxu0 0.0
        %4642 = vmatmul.mubr.f32.gmra.mrb[0].mxu0 %v575
        %v4643 = vpop.f32.mrb[0].mxu0
        %v4644 = vadd.f32 0.0, %v4643
        %v4645 = vpop.f32.mrb[0].mxu0
        %4646 = vmatprep.mubr.f32.mxu0 0.0
        %4647 = vmatmul.mubr.f32.gmra.mrb[0].mxu0 %v577
        %v4648 = vpop.f32.mrb[0].mxu0
        %v4649 = vadd.f32 0.0, %v4648
        %v4650 = vpop.f32.mrb[0].mxu0
        %4651 = vmatprep.mubr.f32.mxu0 0.0
        %4652 = vmatmul.mubr.f32.gmra.mrb[0].mxu0 %v579
        %v4653 = vpop.f32.mrb[0].mxu0
        %v4654 = vadd.f32 0.0, %v4653
        %v4655 = vpop.f32.mrb[0].mxu0
        %4656 = vmatprep.mubr.f32.mxu0 0.0
        %4657 = vmatmul.mubr.f32.gmra.mrb[0].mxu0 %v581
        %v4658 = vpop.f32.mrb[0].mxu0
        %v4659 = vadd.f32 0.0, %v4658
        %v4660 = vpop.f32.mrb[0].mxu0
        %4661 = vmatprep.mubr.f32.mxu0 0.0
        %4662 = vmatmul.mubr.f32.gmra.mrb[0].mxu0 %v579
        %v4663 = vpop.f32.mrb[0].mxu0
        %v4664 = vadd.f32 0.0, %v4663
        %v4665 = vpop.f32.mrb[0].mxu0
        %4666 = vmatprep.mubr.f32.mxu0 0.0
        %4667 = vmatmul.mubr.f32.gmra.mrb[0].mxu0 %v581
        %v4668 = vpop.f32.mrb[0].mxu0
        %v4669 = vadd.f32 0.0, %v4668
        %v4670 = vpop.f32.mrb[0].mxu0
        %4671 = vmatprep.mubr.f32.mxu0 0.0
        %4672 = vmatmul.mubr.f32.gmra.mrb[0].mxu0 %v583
        %v4673 = vpop.f32.mrb[0].mxu0
        %v4674 = vadd.f32 0.0, %v4673
        %v4675 = vpop.f32.mrb[0].mxu0
        %4676 = vmatprep.mubr.f32.mxu0 0.0
        %4677 = vmatmul.mubr.f32.gmra.mrb[0].mxu0 %v585
        %v4678 = vpop.f32.mrb[0].mxu0
        %v4679 = vadd.f32 0.0, %v4678
        %v4680 = vpop.f32.mrb[0].mxu0
        %4681 = vmatprep.mubr.f32.mxu0 0.0
        %4682 = vmatmul.mubr.f32.gmra.mrb[0].mxu0 %v583
        %v4683 = vpop.f32.mrb[0].mxu0
        %v4684 = vadd.f32 0.0, %v4683
        %v4685 = vpop.f32.mrb[0].mxu0
        %4686 = vmatprep.mubr.f32.mxu0 0.0
        %4687 = vmatmul.mubr.f32.gmra.mrb[0].mxu0 %v585
        %v4688 = vpop.f32.mrb[0].mxu0
        %v4689 = vadd.f32 0.0, %v4688
        %v4690 = vpop.f32.mrb[0].mxu0
        %4691 = vmatprep.mubr.f32.mxu0 0.0
        %4692 = vmatmul.mubr.f32.gmra.mrb[0].mxu0 %v587
        %v4693 = vpop.f32.mrb[0].mxu0
        %v4694 = vadd.f32 0.0, %v4693
        %v4695 = vpop.f32.mrb[0].mxu0
        %4696 = vmatprep.mubr.f32.mxu0 0.0
        %4697 = vmatmul.mubr.f32.gmra.mrb[0].mxu0 %v589
        %v4698 = vpop.f32.mrb[0].mxu0
        %v4699 = vadd.f32 0.0, %v4698
        %v4700 = vpop.f32.mrb[0].mxu0
        %4701 = vmatprep.mubr.f32.mxu0 0.0
        %4702 = vmatmul.mubr.f32.gmra.mrb[0].mxu0 %v587
        %v4703 = vpop.f32.mrb[0].mxu0
        %v4704 = vadd.f32 0.0, %v4703
        %v4705 = vpop.f32.mrb[0].mxu0
        %4706 = vmatprep.mubr.f32.mxu0 0.0
        %4707 = vmatmul.mubr.f32.gmra.mrb[0].mxu0 %v589
        %v4708 = vpop.f32.mrb[0].mxu0
        %v4709 = vadd.f32 0.0, %v4708
        %v4710 = vpop.f32.mrb[0].mxu0
        %4711 = vmatprep.mubr.f32.mxu0 0.0
        %4712 = vmatmul.mubr.f32.gmra.mrb[0].mxu0 %v591
        %v4713 = vpop.f32.mrb[0].mxu0
        %v4714 = vadd.f32 0.0, %v4713
        %v4715 = vpop.f32.mrb[0].mxu0
        %4716 = vmatprep.mubr.f32.mxu0 0.0
        %4717 = vmatmul.mubr.f32.gmra.mrb[0].mxu0 %v593
        %v4718 = vpop.f32.mrb[0].mxu0
        %v4719 = vadd.f32 0.0, %v4718
        %v4720 = vpop.f32.mrb[0].mxu0
        %4721 = vmatprep.mubr.f32.mxu0 0.0
        %4722 = vmatmul.mubr.f32.gmra.mrb[0].mxu0 %v591
        %v4723 = vpop.f32.mrb[0].mxu0
        %v4724 = vadd.f32 0.0, %v4723
        %v4725 = vpop.f32.mrb[0].mxu0
        %4726 = vmatprep.mubr.f32.mxu0 0.0
        %4727 = vmatmul.mubr.f32.gmra.mrb[0].mxu0 %v593
        %v4728 = vpop.f32.mrb[0].mxu0
        %v4729 = vadd.f32 0.0, %v4728
        %v4730 = vpop.f32.mrb[0].mxu0
        %4731 = vmatprep.mubr.f32.mxu0 0.0
        %4732 = vmatmul.mubr.f32.gmra.mrb[0].mxu0 %v595
        %v4733 = vpop.f32.mrb[0].mxu0
        %v4734 = vadd.f32 0.0, %v4733
        %v4735 = vpop.f32.mrb[0].mxu0
        %4736 = vmatprep.mubr.f32.mxu0 0.0
        %4737 = vmatmul.mubr.f32.gmra.mrb[0].mxu0 %v597
        %v4738 = vpop.f32.mrb[0].mxu0
        %v4739 = vadd.f32 0.0, %v4738
        %v4740 = vpop.f32.mrb[0].mxu0
        %4741 = vmatprep.mubr.f32.mxu0 0.0
        %4742 = vmatmul.mubr.f32.gmra.mrb[0].mxu0 %v595
        %v4743 = vpop.f32.mrb[0].mxu0
        %v4744 = vadd.f32 0.0, %v4743
        %v4745 = vpop.f32.mrb[0].mxu0
        %4746 = vmatprep.mubr.f32.mxu0 0.0
        %4747 = vmatmul.mubr.f32.gmra.mrb[0].mxu0 %v597
        %v4748 = vpop.f32.mrb[0].mxu0
        %v4749 = vadd.f32 0.0, %v4748
        %v4750 = vpop.f32.mrb[0].mxu0
        %4751 = vmatprep.mubr.f32.mxu0 0.0
        %4752 = vmatmul.mubr.f32.gmra.mrb[0].mxu0 %v599
        %v4753 = vpop.f32.mrb[0].mxu0
        %v4754 = vadd.f32 0.0, %v4753
        %v4755 = vpop.f32.mrb[0].mxu0
        %4756 = vmatprep.mubr.f32.mxu0 0.0
        %4757 = vmatmul.mubr.f32.gmra.mrb[0].mxu0 %v601
        %v4758 = vpop.f32.mrb[0].mxu0
        %v4759 = vadd.f32 0.0, %v4758
        %v4760 = vpop.f32.mrb[0].mxu0
        %4761 = vmatprep.mubr.f32.mxu0 0.0
        %4762 = vmatmul.mubr.f32.gmra.mrb[0].mxu0 %v599
        %v4763 = vpop.f32.mrb[0].mxu0
        %v4764 = vadd.f32 0.0, %v4763
        %v4765 = vpop.f32.mrb[0].mxu0
        %4766 = vmatprep.mubr.f32.mxu0 0.0
        %4767 = vmatmul.mubr.f32.gmra.mrb[0].mxu0 %v601
        %v4768 = vpop.f32.mrb[0].mxu0
        %v4769 = vadd.f32 0.0, %v4768
        %v4770 = vpop.f32.mrb[0].mxu0
        %4771 = vmatprep.mubr.f32.mxu0 0.0
        %4772 = vmatmul.mubr.f32.gmra.mrb[0].mxu0 %v603
        %v4773 = vpop.f32.mrb[0].mxu0
        %v4774 = vadd.f32 0.0, %v4773
        %v4775 = vpop.f32.mrb[0].mxu0
        %4776 = vmatprep.mubr.f32.mxu0 0.0
        %4777 = vmatmul.mubr.f32.gmra.mrb[0].mxu0 %v605
        %v4778 = vpop.f32.mrb[0].mxu0
        %v4779 = vadd.f32 0.0, %v4778
        %v4780 = vpop.f32.mrb[0].mxu0
        %4781 = vmatprep.mubr.f32.mxu0 0.0
        %4782 = vmatmul.mubr.f32.gmra.mrb[0].mxu0 %v603
        %v4783 = vpop.f32.mrb[0].mxu0
        %v4784 = vadd.f32 0.0, %v4783
        %v4785 = vpop.f32.mrb[0].mxu0
        %4786 = vmatprep.mubr.f32.mxu0 0.0
        %4787 = vmatmul.mubr.f32.gmra.mrb[0].mxu0 %v605
        %v4788 = vpop.f32.mrb[0].mxu0
        %v4789 = vadd.f32 0.0, %v4788
        %v4790 = vpop.f32.mrb[0].mxu0
        %4791 = vmatprep.mubr.f32.mxu0 0.0
        %4792 = vmatmul.mubr.f32.gmra.mrb[0].mxu0 %v4410
        %v4793 = vpop.f32.mrb[0].mxu0
        %v4794 = vadd.f32 0.0, %v4793
        %v4795 = vpop.f32.mrb[0].mxu0
        %4796 = vmatprep.mubr.f32.mxu0 0.0
        %4797 = vmatmul.mubr.f32.gmra.mrb[0].mxu0 %v4412
        %v4798 = vpop.f32.mrb[0].mxu0
        %v4799 = vadd.f32 0.0, %v4798
        %v4800 = vpop.f32.mrb[0].mxu0
        %4801 = vdwg.mxu0
        %v4803 = vsel %vm538, %v440, 0
        %v4805 = vsel %vm538, %v404, 0
        %v4808 = vsel %vm607, %v4404, 0
        %4810 = vmatprep.subr.mxu0 0.0
        %4811 = vmatpush1.msra.mxu0 %v4808
        %4812 = vmatprep.subr.mxu0 0.0
        %4813 = vmatpush1.msra.mxu0 0.0
        %4814 = vmatprep.subr.mxu0 0.0
        %4815 = vmatpush1.msra.mxu0 0.0
        %4816 = vmatprep.subr.mxu0 0.0
        %4817 = vmatpush1.msra.mxu0 0.0
        %4818 = vmatprep.subr.mxu0 0.0
        %4819 = vmatpush1.msra.mxu0 0.0
        %4820 = vmatprep.subr.mxu0 0.0
        %4821 = vmatpush1.msra.mxu0 0.0
        %4822 = vmatprep.subr.mxu0 0.0
        %4823 = vmatpush1.msra.mxu0 0.0
        %4824 = vmatprep.subr.mxu0 0.0
        %4825 = vmatpush1.msra.mxu0 0.0
        %4826 = vmatprep.subr.mxu0 0.0
        %4827 = vmatpush1.msra.mxu0 0.0
        %4828 = vmatprep.subr.mxu0 0.0
        %4829 = vmatpush1.msra.mxu0 0.0
        %4830 = vmatprep.subr.mxu0 0.0
        %4831 = vmatpush1.msra.mxu0 0.0
        %4832 = vmatprep.subr.mxu0 0.0
        %4833 = vmatpush1.msra.mxu0 0.0
        %4834 = vmatprep.subr.mxu0 0.0
        %4835 = vmatpush1.msra.mxu0 0.0
        %4836 = vmatprep.subr.mxu0 0.0
        %4837 = vmatpush1.msra.mxu0 0.0
        %4838 = vmatprep.subr.mxu0 0.0
        %4839 = vmatpush1.msra.mxu0 0.0
        %4840 = vmatprep.subr.mxu0 0.0
        %4841 = vmatpush1.msra.mxu0 0.0
        %4842 = vmatprep.subr.mxu0 0.0
        %4843 = vmatpush1.msra.mxu0 0.0
        %4844 = vmatprep.subr.mxu0 0.0
        %4845 = vmatpush1.msra.mxu0 0.0
        %4846 = vmatprep.subr.mxu0 0.0
        %4847 = vmatpush1.msra.mxu0 0.0
        %4848 = vmatprep.subr.mxu0 0.0
        %4849 = vmatpush1.msra.mxu0 0.0
        %4850 = vmatprep.subr.mxu0 0.0
        %4851 = vmatpush1.msra.mxu0 0.0
        %4852 = vmatprep.subr.mxu0 0.0
        %4853 = vmatpush1.msra.mxu0 0.0
        %4854 = vmatprep.subr.mxu0 0.0
        %4855 = vmatpush1.msra.mxu0 0.0
        %4856 = vmatprep.subr.mxu0 0.0
        %4857 = vmatpush1.msra.mxu0 0.0
        %4858 = vmatprep.subr.mxu0 0.0
        %4859 = vmatpush1.msra.mxu0 0.0
        %4860 = vmatprep.subr.mxu0 0.0
        %4861 = vmatpush1.msra.mxu0 0.0
        %4862 = vmatprep.subr.mxu0 0.0
        %4863 = vmatpush1.msra.mxu0 0.0
        %4864 = vmatprep.subr.mxu0 0.0
        %4865 = vmatpush1.msra.mxu0 0.0
        %4866 = vmatprep.subr.mxu0 0.0
        %4867 = vmatpush1.msra.mxu0 0.0
        %4868 = vmatprep.subr.mxu0 0.0
        %4869 = vmatpush1.msra.mxu0 0.0
        %4870 = vmatprep.subr.mxu0 0.0
        %4871 = vmatpush1.msra.mxu0 0.0
        %4872 = vmatprep.subr.mxu0 0.0
        %4873 = vmatpush1.msra.mxu0 0.0
        %4874 = vmatprep.mubr.f32.mxu0 0.0
        %4875 = vmatmul.mubr.f32.gmra.mrb[0].mxu0 %v1002
        %v4876 = vpop.f32.mrb[0].mxu0
        %v4877 = vadd.f32 %v4484, %v4876
        %v4878 = vpop.f32.mrb[0].mxu0
        %4879 = vmatprep.mubr.f32.mxu0 0.0
        %4880 = vmatmul.mubr.f32.gmra.mrb[0].mxu0 %v1004
        %v4881 = vpop.f32.mrb[0].mxu0
        %v4882 = vadd.f32 %v4489, %v4881
        %v4883 = vpop.f32.mrb[0].mxu0
        %4884 = vmatprep.mubr.f32.mxu0 0.0
        %4885 = vmatmul.mubr.f32.gmra.mrb[0].mxu0 %v1007
        %v4886 = vpop.f32.mrb[0].mxu0
        %v4887 = vadd.f32 %v4494, %v4886
        %v4888 = vpop.f32.mrb[0].mxu0
        %4889 = vmatprep.mubr.f32.mxu0 0.0
        %4890 = vmatmul.mubr.f32.gmra.mrb[0].mxu0 %v1009
        %v4891 = vpop.f32.mrb[0].mxu0
        %v4892 = vadd.f32 %v4499, %v4891
        %v4893 = vpop.f32.mrb[0].mxu0
        %4894 = vmatprep.mubr.f32.mxu0 0.0
        %4895 = vmatmul.mubr.f32.gmra.mrb[0].mxu0 %v1007
        %v4896 = vpop.f32.mrb[0].mxu0
        %v4897 = vadd.f32 %v4504, %v4896
        %v4898 = vpop.f32.mrb[0].mxu0
        %4899 = vmatprep.mubr.f32.mxu0 0.0
        %4900 = vmatmul.mubr.f32.gmra.mrb[0].mxu0 %v1009
        %v4901 = vpop.f32.mrb[0].mxu0
        %v4902 = vadd.f32 %v4509, %v4901
        %v4903 = vpop.f32.mrb[0].mxu0
        %4904 = vmatprep.mubr.f32.mxu0 0.0
        %4905 = vmatmul.mubr.f32.gmra.mrb[0].mxu0 %v1012
        %v4906 = vpop.f32.mrb[0].mxu0
        %v4907 = vadd.f32 %v4514, %v4906
        %v4908 = vpop.f32.mrb[0].mxu0
        %4909 = vmatprep.mubr.f32.mxu0 0.0
        %4910 = vmatmul.mubr.f32.gmra.mrb[0].mxu0 %v1014
        %v4911 = vpop.f32.mrb[0].mxu0
        %v4912 = vadd.f32 %v4519, %v4911
        %v4913 = vpop.f32.mrb[0].mxu0
        %4914 = vmatprep.mubr.f32.mxu0 0.0
        %4915 = vmatmul.mubr.f32.gmra.mrb[0].mxu0 %v1012
        %v4916 = vpop.f32.mrb[0].mxu0
        %v4917 = vadd.f32 %v4524, %v4916
        %v4918 = vpop.f32.mrb[0].mxu0
        %4919 = vmatprep.mubr.f32.mxu0 0.0
        %4920 = vmatmul.mubr.f32.gmra.mrb[0].mxu0 %v1014
        %v4921 = vpop.f32.mrb[0].mxu0
        %v4922 = vadd.f32 %v4529, %v4921
        %v4923 = vpop.f32.mrb[0].mxu0
        %4924 = vmatprep.mubr.f32.mxu0 0.0
        %4925 = vmatmul.mubr.f32.gmra.mrb[0].mxu0 %v1017
        %v4926 = vpop.f32.mrb[0].mxu0
        %v4927 = vadd.f32 %v4534, %v4926
        %v4928 = vpop.f32.mrb[0].mxu0
        %4929 = vmatprep.mubr.f32.mxu0 0.0
        %4930 = vmatmul.mubr.f32.gmra.mrb[0].mxu0 %v1019
        %v4931 = vpop.f32.mrb[0].mxu0
        %v4932 = vadd.f32 %v4539, %v4931
        %v4933 = vpop.f32.mrb[0].mxu0
        %4934 = vmatprep.mubr.f32.mxu0 0.0
        %4935 = vmatmul.mubr.f32.gmra.mrb[0].mxu0 %v1017
        %v4936 = vpop.f32.mrb[0].mxu0
        %v4937 = vadd.f32 %v4544, %v4936
        %v4938 = vpop.f32.mrb[0].mxu0
        %4939 = vmatprep.mubr.f32.mxu0 0.0
        %4940 = vmatmul.mubr.f32.gmra.mrb[0].mxu0 %v1019
        %v4941 = vpop.f32.mrb[0].mxu0
        %v4942 = vadd.f32 %v4549, %v4941
        %v4943 = vpop.f32.mrb[0].mxu0
        %4944 = vmatprep.mubr.f32.mxu0 0.0
        %4945 = vmatmul.mubr.f32.gmra.mrb[0].mxu0 %v1022
        %v4946 = vpop.f32.mrb[0].mxu0
        %v4947 = vadd.f32 %v4554, %v4946
        %v4948 = vpop.f32.mrb[0].mxu0
        %4949 = vmatprep.mubr.f32.mxu0 0.0
        %4950 = vmatmul.mubr.f32.gmra.mrb[0].mxu0 %v1024
        %v4951 = vpop.f32.mrb[0].mxu0
        %v4952 = vadd.f32 %v4559, %v4951
        %v4953 = vpop.f32.mrb[0].mxu0
        %4954 = vmatprep.mubr.f32.mxu0 0.0
        %4955 = vmatmul.mubr.f32.gmra.mrb[0].mxu0 %v1022
        %v4956 = vpop.f32.mrb[0].mxu0
        %v4957 = vadd.f32 %v4564, %v4956
        %v4958 = vpop.f32.mrb[0].mxu0
        %4959 = vmatprep.mubr.f32.mxu0 0.0
        %4960 = vmatmul.mubr.f32.gmra.mrb[0].mxu0 %v1024
        %v4961 = vpop.f32.mrb[0].mxu0
        %v4962 = vadd.f32 %v4569, %v4961
        %v4963 = vpop.f32.mrb[0].mxu0
        %4964 = vmatprep.mubr.f32.mxu0 0.0
        %4965 = vmatmul.mubr.f32.gmra.mrb[0].mxu0 %v1027
        %v4966 = vpop.f32.mrb[0].mxu0
        %v4967 = vadd.f32 %v4574, %v4966
        %v4968 = vpop.f32.mrb[0].mxu0
        %4969 = vmatprep.mubr.f32.mxu0 0.0
        %4970 = vmatmul.mubr.f32.gmra.mrb[0].mxu0 %v1029
        %v4971 = vpop.f32.mrb[0].mxu0
        %v4972 = vadd.f32 %v4579, %v4971
        %v4973 = vpop.f32.mrb[0].mxu0
        %4974 = vmatprep.mubr.f32.mxu0 0.0
        %4975 = vmatmul.mubr.f32.gmra.mrb[0].mxu0 %v1027
        %v4976 = vpop.f32.mrb[0].mxu0
        %v4977 = vadd.f32 %v4584, %v4976
        %v4978 = vpop.f32.mrb[0].mxu0
        %4979 = vmatprep.mubr.f32.mxu0 0.0
        %4980 = vmatmul.mubr.f32.gmra.mrb[0].mxu0 %v1029
        %v4981 = vpop.f32.mrb[0].mxu0
        %v4982 = vadd.f32 %v4589, %v4981
        %v4983 = vpop.f32.mrb[0].mxu0
        %4984 = vmatprep.mubr.f32.mxu0 0.0
        %4985 = vmatmul.mubr.f32.gmra.mrb[0].mxu0 %v1032
        %v4986 = vpop.f32.mrb[0].mxu0
        %v4987 = vadd.f32 %v4594, %v4986
        %v4988 = vpop.f32.mrb[0].mxu0
        %4989 = vmatprep.mubr.f32.mxu0 0.0
        %4990 = vmatmul.mubr.f32.gmra.mrb[0].mxu0 %v1034
        %v4991 = vpop.f32.mrb[0].mxu0
        %v4992 = vadd.f32 %v4599, %v4991
        %v4993 = vpop.f32.mrb[0].mxu0
        %4994 = vmatprep.mubr.f32.mxu0 0.0
        %4995 = vmatmul.mubr.f32.gmra.mrb[0].mxu0 %v1032
        %v4996 = vpop.f32.mrb[0].mxu0
        %v4997 = vadd.f32 %v4604, %v4996
        %v4998 = vpop.f32.mrb[0].mxu0
        %4999 = vmatprep.mubr.f32.mxu0 0.0
        %5000 = vmatmul.mubr.f32.gmra.mrb[0].mxu0 %v1034
        %v5001 = vpop.f32.mrb[0].mxu0
        %v5002 = vadd.f32 %v4609, %v5001
        %v5003 = vpop.f32.mrb[0].mxu0
        %5004 = vmatprep.mubr.f32.mxu0 0.0
        %5005 = vmatmul.mubr.f32.gmra.mrb[0].mxu0 %v1037
        %v5006 = vpop.f32.mrb[0].mxu0
        %v5007 = vadd.f32 %v4614, %v5006
        %v5008 = vpop.f32.mrb[0].mxu0
        %5009 = vmatprep.mubr.f32.mxu0 0.0
        %5010 = vmatmul.mubr.f32.gmra.mrb[0].mxu0 %v1039
        %v5011 = vpop.f32.mrb[0].mxu0
        %v5012 = vadd.f32 %v4619, %v5011
        %v5013 = vpop.f32.mrb[0].mxu0
        %5014 = vmatprep.mubr.f32.mxu0 0.0
        %5015 = vmatmul.mubr.f32.gmra.mrb[0].mxu0 %v1037
        %v5016 = vpop.f32.mrb[0].mxu0
        %v5017 = vadd.f32 %v4624, %v5016
        %v5018 = vpop.f32.mrb[0].mxu0
        %5019 = vmatprep.mubr.f32.mxu0 0.0
        %5020 = vmatmul.mubr.f32.gmra.mrb[0].mxu0 %v1039
        %v5021 = vpop.f32.mrb[0].mxu0
        %v5022 = vadd.f32 %v4629, %v5021
        %v5023 = vpop.f32.mrb[0].mxu0
        %5024 = vmatprep.mubr.f32.mxu0 0.0
        %5025 = vmatmul.mubr.f32.gmra.mrb[0].mxu0 %v1042
        %v5026 = vpop.f32.mrb[0].mxu0
        %v5027 = vadd.f32 %v4634, %v5026
        %v5028 = vpop.f32.mrb[0].mxu0
        %5029 = vmatprep.mubr.f32.mxu0 0.0
        %5030 = vmatmul.mubr.f32.gmra.mrb[0].mxu0 %v1044
        %v5031 = vpop.f32.mrb[0].mxu0
        %v5032 = vadd.f32 %v4639, %v5031
        %v5033 = vpop.f32.mrb[0].mxu0
        %5034 = vmatprep.mubr.f32.mxu0 0.0
        %5035 = vmatmul.mubr.f32.gmra.mrb[0].mxu0 %v1042
        %v5036 = vpop.f32.mrb[0].mxu0
        %v5037 = vadd.f32 %v4644, %v5036
        %v5038 = vpop.f32.mrb[0].mxu0
        %5039 = vmatprep.mubr.f32.mxu0 0.0
        %5040 = vmatmul.mubr.f32.gmra.mrb[0].mxu0 %v1044
        %v5041 = vpop.f32.mrb[0].mxu0
        %v5042 = vadd.f32 %v4649, %v5041
        %v5043 = vpop.f32.mrb[0].mxu0
        %5044 = vmatprep.mubr.f32.mxu0 0.0
        %5045 = vmatmul.mubr.f32.gmra.mrb[0].mxu0 %v1047
        %v5046 = vpop.f32.mrb[0].mxu0
        %v5047 = vadd.f32 %v4654, %v5046
        %v5048 = vpop.f32.mrb[0].mxu0
        %5049 = vmatprep.mubr.f32.mxu0 0.0
        %5050 = vmatmul.mubr.f32.gmra.mrb[0].mxu0 %v1049
        %v5051 = vpop.f32.mrb[0].mxu0
        %v5052 = vadd.f32 %v4659, %v5051
        %v5053 = vpop.f32.mrb[0].mxu0
        %5054 = vmatprep.mubr.f32.mxu0 0.0
        %5055 = vmatmul.mubr.f32.gmra.mrb[0].mxu0 %v1047
        %v5056 = vpop.f32.mrb[0].mxu0
        %v5057 = vadd.f32 %v4664, %v5056
        %v5058 = vpop.f32.mrb[0].mxu0
        %5059 = vmatprep.mubr.f32.mxu0 0.0
        %5060 = vmatmul.mubr.f32.gmra.mrb[0].mxu0 %v1049
        %v5061 = vpop.f32.mrb[0].mxu0
        %v5062 = vadd.f32 %v4669, %v5061
        %v5063 = vpop.f32.mrb[0].mxu0
        %5064 = vmatprep.mubr.f32.mxu0 0.0
        %5065 = vmatmul.mubr.f32.gmra.mrb[0].mxu0 %v1052
        %v5066 = vpop.f32.mrb[0].mxu0
        %v5067 = vadd.f32 %v4674, %v5066
        %v5068 = vpop.f32.mrb[0].mxu0
        %5069 = vmatprep.mubr.f32.mxu0 0.0
        %5070 = vmatmul.mubr.f32.gmra.mrb[0].mxu0 %v1054
        %v5071 = vpop.f32.mrb[0].mxu0
        %v5072 = vadd.f32 %v4679, %v5071
        %v5073 = vpop.f32.mrb[0].mxu0
        %5074 = vmatprep.mubr.f32.mxu0 0.0
        %5075 = vmatmul.mubr.f32.gmra.mrb[0].mxu0 %v1052
        %v5076 = vpop.f32.mrb[0].mxu0
        %v5077 = vadd.f32 %v4684, %v5076
        %v5078 = vpop.f32.mrb[0].mxu0
        %5079 = vmatprep.mubr.f32.mxu0 0.0
        %5080 = vmatmul.mubr.f32.gmra.mrb[0].mxu0 %v1054
        %v5081 = vpop.f32.mrb[0].mxu0
        %v5082 = vadd.f32 %v4689, %v5081
        %v5083 = vpop.f32.mrb[0].mxu0
        %5084 = vmatprep.mubr.f32.mxu0 0.0
        %5085 = vmatmul.mubr.f32.gmra.mrb[0].mxu0 %v1057
        %v5086 = vpop.f32.mrb[0].mxu0
        %v5087 = vadd.f32 %v4694, %v5086
        %v5088 = vpop.f32.mrb[0].mxu0
        %5089 = vmatprep.mubr.f32.mxu0 0.0
        %5090 = vmatmul.mubr.f32.gmra.mrb[0].mxu0 %v1059
        %v5091 = vpop.f32.mrb[0].mxu0
        %v5092 = vadd.f32 %v4699, %v5091
        %v5093 = vpop.f32.mrb[0].mxu0
        %5094 = vmatprep.mubr.f32.mxu0 0.0
        %5095 = vmatmul.mubr.f32.gmra.mrb[0].mxu0 %v1057
        %v5096 = vpop.f32.mrb[0].mxu0
        %v5097 = vadd.f32 %v4704, %v5096
        %v5098 = vpop.f32.mrb[0].mxu0
        %5099 = vmatprep.mubr.f32.mxu0 0.0
        %5100 = vmatmul.mubr.f32.gmra.mrb[0].mxu0 %v1059
        %v5101 = vpop.f32.mrb[0].mxu0
        %v5102 = vadd.f32 %v4709, %v5101
        %v5103 = vpop.f32.mrb[0].mxu0
        %5104 = vmatprep.mubr.f32.mxu0 0.0
        %5105 = vmatmul.mubr.f32.gmra.mrb[0].mxu0 %v1062
        %v5106 = vpop.f32.mrb[0].mxu0
        %v5107 = vadd.f32 %v4714, %v5106
        %v5108 = vpop.f32.mrb[0].mxu0
        %5109 = vmatprep.mubr.f32.mxu0 0.0
        %5110 = vmatmul.mubr.f32.gmra.mrb[0].mxu0 %v1064
        %v5111 = vpop.f32.mrb[0].mxu0
        %v5112 = vadd.f32 %v4719, %v5111
        %v5113 = vpop.f32.mrb[0].mxu0
        %5114 = vmatprep.mubr.f32.mxu0 0.0
        %5115 = vmatmul.mubr.f32.gmra.mrb[0].mxu0 %v1062
        %v5116 = vpop.f32.mrb[0].mxu0
        %v5117 = vadd.f32 %v4724, %v5116
        %v5118 = vpop.f32.mrb[0].mxu0
        %5119 = vmatprep.mubr.f32.mxu0 0.0
        %5120 = vmatmul.mubr.f32.gmra.mrb[0].mxu0 %v1064
        %v5121 = vpop.f32.mrb[0].mxu0
        %v5122 = vadd.f32 %v4729, %v5121
        %v5123 = vpop.f32.mrb[0].mxu0
        %5124 = vmatprep.mubr.f32.mxu0 0.0
        %5125 = vmatmul.mubr.f32.gmra.mrb[0].mxu0 %v1067
        %v5126 = vpop.f32.mrb[0].mxu0
        %v5127 = vadd.f32 %v4734, %v5126
        %v5128 = vpop.f32.mrb[0].mxu0
        %5129 = vmatprep.mubr.f32.mxu0 0.0
        %5130 = vmatmul.mubr.f32.gmra.mrb[0].mxu0 %v1069
        %v5131 = vpop.f32.mrb[0].mxu0
        %v5132 = vadd.f32 %v4739, %v5131
        %v5133 = vpop.f32.mrb[0].mxu0
        %5134 = vmatprep.mubr.f32.mxu0 0.0
        %5135 = vmatmul.mubr.f32.gmra.mrb[0].mxu0 %v1067
        %v5136 = vpop.f32.mrb[0].mxu0
        %v5137 = vadd.f32 %v4744, %v5136
        %v5138 = vpop.f32.mrb[0].mxu0
        %5139 = vmatprep.mubr.f32.mxu0 0.0
        %5140 = vmatmul.mubr.f32.gmra.mrb[0].mxu0 %v1069
        %v5141 = vpop.f32.mrb[0].mxu0
        %v5142 = vadd.f32 %v4749, %v5141
        %v5143 = vpop.f32.mrb[0].mxu0
        %5144 = vmatprep.mubr.f32.mxu0 0.0
        %5145 = vmatmul.mubr.f32.gmra.mrb[0].mxu0 %v1072
        %v5146 = vpop.f32.mrb[0].mxu0
        %v5147 = vadd.f32 %v4754, %v5146
        %v5148 = vpop.f32.mrb[0].mxu0
        %5149 = vmatprep.mubr.f32.mxu0 0.0
        %5150 = vmatmul.mubr.f32.gmra.mrb[0].mxu0 %v1074
        %v5151 = vpop.f32.mrb[0].mxu0
        %v5152 = vadd.f32 %v4759, %v5151
        %v5153 = vpop.f32.mrb[0].mxu0
        %5154 = vmatprep.mubr.f32.mxu0 0.0
        %5155 = vmatmul.mubr.f32.gmra.mrb[0].mxu0 %v1072
        %v5156 = vpop.f32.mrb[0].mxu0
        %v5157 = vadd.f32 %v4764, %v5156
        %v5158 = vpop.f32.mrb[0].mxu0
        %5159 = vmatprep.mubr.f32.mxu0 0.0
        %5160 = vmatmul.mubr.f32.gmra.mrb[0].mxu0 %v1074
        %v5161 = vpop.f32.mrb[0].mxu0
        %v5162 = vadd.f32 %v4769, %v5161
        %v5163 = vpop.f32.mrb[0].mxu0
        %5164 = vmatprep.mubr.f32.mxu0 0.0
        %5165 = vmatmul.mubr.f32.gmra.mrb[0].mxu0 %v1077
        %v5166 = vpop.f32.mrb[0].mxu0
        %v5167 = vadd.f32 %v4774, %v5166
        %v5168 = vpop.f32.mrb[0].mxu0
        %5169 = vmatprep.mubr.f32.mxu0 0.0
        %5170 = vmatmul.mubr.f32.gmra.mrb[0].mxu0 %v1079
        %v5171 = vpop.f32.mrb[0].mxu0
        %v5172 = vadd.f32 %v4779, %v5171
        %v5173 = vpop.f32.mrb[0].mxu0
        %5174 = vmatprep.mubr.f32.mxu0 0.0
        %5175 = vmatmul.mubr.f32.gmra.mrb[0].mxu0 %v1077
        %v5176 = vpop.f32.mrb[0].mxu0
        %v5177 = vadd.f32 %v4784, %v5176
        %v5178 = vpop.f32.mrb[0].mxu0
        %5179 = vmatprep.mubr.f32.mxu0 0.0
        %5180 = vmatmul.mubr.f32.gmra.mrb[0].mxu0 %v1079
        %v5181 = vpop.f32.mrb[0].mxu0
        %v5182 = vadd.f32 %v4789, %v5181
        %v5183 = vpop.f32.mrb[0].mxu0
        %5184 = vmatprep.mubr.f32.mxu0 0.0
        %5185 = vmatmul.mubr.f32.gmra.mrb[0].mxu0 %v4803
        %v5186 = vpop.f32.mrb[0].mxu0
        %v5187 = vadd.f32 %v4794, %v5186
        %v5188 = vpop.f32.mrb[0].mxu0
        %5189 = vmatprep.mubr.f32.mxu0 0.0
        %5190 = vmatmul.mubr.f32.gmra.mrb[0].mxu0 %v4805
        %v5191 = vpop.f32.mrb[0].mxu0
        %v5192 = vadd.f32 %v4799, %v5191
        %v5193 = vpop.f32.mrb[0].mxu0
        %5194 = vdwg.mxu0
        %v5195 = vadd.f32 %v4404, %v4406
        %v5196 = vsel %vm538, %v495, 0
        %v5199 = vsel %vm538, %v531, 0
        %v5202 = vsel %vm607, %v4408, 0
        %5204 = vmatprep.subr.mxu0 0.0
        %5205 = vmatpush1.msra.mxu0 %v5202
        %5206 = vmatprep.subr.mxu0 0.0
        %5207 = vmatpush1.msra.mxu0 0.0
        %5208 = vmatprep.subr.mxu0 0.0
        %5209 = vmatpush1.msra.mxu0 0.0
        %5210 = vmatprep.subr.mxu0 0.0
        %5211 = vmatpush1.msra.mxu0 0.0
        %5212 = vmatprep.subr.mxu0 0.0
        %5213 = vmatpush1.msra.mxu0 0.0
        %5214 = vmatprep.subr.mxu0 0.0
        %5215 = vmatpush1.msra.mxu0 0.0
        %5216 = vmatprep.subr.mxu0 0.0
        %5217 = vmatpush1.msra.mxu0 0.0
        %5218 = vmatprep.subr.mxu0 0.0
        %5219 = vmatpush1.msra.mxu0 0.0
        %5220 = vmatprep.subr.mxu0 0.0
        %5221 = vmatpush1.msra.mxu0 0.0
        %5222 = vmatprep.subr.mxu0 0.0
        %5223 = vmatpush1.msra.mxu0 0.0
        %5224 = vmatprep.subr.mxu0 0.0
        %5225 = vmatpush1.msra.mxu0 0.0
        %5226 = vmatprep.subr.mxu0 0.0
        %5227 = vmatpush1.msra.mxu0 0.0
        %5228 = vmatprep.subr.mxu0 0.0
        %5229 = vmatpush1.msra.mxu0 0.0
        %5230 = vmatprep.subr.mxu0 0.0
        %5231 = vmatpush1.msra.mxu0 0.0
        %5232 = vmatprep.subr.mxu0 0.0
        %5233 = vmatpush1.msra.mxu0 0.0
        %5234 = vmatprep.subr.mxu0 0.0
        %5235 = vmatpush1.msra.mxu0 0.0
        %5236 = vmatprep.subr.mxu0 0.0
        %5237 = vmatpush1.msra.mxu0 0.0
        %5238 = vmatprep.subr.mxu0 0.0
        %5239 = vmatpush1.msra.mxu0 0.0
        %5240 = vmatprep.subr.mxu0 0.0
        %5241 = vmatpush1.msra.mxu0 0.0
        %5242 = vmatprep.subr.mxu0 0.0
        %5243 = vmatpush1.msra.mxu0 0.0
        %5244 = vmatprep.subr.mxu0 0.0
        %5245 = vmatpush1.msra.mxu0 0.0
        %5246 = vmatprep.subr.mxu0 0.0
        %5247 = vmatpush1.msra.mxu0 0.0
        %5248 = vmatprep.subr.mxu0 0.0
        %5249 = vmatpush1.msra.mxu0 0.0
        %5250 = vmatprep.subr.mxu0 0.0
        %5251 = vmatpush1.msra.mxu0 0.0
        %5252 = vmatprep.subr.mxu0 0.0
        %5253 = vmatpush1.msra.mxu0 0.0
        %5254 = vmatprep.subr.mxu0 0.0
        %5255 = vmatpush1.msra.mxu0 0.0
        %5256 = vmatprep.subr.mxu0 0.0
        %5257 = vmatpush1.msra.mxu0 0.0
        %5258 = vmatprep.subr.mxu0 0.0
        %5259 = vmatpush1.msra.mxu0 0.0
        %5260 = vmatprep.subr.mxu0 0.0
        %5261 = vmatpush1.msra.mxu0 0.0
        %5262 = vmatprep.subr.mxu0 0.0
        %5263 = vmatpush1.msra.mxu0 0.0
        %5264 = vmatprep.subr.mxu0 0.0
        %5265 = vmatpush1.msra.mxu0 0.0
        %5266 = vmatprep.subr.mxu0 0.0
        %5267 = vmatpush1.msra.mxu0 0.0
        %5268 = vmatprep.mubr.f32.mxu0 0.0
        %5269 = vmatmul.mubr.f32.gmra.mrb[0].mxu0 %v1475
        %v5270 = vpop.f32.mrb[0].mxu0
        %v5271 = vadd.f32 0.0, %v5270
        %v5272 = vpop.f32.mrb[0].mxu0
        %5273 = vmatprep.mubr.f32.mxu0 0.0
        %5274 = vmatmul.mubr.f32.gmra.mrb[0].mxu0 %v1478
        %v5275 = vpop.f32.mrb[0].mxu0
        %v5276 = vadd.f32 0.0, %v5275
        %v5277 = vpop.f32.mrb[0].mxu0
        %5278 = vmatprep.mubr.f32.mxu0 0.0
        %5279 = vmatmul.mubr.f32.gmra.mrb[0].mxu0 %v1480
        %v5280 = vpop.f32.mrb[0].mxu0
        %v5281 = vadd.f32 0.0, %v5280
        %v5282 = vpop.f32.mrb[0].mxu0
        %5283 = vmatprep.mubr.f32.mxu0 0.0
        %5284 = vmatmul.mubr.f32.gmra.mrb[0].mxu0 %v1483
        %v5285 = vpop.f32.mrb[0].mxu0
        %v5286 = vadd.f32 0.0, %v5285
        %v5287 = vpop.f32.mrb[0].mxu0
        %5288 = vmatprep.mubr.f32.mxu0 0.0
        %5289 = vmatmul.mubr.f32.gmra.mrb[0].mxu0 %v1480
        %v5290 = vpop.f32.mrb[0].mxu0
        %v5291 = vadd.f32 0.0, %v5290
        %v5292 = vpop.f32.mrb[0].mxu0
        %5293 = vmatprep.mubr.f32.mxu0 0.0
        %5294 = vmatmul.mubr.f32.gmra.mrb[0].mxu0 %v1483
        %v5295 = vpop.f32.mrb[0].mxu0
        %v5296 = vadd.f32 0.0, %v5295
        %v5297 = vpop.f32.mrb[0].mxu0
        %5298 = vmatprep.mubr.f32.mxu0 0.0
        %5299 = vmatmul.mubr.f32.gmra.mrb[0].mxu0 %v1485
        %v5300 = vpop.f32.mrb[0].mxu0
        %v5301 = vadd.f32 0.0, %v5300
        %v5302 = vpop.f32.mrb[0].mxu0
        %5303 = vmatprep.mubr.f32.mxu0 0.0
        %5304 = vmatmul.mubr.f32.gmra.mrb[0].mxu0 %v1488
        %v5305 = vpop.f32.mrb[0].mxu0
        %v5306 = vadd.f32 0.0, %v5305
        %v5307 = vpop.f32.mrb[0].mxu0
        %5308 = vmatprep.mubr.f32.mxu0 0.0
        %5309 = vmatmul.mubr.f32.gmra.mrb[0].mxu0 %v1485
        %v5310 = vpop.f32.mrb[0].mxu0
        %v5311 = vadd.f32 0.0, %v5310
        %v5312 = vpop.f32.mrb[0].mxu0
        %5313 = vmatprep.mubr.f32.mxu0 0.0
        %5314 = vmatmul.mubr.f32.gmra.mrb[0].mxu0 %v1488
        %v5315 = vpop.f32.mrb[0].mxu0
        %v5316 = vadd.f32 0.0, %v5315
        %v5317 = vpop.f32.mrb[0].mxu0
        %5318 = vmatprep.mubr.f32.mxu0 0.0
        %5319 = vmatmul.mubr.f32.gmra.mrb[0].mxu0 %v1490
        %v5320 = vpop.f32.mrb[0].mxu0
        %v5321 = vadd.f32 0.0, %v5320
        %v5322 = vpop.f32.mrb[0].mxu0
        %5323 = vmatprep.mubr.f32.mxu0 0.0
        %5324 = vmatmul.mubr.f32.gmra.mrb[0].mxu0 %v1493
        %v5325 = vpop.f32.mrb[0].mxu0
        %v5326 = vadd.f32 0.0, %v5325
        %v5327 = vpop.f32.mrb[0].mxu0
        %5328 = vmatprep.mubr.f32.mxu0 0.0
        %5329 = vmatmul.mubr.f32.gmra.mrb[0].mxu0 %v1490
        %v5330 = vpop.f32.mrb[0].mxu0
        %v5331 = vadd.f32 0.0, %v5330
        %v5332 = vpop.f32.mrb[0].mxu0
        %5333 = vmatprep.mubr.f32.mxu0 0.0
        %5334 = vmatmul.mubr.f32.gmra.mrb[0].mxu0 %v1493
        %v5335 = vpop.f32.mrb[0].mxu0
        %v5336 = vadd.f32 0.0, %v5335
        %v5337 = vpop.f32.mrb[0].mxu0
        %5338 = vmatprep.mubr.f32.mxu0 0.0
        %5339 = vmatmul.mubr.f32.gmra.mrb[0].mxu0 %v1495
        %v5340 = vpop.f32.mrb[0].mxu0
        %v5341 = vadd.f32 0.0, %v5340
        %v5342 = vpop.f32.mrb[0].mxu0
        %5343 = vmatprep.mubr.f32.mxu0 0.0
        %5344 = vmatmul.mubr.f32.gmra.mrb[0].mxu0 %v1498
        %v5345 = vpop.f32.mrb[0].mxu0
        %v5346 = vadd.f32 0.0, %v5345
        %v5347 = vpop.f32.mrb[0].mxu0
        %5348 = vmatprep.mubr.f32.mxu0 0.0
        %5349 = vmatmul.mubr.f32.gmra.mrb[0].mxu0 %v1495
        %v5350 = vpop.f32.mrb[0].mxu0
        %v5351 = vadd.f32 0.0, %v5350
        %v5352 = vpop.f32.mrb[0].mxu0
        %5353 = vmatprep.mubr.f32.mxu0 0.0
        %5354 = vmatmul.mubr.f32.gmra.mrb[0].mxu0 %v1498
        %v5355 = vpop.f32.mrb[0].mxu0
        %v5356 = vadd.f32 0.0, %v5355
        %v5357 = vpop.f32.mrb[0].mxu0
        %5358 = vmatprep.mubr.f32.mxu0 0.0
        %5359 = vmatmul.mubr.f32.gmra.mrb[0].mxu0 %v1500
        %v5360 = vpop.f32.mrb[0].mxu0
        %v5361 = vadd.f32 0.0, %v5360
        %v5362 = vpop.f32.mrb[0].mxu0
        %5363 = vmatprep.mubr.f32.mxu0 0.0
        %5364 = vmatmul.mubr.f32.gmra.mrb[0].mxu0 %v1503
        %v5365 = vpop.f32.mrb[0].mxu0
        %v5366 = vadd.f32 0.0, %v5365
        %v5367 = vpop.f32.mrb[0].mxu0
        %5368 = vmatprep.mubr.f32.mxu0 0.0
        %5369 = vmatmul.mubr.f32.gmra.mrb[0].mxu0 %v1500
        %v5370 = vpop.f32.mrb[0].mxu0
        %v5371 = vadd.f32 0.0, %v5370
        %v5372 = vpop.f32.mrb[0].mxu0
        %5373 = vmatprep.mubr.f32.mxu0 0.0
        %5374 = vmatmul.mubr.f32.gmra.mrb[0].mxu0 %v1503
        %v5375 = vpop.f32.mrb[0].mxu0
        %v5376 = vadd.f32 0.0, %v5375
        %v5377 = vpop.f32.mrb[0].mxu0
        %5378 = vmatprep.mubr.f32.mxu0 0.0
        %5379 = vmatmul.mubr.f32.gmra.mrb[0].mxu0 %v1505
        %v5380 = vpop.f32.mrb[0].mxu0
        %v5381 = vadd.f32 0.0, %v5380
        %v5382 = vpop.f32.mrb[0].mxu0
        %5383 = vmatprep.mubr.f32.mxu0 0.0
        %5384 = vmatmul.mubr.f32.gmra.mrb[0].mxu0 %v1508
        %v5385 = vpop.f32.mrb[0].mxu0
        %v5386 = vadd.f32 0.0, %v5385
        %v5387 = vpop.f32.mrb[0].mxu0
        %5388 = vmatprep.mubr.f32.mxu0 0.0
        %5389 = vmatmul.mubr.f32.gmra.mrb[0].mxu0 %v1505
        %v5390 = vpop.f32.mrb[0].mxu0
        %v5391 = vadd.f32 0.0, %v5390
        %v5392 = vpop.f32.mrb[0].mxu0
        %5393 = vmatprep.mubr.f32.mxu0 0.0
        %5394 = vmatmul.mubr.f32.gmra.mrb[0].mxu0 %v1508
        %v5395 = vpop.f32.mrb[0].mxu0
        %v5396 = vadd.f32 0.0, %v5395
        %v5397 = vpop.f32.mrb[0].mxu0
        %5398 = vmatprep.mubr.f32.mxu0 0.0
        %5399 = vmatmul.mubr.f32.gmra.mrb[0].mxu0 %v1510
        %v5400 = vpop.f32.mrb[0].mxu0
        %v5401 = vadd.f32 0.0, %v5400
        %v5402 = vpop.f32.mrb[0].mxu0
        %5403 = vmatprep.mubr.f32.mxu0 0.0
        %5404 = vmatmul.mubr.f32.gmra.mrb[0].mxu0 %v1513
        %v5405 = vpop.f32.mrb[0].mxu0
        %v5406 = vadd.f32 0.0, %v5405
        %v5407 = vpop.f32.mrb[0].mxu0
        %5408 = vmatprep.mubr.f32.mxu0 0.0
        %5409 = vmatmul.mubr.f32.gmra.mrb[0].mxu0 %v1510
        %v5410 = vpop.f32.mrb[0].mxu0
        %v5411 = vadd.f32 0.0, %v5410
        %v5412 = vpop.f32.mrb[0].mxu0
        %5413 = vmatprep.mubr.f32.mxu0 0.0
        %5414 = vmatmul.mubr.f32.gmra.mrb[0].mxu0 %v1513
        %v5415 = vpop.f32.mrb[0].mxu0
        %v5416 = vadd.f32 0.0, %v5415
        %v5417 = vpop.f32.mrb[0].mxu0
        %5418 = vmatprep.mubr.f32.mxu0 0.0
        %5419 = vmatmul.mubr.f32.gmra.mrb[0].mxu0 %v1515
        %v5420 = vpop.f32.mrb[0].mxu0
        %v5421 = vadd.f32 0.0, %v5420
        %v5422 = vpop.f32.mrb[0].mxu0
        %5423 = vmatprep.mubr.f32.mxu0 0.0
        %5424 = vmatmul.mubr.f32.gmra.mrb[0].mxu0 %v1518
        %v5425 = vpop.f32.mrb[0].mxu0
        %v5426 = vadd.f32 0.0, %v5425
        %v5427 = vpop.f32.mrb[0].mxu0
        %5428 = vmatprep.mubr.f32.mxu0 0.0
        %5429 = vmatmul.mubr.f32.gmra.mrb[0].mxu0 %v1515
        %v5430 = vpop.f32.mrb[0].mxu0
        %v5431 = vadd.f32 0.0, %v5430
        %v5432 = vpop.f32.mrb[0].mxu0
        %5433 = vmatprep.mubr.f32.mxu0 0.0
        %5434 = vmatmul.mubr.f32.gmra.mrb[0].mxu0 %v1518
        %v5435 = vpop.f32.mrb[0].mxu0
        %v5436 = vadd.f32 0.0, %v5435
        %v5437 = vpop.f32.mrb[0].mxu0
        %5438 = vmatprep.mubr.f32.mxu0 0.0
        %5439 = vmatmul.mubr.f32.gmra.mrb[0].mxu0 %v1520
        %v5440 = vpop.f32.mrb[0].mxu0
        %v5441 = vadd.f32 0.0, %v5440
        %v5442 = vpop.f32.mrb[0].mxu0
        %5443 = vmatprep.mubr.f32.mxu0 0.0
        %5444 = vmatmul.mubr.f32.gmra.mrb[0].mxu0 %v1523
        %v5445 = vpop.f32.mrb[0].mxu0
        %v5446 = vadd.f32 0.0, %v5445
        %v5447 = vpop.f32.mrb[0].mxu0
        %5448 = vmatprep.mubr.f32.mxu0 0.0
        %5449 = vmatmul.mubr.f32.gmra.mrb[0].mxu0 %v1520
        %v5450 = vpop.f32.mrb[0].mxu0
        %v5451 = vadd.f32 0.0, %v5450
        %v5452 = vpop.f32.mrb[0].mxu0
        %5453 = vmatprep.mubr.f32.mxu0 0.0
        %5454 = vmatmul.mubr.f32.gmra.mrb[0].mxu0 %v1523
        %v5455 = vpop.f32.mrb[0].mxu0
        %v5456 = vadd.f32 0.0, %v5455
        %v5457 = vpop.f32.mrb[0].mxu0
        %5458 = vmatprep.mubr.f32.mxu0 0.0
        %5459 = vmatmul.mubr.f32.gmra.mrb[0].mxu0 %v1525
        %v5460 = vpop.f32.mrb[0].mxu0
        %v5461 = vadd.f32 0.0, %v5460
        %v5462 = vpop.f32.mrb[0].mxu0
        %5463 = vmatprep.mubr.f32.mxu0 0.0
        %5464 = vmatmul.mubr.f32.gmra.mrb[0].mxu0 %v1528
        %v5465 = vpop.f32.mrb[0].mxu0
        %v5466 = vadd.f32 0.0, %v5465
        %v5467 = vpop.f32.mrb[0].mxu0
        %5468 = vmatprep.mubr.f32.mxu0 0.0
        %5469 = vmatmul.mubr.f32.gmra.mrb[0].mxu0 %v1525
        %v5470 = vpop.f32.mrb[0].mxu0
        %v5471 = vadd.f32 0.0, %v5470
        %v5472 = vpop.f32.mrb[0].mxu0
        %5473 = vmatprep.mubr.f32.mxu0 0.0
        %5474 = vmatmul.mubr.f32.gmra.mrb[0].mxu0 %v1528
        %v5475 = vpop.f32.mrb[0].mxu0
        %v5476 = vadd.f32 0.0, %v5475
        %v5477 = vpop.f32.mrb[0].mxu0
        %5478 = vmatprep.mubr.f32.mxu0 0.0
        %5479 = vmatmul.mubr.f32.gmra.mrb[0].mxu0 %v1530
        %v5480 = vpop.f32.mrb[0].mxu0
        %v5481 = vadd.f32 0.0, %v5480
        %v5482 = vpop.f32.mrb[0].mxu0
        %5483 = vmatprep.mubr.f32.mxu0 0.0
        %5484 = vmatmul.mubr.f32.gmra.mrb[0].mxu0 %v1533
        %v5485 = vpop.f32.mrb[0].mxu0
        %v5486 = vadd.f32 0.0, %v5485
        %v5487 = vpop.f32.mrb[0].mxu0
        %5488 = vmatprep.mubr.f32.mxu0 0.0
        %5489 = vmatmul.mubr.f32.gmra.mrb[0].mxu0 %v1530
        %v5490 = vpop.f32.mrb[0].mxu0
        %v5491 = vadd.f32 0.0, %v5490
        %v5492 = vpop.f32.mrb[0].mxu0
        %5493 = vmatprep.mubr.f32.mxu0 0.0
        %5494 = vmatmul.mubr.f32.gmra.mrb[0].mxu0 %v1533
        %v5495 = vpop.f32.mrb[0].mxu0
        %v5496 = vadd.f32 0.0, %v5495
        %v5497 = vpop.f32.mrb[0].mxu0
        %5498 = vmatprep.mubr.f32.mxu0 0.0
        %5499 = vmatmul.mubr.f32.gmra.mrb[0].mxu0 %v1535
        %v5500 = vpop.f32.mrb[0].mxu0
        %v5501 = vadd.f32 0.0, %v5500
        %v5502 = vpop.f32.mrb[0].mxu0
        %5503 = vmatprep.mubr.f32.mxu0 0.0
        %5504 = vmatmul.mubr.f32.gmra.mrb[0].mxu0 %v1538
        %v5505 = vpop.f32.mrb[0].mxu0
        %v5506 = vadd.f32 0.0, %v5505
        %v5507 = vpop.f32.mrb[0].mxu0
        %5508 = vmatprep.mubr.f32.mxu0 0.0
        %5509 = vmatmul.mubr.f32.gmra.mrb[0].mxu0 %v1535
        %v5510 = vpop.f32.mrb[0].mxu0
        %v5511 = vadd.f32 0.0, %v5510
        %v5512 = vpop.f32.mrb[0].mxu0
        %5513 = vmatprep.mubr.f32.mxu0 0.0
        %5514 = vmatmul.mubr.f32.gmra.mrb[0].mxu0 %v1538
        %v5515 = vpop.f32.mrb[0].mxu0
        %v5516 = vadd.f32 0.0, %v5515
        %v5517 = vpop.f32.mrb[0].mxu0
        %5518 = vmatprep.mubr.f32.mxu0 0.0
        %5519 = vmatmul.mubr.f32.gmra.mrb[0].mxu0 %v1540
        %v5520 = vpop.f32.mrb[0].mxu0
        %v5521 = vadd.f32 0.0, %v5520
        %v5522 = vpop.f32.mrb[0].mxu0
        %5523 = vmatprep.mubr.f32.mxu0 0.0
        %5524 = vmatmul.mubr.f32.gmra.mrb[0].mxu0 %v1543
        %v5525 = vpop.f32.mrb[0].mxu0
        %v5526 = vadd.f32 0.0, %v5525
        %v5527 = vpop.f32.mrb[0].mxu0
        %5528 = vmatprep.mubr.f32.mxu0 0.0
        %5529 = vmatmul.mubr.f32.gmra.mrb[0].mxu0 %v1540
        %v5530 = vpop.f32.mrb[0].mxu0
        %v5531 = vadd.f32 0.0, %v5530
        %v5532 = vpop.f32.mrb[0].mxu0
        %5533 = vmatprep.mubr.f32.mxu0 0.0
        %5534 = vmatmul.mubr.f32.gmra.mrb[0].mxu0 %v1543
        %v5535 = vpop.f32.mrb[0].mxu0
        %v5536 = vadd.f32 0.0, %v5535
        %v5537 = vpop.f32.mrb[0].mxu0
        %5538 = vmatprep.mubr.f32.mxu0 0.0
        %5539 = vmatmul.mubr.f32.gmra.mrb[0].mxu0 %v1545
        %v5540 = vpop.f32.mrb[0].mxu0
        %v5541 = vadd.f32 0.0, %v5540
        %v5542 = vpop.f32.mrb[0].mxu0
        %5543 = vmatprep.mubr.f32.mxu0 0.0
        %5544 = vmatmul.mubr.f32.gmra.mrb[0].mxu0 %v1548
        %v5545 = vpop.f32.mrb[0].mxu0
        %v5546 = vadd.f32 0.0, %v5545
        %v5547 = vpop.f32.mrb[0].mxu0
        %5548 = vmatprep.mubr.f32.mxu0 0.0
        %5549 = vmatmul.mubr.f32.gmra.mrb[0].mxu0 %v1545
        %v5550 = vpop.f32.mrb[0].mxu0
        %v5551 = vadd.f32 0.0, %v5550
        %v5552 = vpop.f32.mrb[0].mxu0
        %5553 = vmatprep.mubr.f32.mxu0 0.0
        %5554 = vmatmul.mubr.f32.gmra.mrb[0].mxu0 %v1548
        %v5555 = vpop.f32.mrb[0].mxu0
        %v5556 = vadd.f32 0.0, %v5555
        %v5557 = vpop.f32.mrb[0].mxu0
        %5558 = vmatprep.mubr.f32.mxu0 0.0
        %5559 = vmatmul.mubr.f32.gmra.mrb[0].mxu0 %v1550
        %v5560 = vpop.f32.mrb[0].mxu0
        %v5561 = vadd.f32 0.0, %v5560
        %v5562 = vpop.f32.mrb[0].mxu0
        %5563 = vmatprep.mubr.f32.mxu0 0.0
        %5564 = vmatmul.mubr.f32.gmra.mrb[0].mxu0 %v1553
        %v5565 = vpop.f32.mrb[0].mxu0
        %v5566 = vadd.f32 0.0, %v5565
        %v5567 = vpop.f32.mrb[0].mxu0
        %5568 = vmatprep.mubr.f32.mxu0 0.0
        %5569 = vmatmul.mubr.f32.gmra.mrb[0].mxu0 %v1550
        %v5570 = vpop.f32.mrb[0].mxu0
        %v5571 = vadd.f32 0.0, %v5570
        %v5572 = vpop.f32.mrb[0].mxu0
        %5573 = vmatprep.mubr.f32.mxu0 0.0
        %5574 = vmatmul.mubr.f32.gmra.mrb[0].mxu0 %v1553
        %v5575 = vpop.f32.mrb[0].mxu0
        %v5576 = vadd.f32 0.0, %v5575
        %v5577 = vpop.f32.mrb[0].mxu0
        %5578 = vmatprep.mubr.f32.mxu0 0.0
        %5579 = vmatmul.mubr.f32.gmra.mrb[0].mxu0 %v5196
        %v5580 = vpop.f32.mrb[0].mxu0
        %v5581 = vadd.f32 0.0, %v5580
        %v5582 = vpop.f32.mrb[0].mxu0
        %5583 = vmatprep.mubr.f32.mxu0 0.0
        %5584 = vmatmul.mubr.f32.gmra.mrb[0].mxu0 %v5199
        %v5585 = vpop.f32.mrb[0].mxu0
        %v5586 = vadd.f32 0.0, %v5585
        %v5587 = vpop.f32.mrb[0].mxu0
        %5588 = vdwg.mxu0
        %v5590 = vsel %vm607, %v5195, 0
        %5592 = vmatprep.subr.mxu0 0.0
        %5593 = vmatpush1.msra.mxu0 %v5590
        %5594 = vmatprep.subr.mxu0 0.0
        %5595 = vmatpush1.msra.mxu0 0.0
        %5596 = vmatprep.subr.mxu0 0.0
        %5597 = vmatpush1.msra.mxu0 0.0
        %5598 = vmatprep.subr.mxu0 0.0
        %5599 = vmatpush1.msra.mxu0 0.0
        %5600 = vmatprep.subr.mxu0 0.0
        %5601 = vmatpush1.msra.mxu0 0.0
        %5602 = vmatprep.subr.mxu0 0.0
        %5603 = vmatpush1.msra.mxu0 0.0
        %5604 = vmatprep.subr.mxu0 0.0
        %5605 = vmatpush1.msra.mxu0 0.0
        %5606 = vmatprep.subr.mxu0 0.0
        %5607 = vmatpush1.msra.mxu0 0.0
        %5608 = vmatprep.subr.mxu0 0.0
        %5609 = vmatpush1.msra.mxu0 0.0
        %5610 = vmatprep.subr.mxu0 0.0
        %5611 = vmatpush1.msra.mxu0 0.0
        %5612 = vmatprep.subr.mxu0 0.0
        %5613 = vmatpush1.msra.mxu0 0.0
        %5614 = vmatprep.subr.mxu0 0.0
        %5615 = vmatpush1.msra.mxu0 0.0
        %5616 = vmatprep.subr.mxu0 0.0
        %5617 = vmatpush1.msra.mxu0 0.0
        %5618 = vmatprep.subr.mxu0 0.0
        %5619 = vmatpush1.msra.mxu0 0.0
        %5620 = vmatprep.subr.mxu0 0.0
        %5621 = vmatpush1.msra.mxu0 0.0
        %5622 = vmatprep.subr.mxu0 0.0
        %5623 = vmatpush1.msra.mxu0 0.0
        %5624 = vmatprep.subr.mxu0 0.0
        %5625 = vmatpush1.msra.mxu0 0.0
        %5626 = vmatprep.subr.mxu0 0.0
        %5627 = vmatpush1.msra.mxu0 0.0
        %5628 = vmatprep.subr.mxu0 0.0
        %5629 = vmatpush1.msra.mxu0 0.0
        %5630 = vmatprep.subr.mxu0 0.0
        %5631 = vmatpush1.msra.mxu0 0.0
        %5632 = vmatprep.subr.mxu0 0.0
        %5633 = vmatpush1.msra.mxu0 0.0
        %5634 = vmatprep.subr.mxu0 0.0
        %5635 = vmatpush1.msra.mxu0 0.0
        %5636 = vmatprep.subr.mxu0 0.0
        %5637 = vmatpush1.msra.mxu0 0.0
        %5638 = vmatprep.subr.mxu0 0.0
        %5639 = vmatpush1.msra.mxu0 0.0
        %5640 = vmatprep.subr.mxu0 0.0
        %5641 = vmatpush1.msra.mxu0 0.0
        %5642 = vmatprep.subr.mxu0 0.0
        %5643 = vmatpush1.msra.mxu0 0.0
        %5644 = vmatprep.subr.mxu0 0.0
        %5645 = vmatpush1.msra.mxu0 0.0
        %5646 = vmatprep.subr.mxu0 0.0
        %5647 = vmatpush1.msra.mxu0 0.0
        %5648 = vmatprep.subr.mxu0 0.0
        %5649 = vmatpush1.msra.mxu0 0.0
        %5650 = vmatprep.subr.mxu0 0.0
        %5651 = vmatpush1.msra.mxu0 0.0
        %5652 = vmatprep.subr.mxu0 0.0
        %5653 = vmatpush1.msra.mxu0 0.0
        %5654 = vmatprep.subr.mxu0 0.0
        %5655 = vmatpush1.msra.mxu0 0.0
        %5656 = vmatprep.mubr.f32.mxu0 0.0
        %5657 = vmatmul.mubr.f32.gmra.mrb[0].mxu0 %v543
        %v5658 = vpop.f32.mrb[0].mxu0
        %v5659 = vadd.f32 %v5271, %v5658
        %v5660 = vpop.f32.mrb[0].mxu0
        %5661 = vmatprep.mubr.f32.mxu0 0.0
        %5662 = vmatmul.mubr.f32.gmra.mrb[0].mxu0 %v545
        %v5663 = vpop.f32.mrb[0].mxu0
        %v5664 = vadd.f32 %v5276, %v5663
        %v5665 = vpop.f32.mrb[0].mxu0
        %5666 = vmatprep.mubr.f32.mxu0 0.0
        %5667 = vmatmul.mubr.f32.gmra.mrb[0].mxu0 %v547
        %v5668 = vpop.f32.mrb[0].mxu0
        %v5669 = vadd.f32 %v5281, %v5668
        %v5670 = vpop.f32.mrb[0].mxu0
        %5671 = vmatprep.mubr.f32.mxu0 0.0
        %5672 = vmatmul.mubr.f32.gmra.mrb[0].mxu0 %v549
        %v5673 = vpop.f32.mrb[0].mxu0
        %v5674 = vadd.f32 %v5286, %v5673
        %v5675 = vpop.f32.mrb[0].mxu0
        %5676 = vmatprep.mubr.f32.mxu0 0.0
        %5677 = vmatmul.mubr.f32.gmra.mrb[0].mxu0 %v547
        %v5678 = vpop.f32.mrb[0].mxu0
        %v5679 = vadd.f32 %v5291, %v5678
        %v5680 = vpop.f32.mrb[0].mxu0
        %5681 = vmatprep.mubr.f32.mxu0 0.0
        %5682 = vmatmul.mubr.f32.gmra.mrb[0].mxu0 %v549
        %v5683 = vpop.f32.mrb[0].mxu0
        %v5684 = vadd.f32 %v5296, %v5683
        %v5685 = vpop.f32.mrb[0].mxu0
        %5686 = vmatprep.mubr.f32.mxu0 0.0
        %5687 = vmatmul.mubr.f32.gmra.mrb[0].mxu0 %v551
        %v5688 = vpop.f32.mrb[0].mxu0
        %v5689 = vadd.f32 %v5301, %v5688
        %v5690 = vpop.f32.mrb[0].mxu0
        %5691 = vmatprep.mubr.f32.mxu0 0.0
        %5692 = vmatmul.mubr.f32.gmra.mrb[0].mxu0 %v553
        %v5693 = vpop.f32.mrb[0].mxu0
        %v5694 = vadd.f32 %v5306, %v5693
        %v5695 = vpop.f32.mrb[0].mxu0
        %5696 = vmatprep.mubr.f32.mxu0 0.0
        %5697 = vmatmul.mubr.f32.gmra.mrb[0].mxu0 %v551
        %v5698 = vpop.f32.mrb[0].mxu0
        %v5699 = vadd.f32 %v5311, %v5698
        %v5700 = vpop.f32.mrb[0].mxu0
        %5701 = vmatprep.mubr.f32.mxu0 0.0
        %5702 = vmatmul.mubr.f32.gmra.mrb[0].mxu0 %v553
        %v5703 = vpop.f32.mrb[0].mxu0
        %v5704 = vadd.f32 %v5316, %v5703
        %v5705 = vpop.f32.mrb[0].mxu0
        %5706 = vmatprep.mubr.f32.mxu0 0.0
        %5707 = vmatmul.mubr.f32.gmra.mrb[0].mxu0 %v555
        %v5708 = vpop.f32.mrb[0].mxu0
        %v5709 = vadd.f32 %v5321, %v5708
        %v5710 = vpop.f32.mrb[0].mxu0
        %5711 = vmatprep.mubr.f32.mxu0 0.0
        %5712 = vmatmul.mubr.f32.gmra.mrb[0].mxu0 %v557
        %v5713 = vpop.f32.mrb[0].mxu0
        %v5714 = vadd.f32 %v5326, %v5713
        %v5715 = vpop.f32.mrb[0].mxu0
        %5716 = vmatprep.mubr.f32.mxu0 0.0
        %5717 = vmatmul.mubr.f32.gmra.mrb[0].mxu0 %v555
        %v5718 = vpop.f32.mrb[0].mxu0
        %v5719 = vadd.f32 %v5331, %v5718
        %v5720 = vpop.f32.mrb[0].mxu0
        %5721 = vmatprep.mubr.f32.mxu0 0.0
        %5722 = vmatmul.mubr.f32.gmra.mrb[0].mxu0 %v557
        %v5723 = vpop.f32.mrb[0].mxu0
        %v5724 = vadd.f32 %v5336, %v5723
        %v5725 = vpop.f32.mrb[0].mxu0
        %5726 = vmatprep.mubr.f32.mxu0 0.0
        %5727 = vmatmul.mubr.f32.gmra.mrb[0].mxu0 %v559
        %v5728 = vpop.f32.mrb[0].mxu0
        %v5729 = vadd.f32 %v5341, %v5728
        %v5730 = vpop.f32.mrb[0].mxu0
        %5731 = vmatprep.mubr.f32.mxu0 0.0
        %5732 = vmatmul.mubr.f32.gmra.mrb[0].mxu0 %v561
        %v5733 = vpop.f32.mrb[0].mxu0
        %v5734 = vadd.f32 %v5346, %v5733
        %v5735 = vpop.f32.mrb[0].mxu0
        %5736 = vmatprep.mubr.f32.mxu0 0.0
        %5737 = vmatmul.mubr.f32.gmra.mrb[0].mxu0 %v559
        %v5738 = vpop.f32.mrb[0].mxu0
        %v5739 = vadd.f32 %v5351, %v5738
        %v5740 = vpop.f32.mrb[0].mxu0
        %5741 = vmatprep.mubr.f32.mxu0 0.0
        %5742 = vmatmul.mubr.f32.gmra.mrb[0].mxu0 %v561
        %v5743 = vpop.f32.mrb[0].mxu0
        %v5744 = vadd.f32 %v5356, %v5743
        %v5745 = vpop.f32.mrb[0].mxu0
        %5746 = vmatprep.mubr.f32.mxu0 0.0
        %5747 = vmatmul.mubr.f32.gmra.mrb[0].mxu0 %v563
        %v5748 = vpop.f32.mrb[0].mxu0
        %v5749 = vadd.f32 %v5361, %v5748
        %v5750 = vpop.f32.mrb[0].mxu0
        %5751 = vmatprep.mubr.f32.mxu0 0.0
        %5752 = vmatmul.mubr.f32.gmra.mrb[0].mxu0 %v565
        %v5753 = vpop.f32.mrb[0].mxu0
        %v5754 = vadd.f32 %v5366, %v5753
        %v5755 = vpop.f32.mrb[0].mxu0
        %5756 = vmatprep.mubr.f32.mxu0 0.0
        %5757 = vmatmul.mubr.f32.gmra.mrb[0].mxu0 %v563
        %v5758 = vpop.f32.mrb[0].mxu0
        %v5759 = vadd.f32 %v5371, %v5758
        %v5760 = vpop.f32.mrb[0].mxu0
        %5761 = vmatprep.mubr.f32.mxu0 0.0
        %5762 = vmatmul.mubr.f32.gmra.mrb[0].mxu0 %v565
        %v5763 = vpop.f32.mrb[0].mxu0
        %v5764 = vadd.f32 %v5376, %v5763
        %v5765 = vpop.f32.mrb[0].mxu0
        %5766 = vmatprep.mubr.f32.mxu0 0.0
        %5767 = vmatmul.mubr.f32.gmra.mrb[0].mxu0 %v567
        %v5768 = vpop.f32.mrb[0].mxu0
        %v5769 = vadd.f32 %v5381, %v5768
        %v5770 = vpop.f32.mrb[0].mxu0
        %5771 = vmatprep.mubr.f32.mxu0 0.0
        %5772 = vmatmul.mubr.f32.gmra.mrb[0].mxu0 %v569
        %v5773 = vpop.f32.mrb[0].mxu0
        %v5774 = vadd.f32 %v5386, %v5773
        %v5775 = vpop.f32.mrb[0].mxu0
        %5776 = vmatprep.mubr.f32.mxu0 0.0
        %5777 = vmatmul.mubr.f32.gmra.mrb[0].mxu0 %v567
        %v5778 = vpop.f32.mrb[0].mxu0
        %v5779 = vadd.f32 %v5391, %v5778
        %v5780 = vpop.f32.mrb[0].mxu0
        %5781 = vmatprep.mubr.f32.mxu0 0.0
        %5782 = vmatmul.mubr.f32.gmra.mrb[0].mxu0 %v569
        %v5783 = vpop.f32.mrb[0].mxu0
        %v5784 = vadd.f32 %v5396, %v5783
        %v5785 = vpop.f32.mrb[0].mxu0
        %5786 = vmatprep.mubr.f32.mxu0 0.0
        %5787 = vmatmul.mubr.f32.gmra.mrb[0].mxu0 %v571
        %v5788 = vpop.f32.mrb[0].mxu0
        %v5789 = vadd.f32 %v5401, %v5788
        %v5790 = vpop.f32.mrb[0].mxu0
        %5791 = vmatprep.mubr.f32.mxu0 0.0
        %5792 = vmatmul.mubr.f32.gmra.mrb[0].mxu0 %v573
        %v5793 = vpop.f32.mrb[0].mxu0
        %v5794 = vadd.f32 %v5406, %v5793
        %v5795 = vpop.f32.mrb[0].mxu0
        %5796 = vmatprep.mubr.f32.mxu0 0.0
        %5797 = vmatmul.mubr.f32.gmra.mrb[0].mxu0 %v571
        %v5798 = vpop.f32.mrb[0].mxu0
        %v5799 = vadd.f32 %v5411, %v5798
        %v5800 = vpop.f32.mrb[0].mxu0
        %5801 = vmatprep.mubr.f32.mxu0 0.0
        %5802 = vmatmul.mubr.f32.gmra.mrb[0].mxu0 %v573
        %v5803 = vpop.f32.mrb[0].mxu0
        %v5804 = vadd.f32 %v5416, %v5803
        %v5805 = vpop.f32.mrb[0].mxu0
        %5806 = vmatprep.mubr.f32.mxu0 0.0
        %5807 = vmatmul.mubr.f32.gmra.mrb[0].mxu0 %v575
        %v5808 = vpop.f32.mrb[0].mxu0
        %v5809 = vadd.f32 %v5421, %v5808
        %v5810 = vpop.f32.mrb[0].mxu0
        %5811 = vmatprep.mubr.f32.mxu0 0.0
        %5812 = vmatmul.mubr.f32.gmra.mrb[0].mxu0 %v577
        %v5813 = vpop.f32.mrb[0].mxu0
        %v5814 = vadd.f32 %v5426, %v5813
        %v5815 = vpop.f32.mrb[0].mxu0
        %5816 = vmatprep.mubr.f32.mxu0 0.0
        %5817 = vmatmul.mubr.f32.gmra.mrb[0].mxu0 %v575
        %v5818 = vpop.f32.mrb[0].mxu0
        %v5819 = vadd.f32 %v5431, %v5818
        %v5820 = vpop.f32.mrb[0].mxu0
        %5821 = vmatprep.mubr.f32.mxu0 0.0
        %5822 = vmatmul.mubr.f32.gmra.mrb[0].mxu0 %v577
        %v5823 = vpop.f32.mrb[0].mxu0
        %v5824 = vadd.f32 %v5436, %v5823
        %v5825 = vpop.f32.mrb[0].mxu0
        %5826 = vmatprep.mubr.f32.mxu0 0.0
        %5827 = vmatmul.mubr.f32.gmra.mrb[0].mxu0 %v579
        %v5828 = vpop.f32.mrb[0].mxu0
        %v5829 = vadd.f32 %v5441, %v5828
        %v5830 = vpop.f32.mrb[0].mxu0
        %5831 = vmatprep.mubr.f32.mxu0 0.0
        %5832 = vmatmul.mubr.f32.gmra.mrb[0].mxu0 %v581
        %v5833 = vpop.f32.mrb[0].mxu0
        %v5834 = vadd.f32 %v5446, %v5833
        %v5835 = vpop.f32.mrb[0].mxu0
        %5836 = vmatprep.mubr.f32.mxu0 0.0
        %5837 = vmatmul.mubr.f32.gmra.mrb[0].mxu0 %v579
        %v5838 = vpop.f32.mrb[0].mxu0
        %v5839 = vadd.f32 %v5451, %v5838
        %v5840 = vpop.f32.mrb[0].mxu0
        %5841 = vmatprep.mubr.f32.mxu0 0.0
        %5842 = vmatmul.mubr.f32.gmra.mrb[0].mxu0 %v581
        %v5843 = vpop.f32.mrb[0].mxu0
        %v5844 = vadd.f32 %v5456, %v5843
        %v5845 = vpop.f32.mrb[0].mxu0
        %5846 = vmatprep.mubr.f32.mxu0 0.0
        %5847 = vmatmul.mubr.f32.gmra.mrb[0].mxu0 %v583
        %v5848 = vpop.f32.mrb[0].mxu0
        %v5849 = vadd.f32 %v5461, %v5848
        %v5850 = vpop.f32.mrb[0].mxu0
        %5851 = vmatprep.mubr.f32.mxu0 0.0
        %5852 = vmatmul.mubr.f32.gmra.mrb[0].mxu0 %v585
        %v5853 = vpop.f32.mrb[0].mxu0
        %v5854 = vadd.f32 %v5466, %v5853
        %v5855 = vpop.f32.mrb[0].mxu0
        %5856 = vmatprep.mubr.f32.mxu0 0.0
        %5857 = vmatmul.mubr.f32.gmra.mrb[0].mxu0 %v583
        %v5858 = vpop.f32.mrb[0].mxu0
        %v5859 = vadd.f32 %v5471, %v5858
        %v5860 = vpop.f32.mrb[0].mxu0
        %5861 = vmatprep.mubr.f32.mxu0 0.0
        %5862 = vmatmul.mubr.f32.gmra.mrb[0].mxu0 %v585
        %v5863 = vpop.f32.mrb[0].mxu0
        %v5864 = vadd.f32 %v5476, %v5863
        %v5865 = vpop.f32.mrb[0].mxu0
        %5866 = vmatprep.mubr.f32.mxu0 0.0
        %5867 = vmatmul.mubr.f32.gmra.mrb[0].mxu0 %v587
        %v5868 = vpop.f32.mrb[0].mxu0
        %v5869 = vadd.f32 %v5481, %v5868
        %v5870 = vpop.f32.mrb[0].mxu0
        %5871 = vmatprep.mubr.f32.mxu0 0.0
        %5872 = vmatmul.mubr.f32.gmra.mrb[0].mxu0 %v589
        %v5873 = vpop.f32.mrb[0].mxu0
        %v5874 = vadd.f32 %v5486, %v5873
        %v5875 = vpop.f32.mrb[0].mxu0
        %5876 = vmatprep.mubr.f32.mxu0 0.0
        %5877 = vmatmul.mubr.f32.gmra.mrb[0].mxu0 %v587
        %v5878 = vpop.f32.mrb[0].mxu0
        %v5879 = vadd.f32 %v5491, %v5878
        %v5880 = vpop.f32.mrb[0].mxu0
        %5881 = vmatprep.mubr.f32.mxu0 0.0
        %5882 = vmatmul.mubr.f32.gmra.mrb[0].mxu0 %v589
        %v5883 = vpop.f32.mrb[0].mxu0
        %v5884 = vadd.f32 %v5496, %v5883
        %v5885 = vpop.f32.mrb[0].mxu0
        %5886 = vmatprep.mubr.f32.mxu0 0.0
        %5887 = vmatmul.mubr.f32.gmra.mrb[0].mxu0 %v591
        %v5888 = vpop.f32.mrb[0].mxu0
        %v5889 = vadd.f32 %v5501, %v5888
        %v5890 = vpop.f32.mrb[0].mxu0
        %5891 = vmatprep.mubr.f32.mxu0 0.0
        %5892 = vmatmul.mubr.f32.gmra.mrb[0].mxu0 %v593
        %v5893 = vpop.f32.mrb[0].mxu0
        %v5894 = vadd.f32 %v5506, %v5893
        %v5895 = vpop.f32.mrb[0].mxu0
        %5896 = vmatprep.mubr.f32.mxu0 0.0
        %5897 = vmatmul.mubr.f32.gmra.mrb[0].mxu0 %v591
        %v5898 = vpop.f32.mrb[0].mxu0
        %v5899 = vadd.f32 %v5511, %v5898
        %v5900 = vpop.f32.mrb[0].mxu0
        %5901 = vmatprep.mubr.f32.mxu0 0.0
        %5902 = vmatmul.mubr.f32.gmra.mrb[0].mxu0 %v593
        %v5903 = vpop.f32.mrb[0].mxu0
        %v5904 = vadd.f32 %v5516, %v5903
        %v5905 = vpop.f32.mrb[0].mxu0
        %5906 = vmatprep.mubr.f32.mxu0 0.0
        %5907 = vmatmul.mubr.f32.gmra.mrb[0].mxu0 %v595
        %v5908 = vpop.f32.mrb[0].mxu0
        %v5909 = vadd.f32 %v5521, %v5908
        %v5910 = vpop.f32.mrb[0].mxu0
        %5911 = vmatprep.mubr.f32.mxu0 0.0
        %5912 = vmatmul.mubr.f32.gmra.mrb[0].mxu0 %v597
        %v5913 = vpop.f32.mrb[0].mxu0
        %v5914 = vadd.f32 %v5526, %v5913
        %v5915 = vpop.f32.mrb[0].mxu0
        %5916 = vmatprep.mubr.f32.mxu0 0.0
        %5917 = vmatmul.mubr.f32.gmra.mrb[0].mxu0 %v595
        %v5918 = vpop.f32.mrb[0].mxu0
        %v5919 = vadd.f32 %v5531, %v5918
        %v5920 = vpop.f32.mrb[0].mxu0
        %5921 = vmatprep.mubr.f32.mxu0 0.0
        %5922 = vmatmul.mubr.f32.gmra.mrb[0].mxu0 %v597
        %v5923 = vpop.f32.mrb[0].mxu0
        %v5924 = vadd.f32 %v5536, %v5923
        %v5925 = vpop.f32.mrb[0].mxu0
        %5926 = vmatprep.mubr.f32.mxu0 0.0
        %5927 = vmatmul.mubr.f32.gmra.mrb[0].mxu0 %v599
        %v5928 = vpop.f32.mrb[0].mxu0
        %v5929 = vadd.f32 %v5541, %v5928
        %v5930 = vpop.f32.mrb[0].mxu0
        %5931 = vmatprep.mubr.f32.mxu0 0.0
        %5932 = vmatmul.mubr.f32.gmra.mrb[0].mxu0 %v601
        %v5933 = vpop.f32.mrb[0].mxu0
        %v5934 = vadd.f32 %v5546, %v5933
        %v5935 = vpop.f32.mrb[0].mxu0
        %5936 = vmatprep.mubr.f32.mxu0 0.0
        %5937 = vmatmul.mubr.f32.gmra.mrb[0].mxu0 %v599
        %v5938 = vpop.f32.mrb[0].mxu0
        %v5939 = vadd.f32 %v5551, %v5938
        %v5940 = vpop.f32.mrb[0].mxu0
        %5941 = vmatprep.mubr.f32.mxu0 0.0
        %5942 = vmatmul.mubr.f32.gmra.mrb[0].mxu0 %v601
        %v5943 = vpop.f32.mrb[0].mxu0
        %v5944 = vadd.f32 %v5556, %v5943
        %v5945 = vpop.f32.mrb[0].mxu0
        %5946 = vmatprep.mubr.f32.mxu0 0.0
        %5947 = vmatmul.mubr.f32.gmra.mrb[0].mxu0 %v603
        %v5948 = vpop.f32.mrb[0].mxu0
        %v5949 = vadd.f32 %v5561, %v5948
        %v5950 = vpop.f32.mrb[0].mxu0
        %5951 = vmatprep.mubr.f32.mxu0 0.0
        %5952 = vmatmul.mubr.f32.gmra.mrb[0].mxu0 %v605
        %v5953 = vpop.f32.mrb[0].mxu0
        %v5954 = vadd.f32 %v5566, %v5953
        %v5955 = vpop.f32.mrb[0].mxu0
        %5956 = vmatprep.mubr.f32.mxu0 0.0
        %5957 = vmatmul.mubr.f32.gmra.mrb[0].mxu0 %v603
        %v5958 = vpop.f32.mrb[0].mxu0
        %v5959 = vadd.f32 %v5571, %v5958
        %v5960 = vpop.f32.mrb[0].mxu0
        %5961 = vmatprep.mubr.f32.mxu0 0.0
        %5962 = vmatmul.mubr.f32.gmra.mrb[0].mxu0 %v605
        %v5963 = vpop.f32.mrb[0].mxu0
        %v5964 = vadd.f32 %v5576, %v5963
        %v5965 = vpop.f32.mrb[0].mxu0
        %5966 = vmatprep.mubr.f32.mxu0 0.0
        %5967 = vmatmul.mubr.f32.gmra.mrb[0].mxu0 %v4410
        %v5968 = vpop.f32.mrb[0].mxu0
        %v5969 = vadd.f32 %v5581, %v5968
        %v5970 = vpop.f32.mrb[0].mxu0
        %5971 = vmatprep.mubr.f32.mxu0 0.0
        %5972 = vmatmul.mubr.f32.gmra.mrb[0].mxu0 %v4412
        %v5973 = vpop.f32.mrb[0].mxu0
        %v5974 = vadd.f32 %v5586, %v5973
        %v5975 = vpop.f32.mrb[0].mxu0
        %5976 = vdwg.mxu0
        %v5977 = vld [vmem:[#allocation2] sm:$0xff]
        %v5978 = vld [vmem:[#allocation2 + $0x8] sm:$0xff]
        %v5979 = vld [vmem:[#allocation2 + $0x10] sm:$0xff]
        %v5980 = vld [vmem:[#allocation2 + $0x18] sm:$0xff]
        %v5981 = vld [vmem:[#allocation2 + $0x20] sm:$0xff]
        %v5982 = vld [vmem:[#allocation2 + $0x28] sm:$0xff]
        %v5983 = vld [vmem:[#allocation2 + $0x30] sm:$0xff]
        %v5984 = vld [vmem:[#allocation2 + $0x38] sm:$0xff]
        %v5985 = vld [vmem:[#allocation2 + $0x40] sm:$0xff]
        %v5986 = vld [vmem:[#allocation2 + $0x48] sm:$0xff]
        %v5987 = vld [vmem:[#allocation2 + $0x50] sm:$0xff]
        %v5988 = vld [vmem:[#allocation2 + $0x58] sm:$0xff]
        %v5989 = vld [vmem:[#allocation2 + $0x60] sm:$0xff]
        %v5990 = vld [vmem:[#allocation2 + $0x68] sm:$0xff]
        %v5991 = vld [vmem:[#allocation2 + $0x70] sm:$0xff]
        %v5992 = vld [vmem:[#allocation2 + $0x78] sm:$0xff]
        %v5993 = vld [vmem:[#allocation2 + $0x80] sm:$0xff]
        %v5994 = vld [vmem:[#allocation2 + $0x88] sm:$0xff]
        %v5995 = vld [vmem:[#allocation2 + $0x90] sm:$0xff]
        %v5996 = vld [vmem:[#allocation2 + $0x98] sm:$0xff]
        %v5997 = vld [vmem:[#allocation2 + $0xa0] sm:$0xff]
        %v5998 = vld [vmem:[#allocation2 + $0xa8] sm:$0xff]
        %v5999 = vld [vmem:[#allocation2 + $0xb0] sm:$0xff]
        %v6000 = vld [vmem:[#allocation2 + $0xb8] sm:$0xff]
        %v6001 = vld [vmem:[#allocation2 + $0xc0] sm:$0xff]
        %v6002 = vld [vmem:[#allocation2 + $0xc8] sm:$0xff]
        %v6003 = vld [vmem:[#allocation2 + $0xd0] sm:$0xff]
        %v6004 = vld [vmem:[#allocation2 + $0xd8] sm:$0xff]
        %v6005 = vld [vmem:[#allocation2 + $0xe0] sm:$0xff]
        %v6006 = vld [vmem:[#allocation2 + $0xe8] sm:$0xff]
        %v6007 = vld [vmem:[#allocation2 + $0xf0] sm:$0xff]
        %v6008 = vld [vmem:[#allocation2 + $0xf8] sm:$0xff]
        %v6009 = vld [vmem:[#allocation2 + $0x100] sm:$0xff]
        %v6010 = vld [vmem:[#allocation2 + $0x108] sm:$0xff]
        %v6011 = vld [vmem:[#allocation2 + $0x110] sm:$0xff]
        %v6012 = vld [vmem:[#allocation2 + $0x118] sm:$0xff]
        %v6013 = vld [vmem:[#allocation2 + $0x120] sm:$0xff]
        %v6014 = vld [vmem:[#allocation2 + $0x128] sm:$0xff]
        %v6015 = vld [vmem:[#allocation2 + $0x130] sm:$0xff]
        %v6016 = vld [vmem:[#allocation2 + $0x138] sm:$0xff]
        %v6017 = vld [vmem:[#allocation2 + $0x140] sm:$0xff]
        %v6018 = vld [vmem:[#allocation2 + $0x148] sm:$0xff]
        %v6019 = vld [vmem:[#allocation2 + $0x150] sm:$0xff]
        %v6020 = vld [vmem:[#allocation2 + $0x158] sm:$0xff]
        %v6021 = vld [vmem:[#allocation2 + $0x160] sm:$0xff]
        %v6022 = vld [vmem:[#allocation2 + $0x168] sm:$0xff]
        %v6023 = vld [vmem:[#allocation2 + $0x170] sm:$0xff]
        %v6024 = vld [vmem:[#allocation2 + $0x178] sm:$0xff]
        %v6025 = vld [vmem:[#allocation2 + $0x180] sm:$0xff]
        %v6026 = vld [vmem:[#allocation2 + $0x188] sm:$0xff]
        %v6027 = vld [vmem:[#allocation2 + $0x190] sm:$0xff]
        %v6028 = vld [vmem:[#allocation2 + $0x198] sm:$0xff]
        %v6029 = vld [vmem:[#allocation2 + $0x1a0] sm:$0xff]
        %v6030 = vld [vmem:[#allocation2 + $0x1a8] sm:$0xff]
        %v6031 = vld [vmem:[#allocation2 + $0x1b0] sm:$0xff]
        %v6032 = vld [vmem:[#allocation2 + $0x1b8] sm:$0xff]
        %v6033 = vld [vmem:[#allocation2 + $0x1c0] sm:$0xff]
        %v6034 = vld [vmem:[#allocation2 + $0x1c8] sm:$0xff]
        %v6035 = vld [vmem:[#allocation2 + $0x1d0] sm:$0xff]
        %v6036 = vld [vmem:[#allocation2 + $0x1d8] sm:$0xff]
        %v6037 = vld [vmem:[#allocation2 + $0x1e0] sm:$0xff]
        %v6038 = vld [vmem:[#allocation2 + $0x1e8] sm:$0xff]
        %v6039 = vld [vmem:[#allocation2 + $0x1f0] sm:$0xff]
        %v6040 = vld [vmem:[#allocation2 + $0x1f8] sm:$0xff]
        %v6041 = vadd.f32 %v5977, %v4877
        %v6042 = vadd.f32 %v5978, %v4882
        %v6043 = vadd.f32 %v5979, %v4887
        %v6044 = vadd.f32 %v5980, %v4892
        %v6045 = vadd.f32 %v5981, %v4897
        %v6046 = vadd.f32 %v5982, %v4902
        %v6047 = vadd.f32 %v5983, %v4907
        %v6048 = vadd.f32 %v5984, %v4912
        %v6049 = vadd.f32 %v5985, %v4917
        %v6050 = vadd.f32 %v5986, %v4922
        %v6051 = vadd.f32 %v5987, %v4927
        %v6052 = vadd.f32 %v5988, %v4932
        %v6053 = vadd.f32 %v5989, %v4937
        %v6054 = vadd.f32 %v5990, %v4942
        %v6055 = vadd.f32 %v5991, %v4947
        %v6056 = vadd.f32 %v5992, %v4952
        %v6057 = vadd.f32 %v5993, %v4957
        %v6058 = vadd.f32 %v5994, %v4962
        %v6059 = vadd.f32 %v5995, %v4967
        %v6060 = vadd.f32 %v5996, %v4972
        %v6061 = vadd.f32 %v5997, %v4977
        %v6062 = vadd.f32 %v5998, %v4982
        %v6063 = vadd.f32 %v5999, %v4987
        %v6064 = vadd.f32 %v6000, %v4992
        %v6065 = vadd.f32 %v6001, %v4997
        %v6066 = vadd.f32 %v6002, %v5002
        %v6067 = vadd.f32 %v6003, %v5007
        %v6068 = vadd.f32 %v6004, %v5012
        %v6069 = vadd.f32 %v6005, %v5017
        %v6070 = vadd.f32 %v6006, %v5022
        %v6071 = vadd.f32 %v6007, %v5027
        %v6072 = vadd.f32 %v6008, %v5032
        %v6073 = vadd.f32 %v6009, %v5037
        %v6074 = vadd.f32 %v6010, %v5042
        %v6075 = vadd.f32 %v6011, %v5047
        %v6076 = vadd.f32 %v6012, %v5052
        %v6077 = vadd.f32 %v6013, %v5057
        %v6078 = vadd.f32 %v6014, %v5062
        %v6079 = vadd.f32 %v6015, %v5067
        %v6080 = vadd.f32 %v6016, %v5072
        %v6081 = vadd.f32 %v6017, %v5077
        %v6082 = vadd.f32 %v6018, %v5082
        %v6083 = vadd.f32 %v6019, %v5087
        %v6084 = vadd.f32 %v6020, %v5092
        %v6085 = vadd.f32 %v6021, %v5097
        %v6086 = vadd.f32 %v6022, %v5102
        %v6087 = vadd.f32 %v6023, %v5107
        %v6088 = vadd.f32 %v6024, %v5112
        %v6089 = vadd.f32 %v6025, %v5117
        %v6090 = vadd.f32 %v6026, %v5122
        %v6091 = vadd.f32 %v6027, %v5127
        %v6092 = vadd.f32 %v6028, %v5132
        %v6093 = vadd.f32 %v6029, %v5137
        %v6094 = vadd.f32 %v6030, %v5142
        %v6095 = vadd.f32 %v6031, %v5147
        %v6096 = vadd.f32 %v6032, %v5152
        %v6097 = vadd.f32 %v6033, %v5157
        %v6098 = vadd.f32 %v6034, %v5162
        %v6099 = vadd.f32 %v6035, %v5167
        %v6100 = vadd.f32 %v6036, %v5172
        %v6101 = vadd.f32 %v6037, %v5177
        %v6102 = vadd.f32 %v6038, %v5182
        %v6103 = vadd.f32 %v6039, %v5187
        %v6104 = vadd.f32 %v6040, %v5192
        %6105 = vst.msk [vmem:[#allocation2] sm:$0xff] %vm538, %v6041
        %6106 = vst.msk [vmem:[#allocation2 + $0x8] sm:$0xff] %vm538, %v6042
        %6107 = vst.msk [vmem:[#allocation2 + $0x10] sm:$0xff] %vm538, %v6043
        %6108 = vst.msk [vmem:[#allocation2 + $0x18] sm:$0xff] %vm538, %v6044
        %6109 = vst.msk [vmem:[#allocation2 + $0x20] sm:$0xff] %vm538, %v6045
        %6110 = vst.msk [vmem:[#allocation2 + $0x28] sm:$0xff] %vm538, %v6046
        %6111 = vst.msk [vmem:[#allocation2 + $0x30] sm:$0xff] %vm538, %v6047
        %6112 = vst.msk [vmem:[#allocation2 + $0x38] sm:$0xff] %vm538, %v6048
        %6113 = vst.msk [vmem:[#allocation2 + $0x40] sm:$0xff] %vm538, %v6049
        %6114 = vst.msk [vmem:[#allocation2 + $0x48] sm:$0xff] %vm538, %v6050
        %6115 = vst.msk [vmem:[#allocation2 + $0x50] sm:$0xff] %vm538, %v6051
        %6116 = vst.msk [vmem:[#allocation2 + $0x58] sm:$0xff] %vm538, %v6052
        %6117 = vst.msk [vmem:[#allocation2 + $0x60] sm:$0xff] %vm538, %v6053
        %6118 = vst.msk [vmem:[#allocation2 + $0x68] sm:$0xff] %vm538, %v6054
        %6119 = vst.msk [vmem:[#allocation2 + $0x70] sm:$0xff] %vm538, %v6055
        %6120 = vst.msk [vmem:[#allocation2 + $0x78] sm:$0xff] %vm538, %v6056
        %6121 = vst.msk [vmem:[#allocation2 + $0x80] sm:$0xff] %vm538, %v6057
        %6122 = vst.msk [vmem:[#allocation2 + $0x88] sm:$0xff] %vm538, %v6058
        %6123 = vst.msk [vmem:[#allocation2 + $0x90] sm:$0xff] %vm538, %v6059
        %6124 = vst.msk [vmem:[#allocation2 + $0x98] sm:$0xff] %vm538, %v6060
        %6125 = vst.msk [vmem:[#allocation2 + $0xa0] sm:$0xff] %vm538, %v6061
        %6126 = vst.msk [vmem:[#allocation2 + $0xa8] sm:$0xff] %vm538, %v6062
        %6127 = vst.msk [vmem:[#allocation2 + $0xb0] sm:$0xff] %vm538, %v6063
        %6128 = vst.msk [vmem:[#allocation2 + $0xb8] sm:$0xff] %vm538, %v6064
        %6129 = vst.msk [vmem:[#allocation2 + $0xc0] sm:$0xff] %vm538, %v6065
        %6130 = vst.msk [vmem:[#allocation2 + $0xc8] sm:$0xff] %vm538, %v6066
        %6131 = vst.msk [vmem:[#allocation2 + $0xd0] sm:$0xff] %vm538, %v6067
        %6132 = vst.msk [vmem:[#allocation2 + $0xd8] sm:$0xff] %vm538, %v6068
        %6133 = vst.msk [vmem:[#allocation2 + $0xe0] sm:$0xff] %vm538, %v6069
        %6134 = vst.msk [vmem:[#allocation2 + $0xe8] sm:$0xff] %vm538, %v6070
        %6135 = vst.msk [vmem:[#allocation2 + $0xf0] sm:$0xff] %vm538, %v6071
        %6136 = vst.msk [vmem:[#allocation2 + $0xf8] sm:$0xff] %vm538, %v6072
        %6137 = vst.msk [vmem:[#allocation2 + $0x100] sm:$0xff] %vm538, %v6073
        %6138 = vst.msk [vmem:[#allocation2 + $0x108] sm:$0xff] %vm538, %v6074
        %6139 = vst.msk [vmem:[#allocation2 + $0x110] sm:$0xff] %vm538, %v6075
        %6140 = vst.msk [vmem:[#allocation2 + $0x118] sm:$0xff] %vm538, %v6076
        %6141 = vst.msk [vmem:[#allocation2 + $0x120] sm:$0xff] %vm538, %v6077
        %6142 = vst.msk [vmem:[#allocation2 + $0x128] sm:$0xff] %vm538, %v6078
        %6143 = vst.msk [vmem:[#allocation2 + $0x130] sm:$0xff] %vm538, %v6079
        %6144 = vst.msk [vmem:[#allocation2 + $0x138] sm:$0xff] %vm538, %v6080
        %6145 = vst.msk [vmem:[#allocation2 + $0x140] sm:$0xff] %vm538, %v6081
        %6146 = vst.msk [vmem:[#allocation2 + $0x148] sm:$0xff] %vm538, %v6082
        %6147 = vst.msk [vmem:[#allocation2 + $0x150] sm:$0xff] %vm538, %v6083
        %6148 = vst.msk [vmem:[#allocation2 + $0x158] sm:$0xff] %vm538, %v6084
        %6149 = vst.msk [vmem:[#allocation2 + $0x160] sm:$0xff] %vm538, %v6085
        %6150 = vst.msk [vmem:[#allocation2 + $0x168] sm:$0xff] %vm538, %v6086
        %6151 = vst.msk [vmem:[#allocation2 + $0x170] sm:$0xff] %vm538, %v6087
        %6152 = vst.msk [vmem:[#allocation2 + $0x178] sm:$0xff] %vm538, %v6088
        %6153 = vst.msk [vmem:[#allocation2 + $0x180] sm:$0xff] %vm538, %v6089
        %6154 = vst.msk [vmem:[#allocation2 + $0x188] sm:$0xff] %vm538, %v6090
        %6155 = vst.msk [vmem:[#allocation2 + $0x190] sm:$0xff] %vm538, %v6091
        %6156 = vst.msk [vmem:[#allocation2 + $0x198] sm:$0xff] %vm538, %v6092
        %6157 = vst.msk [vmem:[#allocation2 + $0x1a0] sm:$0xff] %vm538, %v6093
        %6158 = vst.msk [vmem:[#allocation2 + $0x1a8] sm:$0xff] %vm538, %v6094
        %6159 = vst.msk [vmem:[#allocation2 + $0x1b0] sm:$0xff] %vm538, %v6095
        %6160 = vst.msk [vmem:[#allocation2 + $0x1b8] sm:$0xff] %vm538, %v6096
        %6161 = vst.msk [vmem:[#allocation2 + $0x1c0] sm:$0xff] %vm538, %v6097
        %6162 = vst.msk [vmem:[#allocation2 + $0x1c8] sm:$0xff] %vm538, %v6098
        %6163 = vst.msk [vmem:[#allocation2 + $0x1d0] sm:$0xff] %vm538, %v6099
        %6164 = vst.msk [vmem:[#allocation2 + $0x1d8] sm:$0xff] %vm538, %v6100
        %6165 = vst.msk [vmem:[#allocation2 + $0x1e0] sm:$0xff] %vm538, %v6101
        %6166 = vst.msk [vmem:[#allocation2 + $0x1e8] sm:$0xff] %vm538, %v6102
        %6167 = vst.msk [vmem:[#allocation2 + $0x1f0] sm:$0xff] %vm538, %v6103
        %6168 = vst.msk [vmem:[#allocation2 + $0x1f8] sm:$0xff] %vm538, %v6104
        %v6169 = vld [vmem:[#allocation3] sm:$0xff]
        %v6170 = vld [vmem:[#allocation3 + $0x8] sm:$0xff]
        %v6171 = vld [vmem:[#allocation3 + $0x10] sm:$0xff]
        %v6172 = vld [vmem:[#allocation3 + $0x18] sm:$0xff]
        %v6173 = vld [vmem:[#allocation3 + $0x20] sm:$0xff]
        %v6174 = vld [vmem:[#allocation3 + $0x28] sm:$0xff]
        %v6175 = vld [vmem:[#allocation3 + $0x30] sm:$0xff]
        %v6176 = vld [vmem:[#allocation3 + $0x38] sm:$0xff]
        %v6177 = vld [vmem:[#allocation3 + $0x40] sm:$0xff]
        %v6178 = vld [vmem:[#allocation3 + $0x48] sm:$0xff]
        %v6179 = vld [vmem:[#allocation3 + $0x50] sm:$0xff]
        %v6180 = vld [vmem:[#allocation3 + $0x58] sm:$0xff]
        %v6181 = vld [vmem:[#allocation3 + $0x60] sm:$0xff]
        %v6182 = vld [vmem:[#allocation3 + $0x68] sm:$0xff]
        %v6183 = vld [vmem:[#allocation3 + $0x70] sm:$0xff]
        %v6184 = vld [vmem:[#allocation3 + $0x78] sm:$0xff]
        %v6185 = vld [vmem:[#allocation3 + $0x80] sm:$0xff]
        %v6186 = vld [vmem:[#allocation3 + $0x88] sm:$0xff]
        %v6187 = vld [vmem:[#allocation3 + $0x90] sm:$0xff]
        %v6188 = vld [vmem:[#allocation3 + $0x98] sm:$0xff]
        %v6189 = vld [vmem:[#allocation3 + $0xa0] sm:$0xff]
        %v6190 = vld [vmem:[#allocation3 + $0xa8] sm:$0xff]
        %v6191 = vld [vmem:[#allocation3 + $0xb0] sm:$0xff]
        %v6192 = vld [vmem:[#allocation3 + $0xb8] sm:$0xff]
        %v6193 = vld [vmem:[#allocation3 + $0xc0] sm:$0xff]
        %v6194 = vld [vmem:[#allocation3 + $0xc8] sm:$0xff]
        %v6195 = vld [vmem:[#allocation3 + $0xd0] sm:$0xff]
        %v6196 = vld [vmem:[#allocation3 + $0xd8] sm:$0xff]
        %v6197 = vld [vmem:[#allocation3 + $0xe0] sm:$0xff]
        %v6198 = vld [vmem:[#allocation3 + $0xe8] sm:$0xff]
        %v6199 = vld [vmem:[#allocation3 + $0xf0] sm:$0xff]
        %v6200 = vld [vmem:[#allocation3 + $0xf8] sm:$0xff]
        %v6201 = vld [vmem:[#allocation3 + $0x100] sm:$0xff]
        %v6202 = vld [vmem:[#allocation3 + $0x108] sm:$0xff]
        %v6203 = vld [vmem:[#allocation3 + $0x110] sm:$0xff]
        %v6204 = vld [vmem:[#allocation3 + $0x118] sm:$0xff]
        %v6205 = vld [vmem:[#allocation3 + $0x120] sm:$0xff]
        %v6206 = vld [vmem:[#allocation3 + $0x128] sm:$0xff]
        %v6207 = vld [vmem:[#allocation3 + $0x130] sm:$0xff]
        %v6208 = vld [vmem:[#allocation3 + $0x138] sm:$0xff]
        %v6209 = vld [vmem:[#allocation3 + $0x140] sm:$0xff]
        %v6210 = vld [vmem:[#allocation3 + $0x148] sm:$0xff]
        %v6211 = vld [vmem:[#allocation3 + $0x150] sm:$0xff]
        %v6212 = vld [vmem:[#allocation3 + $0x158] sm:$0xff]
        %v6213 = vld [vmem:[#allocation3 + $0x160] sm:$0xff]
        %v6214 = vld [vmem:[#allocation3 + $0x168] sm:$0xff]
        %v6215 = vld [vmem:[#allocation3 + $0x170] sm:$0xff]
        %v6216 = vld [vmem:[#allocation3 + $0x178] sm:$0xff]
        %v6217 = vld [vmem:[#allocation3 + $0x180] sm:$0xff]
        %v6218 = vld [vmem:[#allocation3 + $0x188] sm:$0xff]
        %v6219 = vld [vmem:[#allocation3 + $0x190] sm:$0xff]
        %v6220 = vld [vmem:[#allocation3 + $0x198] sm:$0xff]
        %v6221 = vld [vmem:[#allocation3 + $0x1a0] sm:$0xff]
        %v6222 = vld [vmem:[#allocation3 + $0x1a8] sm:$0xff]
        %v6223 = vld [vmem:[#allocation3 + $0x1b0] sm:$0xff]
        %v6224 = vld [vmem:[#allocation3 + $0x1b8] sm:$0xff]
        %v6225 = vld [vmem:[#allocation3 + $0x1c0] sm:$0xff]
        %v6226 = vld [vmem:[#allocation3 + $0x1c8] sm:$0xff]
        %v6227 = vld [vmem:[#allocation3 + $0x1d0] sm:$0xff]
        %v6228 = vld [vmem:[#allocation3 + $0x1d8] sm:$0xff]
        %v6229 = vld [vmem:[#allocation3 + $0x1e0] sm:$0xff]
        %v6230 = vld [vmem:[#allocation3 + $0x1e8] sm:$0xff]
        %v6231 = vld [vmem:[#allocation3 + $0x1f0] sm:$0xff]
        %v6232 = vld [vmem:[#allocation3 + $0x1f8] sm:$0xff]
        %v6233 = vadd.f32 %v6169, %v5659
        %v6234 = vadd.f32 %v6170, %v5664
        %v6235 = vadd.f32 %v6171, %v5669
        %v6236 = vadd.f32 %v6172, %v5674
        %v6237 = vadd.f32 %v6173, %v5679
        %v6238 = vadd.f32 %v6174, %v5684
        %v6239 = vadd.f32 %v6175, %v5689
        %v6240 = vadd.f32 %v6176, %v5694
        %v6241 = vadd.f32 %v6177, %v5699
        %v6242 = vadd.f32 %v6178, %v5704
        %v6243 = vadd.f32 %v6179, %v5709
        %v6244 = vadd.f32 %v6180, %v5714
        %v6245 = vadd.f32 %v6181, %v5719
        %v6246 = vadd.f32 %v6182, %v5724
        %v6247 = vadd.f32 %v6183, %v5729
        %v6248 = vadd.f32 %v6184, %v5734
        %v6249 = vadd.f32 %v6185, %v5739
        %v6250 = vadd.f32 %v6186, %v5744
        %v6251 = vadd.f32 %v6187, %v5749
        %v6252 = vadd.f32 %v6188, %v5754
        %v6253 = vadd.f32 %v6189, %v5759
        %v6254 = vadd.f32 %v6190, %v5764
        %v6255 = vadd.f32 %v6191, %v5769
        %v6256 = vadd.f32 %v6192, %v5774
        %v6257 = vadd.f32 %v6193, %v5779
        %v6258 = vadd.f32 %v6194, %v5784
        %v6259 = vadd.f32 %v6195, %v5789
        %v6260 = vadd.f32 %v6196, %v5794
        %v6261 = vadd.f32 %v6197, %v5799
        %v6262 = vadd.f32 %v6198, %v5804
        %v6263 = vadd.f32 %v6199, %v5809
        %v6264 = vadd.f32 %v6200, %v5814
        %v6265 = vadd.f32 %v6201, %v5819
        %v6266 = vadd.f32 %v6202, %v5824
        %v6267 = vadd.f32 %v6203, %v5829
        %v6268 = vadd.f32 %v6204, %v5834
        %v6269 = vadd.f32 %v6205, %v5839
        %v6270 = vadd.f32 %v6206, %v5844
        %v6271 = vadd.f32 %v6207, %v5849
        %v6272 = vadd.f32 %v6208, %v5854
        %v6273 = vadd.f32 %v6209, %v5859
        %v6274 = vadd.f32 %v6210, %v5864
        %v6275 = vadd.f32 %v6211, %v5869
        %v6276 = vadd.f32 %v6212, %v5874
        %v6277 = vadd.f32 %v6213, %v5879
        %v6278 = vadd.f32 %v6214, %v5884
        %v6279 = vadd.f32 %v6215, %v5889
        %v6280 = vadd.f32 %v6216, %v5894
        %v6281 = vadd.f32 %v6217, %v5899
        %v6282 = vadd.f32 %v6218, %v5904
        %v6283 = vadd.f32 %v6219, %v5909
        %v6284 = vadd.f32 %v6220, %v5914
        %v6285 = vadd.f32 %v6221, %v5919
        %v6286 = vadd.f32 %v6222, %v5924
        %v6287 = vadd.f32 %v6223, %v5929
        %v6288 = vadd.f32 %v6224, %v5934
        %v6289 = vadd.f32 %v6225, %v5939
        %v6290 = vadd.f32 %v6226, %v5944
        %v6291 = vadd.f32 %v6227, %v5949
        %v6292 = vadd.f32 %v6228, %v5954
        %v6293 = vadd.f32 %v6229, %v5959
        %v6294 = vadd.f32 %v6230, %v5964
        %v6295 = vadd.f32 %v6231, %v5969
        %v6296 = vadd.f32 %v6232, %v5974
        %6297 = vst.msk [vmem:[#allocation3] sm:$0xff] %vm538, %v6233
        %6298 = vst.msk [vmem:[#allocation3 + $0x8] sm:$0xff] %vm538, %v6234
        %6299 = vst.msk [vmem:[#allocation3 + $0x10] sm:$0xff] %vm538, %v6235
        %6300 = vst.msk [vmem:[#allocation3 + $0x18] sm:$0xff] %vm538, %v6236
        %6301 = vst.msk [vmem:[#allocation3 + $0x20] sm:$0xff] %vm538, %v6237
        %6302 = vst.msk [vmem:[#allocation3 + $0x28] sm:$0xff] %vm538, %v6238
        %6303 = vst.msk [vmem:[#allocation3 + $0x30] sm:$0xff] %vm538, %v6239
        %6304 = vst.msk [vmem:[#allocation3 + $0x38] sm:$0xff] %vm538, %v6240
        %6305 = vst.msk [vmem:[#allocation3 + $0x40] sm:$0xff] %vm538, %v6241
        %6306 = vst.msk [vmem:[#allocation3 + $0x48] sm:$0xff] %vm538, %v6242
        %6307 = vst.msk [vmem:[#allocation3 + $0x50] sm:$0xff] %vm538, %v6243
        %6308 = vst.msk [vmem:[#allocation3 + $0x58] sm:$0xff] %vm538, %v6244
        %6309 = vst.msk [vmem:[#allocation3 + $0x60] sm:$0xff] %vm538, %v6245
        %6310 = vst.msk [vmem:[#allocation3 + $0x68] sm:$0xff] %vm538, %v6246
        %6311 = vst.msk [vmem:[#allocation3 + $0x70] sm:$0xff] %vm538, %v6247
        %6312 = vst.msk [vmem:[#allocation3 + $0x78] sm:$0xff] %vm538, %v6248
        %6313 = vst.msk [vmem:[#allocation3 + $0x80] sm:$0xff] %vm538, %v6249
        %6314 = vst.msk [vmem:[#allocation3 + $0x88] sm:$0xff] %vm538, %v6250
        %6315 = vst.msk [vmem:[#allocation3 + $0x90] sm:$0xff] %vm538, %v6251
        %6316 = vst.msk [vmem:[#allocation3 + $0x98] sm:$0xff] %vm538, %v6252
        %6317 = vst.msk [vmem:[#allocation3 + $0xa0] sm:$0xff] %vm538, %v6253
        %6318 = vst.msk [vmem:[#allocation3 + $0xa8] sm:$0xff] %vm538, %v6254
        %6319 = vst.msk [vmem:[#allocation3 + $0xb0] sm:$0xff] %vm538, %v6255
        %6320 = vst.msk [vmem:[#allocation3 + $0xb8] sm:$0xff] %vm538, %v6256
        %6321 = vst.msk [vmem:[#allocation3 + $0xc0] sm:$0xff] %vm538, %v6257
        %6322 = vst.msk [vmem:[#allocation3 + $0xc8] sm:$0xff] %vm538, %v6258
        %6323 = vst.msk [vmem:[#allocation3 + $0xd0] sm:$0xff] %vm538, %v6259
        %6324 = vst.msk [vmem:[#allocation3 + $0xd8] sm:$0xff] %vm538, %v6260
        %6325 = vst.msk [vmem:[#allocation3 + $0xe0] sm:$0xff] %vm538, %v6261
        %6326 = vst.msk [vmem:[#allocation3 + $0xe8] sm:$0xff] %vm538, %v6262
        %6327 = vst.msk [vmem:[#allocation3 + $0xf0] sm:$0xff] %vm538, %v6263
        %6328 = vst.msk [vmem:[#allocation3 + $0xf8] sm:$0xff] %vm538, %v6264
        %6329 = vst.msk [vmem:[#allocation3 + $0x100] sm:$0xff] %vm538, %v6265
        %6330 = vst.msk [vmem:[#allocation3 + $0x108] sm:$0xff] %vm538, %v6266
        %6331 = vst.msk [vmem:[#allocation3 + $0x110] sm:$0xff] %vm538, %v6267
        %6332 = vst.msk [vmem:[#allocation3 + $0x118] sm:$0xff] %vm538, %v6268
        %6333 = vst.msk [vmem:[#allocation3 + $0x120] sm:$0xff] %vm538, %v6269
        %6334 = vst.msk [vmem:[#allocation3 + $0x128] sm:$0xff] %vm538, %v6270
        %6335 = vst.msk [vmem:[#allocation3 + $0x130] sm:$0xff] %vm538, %v6271
        %6336 = vst.msk [vmem:[#allocation3 + $0x138] sm:$0xff] %vm538, %v6272
        %6337 = vst.msk [vmem:[#allocation3 + $0x140] sm:$0xff] %vm538, %v6273
        %6338 = vst.msk [vmem:[#allocation3 + $0x148] sm:$0xff] %vm538, %v6274
        %6339 = vst.msk [vmem:[#allocation3 + $0x150] sm:$0xff] %vm538, %v6275
        %6340 = vst.msk [vmem:[#allocation3 + $0x158] sm:$0xff] %vm538, %v6276
        %6341 = vst.msk [vmem:[#allocation3 + $0x160] sm:$0xff] %vm538, %v6277
        %6342 = vst.msk [vmem:[#allocation3 + $0x168] sm:$0xff] %vm538, %v6278
        %6343 = vst.msk [vmem:[#allocation3 + $0x170] sm:$0xff] %vm538, %v6279
        %6344 = vst.msk [vmem:[#allocation3 + $0x178] sm:$0xff] %vm538, %v6280
        %6345 = vst.msk [vmem:[#allocation3 + $0x180] sm:$0xff] %vm538, %v6281
        %6346 = vst.msk [vmem:[#allocation3 + $0x188] sm:$0xff] %vm538, %v6282
        %6347 = vst.msk [vmem:[#allocation3 + $0x190] sm:$0xff] %vm538, %v6283
        %6348 = vst.msk [vmem:[#allocation3 + $0x198] sm:$0xff] %vm538, %v6284
        %6349 = vst.msk [vmem:[#allocation3 + $0x1a0] sm:$0xff] %vm538, %v6285
        %6350 = vst.msk [vmem:[#allocation3 + $0x1a8] sm:$0xff] %vm538, %v6286
        %6351 = vst.msk [vmem:[#allocation3 + $0x1b0] sm:$0xff] %vm538, %v6287
        %6352 = vst.msk [vmem:[#allocation3 + $0x1b8] sm:$0xff] %vm538, %v6288
        %6353 = vst.msk [vmem:[#allocation3 + $0x1c0] sm:$0xff] %vm538, %v6289
        %6354 = vst.msk [vmem:[#allocation3 + $0x1c8] sm:$0xff] %vm538, %v6290
        %6355 = vst.msk [vmem:[#allocation3 + $0x1d0] sm:$0xff] %vm538, %v6291
        %6356 = vst.msk [vmem:[#allocation3 + $0x1d8] sm:$0xff] %vm538, %v6292
        %6357 = vst.msk [vmem:[#allocation3 + $0x1e0] sm:$0xff] %vm538, %v6293
        %6358 = vst.msk [vmem:[#allocation3 + $0x1e8] sm:$0xff] %vm538, %v6294
        %6359 = vst.msk [vmem:[#allocation3 + $0x1f0] sm:$0xff] %vm538, %v6295
        %6360 = vst.msk [vmem:[#allocation3 + $0x1f8] sm:$0xff] %vm538, %v6296
        %v6361 = vld [vmem:[#allocation6] sm:$0x1]
        %v6362 = vld [vmem:[#allocation2] sm:$0xff]
        %v6363 = vld [vmem:[#allocation2 + $0x8] sm:$0xff]
        %v6364 = vld [vmem:[#allocation2 + $0x10] sm:$0xff]
        %v6365 = vld [vmem:[#allocation2 + $0x18] sm:$0xff]
        %v6366 = vld [vmem:[#allocation2 + $0x20] sm:$0xff]
        %v6367 = vld [vmem:[#allocation2 + $0x28] sm:$0xff]
        %v6368 = vld [vmem:[#allocation2 + $0x30] sm:$0xff]
        %v6369 = vld [vmem:[#allocation2 + $0x38] sm:$0xff]
        %v6370 = vld [vmem:[#allocation2 + $0x40] sm:$0xff]
        %v6371 = vld [vmem:[#allocation2 + $0x48] sm:$0xff]
        %v6372 = vld [vmem:[#allocation2 + $0x50] sm:$0xff]
        %v6373 = vld [vmem:[#allocation2 + $0x58] sm:$0xff]
        %v6374 = vld [vmem:[#allocation2 + $0x60] sm:$0xff]
        %v6375 = vld [vmem:[#allocation2 + $0x68] sm:$0xff]
        %v6376 = vld [vmem:[#allocation2 + $0x70] sm:$0xff]
        %v6377 = vld [vmem:[#allocation2 + $0x78] sm:$0xff]
        %v6378 = vld [vmem:[#allocation2 + $0x80] sm:$0xff]
        %v6379 = vld [vmem:[#allocation2 + $0x88] sm:$0xff]
        %v6380 = vld [vmem:[#allocation2 + $0x90] sm:$0xff]
        %v6381 = vld [vmem:[#allocation2 + $0x98] sm:$0xff]
        %v6382 = vld [vmem:[#allocation2 + $0xa0] sm:$0xff]
        %v6383 = vld [vmem:[#allocation2 + $0xa8] sm:$0xff]
        %v6384 = vld [vmem:[#allocation2 + $0xb0] sm:$0xff]
        %v6385 = vld [vmem:[#allocation2 + $0xb8] sm:$0xff]
        %v6386 = vld [vmem:[#allocation2 + $0xc0] sm:$0xff]
        %v6387 = vld [vmem:[#allocation2 + $0xc8] sm:$0xff]
        %v6388 = vld [vmem:[#allocation2 + $0xd0] sm:$0xff]
        %v6389 = vld [vmem:[#allocation2 + $0xd8] sm:$0xff]
        %v6390 = vld [vmem:[#allocation2 + $0xe0] sm:$0xff]
        %v6391 = vld [vmem:[#allocation2 + $0xe8] sm:$0xff]
        %v6392 = vld [vmem:[#allocation2 + $0xf0] sm:$0xff]
        %v6393 = vld [vmem:[#allocation2 + $0xf8] sm:$0xff]
        %v6394 = vld [vmem:[#allocation2 + $0x100] sm:$0xff]
        %v6395 = vld [vmem:[#allocation2 + $0x108] sm:$0xff]
        %v6396 = vld [vmem:[#allocation2 + $0x110] sm:$0xff]
        %v6397 = vld [vmem:[#allocation2 + $0x118] sm:$0xff]
        %v6398 = vld [vmem:[#allocation2 + $0x120] sm:$0xff]
        %v6399 = vld [vmem:[#allocation2 + $0x128] sm:$0xff]
        %v6400 = vld [vmem:[#allocation2 + $0x130] sm:$0xff]
        %v6401 = vld [vmem:[#allocation2 + $0x138] sm:$0xff]
        %v6402 = vld [vmem:[#allocation2 + $0x140] sm:$0xff]
        %v6403 = vld [vmem:[#allocation2 + $0x148] sm:$0xff]
        %v6404 = vld [vmem:[#allocation2 + $0x150] sm:$0xff]
        %v6405 = vld [vmem:[#allocation2 + $0x158] sm:$0xff]
        %v6406 = vld [vmem:[#allocation2 + $0x160] sm:$0xff]
        %v6407 = vld [vmem:[#allocation2 + $0x168] sm:$0xff]
        %v6408 = vld [vmem:[#allocation2 + $0x170] sm:$0xff]
        %v6409 = vld [vmem:[#allocation2 + $0x178] sm:$0xff]
        %v6410 = vld [vmem:[#allocation2 + $0x180] sm:$0xff]
        %v6411 = vld [vmem:[#allocation2 + $0x188] sm:$0xff]
        %v6412 = vld [vmem:[#allocation2 + $0x190] sm:$0xff]
        %v6413 = vld [vmem:[#allocation2 + $0x198] sm:$0xff]
        %v6414 = vld [vmem:[#allocation2 + $0x1a0] sm:$0xff]
        %v6415 = vld [vmem:[#allocation2 + $0x1a8] sm:$0xff]
        %v6416 = vld [vmem:[#allocation2 + $0x1b0] sm:$0xff]
        %v6417 = vld [vmem:[#allocation2 + $0x1b8] sm:$0xff]
        %v6418 = vld [vmem:[#allocation2 + $0x1c0] sm:$0xff]
        %v6419 = vld [vmem:[#allocation2 + $0x1c8] sm:$0xff]
        %v6420 = vld [vmem:[#allocation2 + $0x1d0] sm:$0xff]
        %v6421 = vld [vmem:[#allocation2 + $0x1d8] sm:$0xff]
        %v6422 = vld [vmem:[#allocation2 + $0x1e0] sm:$0xff]
        %v6423 = vld [vmem:[#allocation2 + $0x1e8] sm:$0xff]
        %v6424 = vld [vmem:[#allocation2 + $0x1f0] sm:$0xff]
        %v6425 = vld [vmem:[#allocation2 + $0x1f8] sm:$0xff]
        %v6427 = vlaneseq
        %v6428 = vshrl.u32 %v6427, 7
        %v6429 = vsub.s32 0, %v6428
        %v6430 = vrot.slane %v6361, %v6429
        %v6432 = vadd.f32 %v6362, %v6430
        %v6433 = vadd.f32 %v6363, %v6430
        %v6434 = vadd.f32 %v6364, %v6430
        %v6435 = vadd.f32 %v6365, %v6430
        %v6436 = vadd.f32 %v6366, %v6430
        %v6437 = vadd.f32 %v6367, %v6430
        %v6438 = vadd.f32 %v6368, %v6430
        %v6439 = vadd.f32 %v6369, %v6430
        %v6440 = vadd.f32 %v6370, %v6430
        %v6441 = vadd.f32 %v6371, %v6430
        %v6442 = vadd.f32 %v6372, %v6430
        %v6443 = vadd.f32 %v6373, %v6430
        %v6444 = vadd.f32 %v6374, %v6430
        %v6445 = vadd.f32 %v6375, %v6430
        %v6446 = vadd.f32 %v6376, %v6430
        %v6447 = vadd.f32 %v6377, %v6430
        %v6448 = vadd.f32 %v6378, %v6430
        %v6449 = vadd.f32 %v6379, %v6430
        %v6450 = vadd.f32 %v6380, %v6430
        %v6451 = vadd.f32 %v6381, %v6430
        %v6452 = vadd.f32 %v6382, %v6430
        %v6453 = vadd.f32 %v6383, %v6430
        %v6454 = vadd.f32 %v6384, %v6430
        %v6455 = vadd.f32 %v6385, %v6430
        %v6456 = vadd.f32 %v6386, %v6430
        %v6457 = vadd.f32 %v6387, %v6430
        %v6458 = vadd.f32 %v6388, %v6430
        %v6459 = vadd.f32 %v6389, %v6430
        %v6460 = vadd.f32 %v6390, %v6430
        %v6461 = vadd.f32 %v6391, %v6430
        %v6462 = vadd.f32 %v6392, %v6430
        %v6463 = vadd.f32 %v6393, %v6430
        %v6464 = vadd.f32 %v6394, %v6430
        %v6465 = vadd.f32 %v6395, %v6430
        %v6466 = vadd.f32 %v6396, %v6430
        %v6467 = vadd.f32 %v6397, %v6430
        %v6468 = vadd.f32 %v6398, %v6430
        %v6469 = vadd.f32 %v6399, %v6430
        %v6470 = vadd.f32 %v6400, %v6430
        %v6471 = vadd.f32 %v6401, %v6430
        %v6472 = vadd.f32 %v6402, %v6430
        %v6473 = vadd.f32 %v6403, %v6430
        %v6474 = vadd.f32 %v6404, %v6430
        %v6475 = vadd.f32 %v6405, %v6430
        %v6476 = vadd.f32 %v6406, %v6430
        %v6477 = vadd.f32 %v6407, %v6430
        %v6478 = vadd.f32 %v6408, %v6430
        %v6479 = vadd.f32 %v6409, %v6430
        %v6480 = vadd.f32 %v6410, %v6430
        %v6481 = vadd.f32 %v6411, %v6430
        %v6482 = vadd.f32 %v6412, %v6430
        %v6483 = vadd.f32 %v6413, %v6430
        %v6484 = vadd.f32 %v6414, %v6430
        %v6485 = vadd.f32 %v6415, %v6430
        %v6486 = vadd.f32 %v6416, %v6430
        %v6487 = vadd.f32 %v6417, %v6430
        %v6488 = vadd.f32 %v6418, %v6430
        %v6489 = vadd.f32 %v6419, %v6430
        %v6490 = vadd.f32 %v6420, %v6430
        %v6491 = vadd.f32 %v6421, %v6430
        %v6492 = vadd.f32 %v6422, %v6430
        %v6493 = vadd.f32 %v6423, %v6430
        %v6494 = vadd.f32 %v6424, %v6430
        %v6495 = vadd.f32 %v6425, %v6430
        %v6496 = vld [vmem:[#allocation3] sm:$0xff]
        %v6497 = vld [vmem:[#allocation3 + $0x8] sm:$0xff]
        %v6498 = vld [vmem:[#allocation3 + $0x10] sm:$0xff]
        %v6499 = vld [vmem:[#allocation3 + $0x18] sm:$0xff]
        %v6500 = vld [vmem:[#allocation3 + $0x20] sm:$0xff]
        %v6501 = vld [vmem:[#allocation3 + $0x28] sm:$0xff]
        %v6502 = vld [vmem:[#allocation3 + $0x30] sm:$0xff]
        %v6503 = vld [vmem:[#allocation3 + $0x38] sm:$0xff]
        %v6504 = vld [vmem:[#allocation3 + $0x40] sm:$0xff]
        %v6505 = vld [vmem:[#allocation3 + $0x48] sm:$0xff]
        %v6506 = vld [vmem:[#allocation3 + $0x50] sm:$0xff]
        %v6507 = vld [vmem:[#allocation3 + $0x58] sm:$0xff]
        %v6508 = vld [vmem:[#allocation3 + $0x60] sm:$0xff]
        %v6509 = vld [vmem:[#allocation3 + $0x68] sm:$0xff]
        %v6510 = vld [vmem:[#allocation3 + $0x70] sm:$0xff]
        %v6511 = vld [vmem:[#allocation3 + $0x78] sm:$0xff]
        %v6512 = vld [vmem:[#allocation3 + $0x80] sm:$0xff]
        %v6513 = vld [vmem:[#allocation3 + $0x88] sm:$0xff]
        %v6514 = vld [vmem:[#allocation3 + $0x90] sm:$0xff]
        %v6515 = vld [vmem:[#allocation3 + $0x98] sm:$0xff]
        %v6516 = vld [vmem:[#allocation3 + $0xa0] sm:$0xff]
        %v6517 = vld [vmem:[#allocation3 + $0xa8] sm:$0xff]
        %v6518 = vld [vmem:[#allocation3 + $0xb0] sm:$0xff]
        %v6519 = vld [vmem:[#allocation3 + $0xb8] sm:$0xff]
        %v6520 = vld [vmem:[#allocation3 + $0xc0] sm:$0xff]
        %v6521 = vld [vmem:[#allocation3 + $0xc8] sm:$0xff]
        %v6522 = vld [vmem:[#allocation3 + $0xd0] sm:$0xff]
        %v6523 = vld [vmem:[#allocation3 + $0xd8] sm:$0xff]
        %v6524 = vld [vmem:[#allocation3 + $0xe0] sm:$0xff]
        %v6525 = vld [vmem:[#allocation3 + $0xe8] sm:$0xff]
        %v6526 = vld [vmem:[#allocation3 + $0xf0] sm:$0xff]
        %v6527 = vld [vmem:[#allocation3 + $0xf8] sm:$0xff]
        %v6528 = vld [vmem:[#allocation3 + $0x100] sm:$0xff]
        %v6529 = vld [vmem:[#allocation3 + $0x108] sm:$0xff]
        %v6530 = vld [vmem:[#allocation3 + $0x110] sm:$0xff]
        %v6531 = vld [vmem:[#allocation3 + $0x118] sm:$0xff]
        %v6532 = vld [vmem:[#allocation3 + $0x120] sm:$0xff]
        %v6533 = vld [vmem:[#allocation3 + $0x128] sm:$0xff]
        %v6534 = vld [vmem:[#allocation3 + $0x130] sm:$0xff]
        %v6535 = vld [vmem:[#allocation3 + $0x138] sm:$0xff]
        %v6536 = vld [vmem:[#allocation3 + $0x140] sm:$0xff]
        %v6537 = vld [vmem:[#allocation3 + $0x148] sm:$0xff]
        %v6538 = vld [vmem:[#allocation3 + $0x150] sm:$0xff]
        %v6539 = vld [vmem:[#allocation3 + $0x158] sm:$0xff]
        %v6540 = vld [vmem:[#allocation3 + $0x160] sm:$0xff]
        %v6541 = vld [vmem:[#allocation3 + $0x168] sm:$0xff]
        %v6542 = vld [vmem:[#allocation3 + $0x170] sm:$0xff]
        %v6543 = vld [vmem:[#allocation3 + $0x178] sm:$0xff]
        %v6544 = vld [vmem:[#allocation3 + $0x180] sm:$0xff]
        %v6545 = vld [vmem:[#allocation3 + $0x188] sm:$0xff]
        %v6546 = vld [vmem:[#allocation3 + $0x190] sm:$0xff]
        %v6547 = vld [vmem:[#allocation3 + $0x198] sm:$0xff]
        %v6548 = vld [vmem:[#allocation3 + $0x1a0] sm:$0xff]
        %v6549 = vld [vmem:[#allocation3 + $0x1a8] sm:$0xff]
        %v6550 = vld [vmem:[#allocation3 + $0x1b0] sm:$0xff]
        %v6551 = vld [vmem:[#allocation3 + $0x1b8] sm:$0xff]
        %v6552 = vld [vmem:[#allocation3 + $0x1c0] sm:$0xff]
        %v6553 = vld [vmem:[#allocation3 + $0x1c8] sm:$0xff]
        %v6554 = vld [vmem:[#allocation3 + $0x1d0] sm:$0xff]
        %v6555 = vld [vmem:[#allocation3 + $0x1d8] sm:$0xff]
        %v6556 = vld [vmem:[#allocation3 + $0x1e0] sm:$0xff]
        %v6557 = vld [vmem:[#allocation3 + $0x1e8] sm:$0xff]
        %v6558 = vld [vmem:[#allocation3 + $0x1f0] sm:$0xff]
        %v6559 = vld [vmem:[#allocation3 + $0x1f8] sm:$0xff]
        %v6560 = vadd.f32 %v6496, %v6430
        %v6561 = vadd.f32 %v6497, %v6430
        %v6562 = vadd.f32 %v6498, %v6430
        %v6563 = vadd.f32 %v6499, %v6430
        %v6564 = vadd.f32 %v6500, %v6430
        %v6565 = vadd.f32 %v6501, %v6430
        %v6566 = vadd.f32 %v6502, %v6430
        %v6567 = vadd.f32 %v6503, %v6430
        %v6568 = vadd.f32 %v6504, %v6430
        %v6569 = vadd.f32 %v6505, %v6430
        %v6570 = vadd.f32 %v6506, %v6430
        %v6571 = vadd.f32 %v6507, %v6430
        %v6572 = vadd.f32 %v6508, %v6430
        %v6573 = vadd.f32 %v6509, %v6430
        %v6574 = vadd.f32 %v6510, %v6430
        %v6575 = vadd.f32 %v6511, %v6430
        %v6576 = vadd.f32 %v6512, %v6430
        %v6577 = vadd.f32 %v6513, %v6430
        %v6578 = vadd.f32 %v6514, %v6430
        %v6579 = vadd.f32 %v6515, %v6430
        %v6580 = vadd.f32 %v6516, %v6430
        %v6581 = vadd.f32 %v6517, %v6430
        %v6582 = vadd.f32 %v6518, %v6430
        %v6583 = vadd.f32 %v6519, %v6430
        %v6584 = vadd.f32 %v6520, %v6430
        %v6585 = vadd.f32 %v6521, %v6430
        %v6586 = vadd.f32 %v6522, %v6430
        %v6587 = vadd.f32 %v6523, %v6430
        %v6588 = vadd.f32 %v6524, %v6430
        %v6589 = vadd.f32 %v6525, %v6430
        %v6590 = vadd.f32 %v6526, %v6430
        %v6591 = vadd.f32 %v6527, %v6430
        %v6592 = vadd.f32 %v6528, %v6430
        %v6593 = vadd.f32 %v6529, %v6430
        %v6594 = vadd.f32 %v6530, %v6430
        %v6595 = vadd.f32 %v6531, %v6430
        %v6596 = vadd.f32 %v6532, %v6430
        %v6597 = vadd.f32 %v6533, %v6430
        %v6598 = vadd.f32 %v6534, %v6430
        %v6599 = vadd.f32 %v6535, %v6430
        %v6600 = vadd.f32 %v6536, %v6430
        %v6601 = vadd.f32 %v6537, %v6430
        %v6602 = vadd.f32 %v6538, %v6430
        %v6603 = vadd.f32 %v6539, %v6430
        %v6604 = vadd.f32 %v6540, %v6430
        %v6605 = vadd.f32 %v6541, %v6430
        %v6606 = vadd.f32 %v6542, %v6430
        %v6607 = vadd.f32 %v6543, %v6430
        %v6608 = vadd.f32 %v6544, %v6430
        %v6609 = vadd.f32 %v6545, %v6430
        %v6610 = vadd.f32 %v6546, %v6430
        %v6611 = vadd.f32 %v6547, %v6430
        %v6612 = vadd.f32 %v6548, %v6430
        %v6613 = vadd.f32 %v6549, %v6430
        %v6614 = vadd.f32 %v6550, %v6430
        %v6615 = vadd.f32 %v6551, %v6430
        %v6616 = vadd.f32 %v6552, %v6430
        %v6617 = vadd.f32 %v6553, %v6430
        %v6618 = vadd.f32 %v6554, %v6430
        %v6619 = vadd.f32 %v6555, %v6430
        %v6620 = vadd.f32 %v6556, %v6430
        %v6621 = vadd.f32 %v6557, %v6430
        %v6622 = vadd.f32 %v6558, %v6430
        %v6623 = vadd.f32 %v6559, %v6430
        %6624 = vst.msk [vmem:[%s251] sm:$0xff] %vm538, %v6432
        %6625 = vst.msk [vmem:[%s251 + $0x8] sm:$0xff] %vm538, %v6433
        %6626 = vst.msk [vmem:[%s251 + $0x10] sm:$0xff] %vm538, %v6434
        %6627 = vst.msk [vmem:[%s251 + $0x18] sm:$0xff] %vm538, %v6435
        %6628 = vst.msk [vmem:[%s251 + $0x20] sm:$0xff] %vm538, %v6436
        %6629 = vst.msk [vmem:[%s251 + $0x28] sm:$0xff] %vm538, %v6437
        %6630 = vst.msk [vmem:[%s251 + $0x30] sm:$0xff] %vm538, %v6438
        %6631 = vst.msk [vmem:[%s251 + $0x38] sm:$0xff] %vm538, %v6439
        %6632 = vst.msk [vmem:[%s251 + $0x40] sm:$0xff] %vm538, %v6440
        %6633 = vst.msk [vmem:[%s251 + $0x48] sm:$0xff] %vm538, %v6441
        %6634 = vst.msk [vmem:[%s251 + $0x50] sm:$0xff] %vm538, %v6442
        %6635 = vst.msk [vmem:[%s251 + $0x58] sm:$0xff] %vm538, %v6443
        %6636 = vst.msk [vmem:[%s251 + $0x60] sm:$0xff] %vm538, %v6444
        %6637 = vst.msk [vmem:[%s251 + $0x68] sm:$0xff] %vm538, %v6445
        %6638 = vst.msk [vmem:[%s251 + $0x70] sm:$0xff] %vm538, %v6446
        %6639 = vst.msk [vmem:[%s251 + $0x78] sm:$0xff] %vm538, %v6447
        %6640 = vst.msk [vmem:[%s251 + $0x80] sm:$0xff] %vm538, %v6448
        %6641 = vst.msk [vmem:[%s251 + $0x88] sm:$0xff] %vm538, %v6449
        %6642 = vst.msk [vmem:[%s251 + $0x90] sm:$0xff] %vm538, %v6450
        %6643 = vst.msk [vmem:[%s251 + $0x98] sm:$0xff] %vm538, %v6451
        %6644 = vst.msk [vmem:[%s251 + $0xa0] sm:$0xff] %vm538, %v6452
        %6645 = vst.msk [vmem:[%s251 + $0xa8] sm:$0xff] %vm538, %v6453
        %6646 = vst.msk [vmem:[%s251 + $0xb0] sm:$0xff] %vm538, %v6454
        %6647 = vst.msk [vmem:[%s251 + $0xb8] sm:$0xff] %vm538, %v6455
        %6648 = vst.msk [vmem:[%s251 + $0xc0] sm:$0xff] %vm538, %v6456
        %6649 = vst.msk [vmem:[%s251 + $0xc8] sm:$0xff] %vm538, %v6457
        %6650 = vst.msk [vmem:[%s251 + $0xd0] sm:$0xff] %vm538, %v6458
        %6651 = vst.msk [vmem:[%s251 + $0xd8] sm:$0xff] %vm538, %v6459
        %6652 = vst.msk [vmem:[%s251 + $0xe0] sm:$0xff] %vm538, %v6460
        %6653 = vst.msk [vmem:[%s251 + $0xe8] sm:$0xff] %vm538, %v6461
        %6654 = vst.msk [vmem:[%s251 + $0xf0] sm:$0xff] %vm538, %v6462
        %6655 = vst.msk [vmem:[%s251 + $0xf8] sm:$0xff] %vm538, %v6463
        %6656 = vst.msk [vmem:[%s251 + $0x100] sm:$0xff] %vm538, %v6464
        %6657 = vst.msk [vmem:[%s251 + $0x108] sm:$0xff] %vm538, %v6465
        %6658 = vst.msk [vmem:[%s251 + $0x110] sm:$0xff] %vm538, %v6466
        %6659 = vst.msk [vmem:[%s251 + $0x118] sm:$0xff] %vm538, %v6467
        %6660 = vst.msk [vmem:[%s251 + $0x120] sm:$0xff] %vm538, %v6468
        %6661 = vst.msk [vmem:[%s251 + $0x128] sm:$0xff] %vm538, %v6469
        %6662 = vst.msk [vmem:[%s251 + $0x130] sm:$0xff] %vm538, %v6470
        %6663 = vst.msk [vmem:[%s251 + $0x138] sm:$0xff] %vm538, %v6471
        %6664 = vst.msk [vmem:[%s251 + $0x140] sm:$0xff] %vm538, %v6472
        %6665 = vst.msk [vmem:[%s251 + $0x148] sm:$0xff] %vm538, %v6473
        %6666 = vst.msk [vmem:[%s251 + $0x150] sm:$0xff] %vm538, %v6474
        %6667 = vst.msk [vmem:[%s251 + $0x158] sm:$0xff] %vm538, %v6475
        %6668 = vst.msk [vmem:[%s251 + $0x160] sm:$0xff] %vm538, %v6476
        %6669 = vst.msk [vmem:[%s251 + $0x168] sm:$0xff] %vm538, %v6477
        %6670 = vst.msk [vmem:[%s251 + $0x170] sm:$0xff] %vm538, %v6478
        %6671 = vst.msk [vmem:[%s251 + $0x178] sm:$0xff] %vm538, %v6479
        %6672 = vst.msk [vmem:[%s251 + $0x180] sm:$0xff] %vm538, %v6480
        %6673 = vst.msk [vmem:[%s251 + $0x188] sm:$0xff] %vm538, %v6481
        %6674 = vst.msk [vmem:[%s251 + $0x190] sm:$0xff] %vm538, %v6482
        %6675 = vst.msk [vmem:[%s251 + $0x198] sm:$0xff] %vm538, %v6483
        %6676 = vst.msk [vmem:[%s251 + $0x1a0] sm:$0xff] %vm538, %v6484
        %6677 = vst.msk [vmem:[%s251 + $0x1a8] sm:$0xff] %vm538, %v6485
        %6678 = vst.msk [vmem:[%s251 + $0x1b0] sm:$0xff] %vm538, %v6486
        %6679 = vst.msk [vmem:[%s251 + $0x1b8] sm:$0xff] %vm538, %v6487
        %6680 = vst.msk [vmem:[%s251 + $0x1c0] sm:$0xff] %vm538, %v6488
        %6681 = vst.msk [vmem:[%s251 + $0x1c8] sm:$0xff] %vm538, %v6489
        %6682 = vst.msk [vmem:[%s251 + $0x1d0] sm:$0xff] %vm538, %v6490
        %6683 = vst.msk [vmem:[%s251 + $0x1d8] sm:$0xff] %vm538, %v6491
        %6684 = vst.msk [vmem:[%s251 + $0x1e0] sm:$0xff] %vm538, %v6492
        %6685 = vst.msk [vmem:[%s251 + $0x1e8] sm:$0xff] %vm538, %v6493
        %6686 = vst.msk [vmem:[%s251 + $0x1f0] sm:$0xff] %vm538, %v6494
        %6687 = vst.msk [vmem:[%s251 + $0x1f8] sm:$0xff] %vm538, %v6495
        %6688 = vst.msk [vmem:[%s251 + $0x200] sm:$0xff] %vm538, %v6560
        %6689 = vst.msk [vmem:[%s251 + $0x208] sm:$0xff] %vm538, %v6561
        %6690 = vst.msk [vmem:[%s251 + $0x210] sm:$0xff] %vm538, %v6562
        %6691 = vst.msk [vmem:[%s251 + $0x218] sm:$0xff] %vm538, %v6563
        %6692 = vst.msk [vmem:[%s251 + $0x220] sm:$0xff] %vm538, %v6564
        %6693 = vst.msk [vmem:[%s251 + $0x228] sm:$0xff] %vm538, %v6565
        %6694 = vst.msk [vmem:[%s251 + $0x230] sm:$0xff] %vm538, %v6566
        %6695 = vst.msk [vmem:[%s251 + $0x238] sm:$0xff] %vm538, %v6567
        %6696 = vst.msk [vmem:[%s251 + $0x240] sm:$0xff] %vm538, %v6568
        %6697 = vst.msk [vmem:[%s251 + $0x248] sm:$0xff] %vm538, %v6569
        %6698 = vst.msk [vmem:[%s251 + $0x250] sm:$0xff] %vm538, %v6570
        %6699 = vst.msk [vmem:[%s251 + $0x258] sm:$0xff] %vm538, %v6571
        %6700 = vst.msk [vmem:[%s251 + $0x260] sm:$0xff] %vm538, %v6572
        %6701 = vst.msk [vmem:[%s251 + $0x268] sm:$0xff] %vm538, %v6573
        %6702 = vst.msk [vmem:[%s251 + $0x270] sm:$0xff] %vm538, %v6574
        %6703 = vst.msk [vmem:[%s251 + $0x278] sm:$0xff] %vm538, %v6575
        %6704 = vst.msk [vmem:[%s251 + $0x280] sm:$0xff] %vm538, %v6576
        %6705 = vst.msk [vmem:[%s251 + $0x288] sm:$0xff] %vm538, %v6577
        %6706 = vst.msk [vmem:[%s251 + $0x290] sm:$0xff] %vm538, %v6578
        %6707 = vst.msk [vmem:[%s251 + $0x298] sm:$0xff] %vm538, %v6579
        %6708 = vst.msk [vmem:[%s251 + $0x2a0] sm:$0xff] %vm538, %v6580
        %6709 = vst.msk [vmem:[%s251 + $0x2a8] sm:$0xff] %vm538, %v6581
        %6710 = vst.msk [vmem:[%s251 + $0x2b0] sm:$0xff] %vm538, %v6582
        %6711 = vst.msk [vmem:[%s251 + $0x2b8] sm:$0xff] %vm538, %v6583
        %6712 = vst.msk [vmem:[%s251 + $0x2c0] sm:$0xff] %vm538, %v6584
        %6713 = vst.msk [vmem:[%s251 + $0x2c8] sm:$0xff] %vm538, %v6585
        %6714 = vst.msk [vmem:[%s251 + $0x2d0] sm:$0xff] %vm538, %v6586
        %6715 = vst.msk [vmem:[%s251 + $0x2d8] sm:$0xff] %vm538, %v6587
        %6716 = vst.msk [vmem:[%s251 + $0x2e0] sm:$0xff] %vm538, %v6588
        %6717 = vst.msk [vmem:[%s251 + $0x2e8] sm:$0xff] %vm538, %v6589
        %6718 = vst.msk [vmem:[%s251 + $0x2f0] sm:$0xff] %vm538, %v6590
        %6719 = vst.msk [vmem:[%s251 + $0x2f8] sm:$0xff] %vm538, %v6591
        %6720 = vst.msk [vmem:[%s251 + $0x300] sm:$0xff] %vm538, %v6592
        %6721 = vst.msk [vmem:[%s251 + $0x308] sm:$0xff] %vm538, %v6593
        %6722 = vst.msk [vmem:[%s251 + $0x310] sm:$0xff] %vm538, %v6594
        %6723 = vst.msk [vmem:[%s251 + $0x318] sm:$0xff] %vm538, %v6595
        %6724 = vst.msk [vmem:[%s251 + $0x320] sm:$0xff] %vm538, %v6596
        %6725 = vst.msk [vmem:[%s251 + $0x328] sm:$0xff] %vm538, %v6597
        %6726 = vst.msk [vmem:[%s251 + $0x330] sm:$0xff] %vm538, %v6598
        %6727 = vst.msk [vmem:[%s251 + $0x338] sm:$0xff] %vm538, %v6599
        %6728 = vst.msk [vmem:[%s251 + $0x340] sm:$0xff] %vm538, %v6600
        %6729 = vst.msk [vmem:[%s251 + $0x348] sm:$0xff] %vm538, %v6601
        %6730 = vst.msk [vmem:[%s251 + $0x350] sm:$0xff] %vm538, %v6602
        %6731 = vst.msk [vmem:[%s251 + $0x358] sm:$0xff] %vm538, %v6603
        %6732 = vst.msk [vmem:[%s251 + $0x360] sm:$0xff] %vm538, %v6604
        %6733 = vst.msk [vmem:[%s251 + $0x368] sm:$0xff] %vm538, %v6605
        %6734 = vst.msk [vmem:[%s251 + $0x370] sm:$0xff] %vm538, %v6606
        %6735 = vst.msk [vmem:[%s251 + $0x378] sm:$0xff] %vm538, %v6607
        %6736 = vst.msk [vmem:[%s251 + $0x380] sm:$0xff] %vm538, %v6608
        %6737 = vst.msk [vmem:[%s251 + $0x388] sm:$0xff] %vm538, %v6609
        %6738 = vst.msk [vmem:[%s251 + $0x390] sm:$0xff] %vm538, %v6610
        %6739 = vst.msk [vmem:[%s251 + $0x398] sm:$0xff] %vm538, %v6611
        %6740 = vst.msk [vmem:[%s251 + $0x3a0] sm:$0xff] %vm538, %v6612
        %6741 = vst.msk [vmem:[%s251 + $0x3a8] sm:$0xff] %vm538, %v6613
        %6742 = vst.msk [vmem:[%s251 + $0x3b0] sm:$0xff] %vm538, %v6614
        %6743 = vst.msk [vmem:[%s251 + $0x3b8] sm:$0xff] %vm538, %v6615
        %6744 = vst.msk [vmem:[%s251 + $0x3c0] sm:$0xff] %vm538, %v6616
        %6745 = vst.msk [vmem:[%s251 + $0x3c8] sm:$0xff] %vm538, %v6617
        %6746 = vst.msk [vmem:[%s251 + $0x3d0] sm:$0xff] %vm538, %v6618
        %6747 = vst.msk [vmem:[%s251 + $0x3d8] sm:$0xff] %vm538, %v6619
        %6748 = vst.msk [vmem:[%s251 + $0x3e0] sm:$0xff] %vm538, %v6620
        %6749 = vst.msk [vmem:[%s251 + $0x3e8] sm:$0xff] %vm538, %v6621
        %6750 = vst.msk [vmem:[%s251 + $0x3f0] sm:$0xff] %vm538, %v6622
        %6751 = vst.msk [vmem:[%s251 + $0x3f8] sm:$0xff] %vm538, %v6623
        %s6752 = smul.u32 32, %s23
        %p6753 = scmp.lt.s32.totalorder %s21, 5
        %s6754 = scalar_select %p6753, %s21, 5
        %p6755 = scmp.lt.s32.totalorder %s6752, 31
        %s6756 = scalar_select %p6755, %s6752, 31
        %p6757 = scmp.lt.s32.totalorder %s22, 0
        %s6758 = scalar_select %p6757, %s22, 0
        %s6759 = smul.addr %s6756, 2
        %s6760 = sadd.s32 %s6758, %s6759
        %s6761 = smul.addr %s6754, 128
        %s6762 = sadd.s32 %s6760, %s6761
        %s6763 = smul.addr %s6762, 8
        %s6764 = scalar_lea.vmem %s3, %s6763
        // Predicated region
        $region41: #{upsample3d_forward.1} parent=31 // pred_check
          %p6765 = pneg %p135
        $region42: #{upsample3d_forward.1} parent=31 // pred_check_branch
          %6767 = sbr.rel (%p6765) target = $region44
        $region43: #{upsample3d_forward.1} parent=31 // pred_region
          %s6768 = smul.u32 32, %s23
        $region44: #{upsample3d_forward.1} parent=31 // pred_fallthru
          _
      $region32: #{upsample3d_forward.1} parent=5 // pred_fallthru
        _
      %p6769 = scmp.le.s32.totalorder 2, %s11
      // Predicated region
      $region45: #{upsample3d_forward.1} parent=5 // pred_check
        %p6770 = pneg %p6769
      $region46: #{upsample3d_forward.1} parent=5 // pred_check_branch
        %6772 = sbr.rel (%p6770) target = $region48
      $region47: #{upsample3d_forward.1} parent=5 // pred_region
        %s6773 = ssub.s32 %s11, 2
        // Predicated region
        $region49: #{upsample3d_forward.1} parent=47 // pred_check
          %p6774 = pneg %p141
        $region50: #{upsample3d_forward.1} parent=47 // pred_check_branch
          %6776 = sbr.rel (%p6774) target = $region52
        $region51: #{upsample3d_forward.1} parent=47 // pred_region
          %s6777 = smul.u32 32, %s26
          %p6778 = scmp.lt.s32.totalorder %s24, 5
          %s6779 = scalar_select %p6778, %s24, 5
          %p6780 = scmp.lt.s32.totalorder %s6777, 31
          %s6781 = scalar_select %p6780, %s6777, 31
          %p6782 = scmp.lt.s32.totalorder %s25, 0
          %s6783 = scalar_select %p6782, %s25, 0
          %s6784 = smul.addr %s6781, 2
          %s6785 = sadd.s32 %s6783, %s6784
          %s6786 = smul.addr %s6779, 128
          %s6787 = sadd.s32 %s6785, %s6786
          %s6788 = smul.addr %s6787, 8
          %s6789 = scalar_lea.vmem %s3, %s6788
        $region52: #{upsample3d_forward.1} parent=47 // pred_fallthru
          _
      $region48: #{upsample3d_forward.1} parent=5 // pred_fallthru
        _
    $region6: #{upsample3d_forward.1} parent=1 // loop_footer
      %s15 = sadd.s32 1, %s11
    $region7: #{upsample3d_forward.1} parent=1 // loop_footer_branch
      %10 = sbr.rel target = $region3
    $region8: #{upsample3d_forward.1} parent=1 // loop_exit
      _
    %6790 = vsyncpa [#allocation5], 1
    %s6791 = scalar_lea.sflag [#allocation5], 1
    %6792 = vsyncpa %s6791, 1
    %6793 = vsyncpa [#allocation7], 1

</llo_original>
